<compile_context>
chip_gen: v7x
topology: tpu7x:2x2x1
jax: 0.10.0
libtpu: 0.0.40
codegen_flags: <defaults>
</compile_context>

<pallas_src>
import functools
import math

import jax
import jax.numpy as jnp
from jax.experimental import pallas as pl
from jax.experimental.pallas import tpu as pltpu

# ----------------------------- model dims (small test config) ----------------
BATCH = 2
FRAMES = 8        # num_frames
C_IN = 3
H = W = 16
PATCH = 4         # stand-in backbone downsample factor
FEAT_DIM = 64     # stands for efficientnet_b0's 1280
ATT_HID = 32      # stands for 512 in the spatial-attention 1x1 conv
D_MODEL = 32      # stands for 512
N_HEAD = 4        # stands for 8
HEAD_DIM = D_MODEL // N_HEAD
N_LAYERS = 2      # stands for 6
D_FF = 64         # stands for 2048
TEMP_HID = 16     # stands for 256 in temporal attention
FUS1, FUS2 = 16, 8  # stands for 256, 128 in the fusion MLP
MAX_LEN = 64      # positional-encoding table length (5000 in the original)
LN_EPS = 1e-5

_VMEM = pl.BlockSpec(memory_space=pltpu.MemorySpace.VMEM)  # whole-array block


# ----------------------------- single fused Pallas kernel --------------------
def _deepfake_kernel(nf, nb, hw, eps,
                     # activations / buffers
                     patches_ref, pe_ref,
                     # spatial head weights
                     bb_w, bb_b, sa1_w, sa1_b, sa2_w, sa2_b, fr_w, fr_b,
                     # stacked transformer-encoder weights (leading layer dim)
                     wqkv, bqkv, wo, bo, n1g, n1b, w1, b1, w2, b2, n2g, n2b,
                     # temporal head + fusion MLP weights
                     ta1_w, ta1_b, ta2_w, ta2_b,
                     f1_w, f1_b, f2_w, f2_b, f3_w, f3_b,
                     out_ref):
    """Entire DeepfakeDetector forward, VMEM-resident.

    Row order everywhere is frame-major: row = f * nb + b (then hp, wp for the
    patch rows), so per-frame BxB attention blocks and per-(f,b) pooling blocks
    are contiguous and no attention mask is needed.
    """
    bf16 = jnp.bfloat16
    f32 = jnp.float32
    rows = nf * nb

    # ---- backbone stand-in: patchify "conv" as matmul + ReLU ---------------
    feats = jnp.dot(patches_ref[...].astype(bf16), bb_w[...],
                    preferred_element_type=f32) + bb_b[...]
    feats = jnp.maximum(feats, 0.0)                          # (R_p, FEAT) f32

    # ---- spatial attention: 1x1 conv -> ReLU -> 1x1 conv -> sigmoid gate ---
    a = jnp.dot(feats.astype(bf16), sa1_w[...],
                preferred_element_type=f32) + sa1_b[...]
    a = jnp.maximum(a, 0.0)                                  # (R_p, ATT_HID)
    gate = jax.nn.sigmoid(
        jnp.sum(a * sa2_w[...], axis=-1, keepdims=True) + sa2_b[...])
    attended = feats * gate                                  # (R_p, FEAT)

    # ---- AdaptiveAvgPool2d((1,1)): per-(frame,batch) block mean ------------
    pooled = jnp.mean(attended.reshape(rows, hw, attended.shape[-1]), axis=1)

    # ---- feature_reduction Linear + positional encoding (dropout=identity) -
    x = (jnp.dot(pooled.astype(bf16), fr_w[...], preferred_element_type=f32)
         + fr_b[...] + pe_ref[...])                          # (rows, D) f32
    d = x.shape[-1]

    # ---- transformer encoder: post-norm layers, statically unrolled --------
    for l in range(wqkv.shape[0]):
        # packed QKV projection (1/sqrt(head_dim) pre-folded into Q columns)
        qkv = (jnp.dot(x.astype(bf16), wqkv[l], preferred_element_type=f32)
               + bqkv[l])                                    # (rows, 3D) f32
        qkv = qkv.astype(bf16)

        heads = []
        for h in range(N_HEAD):
            lo = h * HEAD_DIM
            qh = qkv[:, lo:lo + HEAD_DIM].reshape(nf, nb, HEAD_DIM)
            kh = qkv[:, d + lo:d + lo + HEAD_DIM].reshape(nf, nb, HEAD_DIM)
            vh = qkv[:, 2 * d + lo:2 * d + lo + HEAD_DIM].reshape(nf, nb,
                                                                  HEAD_DIM)
            # block-diagonal attention: per-frame (nb x nb) scores, no mask
            s = jnp.einsum('fbh,fch->fbc', qh, kh,
                           preferred_element_type=f32)       # (nf, nb, nb)
            s = s - jnp.max(s, axis=-1, keepdims=True)
            p = jnp.exp(s)
            p = p / jnp.sum(p, axis=-1, keepdims=True)       # exact softmax
            oh = jnp.einsum('fbc,fch->fbh', p.astype(bf16), vh,
                            preferred_element_type=f32)      # (nf, nb, HD)
            heads.append(oh.reshape(rows, HEAD_DIM))
        # single full-width output projection (one K=D matmul, not N_HEAD)
        attn = jnp.concatenate(heads, axis=-1)               # (rows, D)
        attn = (jnp.dot(attn.astype(bf16), wo[l], preferred_element_type=f32)
                + bo[l])

        # residual + post-LayerNorm 1 (f32)
        y = x + attn
        mu = jnp.mean(y, axis=-1, keepdims=True)
        var = jnp.mean((y - mu) ** 2, axis=-1, keepdims=True)
        y = (y - mu) * jax.lax.rsqrt(var + eps) * n1g[l] + n1b[l]

        # FFN (Linear -> ReLU -> Linear), residual + post-LayerNorm 2
        ff = jnp.maximum(
            jnp.dot(y.astype(bf16), w1[l], preferred_element_type=f32)
            + b1[l], 0.0)
        ff = (jnp.dot(ff.astype(bf16), w2[l], preferred_element_type=f32)
              + b2[l])
        z = y + ff
        mu = jnp.mean(z, axis=-1, keepdims=True)
        var = jnp.mean((z - mu) ** 2, axis=-1, keepdims=True)
        x = (z - mu) * jax.lax.rsqrt(var + eps) * n2g[l] + n2b[l]

    # ---- temporal attention gate (Linear -> ReLU -> Linear -> Sigmoid) -----
    ta = jnp.maximum(
        jnp.dot(x.astype(bf16), ta1_w[...], preferred_element_type=f32)
        + ta1_b[...], 0.0)                                   # (rows, TEMP_HID)
    tgate = jax.nn.sigmoid(
        jnp.sum(ta * ta2_w[...], axis=-1, keepdims=True) + ta2_b[...])
    att = x * tgate                                          # (rows, D)

    # ---- global mean over frames (torch.mean(dim=1)) ------------------------
    g = jnp.mean(att.reshape(nf, nb, d), axis=0)             # (nb, D)

    # ---- fusion MLP (dropouts = identity) -----------------------------------
    h1 = jnp.maximum(
        jnp.dot(g.astype(bf16), f1_w[...], preferred_element_type=f32)
        + f1_b[...], 0.0)
    h2 = jnp.maximum(
        jnp.dot(h1.astype(bf16), f2_w[...], preferred_element_type=f32)
        + f2_b[...], 0.0)
    logit = jnp.sum(h2 * f3_w[...], axis=-1, keepdims=True) + f3_b[...]
    out_ref[...] = jax.nn.sigmoid(logit)                     # (nb, 1)


# ----------------------------- parameters ------------------------------------
def make_positional_encoding(max_len, d_model):
    position = jnp.arange(max_len, dtype=jnp.float32)[:, None]
    div_term = jnp.exp(jnp.arange(0, d_model, 2, dtype=jnp.float32)
                       * (-math.log(10000.0) / d_model))
    pe = jnp.zeros((max_len, d_model), jnp.float32)
    pe = pe.at[:, 0::2].set(jnp.sin(position * div_term))
    pe = pe.at[:, 1::2].set(jnp.cos(position * div_term))
    return pe[None]  # (1, max_len, d_model)


def init_params(key):
    keys = iter(jax.random.split(key, 64))
    bf16 = jnp.bfloat16

    def nrm(shape, scale=0.02):
        return scale * jax.random.normal(next(keys), shape, jnp.float32)

    z = lambda *s: jnp.zeros(s, jnp.float32)
    p = {}
    # TODO(synk): pretrained efficientnet_b0 weights cannot be reproduced
    # in-script; this deterministic patchify+linear+ReLU is a stand-in backbone.
    p["bb_w"] = nrm((PATCH * PATCH * C_IN, FEAT_DIM)).astype(bf16)
    p["bb_b"] = z(1, FEAT_DIM)
    # spatial attention (two 1x1 convs); 2nd conv kept as an f32 row vector so
    # the (rows, 1) gate is a VPU reduce inside the fused kernel.
    p["sa1_w"] = nrm((FEAT_DIM, ATT_HID)).astype(bf16); p["sa1_b"] = z(1, ATT_HID)
    p["sa2_w"] = nrm((1, ATT_HID));                     p["sa2_b"] = z(1, 1)
    # feature reduction linear (feature_dim -> d_model)
    p["fr_w"] = nrm((FEAT_DIM, D_MODEL)).astype(bf16);  p["fr_b"] = z(1, D_MODEL)
    # positional encoding buffer
    p["pe"] = make_positional_encoding(MAX_LEN, D_MODEL)

    # transformer encoder layers, STACKED along a leading layer axis.
    # 1/sqrt(HEAD_DIM) is folded into the Q columns of wqkv at init time.
    qscale = 1.0 / math.sqrt(HEAD_DIM)
    wqkv = jnp.stack([nrm((D_MODEL, 3 * D_MODEL)) for _ in range(N_LAYERS)])
    wqkv = wqkv.at[:, :, :D_MODEL].multiply(qscale)
    p["layers"] = {
        "wqkv": wqkv.astype(bf16),
        "bqkv": jnp.zeros((N_LAYERS, 1, 3 * D_MODEL), jnp.float32),
        "wo": jnp.stack([nrm((D_MODEL, D_MODEL))
                         for _ in range(N_LAYERS)]).astype(bf16),
        "bo": jnp.zeros((N_LAYERS, 1, D_MODEL), jnp.float32),
        "n1_g": jnp.ones((N_LAYERS, 1, D_MODEL), jnp.float32),
        "n1_b": jnp.zeros((N_LAYERS, 1, D_MODEL), jnp.float32),
        "w1": jnp.stack([nrm((D_MODEL, D_FF))
                         for _ in range(N_LAYERS)]).astype(bf16),
        "b1": jnp.zeros((N_LAYERS, 1, D_FF), jnp.float32),
        "w2": jnp.stack([nrm((D_FF, D_MODEL))
                         for _ in range(N_LAYERS)]).astype(bf16),
        "b2": jnp.zeros((N_LAYERS, 1, D_MODEL), jnp.float32),
        "n2_g": jnp.ones((N_LAYERS, 1, D_MODEL), jnp.float32),
        "n2_b": jnp.zeros((N_LAYERS, 1, D_MODEL), jnp.float32),
    }
    # temporal attention
    p["ta1_w"] = nrm((D_MODEL, TEMP_HID)).astype(bf16); p["ta1_b"] = z(1, TEMP_HID)
    p["ta2_w"] = nrm((1, TEMP_HID));                    p["ta2_b"] = z(1, 1)
    # fusion MLP
    p["f1_w"] = nrm((D_MODEL, FUS1)).astype(bf16); p["f1_b"] = z(1, FUS1)
    p["f2_w"] = nrm((FUS1, FUS2)).astype(bf16);    p["f2_b"] = z(1, FUS2)
    p["f3_w"] = nrm((1, FUS2));                    p["f3_b"] = z(1, 1)
    return p


# ----------------------------- forward pass ----------------------------------
def deepfake_detector_forward(params, x):
    # x: (B, F, C, H, W), NCHW frames, float32 -- matches the PyTorch module.
    B, F, C, Hh, Ww = x.shape
    Hp, Wp = Hh // PATCH, Ww // PATCH
    hw = Hp * Wp

    # plain-JAX layout plumbing: patchify NCHW frames into matmul rows, ordered
    # FRAME-MAJOR (f, b, hp, wp) so attention / pooling blocks are contiguous.
    xp = x.transpose(1, 0, 2, 3, 4)                              # (F, B, C, H, W)
    xp = xp.reshape(F * B, C, Hp, PATCH, Wp, PATCH)
    xp = xp.transpose(0, 2, 4, 1, 3, 5)                          # (FB,Hp,Wp,C,P,P)
    patches = xp.reshape(F * B * hw, C * PATCH * PATCH)

    # positional encoding indexed by frame (x.size(1) in PyTorch), frame-major
    pe_rows = jnp.repeat(params["pe"][0, :F], B, axis=0)         # (F*B, D_MODEL)

    lp = params["layers"]
    args = (patches, pe_rows,
            params["bb_w"], params["bb_b"], params["sa1_w"], params["sa1_b"],
            params["sa2_w"], params["sa2_b"], params["fr_w"], params["fr_b"],
            lp["wqkv"], lp["bqkv"], lp["wo"], lp["bo"],
            lp["n1_g"], lp["n1_b"], lp["w1"], lp["b1"],
            lp["w2"], lp["b2"], lp["n2_g"], lp["n2_b"],
            params["ta1_w"], params["ta1_b"], params["ta2_w"], params["ta2_b"],
            params["f1_w"], params["f1_b"], params["f2_w"], params["f2_b"],
            params["f3_w"], params["f3_b"])

    kernel = functools.partial(_deepfake_kernel, F, B, hw, LN_EPS)
    out = pl.pallas_call(
        kernel,
        out_shape=jax.ShapeDtypeStruct((B, 1), jnp.float32),
        in_specs=[_VMEM] * len(args),
        out_specs=_VMEM,
        compiler_params=pltpu.CompilerParams(vmem_limit_bytes=32 * 1024 * 1024),
    )(*args)
    return out


# ----------------------------- main -------------------------------------------
if __name__ == "__main__":
    key = jax.random.PRNGKey(0)
    pkey, xkey = jax.random.split(key)
    params = init_params(pkey)
    x = jax.random.uniform(xkey, (BATCH, FRAMES, C_IN, H, W), jnp.float32)

    fwd = jax.jit(deepfake_detector_forward)
    out = jax.block_until_ready(fwd(params, x))

    assert out.shape == (BATCH, 1), out.shape
    assert bool(jnp.all((out >= 0.0) & (out <= 1.0)))  # sigmoid output
    print("KERNEL_OK")
</pallas_src>

<mosaic_0001>
module attributes {stable_mosaic.version = 11 : i64} {
  func.func @_deepfake_kernel(%arg0: memref<256x48xf32, #tpu.memory_space<vmem>>, %arg1: memref<16x32xf32, #tpu.memory_space<vmem>>, %arg2: memref<48x64xbf16, #tpu.memory_space<vmem>>, %arg3: memref<1x64xf32, #tpu.memory_space<vmem>>, %arg4: memref<64x32xbf16, #tpu.memory_space<vmem>>, %arg5: memref<1x32xf32, #tpu.memory_space<vmem>>, %arg6: memref<1x32xf32, #tpu.memory_space<vmem>>, %arg7: memref<1x1xf32, #tpu.memory_space<vmem>>, %arg8: memref<64x32xbf16, #tpu.memory_space<vmem>>, %arg9: memref<1x32xf32, #tpu.memory_space<vmem>>, %arg10: memref<2x32x96xbf16, #tpu.memory_space<vmem>>, %arg11: memref<2x1x96xf32, #tpu.memory_space<vmem>>, %arg12: memref<2x32x32xbf16, #tpu.memory_space<vmem>>, %arg13: memref<2x1x32xf32, #tpu.memory_space<vmem>>, %arg14: memref<2x1x32xf32, #tpu.memory_space<vmem>>, %arg15: memref<2x1x32xf32, #tpu.memory_space<vmem>>, %arg16: memref<2x32x64xbf16, #tpu.memory_space<vmem>>, %arg17: memref<2x1x64xf32, #tpu.memory_space<vmem>>, %arg18: memref<2x64x32xbf16, #tpu.memory_space<vmem>>, %arg19: memref<2x1x32xf32, #tpu.memory_space<vmem>>, %arg20: memref<2x1x32xf32, #tpu.memory_space<vmem>>, %arg21: memref<2x1x32xf32, #tpu.memory_space<vmem>>, %arg22: memref<32x16xbf16, #tpu.memory_space<vmem>>, %arg23: memref<1x16xf32, #tpu.memory_space<vmem>>, %arg24: memref<1x16xf32, #tpu.memory_space<vmem>>, %arg25: memref<1x1xf32, #tpu.memory_space<vmem>>, %arg26: memref<32x16xbf16, #tpu.memory_space<vmem>>, %arg27: memref<1x16xf32, #tpu.memory_space<vmem>>, %arg28: memref<16x8xbf16, #tpu.memory_space<vmem>>, %arg29: memref<1x8xf32, #tpu.memory_space<vmem>>, %arg30: memref<1x8xf32, #tpu.memory_space<vmem>>, %arg31: memref<1x1xf32, #tpu.memory_space<vmem>>, %arg32: memref<2x1xf32, #tpu.memory_space<vmem>>) attributes {dimension_semantics = [], scalar_prefetch = 0 : i64, scratch_operands = 0 : i64, tpu.core_type = #tpu.core_type<tc>} {
    %c0 = arith.constant 0 : index
    %c0_0 = arith.constant 0 : index
    %0 = vector.load %arg0[%c0, %c0_0] : memref<256x48xf32, #tpu.memory_space<vmem>>, vector<256x48xf32>
    %1 = arith.truncf %0 : vector<256x48xf32> to vector<256x48xbf16>
    %c0_1 = arith.constant 0 : index
    %c0_2 = arith.constant 0 : index
    %2 = vector.load %arg2[%c0_1, %c0_2] : memref<48x64xbf16, #tpu.memory_space<vmem>>, vector<48x64xbf16>
    %cst = arith.constant dense<0.000000e+00> : vector<256x64xf32>
    %3 = tpu.matmul %1, %2, %cst {dimension_numbers = #tpu.dot_dimension_numbers<[1], [0], [0], [1], [0, 0, 1, 1], [], []>} : vector<256x48xbf16>, vector<48x64xbf16>, vector<256x64xf32> -> vector<256x64xf32>
    %c0_3 = arith.constant 0 : index
    %c0_4 = arith.constant 0 : index
    %4 = vector.load %arg3[%c0_3, %c0_4] : memref<1x64xf32, #tpu.memory_space<vmem>>, vector<1x64xf32>
    %5 = vector.broadcast %4 : vector<1x64xf32> to vector<256x64xf32>
    %6 = arith.addf %3, %5 : vector<256x64xf32>
    %cst_5 = arith.constant 0.000000e+00 : f32
    %7 = vector.broadcast %cst_5 : f32 to vector<256x64xf32>
    %8 = arith.maximumf %6, %7 : vector<256x64xf32>
    %9 = arith.truncf %8 : vector<256x64xf32> to vector<256x64xbf16>
    %c0_6 = arith.constant 0 : index
    %c0_7 = arith.constant 0 : index
    %10 = vector.load %arg4[%c0_6, %c0_7] : memref<64x32xbf16, #tpu.memory_space<vmem>>, vector<64x32xbf16>
    %cst_8 = arith.constant dense<0.000000e+00> : vector<256x32xf32>
    %11 = tpu.matmul %9, %10, %cst_8 {dimension_numbers = #tpu.dot_dimension_numbers<[1], [0], [0], [1], [0, 0, 1, 1], [], []>} : vector<256x64xbf16>, vector<64x32xbf16>, vector<256x32xf32> -> vector<256x32xf32>
    %c0_9 = arith.constant 0 : index
    %c0_10 = arith.constant 0 : index
    %12 = vector.load %arg5[%c0_9, %c0_10] : memref<1x32xf32, #tpu.memory_space<vmem>>, vector<1x32xf32>
    %13 = vector.broadcast %12 : vector<1x32xf32> to vector<256x32xf32>
    %14 = arith.addf %11, %13 : vector<256x32xf32>
    %cst_11 = arith.constant 0.000000e+00 : f32
    %15 = vector.broadcast %cst_11 : f32 to vector<256x32xf32>
    %16 = arith.maximumf %14, %15 : vector<256x32xf32>
    %c0_12 = arith.constant 0 : index
    %c0_13 = arith.constant 0 : index
    %17 = vector.load %arg6[%c0_12, %c0_13] : memref<1x32xf32, #tpu.memory_space<vmem>>, vector<1x32xf32>
    %18 = vector.broadcast %17 : vector<1x32xf32> to vector<256x32xf32>
    %19 = arith.mulf %16, %18 : vector<256x32xf32>
    %cst_14 = arith.constant dense<0.000000e+00> : vector<256xf32>
    %20 = vector.multi_reduction <add>, %19, %cst_14 [1] : vector<256x32xf32> to vector<256xf32>
    %21 = vector.shape_cast %20 : vector<256xf32> to vector<256x1xf32>
    %c0_15 = arith.constant 0 : index
    %c0_16 = arith.constant 0 : index
    %22 = vector.load %arg7[%c0_15, %c0_16] : memref<1x1xf32, #tpu.memory_space<vmem>>, vector<1x1xf32>
    %23 = vector.broadcast %22 : vector<1x1xf32> to vector<256x1xf32>
    %24 = arith.addf %21, %23 : vector<256x1xf32>
    %25 = arith.negf %24 : vector<256x1xf32>
    %26 = math.exp %25 : vector<256x1xf32>
    %cst_17 = arith.constant 1.000000e+00 : f32
    %27 = vector.broadcast %cst_17 : f32 to vector<256x1xf32>
    %28 = arith.addf %27, %26 : vector<256x1xf32>
    %29 = arith.divf %27, %28 : vector<256x1xf32>
    %30 = vector.broadcast %29 : vector<256x1xf32> to vector<256x64xf32>
    %31 = arith.mulf %8, %30 : vector<256x64xf32>
    %32 = vector.shape_cast %31 : vector<256x64xf32> to vector<16x16x64xf32>
    %cst_18 = arith.constant dense<0.000000e+00> : vector<16x64xf32>
    %33 = vector.multi_reduction <add>, %32, %cst_18 [1] : vector<16x16x64xf32> to vector<16x64xf32>
    %cst_19 = arith.constant 1.600000e+01 : f32
    %34 = vector.broadcast %cst_19 : f32 to vector<16x64xf32>
    %35 = arith.divf %33, %34 : vector<16x64xf32>
    %36 = arith.truncf %35 : vector<16x64xf32> to vector<16x64xbf16>
    %c0_20 = arith.constant 0 : index
    %c0_21 = arith.constant 0 : index
    %37 = vector.load %arg8[%c0_20, %c0_21] : memref<64x32xbf16, #tpu.memory_space<vmem>>, vector<64x32xbf16>
    %cst_22 = arith.constant dense<0.000000e+00> : vector<16x32xf32>
    %38 = tpu.matmul %36, %37, %cst_22 {dimension_numbers = #tpu.dot_dimension_numbers<[1], [0], [0], [1], [0, 0, 1, 1], [], []>} : vector<16x64xbf16>, vector<64x32xbf16>, vector<16x32xf32> -> vector<16x32xf32>
    %c0_23 = arith.constant 0 : index
    %c0_24 = arith.constant 0 : index
    %39 = vector.load %arg9[%c0_23, %c0_24] : memref<1x32xf32, #tpu.memory_space<vmem>>, vector<1x32xf32>
    %40 = vector.broadcast %39 : vector<1x32xf32> to vector<16x32xf32>
    %41 = arith.addf %38, %40 : vector<16x32xf32>
    %c0_25 = arith.constant 0 : index
    %c0_26 = arith.constant 0 : index
    %42 = vector.load %arg1[%c0_25, %c0_26] : memref<16x32xf32, #tpu.memory_space<vmem>>, vector<16x32xf32>
    %43 = arith.addf %41, %42 : vector<16x32xf32>
    %44 = arith.truncf %43 : vector<16x32xf32> to vector<16x32xbf16>
    %c0_27 = arith.constant 0 : index
    %c0_28 = arith.constant 0 : index
    %c0_29 = arith.constant 0 : index
    %45 = vector.load %arg10[%c0_27, %c0_28, %c0_29] : memref<2x32x96xbf16, #tpu.memory_space<vmem>>, vector<1x32x96xbf16>
    %46 = vector.shape_cast %45 : vector<1x32x96xbf16> to vector<32x96xbf16>
    %cst_30 = arith.constant dense<0.000000e+00> : vector<16x96xf32>
    %47 = tpu.matmul %44, %46, %cst_30 {dimension_numbers = #tpu.dot_dimension_numbers<[1], [0], [0], [1], [0, 0, 1, 1], [], []>} : vector<16x32xbf16>, vector<32x96xbf16>, vector<16x96xf32> -> vector<16x96xf32>
    %c0_31 = arith.constant 0 : index
    %c0_32 = arith.constant 0 : index
    %c0_33 = arith.constant 0 : index
    %48 = vector.load %arg11[%c0_31, %c0_32, %c0_33] : memref<2x1x96xf32, #tpu.memory_space<vmem>>, vector<1x1x96xf32>
    %49 = vector.shape_cast %48 : vector<1x1x96xf32> to vector<1x96xf32>
    %50 = vector.broadcast %49 : vector<1x96xf32> to vector<16x96xf32>
    %51 = arith.addf %47, %50 : vector<16x96xf32>
    %52 = arith.truncf %51 : vector<16x96xf32> to vector<16x96xbf16>
    %53 = vector.extract_strided_slice %52 {offsets = [0, 0], sizes = [16, 8], strides = [1, 1]} : vector<16x96xbf16> to vector<16x8xbf16>
    %54 = vector.shape_cast %53 : vector<16x8xbf16> to vector<8x2x8xbf16>
    %55 = vector.extract_strided_slice %52 {offsets = [0, 32], sizes = [16, 8], strides = [1, 1]} : vector<16x96xbf16> to vector<16x8xbf16>
    %56 = vector.shape_cast %55 : vector<16x8xbf16> to vector<8x2x8xbf16>
    %57 = vector.extract_strided_slice %52 {offsets = [0, 64], sizes = [16, 8], strides = [1, 1]} : vector<16x96xbf16> to vector<16x8xbf16>
    %58 = vector.shape_cast %57 : vector<16x8xbf16> to vector<8x2x8xbf16>
    "tpu.trace_start"() <{level = 10 : i32, message = "fbh,fch->fbc"}> : () -> ()
    %cst_34 = arith.constant dense<0.000000e+00> : vector<8x2x2xf32>
    %59 = tpu.matmul %54, %56, %cst_34 {dimension_numbers = #tpu.dot_dimension_numbers<[2], [2], [1], [1], [0, 0, 0, 1, 1, 1], [0], [0]>} : vector<8x2x8xbf16>, vector<8x2x8xbf16>, vector<8x2x2xf32> -> vector<8x2x2xf32>
    "tpu.trace_stop"() : () -> ()
    %cst_35 = arith.constant dense<0xFF800000> : vector<8x2xf32>
    %60 = vector.multi_reduction <maximumf>, %59, %cst_35 [2] : vector<8x2x2xf32> to vector<8x2xf32>
    %61 = vector.shape_cast %60 : vector<8x2xf32> to vector<8x2x1xf32>
    %62 = vector.broadcast %61 : vector<8x2x1xf32> to vector<8x2x2xf32>
    %63 = arith.subf %59, %62 : vector<8x2x2xf32>
    %64 = math.exp %63 : vector<8x2x2xf32>
    %cst_36 = arith.constant dense<0.000000e+00> : vector<8x2xf32>
    %65 = vector.multi_reduction <add>, %64, %cst_36 [2] : vector<8x2x2xf32> to vector<8x2xf32>
    %66 = vector.shape_cast %65 : vector<8x2xf32> to vector<8x2x1xf32>
    %67 = vector.broadcast %66 : vector<8x2x1xf32> to vector<8x2x2xf32>
    %68 = arith.divf %64, %67 : vector<8x2x2xf32>
    %69 = arith.truncf %68 : vector<8x2x2xf32> to vector<8x2x2xbf16>
    "tpu.trace_start"() <{level = 10 : i32, message = "fbc,fch->fbh"}> : () -> ()
    %cst_37 = arith.constant dense<0.000000e+00> : vector<8x2x8xf32>
    %70 = tpu.matmul %69, %58, %cst_37 {dimension_numbers = #tpu.dot_dimension_numbers<[2], [1], [1], [2], [0, 0, 0, 1, 1, 2], [0], [0]>} : vector<8x2x2xbf16>, vector<8x2x8xbf16>, vector<8x2x8xf32> -> vector<8x2x8xf32>
    "tpu.trace_stop"() : () -> ()
    %71 = vector.shape_cast %70 : vector<8x2x8xf32> to vector<16x8xf32>
    %72 = vector.extract_strided_slice %52 {offsets = [0, 8], sizes = [16, 8], strides = [1, 1]} : vector<16x96xbf16> to vector<16x8xbf16>
    %73 = vector.shape_cast %72 : vector<16x8xbf16> to vector<8x2x8xbf16>
    %74 = vector.extract_strided_slice %52 {offsets = [0, 40], sizes = [16, 8], strides = [1, 1]} : vector<16x96xbf16> to vector<16x8xbf16>
    %75 = vector.shape_cast %74 : vector<16x8xbf16> to vector<8x2x8xbf16>
    %76 = vector.extract_strided_slice %52 {offsets = [0, 72], sizes = [16, 8], strides = [1, 1]} : vector<16x96xbf16> to vector<16x8xbf16>
    %77 = vector.shape_cast %76 : vector<16x8xbf16> to vector<8x2x8xbf16>
    "tpu.trace_start"() <{level = 10 : i32, message = "fbh,fch->fbc"}> : () -> ()
    %cst_38 = arith.constant dense<0.000000e+00> : vector<8x2x2xf32>
    %78 = tpu.matmul %73, %75, %cst_38 {dimension_numbers = #tpu.dot_dimension_numbers<[2], [2], [1], [1], [0, 0, 0, 1, 1, 1], [0], [0]>} : vector<8x2x8xbf16>, vector<8x2x8xbf16>, vector<8x2x2xf32> -> vector<8x2x2xf32>
    "tpu.trace_stop"() : () -> ()
    %cst_39 = arith.constant dense<0xFF800000> : vector<8x2xf32>
    %79 = vector.multi_reduction <maximumf>, %78, %cst_39 [2] : vector<8x2x2xf32> to vector<8x2xf32>
    %80 = vector.shape_cast %79 : vector<8x2xf32> to vector<8x2x1xf32>
    %81 = vector.broadcast %80 : vector<8x2x1xf32> to vector<8x2x2xf32>
    %82 = arith.subf %78, %81 : vector<8x2x2xf32>
    %83 = math.exp %82 : vector<8x2x2xf32>
    %cst_40 = arith.constant dense<0.000000e+00> : vector<8x2xf32>
    %84 = vector.multi_reduction <add>, %83, %cst_40 [2] : vector<8x2x2xf32> to vector<8x2xf32>
    %85 = vector.shape_cast %84 : vector<8x2xf32> to vector<8x2x1xf32>
    %86 = vector.broadcast %85 : vector<8x2x1xf32> to vector<8x2x2xf32>
    %87 = arith.divf %83, %86 : vector<8x2x2xf32>
    %88 = arith.truncf %87 : vector<8x2x2xf32> to vector<8x2x2xbf16>
    "tpu.trace_start"() <{level = 10 : i32, message = "fbc,fch->fbh"}> : () -> ()
    %cst_41 = arith.constant dense<0.000000e+00> : vector<8x2x8xf32>
    %89 = tpu.matmul %88, %77, %cst_41 {dimension_numbers = #tpu.dot_dimension_numbers<[2], [1], [1], [2], [0, 0, 0, 1, 1, 2], [0], [0]>} : vector<8x2x2xbf16>, vector<8x2x8xbf16>, vector<8x2x8xf32> -> vector<8x2x8xf32>
    "tpu.trace_stop"() : () -> ()
    %90 = vector.shape_cast %89 : vector<8x2x8xf32> to vector<16x8xf32>
    %91 = vector.extract_strided_slice %52 {offsets = [0, 16], sizes = [16, 8], strides = [1, 1]} : vector<16x96xbf16> to vector<16x8xbf16>
    %92 = vector.shape_cast %91 : vector<16x8xbf16> to vector<8x2x8xbf16>
    %93 = vector.extract_strided_slice %52 {offsets = [0, 48], sizes = [16, 8], strides = [1, 1]} : vector<16x96xbf16> to vector<16x8xbf16>
    %94 = vector.shape_cast %93 : vector<16x8xbf16> to vector<8x2x8xbf16>
    %95 = vector.extract_strided_slice %52 {offsets = [0, 80], sizes = [16, 8], strides = [1, 1]} : vector<16x96xbf16> to vector<16x8xbf16>
    %96 = vector.shape_cast %95 : vector<16x8xbf16> to vector<8x2x8xbf16>
    "tpu.trace_start"() <{level = 10 : i32, message = "fbh,fch->fbc"}> : () -> ()
    %cst_42 = arith.constant dense<0.000000e+00> : vector<8x2x2xf32>
    %97 = tpu.matmul %92, %94, %cst_42 {dimension_numbers = #tpu.dot_dimension_numbers<[2], [2], [1], [1], [0, 0, 0, 1, 1, 1], [0], [0]>} : vector<8x2x8xbf16>, vector<8x2x8xbf16>, vector<8x2x2xf32> -> vector<8x2x2xf32>
    "tpu.trace_stop"() : () -> ()
    %cst_43 = arith.constant dense<0xFF800000> : vector<8x2xf32>
    %98 = vector.multi_reduction <maximumf>, %97, %cst_43 [2] : vector<8x2x2xf32> to vector<8x2xf32>
    %99 = vector.shape_cast %98 : vector<8x2xf32> to vector<8x2x1xf32>
    %100 = vector.broadcast %99 : vector<8x2x1xf32> to vector<8x2x2xf32>
    %101 = arith.subf %97, %100 : vector<8x2x2xf32>
    %102 = math.exp %101 : vector<8x2x2xf32>
    %cst_44 = arith.constant dense<0.000000e+00> : vector<8x2xf32>
    %103 = vector.multi_reduction <add>, %102, %cst_44 [2] : vector<8x2x2xf32> to vector<8x2xf32>
    %104 = vector.shape_cast %103 : vector<8x2xf32> to vector<8x2x1xf32>
    %105 = vector.broadcast %104 : vector<8x2x1xf32> to vector<8x2x2xf32>
    %106 = arith.divf %102, %105 : vector<8x2x2xf32>
    %107 = arith.truncf %106 : vector<8x2x2xf32> to vector<8x2x2xbf16>
    "tpu.trace_start"() <{level = 10 : i32, message = "fbc,fch->fbh"}> : () -> ()
    %cst_45 = arith.constant dense<0.000000e+00> : vector<8x2x8xf32>
    %108 = tpu.matmul %107, %96, %cst_45 {dimension_numbers = #tpu.dot_dimension_numbers<[2], [1], [1], [2], [0, 0, 0, 1, 1, 2], [0], [0]>} : vector<8x2x2xbf16>, vector<8x2x8xbf16>, vector<8x2x8xf32> -> vector<8x2x8xf32>
    "tpu.trace_stop"() : () -> ()
    %109 = vector.shape_cast %108 : vector<8x2x8xf32> to vector<16x8xf32>
    %110 = vector.extract_strided_slice %52 {offsets = [0, 24], sizes = [16, 8], strides = [1, 1]} : vector<16x96xbf16> to vector<16x8xbf16>
    %111 = vector.shape_cast %110 : vector<16x8xbf16> to vector<8x2x8xbf16>
    %112 = vector.extract_strided_slice %52 {offsets = [0, 56], sizes = [16, 8], strides = [1, 1]} : vector<16x96xbf16> to vector<16x8xbf16>
    %113 = vector.shape_cast %112 : vector<16x8xbf16> to vector<8x2x8xbf16>
    %114 = vector.extract_strided_slice %52 {offsets = [0, 88], sizes = [16, 8], strides = [1, 1]} : vector<16x96xbf16> to vector<16x8xbf16>
    %115 = vector.shape_cast %114 : vector<16x8xbf16> to vector<8x2x8xbf16>
    "tpu.trace_start"() <{level = 10 : i32, message = "fbh,fch->fbc"}> : () -> ()
    %cst_46 = arith.constant dense<0.000000e+00> : vector<8x2x2xf32>
    %116 = tpu.matmul %111, %113, %cst_46 {dimension_numbers = #tpu.dot_dimension_numbers<[2], [2], [1], [1], [0, 0, 0, 1, 1, 1], [0], [0]>} : vector<8x2x8xbf16>, vector<8x2x8xbf16>, vector<8x2x2xf32> -> vector<8x2x2xf32>
    "tpu.trace_stop"() : () -> ()
    %cst_47 = arith.constant dense<0xFF800000> : vector<8x2xf32>
    %117 = vector.multi_reduction <maximumf>, %116, %cst_47 [2] : vector<8x2x2xf32> to vector<8x2xf32>
    %118 = vector.shape_cast %117 : vector<8x2xf32> to vector<8x2x1xf32>
    %119 = vector.broadcast %118 : vector<8x2x1xf32> to vector<8x2x2xf32>
    %120 = arith.subf %116, %119 : vector<8x2x2xf32>
    %121 = math.exp %120 : vector<8x2x2xf32>
    %cst_48 = arith.constant dense<0.000000e+00> : vector<8x2xf32>
    %122 = vector.multi_reduction <add>, %121, %cst_48 [2] : vector<8x2x2xf32> to vector<8x2xf32>
    %123 = vector.shape_cast %122 : vector<8x2xf32> to vector<8x2x1xf32>
    %124 = vector.broadcast %123 : vector<8x2x1xf32> to vector<8x2x2xf32>
    %125 = arith.divf %121, %124 : vector<8x2x2xf32>
    %126 = arith.truncf %125 : vector<8x2x2xf32> to vector<8x2x2xbf16>
    "tpu.trace_start"() <{level = 10 : i32, message = "fbc,fch->fbh"}> : () -> ()
    %cst_49 = arith.constant dense<0.000000e+00> : vector<8x2x8xf32>
    %127 = tpu.matmul %126, %115, %cst_49 {dimension_numbers = #tpu.dot_dimension_numbers<[2], [1], [1], [2], [0, 0, 0, 1, 1, 2], [0], [0]>} : vector<8x2x2xbf16>, vector<8x2x8xbf16>, vector<8x2x8xf32> -> vector<8x2x8xf32>
    "tpu.trace_stop"() : () -> ()
    %128 = vector.shape_cast %127 : vector<8x2x8xf32> to vector<16x8xf32>
    %129 = tpu.concatenate %71, %90, %109, %128 in 1 : vector<16x8xf32>, vector<16x8xf32>, vector<16x8xf32>, vector<16x8xf32> -> vector<16x32xf32>
    %130 = arith.truncf %129 : vector<16x32xf32> to vector<16x32xbf16>
    %c0_50 = arith.constant 0 : index
    %c0_51 = arith.constant 0 : index
    %c0_52 = arith.constant 0 : index
    %131 = vector.load %arg12[%c0_50, %c0_51, %c0_52] : memref<2x32x32xbf16, #tpu.memory_space<vmem>>, vector<1x32x32xbf16>
    %132 = vector.shape_cast %131 : vector<1x32x32xbf16> to vector<32x32xbf16>
    %cst_53 = arith.constant dense<0.000000e+00> : vector<16x32xf32>
    %133 = tpu.matmul %130, %132, %cst_53 {dimension_numbers = #tpu.dot_dimension_numbers<[1], [0], [0], [1], [0, 0, 1, 1], [], []>} : vector<16x32xbf16>, vector<32x32xbf16>, vector<16x32xf32> -> vector<16x32xf32>
    %c0_54 = arith.constant 0 : index
    %c0_55 = arith.constant 0 : index
    %c0_56 = arith.constant 0 : index
    %134 = vector.load %arg13[%c0_54, %c0_55, %c0_56] : memref<2x1x32xf32, #tpu.memory_space<vmem>>, vector<1x1x32xf32>
    %135 = vector.shape_cast %134 : vector<1x1x32xf32> to vector<1x32xf32>
    %136 = vector.broadcast %135 : vector<1x32xf32> to vector<16x32xf32>
    %137 = arith.addf %133, %136 : vector<16x32xf32>
    %138 = arith.addf %43, %137 : vector<16x32xf32>
    %cst_57 = arith.constant dense<0.000000e+00> : vector<16xf32>
    %139 = vector.multi_reduction <add>, %138, %cst_57 [1] : vector<16x32xf32> to vector<16xf32>
    %140 = vector.shape_cast %139 : vector<16xf32> to vector<16x1xf32>
    %cst_58 = arith.constant 3.200000e+01 : f32
    %141 = vector.broadcast %cst_58 : f32 to vector<16x1xf32>
    %142 = arith.divf %140, %141 : vector<16x1xf32>
    %143 = vector.broadcast %142 : vector<16x1xf32> to vector<16x32xf32>
    %144 = arith.subf %138, %143 : vector<16x32xf32>
    %145 = arith.mulf %144, %144 : vector<16x32xf32>
    %cst_59 = arith.constant dense<0.000000e+00> : vector<16xf32>
    %146 = vector.multi_reduction <add>, %145, %cst_59 [1] : vector<16x32xf32> to vector<16xf32>
    %147 = vector.shape_cast %146 : vector<16xf32> to vector<16x1xf32>
    %cst_60 = arith.constant 3.200000e+01 : f32
    %148 = vector.broadcast %cst_60 : f32 to vector<16x1xf32>
    %149 = arith.divf %147, %148 : vector<16x1xf32>
    %150 = vector.broadcast %142 : vector<16x1xf32> to vector<16x32xf32>
    %151 = arith.subf %138, %150 : vector<16x32xf32>
    %cst_61 = arith.constant 9.99999974E-6 : f32
    %152 = vector.broadcast %cst_61 : f32 to vector<16x1xf32>
    %153 = arith.addf %149, %152 : vector<16x1xf32>
    %154 = math.rsqrt %153 : vector<16x1xf32>
    %155 = vector.broadcast %154 : vector<16x1xf32> to vector<16x32xf32>
    %156 = arith.mulf %151, %155 : vector<16x32xf32>
    %c0_62 = arith.constant 0 : index
    %c0_63 = arith.constant 0 : index
    %c0_64 = arith.constant 0 : index
    %157 = vector.load %arg14[%c0_62, %c0_63, %c0_64] : memref<2x1x32xf32, #tpu.memory_space<vmem>>, vector<1x1x32xf32>
    %158 = vector.shape_cast %157 : vector<1x1x32xf32> to vector<1x32xf32>
    %159 = vector.broadcast %158 : vector<1x32xf32> to vector<16x32xf32>
    %160 = arith.mulf %156, %159 : vector<16x32xf32>
    %c0_65 = arith.constant 0 : index
    %c0_66 = arith.constant 0 : index
    %c0_67 = arith.constant 0 : index
    %161 = vector.load %arg15[%c0_65, %c0_66, %c0_67] : memref<2x1x32xf32, #tpu.memory_space<vmem>>, vector<1x1x32xf32>
    %162 = vector.shape_cast %161 : vector<1x1x32xf32> to vector<1x32xf32>
    %163 = vector.broadcast %162 : vector<1x32xf32> to vector<16x32xf32>
    %164 = arith.addf %160, %163 : vector<16x32xf32>
    %165 = arith.truncf %164 : vector<16x32xf32> to vector<16x32xbf16>
    %c0_68 = arith.constant 0 : index
    %c0_69 = arith.constant 0 : index
    %c0_70 = arith.constant 0 : index
    %166 = vector.load %arg16[%c0_68, %c0_69, %c0_70] : memref<2x32x64xbf16, #tpu.memory_space<vmem>>, vector<1x32x64xbf16>
    %167 = vector.shape_cast %166 : vector<1x32x64xbf16> to vector<32x64xbf16>
    %cst_71 = arith.constant dense<0.000000e+00> : vector<16x64xf32>
    %168 = tpu.matmul %165, %167, %cst_71 {dimension_numbers = #tpu.dot_dimension_numbers<[1], [0], [0], [1], [0, 0, 1, 1], [], []>} : vector<16x32xbf16>, vector<32x64xbf16>, vector<16x64xf32> -> vector<16x64xf32>
    %c0_72 = arith.constant 0 : index
    %c0_73 = arith.constant 0 : index
    %c0_74 = arith.constant 0 : index
    %169 = vector.load %arg17[%c0_72, %c0_73, %c0_74] : memref<2x1x64xf32, #tpu.memory_space<vmem>>, vector<1x1x64xf32>
    %170 = vector.shape_cast %169 : vector<1x1x64xf32> to vector<1x64xf32>
    %171 = vector.broadcast %170 : vector<1x64xf32> to vector<16x64xf32>
    %172 = arith.addf %168, %171 : vector<16x64xf32>
    %cst_75 = arith.constant 0.000000e+00 : f32
    %173 = vector.broadcast %cst_75 : f32 to vector<16x64xf32>
    %174 = arith.maximumf %172, %173 : vector<16x64xf32>
    %175 = arith.truncf %174 : vector<16x64xf32> to vector<16x64xbf16>
    %c0_76 = arith.constant 0 : index
    %c0_77 = arith.constant 0 : index
    %c0_78 = arith.constant 0 : index
    %176 = vector.load %arg18[%c0_76, %c0_77, %c0_78] : memref<2x64x32xbf16, #tpu.memory_space<vmem>>, vector<1x64x32xbf16>
    %177 = vector.shape_cast %176 : vector<1x64x32xbf16> to vector<64x32xbf16>
    %cst_79 = arith.constant dense<0.000000e+00> : vector<16x32xf32>
    %178 = tpu.matmul %175, %177, %cst_79 {dimension_numbers = #tpu.dot_dimension_numbers<[1], [0], [0], [1], [0, 0, 1, 1], [], []>} : vector<16x64xbf16>, vector<64x32xbf16>, vector<16x32xf32> -> vector<16x32xf32>
    %c0_80 = arith.constant 0 : index
    %c0_81 = arith.constant 0 : index
    %c0_82 = arith.constant 0 : index
    %179 = vector.load %arg19[%c0_80, %c0_81, %c0_82] : memref<2x1x32xf32, #tpu.memory_space<vmem>>, vector<1x1x32xf32>
    %180 = vector.shape_cast %179 : vector<1x1x32xf32> to vector<1x32xf32>
    %181 = vector.broadcast %180 : vector<1x32xf32> to vector<16x32xf32>
    %182 = arith.addf %178, %181 : vector<16x32xf32>
    %183 = arith.addf %164, %182 : vector<16x32xf32>
    %cst_83 = arith.constant dense<0.000000e+00> : vector<16xf32>
    %184 = vector.multi_reduction <add>, %183, %cst_83 [1] : vector<16x32xf32> to vector<16xf32>
    %185 = vector.shape_cast %184 : vector<16xf32> to vector<16x1xf32>
    %cst_84 = arith.constant 3.200000e+01 : f32
    %186 = vector.broadcast %cst_84 : f32 to vector<16x1xf32>
    %187 = arith.divf %185, %186 : vector<16x1xf32>
    %188 = vector.broadcast %187 : vector<16x1xf32> to vector<16x32xf32>
    %189 = arith.subf %183, %188 : vector<16x32xf32>
    %190 = arith.mulf %189, %189 : vector<16x32xf32>
    %cst_85 = arith.constant dense<0.000000e+00> : vector<16xf32>
    %191 = vector.multi_reduction <add>, %190, %cst_85 [1] : vector<16x32xf32> to vector<16xf32>
    %192 = vector.shape_cast %191 : vector<16xf32> to vector<16x1xf32>
    %cst_86 = arith.constant 3.200000e+01 : f32
    %193 = vector.broadcast %cst_86 : f32 to vector<16x1xf32>
    %194 = arith.divf %192, %193 : vector<16x1xf32>
    %195 = vector.broadcast %187 : vector<16x1xf32> to vector<16x32xf32>
    %196 = arith.subf %183, %195 : vector<16x32xf32>
    %cst_87 = arith.constant 9.99999974E-6 : f32
    %197 = vector.broadcast %cst_87 : f32 to vector<16x1xf32>
    %198 = arith.addf %194, %197 : vector<16x1xf32>
    %199 = math.rsqrt %198 : vector<16x1xf32>
    %200 = vector.broadcast %199 : vector<16x1xf32> to vector<16x32xf32>
    %201 = arith.mulf %196, %200 : vector<16x32xf32>
    %c0_88 = arith.constant 0 : index
    %c0_89 = arith.constant 0 : index
    %c0_90 = arith.constant 0 : index
    %202 = vector.load %arg20[%c0_88, %c0_89, %c0_90] : memref<2x1x32xf32, #tpu.memory_space<vmem>>, vector<1x1x32xf32>
    %203 = vector.shape_cast %202 : vector<1x1x32xf32> to vector<1x32xf32>
    %204 = vector.broadcast %203 : vector<1x32xf32> to vector<16x32xf32>
    %205 = arith.mulf %201, %204 : vector<16x32xf32>
    %c0_91 = arith.constant 0 : index
    %c0_92 = arith.constant 0 : index
    %c0_93 = arith.constant 0 : index
    %206 = vector.load %arg21[%c0_91, %c0_92, %c0_93] : memref<2x1x32xf32, #tpu.memory_space<vmem>>, vector<1x1x32xf32>
    %207 = vector.shape_cast %206 : vector<1x1x32xf32> to vector<1x32xf32>
    %208 = vector.broadcast %207 : vector<1x32xf32> to vector<16x32xf32>
    %209 = arith.addf %205, %208 : vector<16x32xf32>
    %210 = arith.truncf %209 : vector<16x32xf32> to vector<16x32xbf16>
    %c1 = arith.constant 1 : index
    %c0_94 = arith.constant 0 : index
    %c0_95 = arith.constant 0 : index
    %211 = vector.load %arg10[%c1, %c0_94, %c0_95] : memref<2x32x96xbf16, #tpu.memory_space<vmem>>, vector<1x32x96xbf16>
    %212 = vector.shape_cast %211 : vector<1x32x96xbf16> to vector<32x96xbf16>
    %cst_96 = arith.constant dense<0.000000e+00> : vector<16x96xf32>
    %213 = tpu.matmul %210, %212, %cst_96 {dimension_numbers = #tpu.dot_dimension_numbers<[1], [0], [0], [1], [0, 0, 1, 1], [], []>} : vector<16x32xbf16>, vector<32x96xbf16>, vector<16x96xf32> -> vector<16x96xf32>
    %c1_97 = arith.constant 1 : index
    %c0_98 = arith.constant 0 : index
    %c0_99 = arith.constant 0 : index
    %214 = vector.load %arg11[%c1_97, %c0_98, %c0_99] : memref<2x1x96xf32, #tpu.memory_space<vmem>>, vector<1x1x96xf32>
    %215 = vector.shape_cast %214 : vector<1x1x96xf32> to vector<1x96xf32>
    %216 = vector.broadcast %215 : vector<1x96xf32> to vector<16x96xf32>
    %217 = arith.addf %213, %216 : vector<16x96xf32>
    %218 = arith.truncf %217 : vector<16x96xf32> to vector<16x96xbf16>
    %219 = vector.extract_strided_slice %218 {offsets = [0, 0], sizes = [16, 8], strides = [1, 1]} : vector<16x96xbf16> to vector<16x8xbf16>
    %220 = vector.shape_cast %219 : vector<16x8xbf16> to vector<8x2x8xbf16>
    %221 = vector.extract_strided_slice %218 {offsets = [0, 32], sizes = [16, 8], strides = [1, 1]} : vector<16x96xbf16> to vector<16x8xbf16>
    %222 = vector.shape_cast %221 : vector<16x8xbf16> to vector<8x2x8xbf16>
    %223 = vector.extract_strided_slice %218 {offsets = [0, 64], sizes = [16, 8], strides = [1, 1]} : vector<16x96xbf16> to vector<16x8xbf16>
    %224 = vector.shape_cast %223 : vector<16x8xbf16> to vector<8x2x8xbf16>
    "tpu.trace_start"() <{level = 10 : i32, message = "fbh,fch->fbc"}> : () -> ()
    %cst_100 = arith.constant dense<0.000000e+00> : vector<8x2x2xf32>
    %225 = tpu.matmul %220, %222, %cst_100 {dimension_numbers = #tpu.dot_dimension_numbers<[2], [2], [1], [1], [0, 0, 0, 1, 1, 1], [0], [0]>} : vector<8x2x8xbf16>, vector<8x2x8xbf16>, vector<8x2x2xf32> -> vector<8x2x2xf32>
    "tpu.trace_stop"() : () -> ()
    %cst_101 = arith.constant dense<0xFF800000> : vector<8x2xf32>
    %226 = vector.multi_reduction <maximumf>, %225, %cst_101 [2] : vector<8x2x2xf32> to vector<8x2xf32>
    %227 = vector.shape_cast %226 : vector<8x2xf32> to vector<8x2x1xf32>
    %228 = vector.broadcast %227 : vector<8x2x1xf32> to vector<8x2x2xf32>
    %229 = arith.subf %225, %228 : vector<8x2x2xf32>
    %230 = math.exp %229 : vector<8x2x2xf32>
    %cst_102 = arith.constant dense<0.000000e+00> : vector<8x2xf32>
    %231 = vector.multi_reduction <add>, %230, %cst_102 [2] : vector<8x2x2xf32> to vector<8x2xf32>
    %232 = vector.shape_cast %231 : vector<8x2xf32> to vector<8x2x1xf32>
    %233 = vector.broadcast %232 : vector<8x2x1xf32> to vector<8x2x2xf32>
    %234 = arith.divf %230, %233 : vector<8x2x2xf32>
    %235 = arith.truncf %234 : vector<8x2x2xf32> to vector<8x2x2xbf16>
    "tpu.trace_start"() <{level = 10 : i32, message = "fbc,fch->fbh"}> : () -> ()
    %cst_103 = arith.constant dense<0.000000e+00> : vector<8x2x8xf32>
    %236 = tpu.matmul %235, %224, %cst_103 {dimension_numbers = #tpu.dot_dimension_numbers<[2], [1], [1], [2], [0, 0, 0, 1, 1, 2], [0], [0]>} : vector<8x2x2xbf16>, vector<8x2x8xbf16>, vector<8x2x8xf32> -> vector<8x2x8xf32>
    "tpu.trace_stop"() : () -> ()
    %237 = vector.shape_cast %236 : vector<8x2x8xf32> to vector<16x8xf32>
    %238 = vector.extract_strided_slice %218 {offsets = [0, 8], sizes = [16, 8], strides = [1, 1]} : vector<16x96xbf16> to vector<16x8xbf16>
    %239 = vector.shape_cast %238 : vector<16x8xbf16> to vector<8x2x8xbf16>
    %240 = vector.extract_strided_slice %218 {offsets = [0, 40], sizes = [16, 8], strides = [1, 1]} : vector<16x96xbf16> to vector<16x8xbf16>
    %241 = vector.shape_cast %240 : vector<16x8xbf16> to vector<8x2x8xbf16>
    %242 = vector.extract_strided_slice %218 {offsets = [0, 72], sizes = [16, 8], strides = [1, 1]} : vector<16x96xbf16> to vector<16x8xbf16>
    %243 = vector.shape_cast %242 : vector<16x8xbf16> to vector<8x2x8xbf16>
    "tpu.trace_start"() <{level = 10 : i32, message = "fbh,fch->fbc"}> : () -> ()
    %cst_104 = arith.constant dense<0.000000e+00> : vector<8x2x2xf32>
    %244 = tpu.matmul %239, %241, %cst_104 {dimension_numbers = #tpu.dot_dimension_numbers<[2], [2], [1], [1], [0, 0, 0, 1, 1, 1], [0], [0]>} : vector<8x2x8xbf16>, vector<8x2x8xbf16>, vector<8x2x2xf32> -> vector<8x2x2xf32>
    "tpu.trace_stop"() : () -> ()
    %cst_105 = arith.constant dense<0xFF800000> : vector<8x2xf32>
    %245 = vector.multi_reduction <maximumf>, %244, %cst_105 [2] : vector<8x2x2xf32> to vector<8x2xf32>
    %246 = vector.shape_cast %245 : vector<8x2xf32> to vector<8x2x1xf32>
    %247 = vector.broadcast %246 : vector<8x2x1xf32> to vector<8x2x2xf32>
    %248 = arith.subf %244, %247 : vector<8x2x2xf32>
    %249 = math.exp %248 : vector<8x2x2xf32>
    %cst_106 = arith.constant dense<0.000000e+00> : vector<8x2xf32>
    %250 = vector.multi_reduction <add>, %249, %cst_106 [2] : vector<8x2x2xf32> to vector<8x2xf32>
    %251 = vector.shape_cast %250 : vector<8x2xf32> to vector<8x2x1xf32>
    %252 = vector.broadcast %251 : vector<8x2x1xf32> to vector<8x2x2xf32>
    %253 = arith.divf %249, %252 : vector<8x2x2xf32>
    %254 = arith.truncf %253 : vector<8x2x2xf32> to vector<8x2x2xbf16>
    "tpu.trace_start"() <{level = 10 : i32, message = "fbc,fch->fbh"}> : () -> ()
    %cst_107 = arith.constant dense<0.000000e+00> : vector<8x2x8xf32>
    %255 = tpu.matmul %254, %243, %cst_107 {dimension_numbers = #tpu.dot_dimension_numbers<[2], [1], [1], [2], [0, 0, 0, 1, 1, 2], [0], [0]>} : vector<8x2x2xbf16>, vector<8x2x8xbf16>, vector<8x2x8xf32> -> vector<8x2x8xf32>
    "tpu.trace_stop"() : () -> ()
    %256 = vector.shape_cast %255 : vector<8x2x8xf32> to vector<16x8xf32>
    %257 = vector.extract_strided_slice %218 {offsets = [0, 16], sizes = [16, 8], strides = [1, 1]} : vector<16x96xbf16> to vector<16x8xbf16>
    %258 = vector.shape_cast %257 : vector<16x8xbf16> to vector<8x2x8xbf16>
    %259 = vector.extract_strided_slice %218 {offsets = [0, 48], sizes = [16, 8], strides = [1, 1]} : vector<16x96xbf16> to vector<16x8xbf16>
    %260 = vector.shape_cast %259 : vector<16x8xbf16> to vector<8x2x8xbf16>
    %261 = vector.extract_strided_slice %218 {offsets = [0, 80], sizes = [16, 8], strides = [1, 1]} : vector<16x96xbf16> to vector<16x8xbf16>
    %262 = vector.shape_cast %261 : vector<16x8xbf16> to vector<8x2x8xbf16>
    "tpu.trace_start"() <{level = 10 : i32, message = "fbh,fch->fbc"}> : () -> ()
    %cst_108 = arith.constant dense<0.000000e+00> : vector<8x2x2xf32>
    %263 = tpu.matmul %258, %260, %cst_108 {dimension_numbers = #tpu.dot_dimension_numbers<[2], [2], [1], [1], [0, 0, 0, 1, 1, 1], [0], [0]>} : vector<8x2x8xbf16>, vector<8x2x8xbf16>, vector<8x2x2xf32> -> vector<8x2x2xf32>
    "tpu.trace_stop"() : () -> ()
    %cst_109 = arith.constant dense<0xFF800000> : vector<8x2xf32>
    %264 = vector.multi_reduction <maximumf>, %263, %cst_109 [2] : vector<8x2x2xf32> to vector<8x2xf32>
    %265 = vector.shape_cast %264 : vector<8x2xf32> to vector<8x2x1xf32>
    %266 = vector.broadcast %265 : vector<8x2x1xf32> to vector<8x2x2xf32>
    %267 = arith.subf %263, %266 : vector<8x2x2xf32>
    %268 = math.exp %267 : vector<8x2x2xf32>
    %cst_110 = arith.constant dense<0.000000e+00> : vector<8x2xf32>
    %269 = vector.multi_reduction <add>, %268, %cst_110 [2] : vector<8x2x2xf32> to vector<8x2xf32>
    %270 = vector.shape_cast %269 : vector<8x2xf32> to vector<8x2x1xf32>
    %271 = vector.broadcast %270 : vector<8x2x1xf32> to vector<8x2x2xf32>
    %272 = arith.divf %268, %271 : vector<8x2x2xf32>
    %273 = arith.truncf %272 : vector<8x2x2xf32> to vector<8x2x2xbf16>
    "tpu.trace_start"() <{level = 10 : i32, message = "fbc,fch->fbh"}> : () -> ()
    %cst_111 = arith.constant dense<0.000000e+00> : vector<8x2x8xf32>
    %274 = tpu.matmul %273, %262, %cst_111 {dimension_numbers = #tpu.dot_dimension_numbers<[2], [1], [1], [2], [0, 0, 0, 1, 1, 2], [0], [0]>} : vector<8x2x2xbf16>, vector<8x2x8xbf16>, vector<8x2x8xf32> -> vector<8x2x8xf32>
    "tpu.trace_stop"() : () -> ()
    %275 = vector.shape_cast %274 : vector<8x2x8xf32> to vector<16x8xf32>
    %276 = vector.extract_strided_slice %218 {offsets = [0, 24], sizes = [16, 8], strides = [1, 1]} : vector<16x96xbf16> to vector<16x8xbf16>
    %277 = vector.shape_cast %276 : vector<16x8xbf16> to vector<8x2x8xbf16>
    %278 = vector.extract_strided_slice %218 {offsets = [0, 56], sizes = [16, 8], strides = [1, 1]} : vector<16x96xbf16> to vector<16x8xbf16>
    %279 = vector.shape_cast %278 : vector<16x8xbf16> to vector<8x2x8xbf16>
    %280 = vector.extract_strided_slice %218 {offsets = [0, 88], sizes = [16, 8], strides = [1, 1]} : vector<16x96xbf16> to vector<16x8xbf16>
    %281 = vector.shape_cast %280 : vector<16x8xbf16> to vector<8x2x8xbf16>
    "tpu.trace_start"() <{level = 10 : i32, message = "fbh,fch->fbc"}> : () -> ()
    %cst_112 = arith.constant dense<0.000000e+00> : vector<8x2x2xf32>
    %282 = tpu.matmul %277, %279, %cst_112 {dimension_numbers = #tpu.dot_dimension_numbers<[2], [2], [1], [1], [0, 0, 0, 1, 1, 1], [0], [0]>} : vector<8x2x8xbf16>, vector<8x2x8xbf16>, vector<8x2x2xf32> -> vector<8x2x2xf32>
    "tpu.trace_stop"() : () -> ()
    %cst_113 = arith.constant dense<0xFF800000> : vector<8x2xf32>
    %283 = vector.multi_reduction <maximumf>, %282, %cst_113 [2] : vector<8x2x2xf32> to vector<8x2xf32>
    %284 = vector.shape_cast %283 : vector<8x2xf32> to vector<8x2x1xf32>
    %285 = vector.broadcast %284 : vector<8x2x1xf32> to vector<8x2x2xf32>
    %286 = arith.subf %282, %285 : vector<8x2x2xf32>
    %287 = math.exp %286 : vector<8x2x2xf32>
    %cst_114 = arith.constant dense<0.000000e+00> : vector<8x2xf32>
    %288 = vector.multi_reduction <add>, %287, %cst_114 [2] : vector<8x2x2xf32> to vector<8x2xf32>
    %289 = vector.shape_cast %288 : vector<8x2xf32> to vector<8x2x1xf32>
    %290 = vector.broadcast %289 : vector<8x2x1xf32> to vector<8x2x2xf32>
    %291 = arith.divf %287, %290 : vector<8x2x2xf32>
    %292 = arith.truncf %291 : vector<8x2x2xf32> to vector<8x2x2xbf16>
    "tpu.trace_start"() <{level = 10 : i32, message = "fbc,fch->fbh"}> : () -> ()
    %cst_115 = arith.constant dense<0.000000e+00> : vector<8x2x8xf32>
    %293 = tpu.matmul %292, %281, %cst_115 {dimension_numbers = #tpu.dot_dimension_numbers<[2], [1], [1], [2], [0, 0, 0, 1, 1, 2], [0], [0]>} : vector<8x2x2xbf16>, vector<8x2x8xbf16>, vector<8x2x8xf32> -> vector<8x2x8xf32>
    "tpu.trace_stop"() : () -> ()
    %294 = vector.shape_cast %293 : vector<8x2x8xf32> to vector<16x8xf32>
    %295 = tpu.concatenate %237, %256, %275, %294 in 1 : vector<16x8xf32>, vector<16x8xf32>, vector<16x8xf32>, vector<16x8xf32> -> vector<16x32xf32>
    %296 = arith.truncf %295 : vector<16x32xf32> to vector<16x32xbf16>
    %c1_116 = arith.constant 1 : index
    %c0_117 = arith.constant 0 : index
    %c0_118 = arith.constant 0 : index
    %297 = vector.load %arg12[%c1_116, %c0_117, %c0_118] : memref<2x32x32xbf16, #tpu.memory_space<vmem>>, vector<1x32x32xbf16>
    %298 = vector.shape_cast %297 : vector<1x32x32xbf16> to vector<32x32xbf16>
    %cst_119 = arith.constant dense<0.000000e+00> : vector<16x32xf32>
    %299 = tpu.matmul %296, %298, %cst_119 {dimension_numbers = #tpu.dot_dimension_numbers<[1], [0], [0], [1], [0, 0, 1, 1], [], []>} : vector<16x32xbf16>, vector<32x32xbf16>, vector<16x32xf32> -> vector<16x32xf32>
    %c1_120 = arith.constant 1 : index
    %c0_121 = arith.constant 0 : index
    %c0_122 = arith.constant 0 : index
    %300 = vector.load %arg13[%c1_120, %c0_121, %c0_122] : memref<2x1x32xf32, #tpu.memory_space<vmem>>, vector<1x1x32xf32>
    %301 = vector.shape_cast %300 : vector<1x1x32xf32> to vector<1x32xf32>
    %302 = vector.broadcast %301 : vector<1x32xf32> to vector<16x32xf32>
    %303 = arith.addf %299, %302 : vector<16x32xf32>
    %304 = arith.addf %209, %303 : vector<16x32xf32>
    %cst_123 = arith.constant dense<0.000000e+00> : vector<16xf32>
    %305 = vector.multi_reduction <add>, %304, %cst_123 [1] : vector<16x32xf32> to vector<16xf32>
    %306 = vector.shape_cast %305 : vector<16xf32> to vector<16x1xf32>
    %cst_124 = arith.constant 3.200000e+01 : f32
    %307 = vector.broadcast %cst_124 : f32 to vector<16x1xf32>
    %308 = arith.divf %306, %307 : vector<16x1xf32>
    %309 = vector.broadcast %308 : vector<16x1xf32> to vector<16x32xf32>
    %310 = arith.subf %304, %309 : vector<16x32xf32>
    %311 = arith.mulf %310, %310 : vector<16x32xf32>
    %cst_125 = arith.constant dense<0.000000e+00> : vector<16xf32>
    %312 = vector.multi_reduction <add>, %311, %cst_125 [1] : vector<16x32xf32> to vector<16xf32>
    %313 = vector.shape_cast %312 : vector<16xf32> to vector<16x1xf32>
    %cst_126 = arith.constant 3.200000e+01 : f32
    %314 = vector.broadcast %cst_126 : f32 to vector<16x1xf32>
    %315 = arith.divf %313, %314 : vector<16x1xf32>
    %316 = vector.broadcast %308 : vector<16x1xf32> to vector<16x32xf32>
    %317 = arith.subf %304, %316 : vector<16x32xf32>
    %cst_127 = arith.constant 9.99999974E-6 : f32
    %318 = vector.broadcast %cst_127 : f32 to vector<16x1xf32>
    %319 = arith.addf %315, %318 : vector<16x1xf32>
    %320 = math.rsqrt %319 : vector<16x1xf32>
    %321 = vector.broadcast %320 : vector<16x1xf32> to vector<16x32xf32>
    %322 = arith.mulf %317, %321 : vector<16x32xf32>
    %c1_128 = arith.constant 1 : index
    %c0_129 = arith.constant 0 : index
    %c0_130 = arith.constant 0 : index
    %323 = vector.load %arg14[%c1_128, %c0_129, %c0_130] : memref<2x1x32xf32, #tpu.memory_space<vmem>>, vector<1x1x32xf32>
    %324 = vector.shape_cast %323 : vector<1x1x32xf32> to vector<1x32xf32>
    %325 = vector.broadcast %324 : vector<1x32xf32> to vector<16x32xf32>
    %326 = arith.mulf %322, %325 : vector<16x32xf32>
    %c1_131 = arith.constant 1 : index
    %c0_132 = arith.constant 0 : index
    %c0_133 = arith.constant 0 : index
    %327 = vector.load %arg15[%c1_131, %c0_132, %c0_133] : memref<2x1x32xf32, #tpu.memory_space<vmem>>, vector<1x1x32xf32>
    %328 = vector.shape_cast %327 : vector<1x1x32xf32> to vector<1x32xf32>
    %329 = vector.broadcast %328 : vector<1x32xf32> to vector<16x32xf32>
    %330 = arith.addf %326, %329 : vector<16x32xf32>
    %331 = arith.truncf %330 : vector<16x32xf32> to vector<16x32xbf16>
    %c1_134 = arith.constant 1 : index
    %c0_135 = arith.constant 0 : index
    %c0_136 = arith.constant 0 : index
    %332 = vector.load %arg16[%c1_134, %c0_135, %c0_136] : memref<2x32x64xbf16, #tpu.memory_space<vmem>>, vector<1x32x64xbf16>
    %333 = vector.shape_cast %332 : vector<1x32x64xbf16> to vector<32x64xbf16>
    %cst_137 = arith.constant dense<0.000000e+00> : vector<16x64xf32>
    %334 = tpu.matmul %331, %333, %cst_137 {dimension_numbers = #tpu.dot_dimension_numbers<[1], [0], [0], [1], [0, 0, 1, 1], [], []>} : vector<16x32xbf16>, vector<32x64xbf16>, vector<16x64xf32> -> vector<16x64xf32>
    %c1_138 = arith.constant 1 : index
    %c0_139 = arith.constant 0 : index
    %c0_140 = arith.constant 0 : index
    %335 = vector.load %arg17[%c1_138, %c0_139, %c0_140] : memref<2x1x64xf32, #tpu.memory_space<vmem>>, vector<1x1x64xf32>
    %336 = vector.shape_cast %335 : vector<1x1x64xf32> to vector<1x64xf32>
    %337 = vector.broadcast %336 : vector<1x64xf32> to vector<16x64xf32>
    %338 = arith.addf %334, %337 : vector<16x64xf32>
    %cst_141 = arith.constant 0.000000e+00 : f32
    %339 = vector.broadcast %cst_141 : f32 to vector<16x64xf32>
    %340 = arith.maximumf %338, %339 : vector<16x64xf32>
    %341 = arith.truncf %340 : vector<16x64xf32> to vector<16x64xbf16>
    %c1_142 = arith.constant 1 : index
    %c0_143 = arith.constant 0 : index
    %c0_144 = arith.constant 0 : index
    %342 = vector.load %arg18[%c1_142, %c0_143, %c0_144] : memref<2x64x32xbf16, #tpu.memory_space<vmem>>, vector<1x64x32xbf16>
    %343 = vector.shape_cast %342 : vector<1x64x32xbf16> to vector<64x32xbf16>
    %cst_145 = arith.constant dense<0.000000e+00> : vector<16x32xf32>
    %344 = tpu.matmul %341, %343, %cst_145 {dimension_numbers = #tpu.dot_dimension_numbers<[1], [0], [0], [1], [0, 0, 1, 1], [], []>} : vector<16x64xbf16>, vector<64x32xbf16>, vector<16x32xf32> -> vector<16x32xf32>
    %c1_146 = arith.constant 1 : index
    %c0_147 = arith.constant 0 : index
    %c0_148 = arith.constant 0 : index
    %345 = vector.load %arg19[%c1_146, %c0_147, %c0_148] : memref<2x1x32xf32, #tpu.memory_space<vmem>>, vector<1x1x32xf32>
    %346 = vector.shape_cast %345 : vector<1x1x32xf32> to vector<1x32xf32>
    %347 = vector.broadcast %346 : vector<1x32xf32> to vector<16x32xf32>
    %348 = arith.addf %344, %347 : vector<16x32xf32>
    %349 = arith.addf %330, %348 : vector<16x32xf32>
    %cst_149 = arith.constant dense<0.000000e+00> : vector<16xf32>
    %350 = vector.multi_reduction <add>, %349, %cst_149 [1] : vector<16x32xf32> to vector<16xf32>
    %351 = vector.shape_cast %350 : vector<16xf32> to vector<16x1xf32>
    %cst_150 = arith.constant 3.200000e+01 : f32
    %352 = vector.broadcast %cst_150 : f32 to vector<16x1xf32>
    %353 = arith.divf %351, %352 : vector<16x1xf32>
    %354 = vector.broadcast %353 : vector<16x1xf32> to vector<16x32xf32>
    %355 = arith.subf %349, %354 : vector<16x32xf32>
    %356 = arith.mulf %355, %355 : vector<16x32xf32>
    %cst_151 = arith.constant dense<0.000000e+00> : vector<16xf32>
    %357 = vector.multi_reduction <add>, %356, %cst_151 [1] : vector<16x32xf32> to vector<16xf32>
    %358 = vector.shape_cast %357 : vector<16xf32> to vector<16x1xf32>
    %cst_152 = arith.constant 3.200000e+01 : f32
    %359 = vector.broadcast %cst_152 : f32 to vector<16x1xf32>
    %360 = arith.divf %358, %359 : vector<16x1xf32>
    %361 = vector.broadcast %353 : vector<16x1xf32> to vector<16x32xf32>
    %362 = arith.subf %349, %361 : vector<16x32xf32>
    %cst_153 = arith.constant 9.99999974E-6 : f32
    %363 = vector.broadcast %cst_153 : f32 to vector<16x1xf32>
    %364 = arith.addf %360, %363 : vector<16x1xf32>
    %365 = math.rsqrt %364 : vector<16x1xf32>
    %366 = vector.broadcast %365 : vector<16x1xf32> to vector<16x32xf32>
    %367 = arith.mulf %362, %366 : vector<16x32xf32>
    %c1_154 = arith.constant 1 : index
    %c0_155 = arith.constant 0 : index
    %c0_156 = arith.constant 0 : index
    %368 = vector.load %arg20[%c1_154, %c0_155, %c0_156] : memref<2x1x32xf32, #tpu.memory_space<vmem>>, vector<1x1x32xf32>
    %369 = vector.shape_cast %368 : vector<1x1x32xf32> to vector<1x32xf32>
    %370 = vector.broadcast %369 : vector<1x32xf32> to vector<16x32xf32>
    %371 = arith.mulf %367, %370 : vector<16x32xf32>
    %c1_157 = arith.constant 1 : index
    %c0_158 = arith.constant 0 : index
    %c0_159 = arith.constant 0 : index
    %372 = vector.load %arg21[%c1_157, %c0_158, %c0_159] : memref<2x1x32xf32, #tpu.memory_space<vmem>>, vector<1x1x32xf32>
    %373 = vector.shape_cast %372 : vector<1x1x32xf32> to vector<1x32xf32>
    %374 = vector.broadcast %373 : vector<1x32xf32> to vector<16x32xf32>
    %375 = arith.addf %371, %374 : vector<16x32xf32>
    %376 = arith.truncf %375 : vector<16x32xf32> to vector<16x32xbf16>
    %c0_160 = arith.constant 0 : index
    %c0_161 = arith.constant 0 : index
    %377 = vector.load %arg22[%c0_160, %c0_161] : memref<32x16xbf16, #tpu.memory_space<vmem>>, vector<32x16xbf16>
    %cst_162 = arith.constant dense<0.000000e+00> : vector<16x16xf32>
    %378 = tpu.matmul %376, %377, %cst_162 {dimension_numbers = #tpu.dot_dimension_numbers<[1], [0], [0], [1], [0, 0, 1, 1], [], []>} : vector<16x32xbf16>, vector<32x16xbf16>, vector<16x16xf32> -> vector<16x16xf32>
    %c0_163 = arith.constant 0 : index
    %c0_164 = arith.constant 0 : index
    %379 = vector.load %arg23[%c0_163, %c0_164] : memref<1x16xf32, #tpu.memory_space<vmem>>, vector<1x16xf32>
    %380 = vector.broadcast %379 : vector<1x16xf32> to vector<16x16xf32>
    %381 = arith.addf %378, %380 : vector<16x16xf32>
    %cst_165 = arith.constant 0.000000e+00 : f32
    %382 = vector.broadcast %cst_165 : f32 to vector<16x16xf32>
    %383 = arith.maximumf %381, %382 : vector<16x16xf32>
    %c0_166 = arith.constant 0 : index
    %c0_167 = arith.constant 0 : index
    %384 = vector.load %arg24[%c0_166, %c0_167] : memref<1x16xf32, #tpu.memory_space<vmem>>, vector<1x16xf32>
    %385 = vector.broadcast %384 : vector<1x16xf32> to vector<16x16xf32>
    %386 = arith.mulf %383, %385 : vector<16x16xf32>
    %cst_168 = arith.constant dense<0.000000e+00> : vector<16xf32>
    %387 = vector.multi_reduction <add>, %386, %cst_168 [1] : vector<16x16xf32> to vector<16xf32>
    %388 = vector.shape_cast %387 : vector<16xf32> to vector<16x1xf32>
    %c0_169 = arith.constant 0 : index
    %c0_170 = arith.constant 0 : index
    %389 = vector.load %arg25[%c0_169, %c0_170] : memref<1x1xf32, #tpu.memory_space<vmem>>, vector<1x1xf32>
    %390 = vector.broadcast %389 : vector<1x1xf32> to vector<16x1xf32>
    %391 = arith.addf %388, %390 : vector<16x1xf32>
    %392 = arith.negf %391 : vector<16x1xf32>
    %393 = math.exp %392 : vector<16x1xf32>
    %cst_171 = arith.constant 1.000000e+00 : f32
    %394 = vector.broadcast %cst_171 : f32 to vector<16x1xf32>
    %395 = arith.addf %394, %393 : vector<16x1xf32>
    %396 = arith.divf %394, %395 : vector<16x1xf32>
    %397 = vector.broadcast %396 : vector<16x1xf32> to vector<16x32xf32>
    %398 = arith.mulf %375, %397 : vector<16x32xf32>
    %399 = vector.shape_cast %398 : vector<16x32xf32> to vector<8x2x32xf32>
    %cst_172 = arith.constant dense<0.000000e+00> : vector<2x32xf32>
    %400 = vector.multi_reduction <add>, %399, %cst_172 [0] : vector<8x2x32xf32> to vector<2x32xf32>
    %cst_173 = arith.constant 8.000000e+00 : f32
    %401 = vector.broadcast %cst_173 : f32 to vector<2x32xf32>
    %402 = arith.divf %400, %401 : vector<2x32xf32>
    %403 = arith.truncf %402 : vector<2x32xf32> to vector<2x32xbf16>
    %c0_174 = arith.constant 0 : index
    %c0_175 = arith.constant 0 : index
    %404 = vector.load %arg26[%c0_174, %c0_175] : memref<32x16xbf16, #tpu.memory_space<vmem>>, vector<32x16xbf16>
    %cst_176 = arith.constant dense<0.000000e+00> : vector<2x16xf32>
    %405 = tpu.matmul %403, %404, %cst_176 {dimension_numbers = #tpu.dot_dimension_numbers<[1], [0], [0], [1], [0, 0, 1, 1], [], []>} : vector<2x32xbf16>, vector<32x16xbf16>, vector<2x16xf32> -> vector<2x16xf32>
    %c0_177 = arith.constant 0 : index
    %c0_178 = arith.constant 0 : index
    %406 = vector.load %arg27[%c0_177, %c0_178] : memref<1x16xf32, #tpu.memory_space<vmem>>, vector<1x16xf32>
    %407 = vector.broadcast %406 : vector<1x16xf32> to vector<2x16xf32>
    %408 = arith.addf %405, %407 : vector<2x16xf32>
    %cst_179 = arith.constant 0.000000e+00 : f32
    %409 = vector.broadcast %cst_179 : f32 to vector<2x16xf32>
    %410 = arith.maximumf %408, %409 : vector<2x16xf32>
    %411 = arith.truncf %410 : vector<2x16xf32> to vector<2x16xbf16>
    %c0_180 = arith.constant 0 : index
    %c0_181 = arith.constant 0 : index
    %412 = vector.load %arg28[%c0_180, %c0_181] : memref<16x8xbf16, #tpu.memory_space<vmem>>, vector<16x8xbf16>
    %cst_182 = arith.constant dense<0.000000e+00> : vector<2x8xf32>
    %413 = tpu.matmul %411, %412, %cst_182 {dimension_numbers = #tpu.dot_dimension_numbers<[1], [0], [0], [1], [0, 0, 1, 1], [], []>} : vector<2x16xbf16>, vector<16x8xbf16>, vector<2x8xf32> -> vector<2x8xf32>
    %c0_183 = arith.constant 0 : index
    %c0_184 = arith.constant 0 : index
    %414 = vector.load %arg29[%c0_183, %c0_184] : memref<1x8xf32, #tpu.memory_space<vmem>>, vector<1x8xf32>
    %415 = vector.broadcast %414 : vector<1x8xf32> to vector<2x8xf32>
    %416 = arith.addf %413, %415 : vector<2x8xf32>
    %cst_185 = arith.constant 0.000000e+00 : f32
    %417 = vector.broadcast %cst_185 : f32 to vector<2x8xf32>
    %418 = arith.maximumf %416, %417 : vector<2x8xf32>
    %c0_186 = arith.constant 0 : index
    %c0_187 = arith.constant 0 : index
    %419 = vector.load %arg30[%c0_186, %c0_187] : memref<1x8xf32, #tpu.memory_space<vmem>>, vector<1x8xf32>
    %420 = vector.broadcast %419 : vector<1x8xf32> to vector<2x8xf32>
    %421 = arith.mulf %418, %420 : vector<2x8xf32>
    %cst_188 = arith.constant dense<0.000000e+00> : vector<2xf32>
    %422 = vector.multi_reduction <add>, %421, %cst_188 [1] : vector<2x8xf32> to vector<2xf32>
    %423 = vector.shape_cast %422 : vector<2xf32> to vector<2x1xf32>
    %c0_189 = arith.constant 0 : index
    %c0_190 = arith.constant 0 : index
    %424 = vector.load %arg31[%c0_189, %c0_190] : memref<1x1xf32, #tpu.memory_space<vmem>>, vector<1x1xf32>
    %425 = vector.broadcast %424 : vector<1x1xf32> to vector<2x1xf32>
    %426 = arith.addf %423, %425 : vector<2x1xf32>
    %427 = arith.negf %426 : vector<2x1xf32>
    %428 = math.exp %427 : vector<2x1xf32>
    %cst_191 = arith.constant 1.000000e+00 : f32
    %429 = vector.broadcast %cst_191 : f32 to vector<2x1xf32>
    %430 = arith.addf %429, %428 : vector<2x1xf32>
    %431 = arith.divf %429, %430 : vector<2x1xf32>
    %c0_192 = arith.constant 0 : index
    %c0_193 = arith.constant 0 : index
    %432 = vector.load %arg32[%c0_192, %c0_193] : memref<2x1xf32, #tpu.memory_space<vmem>>, vector<2x1xf32>
    tpu.vector_store %arg32[%c0_192, %c0_193], %431 {strides = array<i32>} : memref<2x1xf32, #tpu.memory_space<vmem>>, vector<2x1xf32>,
    return
  }
}

</mosaic_0001>

<llo_original>
// kernel: deepfake_detector_forward.1
$region0: #{deepfake_detector_forward.1}
  #allocation0 [shape = 'u32[]', space=smem, size = 0x4, offset = 0x4, fixed_abs, tag = 'smem constant byte address 0x4 - core index']
  #allocation1 [shape = 'u32[144,128]{1,0:T(1,128)}', space=vmem, size = 0x12000, scoped, tag = 'internal scratch']
  #allocation2 [shape = 'f32[1,1]{1,0:T(1,128)S(1)}', space=vmem, size = 0x200, scoped, tag = 'scoped memory for deepfake_detector_forward.1']
  #allocation3 [shape = 'f32[1,1]{1,0:T(1,128)S(1)}', space=vmem, size = 0x200, scoped, tag = 'scoped memory for deepfake_detector_forward.1']
  #allocation4 [shape = 'f32[1,1]{1,0:T(1,128)S(1)}', space=vmem, size = 0x200, scoped, tag = 'scoped memory for deepfake_detector_forward.1']
  %s0 = inlined_call_operand.smem [shape: u32[33], index: -1, kind: input, shape index: {}]
  %s1 = sld [smem:[%s0]]
  %s2 = scalar_lea.smem %s0, 1
  %s3 = sld [smem:[%s2]]
  %s4 = scalar_lea.smem %s0, 2
  %s5 = sld [smem:[%s4]]
  %s6 = scalar_lea.smem %s0, 3
  %s7 = sld [smem:[%s6]]
  %s8 = scalar_lea.smem %s0, 4
  %s9 = sld [smem:[%s8]]
  %s10 = scalar_lea.smem %s0, 5
  %s11 = sld [smem:[%s10]]
  %s12 = scalar_lea.smem %s0, 6
  %s13 = sld [smem:[%s12]]
  %s14 = scalar_lea.smem %s0, 7
  %s15 = sld [smem:[%s14]]
  %s16 = scalar_lea.smem %s0, 8
  %s17 = sld [smem:[%s16]]
  %s18 = scalar_lea.smem %s0, 9
  %s19 = sld [smem:[%s18]]
  %s20 = scalar_lea.smem %s0, 10
  %s21 = sld [smem:[%s20]]
  %s22 = scalar_lea.smem %s0, 11
  %s23 = sld [smem:[%s22]]
  %s24 = scalar_lea.smem %s0, 12
  %s25 = sld [smem:[%s24]]
  %s26 = scalar_lea.smem %s0, 13
  %s27 = sld [smem:[%s26]]
  %s28 = scalar_lea.smem %s0, 14
  %s29 = sld [smem:[%s28]]
  %s30 = scalar_lea.smem %s0, 15
  %s31 = sld [smem:[%s30]]
  %s32 = scalar_lea.smem %s0, 16
  %s33 = sld [smem:[%s32]]
  %s34 = scalar_lea.smem %s0, 17
  %s35 = sld [smem:[%s34]]
  %s36 = scalar_lea.smem %s0, 18
  %s37 = sld [smem:[%s36]]
  %s38 = scalar_lea.smem %s0, 19
  %s39 = sld [smem:[%s38]]
  %s40 = scalar_lea.smem %s0, 20
  %s41 = sld [smem:[%s40]]
  %s42 = scalar_lea.smem %s0, 21
  %s43 = sld [smem:[%s42]]
  %s44 = scalar_lea.smem %s0, 22
  %s45 = sld [smem:[%s44]]
  %s46 = scalar_lea.smem %s0, 23
  %s47 = sld [smem:[%s46]]
  %s48 = scalar_lea.smem %s0, 24
  %s49 = sld [smem:[%s48]]
  %s50 = scalar_lea.smem %s0, 25
  %s51 = sld [smem:[%s50]]
  %s52 = scalar_lea.smem %s0, 26
  %s53 = sld [smem:[%s52]]
  %s54 = scalar_lea.smem %s0, 27
  %s55 = sld [smem:[%s54]]
  %s56 = scalar_lea.smem %s0, 28
  %s57 = sld [smem:[%s56]]
  %s58 = scalar_lea.smem %s0, 29
  %s59 = sld [smem:[%s58]]
  %s60 = scalar_lea.smem %s0, 30
  %s61 = sld [smem:[%s60]]
  %s62 = scalar_lea.smem %s0, 31
  %s63 = sld [smem:[%s62]]
  %s64 = scalar_lea.smem %s0, 32
  %s65 = sld [smem:[%s64]]
  %s66 = sld [smem:[#allocation0]]
  $region138: #{deepfake_detector_forward.1} parent=0
    _
  %s68 = ssub.s32 1, %s66
  %s69 = scalar_select 0, %s68, %s66
  %v70 = vstv %s15
  %71 = vst [vmem:[#allocation2] sm:$0x1] %v70
  %v72 = vstv %s51
  %73 = vst [vmem:[#allocation3] sm:$0x1] %v72
  %v74 = vstv %s63
  %75 = vst [vmem:[#allocation4] sm:$0x1] %v74
  // Predicated region
  $region2: #{deepfake_detector_forward.1} parent=0 // pred_check
    _
  $region3: #{deepfake_detector_forward.1} parent=0 // pred_check_branch
    %77 = sbr.rel (0) target = $region5
  $region4: #{deepfake_detector_forward.1} parent=0 // pred_region
    _
  $region5: #{deepfake_detector_forward.1} parent=0 // pred_fallthru
    _
  // Predicated region
  $region6: #{deepfake_detector_forward.1} parent=0 // pred_check
    _
  $region7: #{deepfake_detector_forward.1} parent=0 // pred_check_branch
    %79 = sbr.rel (0) target = $region9
  $region8: #{deepfake_detector_forward.1} parent=0 // pred_region
    _
  $region9: #{deepfake_detector_forward.1} parent=0 // pred_fallthru
    _
  // Predicated region
  $region10: #{deepfake_detector_forward.1} parent=0 // pred_check
    _
  $region11: #{deepfake_detector_forward.1} parent=0 // pred_check_branch
    %81 = sbr.rel (0) target = $region13
  $region12: #{deepfake_detector_forward.1} parent=0 // pred_region
    _
  $region13: #{deepfake_detector_forward.1} parent=0 // pred_fallthru
    _
  // Predicated region
  $region14: #{deepfake_detector_forward.1} parent=0 // pred_check
    _
  $region15: #{deepfake_detector_forward.1} parent=0 // pred_check_branch
    %83 = sbr.rel (0) target = $region17
  $region16: #{deepfake_detector_forward.1} parent=0 // pred_region
    _
  $region17: #{deepfake_detector_forward.1} parent=0 // pred_fallthru
    _
  // Predicated region
  $region18: #{deepfake_detector_forward.1} parent=0 // pred_check
    _
  $region19: #{deepfake_detector_forward.1} parent=0 // pred_check_branch
    %85 = sbr.rel (0) target = $region21
  $region20: #{deepfake_detector_forward.1} parent=0 // pred_region
    _
  $region21: #{deepfake_detector_forward.1} parent=0 // pred_fallthru
    _
  // Predicated region
  $region22: #{deepfake_detector_forward.1} parent=0 // pred_check
    _
  $region23: #{deepfake_detector_forward.1} parent=0 // pred_check_branch
    %87 = sbr.rel (0) target = $region25
  $region24: #{deepfake_detector_forward.1} parent=0 // pred_region
    _
  $region25: #{deepfake_detector_forward.1} parent=0 // pred_fallthru
    _
  // Predicated region
  $region26: #{deepfake_detector_forward.1} parent=0 // pred_check
    _
  $region27: #{deepfake_detector_forward.1} parent=0 // pred_check_branch
    %89 = sbr.rel (0) target = $region29
  $region28: #{deepfake_detector_forward.1} parent=0 // pred_region
    _
  $region29: #{deepfake_detector_forward.1} parent=0 // pred_fallthru
    _
  // Predicated region
  $region30: #{deepfake_detector_forward.1} parent=0 // pred_check
    _
  $region31: #{deepfake_detector_forward.1} parent=0 // pred_check_branch
    %91 = sbr.rel (0) target = $region33
  $region32: #{deepfake_detector_forward.1} parent=0 // pred_region
    _
  $region33: #{deepfake_detector_forward.1} parent=0 // pred_fallthru
    _
  // Predicated region
  $region34: #{deepfake_detector_forward.1} parent=0 // pred_check
    _
  $region35: #{deepfake_detector_forward.1} parent=0 // pred_check_branch
    %93 = sbr.rel (0) target = $region37
  $region36: #{deepfake_detector_forward.1} parent=0 // pred_region
    _
  $region37: #{deepfake_detector_forward.1} parent=0 // pred_fallthru
    _
  // Predicated region
  $region38: #{deepfake_detector_forward.1} parent=0 // pred_check
    _
  $region39: #{deepfake_detector_forward.1} parent=0 // pred_check_branch
    %95 = sbr.rel (0) target = $region41
  $region40: #{deepfake_detector_forward.1} parent=0 // pred_region
    _
  $region41: #{deepfake_detector_forward.1} parent=0 // pred_fallthru
    _
  // Predicated region
  $region42: #{deepfake_detector_forward.1} parent=0 // pred_check
    _
  $region43: #{deepfake_detector_forward.1} parent=0 // pred_check_branch
    %97 = sbr.rel (0) target = $region45
  $region44: #{deepfake_detector_forward.1} parent=0 // pred_region
    _
  $region45: #{deepfake_detector_forward.1} parent=0 // pred_fallthru
    _
  // Predicated region
  $region46: #{deepfake_detector_forward.1} parent=0 // pred_check
    _
  $region47: #{deepfake_detector_forward.1} parent=0 // pred_check_branch
    %99 = sbr.rel (0) target = $region49
  $region48: #{deepfake_detector_forward.1} parent=0 // pred_region
    _
  $region49: #{deepfake_detector_forward.1} parent=0 // pred_fallthru
    _
  // Predicated region
  $region50: #{deepfake_detector_forward.1} parent=0 // pred_check
    _
  $region51: #{deepfake_detector_forward.1} parent=0 // pred_check_branch
    %101 = sbr.rel (0) target = $region53
  $region52: #{deepfake_detector_forward.1} parent=0 // pred_region
    _
  $region53: #{deepfake_detector_forward.1} parent=0 // pred_fallthru
    _
  // Predicated region
  $region54: #{deepfake_detector_forward.1} parent=0 // pred_check
    _
  $region55: #{deepfake_detector_forward.1} parent=0 // pred_check_branch
    %103 = sbr.rel (0) target = $region57
  $region56: #{deepfake_detector_forward.1} parent=0 // pred_region
    _
  $region57: #{deepfake_detector_forward.1} parent=0 // pred_fallthru
    _
  // Predicated region
  $region58: #{deepfake_detector_forward.1} parent=0 // pred_check
    _
  $region59: #{deepfake_detector_forward.1} parent=0 // pred_check_branch
    %105 = sbr.rel (0) target = $region61
  $region60: #{deepfake_detector_forward.1} parent=0 // pred_region
    _
  $region61: #{deepfake_detector_forward.1} parent=0 // pred_fallthru
    _
  // Predicated region
  $region62: #{deepfake_detector_forward.1} parent=0 // pred_check
    _
  $region63: #{deepfake_detector_forward.1} parent=0 // pred_check_branch
    %107 = sbr.rel (0) target = $region65
  $region64: #{deepfake_detector_forward.1} parent=0 // pred_region
    _
  $region65: #{deepfake_detector_forward.1} parent=0 // pred_fallthru
    _
  // Predicated region
  $region66: #{deepfake_detector_forward.1} parent=0 // pred_check
    _
  $region67: #{deepfake_detector_forward.1} parent=0 // pred_check_branch
    %109 = sbr.rel (0) target = $region69
  $region68: #{deepfake_detector_forward.1} parent=0 // pred_region
    _
  $region69: #{deepfake_detector_forward.1} parent=0 // pred_fallthru
    _
  // Predicated region
  $region70: #{deepfake_detector_forward.1} parent=0 // pred_check
    _
  $region71: #{deepfake_detector_forward.1} parent=0 // pred_check_branch
    %111 = sbr.rel (0) target = $region73
  $region72: #{deepfake_detector_forward.1} parent=0 // pred_region
    _
  $region73: #{deepfake_detector_forward.1} parent=0 // pred_fallthru
    _
  // Predicated region
  $region74: #{deepfake_detector_forward.1} parent=0 // pred_check
    _
  $region75: #{deepfake_detector_forward.1} parent=0 // pred_check_branch
    %113 = sbr.rel (0) target = $region77
  $region76: #{deepfake_detector_forward.1} parent=0 // pred_region
    _
  $region77: #{deepfake_detector_forward.1} parent=0 // pred_fallthru
    _
  // Predicated region
  $region78: #{deepfake_detector_forward.1} parent=0 // pred_check
    _
  $region79: #{deepfake_detector_forward.1} parent=0 // pred_check_branch
    %115 = sbr.rel (0) target = $region81
  $region80: #{deepfake_detector_forward.1} parent=0 // pred_region
    _
  $region81: #{deepfake_detector_forward.1} parent=0 // pred_fallthru
    _
  // Predicated region
  $region82: #{deepfake_detector_forward.1} parent=0 // pred_check
    _
  $region83: #{deepfake_detector_forward.1} parent=0 // pred_check_branch
    %117 = sbr.rel (0) target = $region85
  $region84: #{deepfake_detector_forward.1} parent=0 // pred_region
    _
  $region85: #{deepfake_detector_forward.1} parent=0 // pred_fallthru
    _
  // Predicated region
  $region86: #{deepfake_detector_forward.1} parent=0 // pred_check
    _
  $region87: #{deepfake_detector_forward.1} parent=0 // pred_check_branch
    %119 = sbr.rel (0) target = $region89
  $region88: #{deepfake_detector_forward.1} parent=0 // pred_region
    _
  $region89: #{deepfake_detector_forward.1} parent=0 // pred_fallthru
    _
  // Predicated region
  $region90: #{deepfake_detector_forward.1} parent=0 // pred_check
    _
  $region91: #{deepfake_detector_forward.1} parent=0 // pred_check_branch
    %121 = sbr.rel (0) target = $region93
  $region92: #{deepfake_detector_forward.1} parent=0 // pred_region
    _
  $region93: #{deepfake_detector_forward.1} parent=0 // pred_fallthru
    _
  // Predicated region
  $region94: #{deepfake_detector_forward.1} parent=0 // pred_check
    _
  $region95: #{deepfake_detector_forward.1} parent=0 // pred_check_branch
    %123 = sbr.rel (0) target = $region97
  $region96: #{deepfake_detector_forward.1} parent=0 // pred_region
    _
  $region97: #{deepfake_detector_forward.1} parent=0 // pred_fallthru
    _
  // Predicated region
  $region98: #{deepfake_detector_forward.1} parent=0 // pred_check
    _
  $region99: #{deepfake_detector_forward.1} parent=0 // pred_check_branch
    %125 = sbr.rel (0) target = $region101
  $region100: #{deepfake_detector_forward.1} parent=0 // pred_region
    _
  $region101: #{deepfake_detector_forward.1} parent=0 // pred_fallthru
    _
  // Predicated region
  $region102: #{deepfake_detector_forward.1} parent=0 // pred_check
    _
  $region103: #{deepfake_detector_forward.1} parent=0 // pred_check_branch
    %127 = sbr.rel (0) target = $region105
  $region104: #{deepfake_detector_forward.1} parent=0 // pred_region
    _
  $region105: #{deepfake_detector_forward.1} parent=0 // pred_fallthru
    _
  // Predicated region
  $region106: #{deepfake_detector_forward.1} parent=0 // pred_check
    _
  $region107: #{deepfake_detector_forward.1} parent=0 // pred_check_branch
    %129 = sbr.rel (0) target = $region109
  $region108: #{deepfake_detector_forward.1} parent=0 // pred_region
    _
  $region109: #{deepfake_detector_forward.1} parent=0 // pred_fallthru
    _
  // Predicated region
  $region110: #{deepfake_detector_forward.1} parent=0 // pred_check
    _
  $region111: #{deepfake_detector_forward.1} parent=0 // pred_check_branch
    %131 = sbr.rel (0) target = $region113
  $region112: #{deepfake_detector_forward.1} parent=0 // pred_region
    _
  $region113: #{deepfake_detector_forward.1} parent=0 // pred_fallthru
    _
  // Predicated region
  $region114: #{deepfake_detector_forward.1} parent=0 // pred_check
    _
  $region115: #{deepfake_detector_forward.1} parent=0 // pred_check_branch
    %133 = sbr.rel (0) target = $region117
  $region116: #{deepfake_detector_forward.1} parent=0 // pred_region
    _
  $region117: #{deepfake_detector_forward.1} parent=0 // pred_fallthru
    _
  // Predicated region
  $region118: #{deepfake_detector_forward.1} parent=0 // pred_check
    _
  $region119: #{deepfake_detector_forward.1} parent=0 // pred_check_branch
    %135 = sbr.rel (0) target = $region121
  $region120: #{deepfake_detector_forward.1} parent=0 // pred_region
    _
  $region121: #{deepfake_detector_forward.1} parent=0 // pred_fallthru
    _
  // Predicated region
  $region122: #{deepfake_detector_forward.1} parent=0 // pred_check
    _
  $region123: #{deepfake_detector_forward.1} parent=0 // pred_check_branch
    %137 = sbr.rel (0) target = $region125
  $region124: #{deepfake_detector_forward.1} parent=0 // pred_region
    _
  $region125: #{deepfake_detector_forward.1} parent=0 // pred_fallthru
    _
  // Predicated region
  $region126: #{deepfake_detector_forward.1} parent=0 // pred_check
    _
  $region127: #{deepfake_detector_forward.1} parent=0 // pred_check_branch
    %139 = sbr.rel (0) target = $region129
  $region128: #{deepfake_detector_forward.1} parent=0 // pred_region
    _
  $region129: #{deepfake_detector_forward.1} parent=0 // pred_fallthru
    _
  %v141 = vld [vmem:[%s1] sm:$0xff]
  %v142 = vld [vmem:[%s1 + $0x8] sm:$0xff]
  %v143 = vld [vmem:[%s1 + $0x10] sm:$0xff]
  %v144 = vld [vmem:[%s1 + $0x18] sm:$0xff]
  %v145 = vld [vmem:[%s1 + $0x20] sm:$0xff]
  %v146 = vld [vmem:[%s1 + $0x28] sm:$0xff]
  %v147 = vld [vmem:[%s1 + $0x30] sm:$0xff]
  %v148 = vld [vmem:[%s1 + $0x38] sm:$0xff]
  %v149 = vld [vmem:[%s1 + $0x40] sm:$0xff]
  %v150 = vld [vmem:[%s1 + $0x48] sm:$0xff]
  %v151 = vld [vmem:[%s1 + $0x50] sm:$0xff]
  %v152 = vld [vmem:[%s1 + $0x58] sm:$0xff]
  %v153 = vld [vmem:[%s1 + $0x60] sm:$0xff]
  %v154 = vld [vmem:[%s1 + $0x68] sm:$0xff]
  %v155 = vld [vmem:[%s1 + $0x70] sm:$0xff]
  %v156 = vld [vmem:[%s1 + $0x78] sm:$0xff]
  %v157 = vld [vmem:[%s1 + $0x80] sm:$0xff]
  %v158 = vld [vmem:[%s1 + $0x88] sm:$0xff]
  %v159 = vld [vmem:[%s1 + $0x90] sm:$0xff]
  %v160 = vld [vmem:[%s1 + $0x98] sm:$0xff]
  %v161 = vld [vmem:[%s1 + $0xa0] sm:$0xff]
  %v162 = vld [vmem:[%s1 + $0xa8] sm:$0xff]
  %v163 = vld [vmem:[%s1 + $0xb0] sm:$0xff]
  %v164 = vld [vmem:[%s1 + $0xb8] sm:$0xff]
  %v165 = vld [vmem:[%s1 + $0xc0] sm:$0xff]
  %v166 = vld [vmem:[%s1 + $0xc8] sm:$0xff]
  %v167 = vld [vmem:[%s1 + $0xd0] sm:$0xff]
  %v168 = vld [vmem:[%s1 + $0xd8] sm:$0xff]
  %v169 = vld [vmem:[%s1 + $0xe0] sm:$0xff]
  %v170 = vld [vmem:[%s1 + $0xe8] sm:$0xff]
  %v171 = vld [vmem:[%s1 + $0xf0] sm:$0xff]
  %v172 = vld [vmem:[%s1 + $0xf8] sm:$0xff]
  %v173 = vpack.c.bf16 %v142, %v141
  %v174 = vpack.c.bf16 %v144, %v143
  %v175 = vpack.c.bf16 %v146, %v145
  %v176 = vpack.c.bf16 %v148, %v147
  %v177 = vpack.c.bf16 %v150, %v149
  %v178 = vpack.c.bf16 %v152, %v151
  %v179 = vpack.c.bf16 %v154, %v153
  %v180 = vpack.c.bf16 %v156, %v155
  %v181 = vpack.c.bf16 %v158, %v157
  %v182 = vpack.c.bf16 %v160, %v159
  %v183 = vpack.c.bf16 %v162, %v161
  %v184 = vpack.c.bf16 %v164, %v163
  %v185 = vpack.c.bf16 %v166, %v165
  %v186 = vpack.c.bf16 %v168, %v167
  %v187 = vpack.c.bf16 %v170, %v169
  %v188 = vpack.c.bf16 %v172, %v171
  %v189 = vld [vmem:[%s5] sm:$0xf]
  %v190 = vld [vmem:[%s5 + $0x4] sm:$0xf]
  %v191 = vld [vmem:[%s5 + $0x8] sm:$0xf]
  %v192 = vld [vmem:[%s5 + $0xc] sm:$0xf]
  %v193 = vld [vmem:[%s5 + $0x10] sm:$0xf]
  %v194 = vld [vmem:[%s5 + $0x14] sm:$0xf]
  %v195 = vld [vmem:[%s7] sm:$0x1]
  %v197 = vlaneseq
  %v198 = vshrl.u32 %v197, 7
  %v199 = vsub.s32 0, %v198
  %v200 = vrot.slane %v195, %v199
  %v208 = vunpack.c.l.b16 %v189
  %v209 = vunpack.c.l.b16 %v190
  %v210 = vunpack.c.l.b16 %v191
  %v211 = vunpack.c.l.b16 %v192
  %v212 = vunpack.c.l.b16 %v193
  %v213 = vunpack.c.l.b16 %v194
  %v214 = vpack.c.b16 %v209, %v208
  %v215 = vpack.c.b16 %v211, %v210
  %v216 = vpack.c.b16 %v213, %v212
  %vm220 = vcmask 392192
  %v222 = vsel %vm220, %v173, 0
  %v225 = vsel %vm220, %v174, 0
  %v228 = vsel %vm220, %v175, 0
  %v231 = vsel %vm220, %v176, 0
  %v234 = vsel %vm220, %v177, 0
  %v237 = vsel %vm220, %v178, 0
  %v240 = vsel %vm220, %v179, 0
  %v243 = vsel %vm220, %v180, 0
  %v246 = vsel %vm220, %v181, 0
  %v249 = vsel %vm220, %v182, 0
  %v252 = vsel %vm220, %v183, 0
  %v255 = vsel %vm220, %v184, 0
  %v258 = vsel %vm220, %v185, 0
  %v261 = vsel %vm220, %v186, 0
  %v264 = vsel %vm220, %v187, 0
  %v267 = vsel %vm220, %v188, 0
  %269 = vmatprep.subr.bf16.mxu0 0
  %270 = vmatpush1.bf16.msra.mxu0 %v214
  %271 = vmatprep.subr.bf16.mxu0 0
  %272 = vmatpush1.bf16.msra.mxu0 %v215
  %273 = vmatprep.subr.bf16.mxu0 0
  %274 = vmatpush1.bf16.msra.mxu0 %v216
  %275 = vmatprep.subr.bf16.mxu0 0
  %276 = vmatpush1.bf16.msra.mxu0 0
  %277 = vmatprep.subr.bf16.mxu0 0
  %278 = vmatpush1.bf16.msra.mxu0 0
  %279 = vmatprep.subr.bf16.mxu0 0
  %280 = vmatpush1.bf16.msra.mxu0 0
  %281 = vmatprep.subr.bf16.mxu0 0
  %282 = vmatpush1.bf16.msra.mxu0 0
  %283 = vmatprep.subr.bf16.mxu0 0
  %284 = vmatpush1.bf16.msra.mxu0 0
  %285 = vmatprep.subr.bf16.mxu0 0
  %286 = vmatpush1.bf16.msra.mxu0 0
  %287 = vmatprep.subr.bf16.mxu0 0
  %288 = vmatpush1.bf16.msra.mxu0 0
  %289 = vmatprep.subr.bf16.mxu0 0
  %290 = vmatpush1.bf16.msra.mxu0 0
  %291 = vmatprep.subr.bf16.mxu0 0
  %292 = vmatpush1.bf16.msra.mxu0 0
  %293 = vmatprep.subr.bf16.mxu0 0
  %294 = vmatpush1.bf16.msra.mxu0 0
  %295 = vmatprep.subr.bf16.mxu0 0
  %296 = vmatpush1.bf16.msra.mxu0 0
  %297 = vmatprep.subr.bf16.mxu0 0
  %298 = vmatpush1.bf16.msra.mxu0 0
  %299 = vmatprep.subr.bf16.mxu0 0
  %300 = vmatpush1.bf16.msra.mxu0 0
  %301 = vmatprep.mubr.bf16.mxu0 0
  %302 = vmatmul.mubr.bf16.gmra.mrb[0].mxu0 %v222
  %v303 = vpop.f32.mrb[0].mxu0
  %v304 = vadd.f32 %v200, %v303
  %v305 = vpop.f32.mrb[0].mxu0
  %v306 = vpop.f32.mrb[0].mxu0
  %v307 = vadd.f32 %v200, %v306
  %v308 = vpop.f32.mrb[0].mxu0
  %309 = vmatprep.mubr.bf16.mxu0 0
  %310 = vmatmul.mubr.bf16.gmra.mrb[0].mxu0 %v225
  %v311 = vpop.f32.mrb[0].mxu0
  %v312 = vadd.f32 %v200, %v311
  %v313 = vpop.f32.mrb[0].mxu0
  %v314 = vpop.f32.mrb[0].mxu0
  %v315 = vadd.f32 %v200, %v314
  %v316 = vpop.f32.mrb[0].mxu0
  %317 = vmatprep.mubr.bf16.mxu0 0
  %318 = vmatmul.mubr.bf16.gmra.mrb[0].mxu0 %v228
  %v319 = vpop.f32.mrb[0].mxu0
  %v320 = vadd.f32 %v200, %v319
  %v321 = vpop.f32.mrb[0].mxu0
  %v322 = vpop.f32.mrb[0].mxu0
  %v323 = vadd.f32 %v200, %v322
  %v324 = vpop.f32.mrb[0].mxu0
  %325 = vmatprep.mubr.bf16.mxu0 0
  %326 = vmatmul.mubr.bf16.gmra.mrb[0].mxu0 %v231
  %v327 = vpop.f32.mrb[0].mxu0
  %v328 = vadd.f32 %v200, %v327
  %v329 = vpop.f32.mrb[0].mxu0
  %v330 = vpop.f32.mrb[0].mxu0
  %v331 = vadd.f32 %v200, %v330
  %v332 = vpop.f32.mrb[0].mxu0
  %333 = vmatprep.mubr.bf16.mxu0 0
  %334 = vmatmul.mubr.bf16.gmra.mrb[0].mxu0 %v234
  %v335 = vpop.f32.mrb[0].mxu0
  %v336 = vadd.f32 %v200, %v335
  %v337 = vpop.f32.mrb[0].mxu0
  %v338 = vpop.f32.mrb[0].mxu0
  %v339 = vadd.f32 %v200, %v338
  %v340 = vpop.f32.mrb[0].mxu0
  %341 = vmatprep.mubr.bf16.mxu0 0
  %342 = vmatmul.mubr.bf16.gmra.mrb[0].mxu0 %v237
  %v343 = vpop.f32.mrb[0].mxu0
  %v344 = vadd.f32 %v200, %v343
  %v345 = vpop.f32.mrb[0].mxu0
  %v346 = vpop.f32.mrb[0].mxu0
  %v347 = vadd.f32 %v200, %v346
  %v348 = vpop.f32.mrb[0].mxu0
  %349 = vmatprep.mubr.bf16.mxu0 0
  %350 = vmatmul.mubr.bf16.gmra.mrb[0].mxu0 %v240
  %v351 = vpop.f32.mrb[0].mxu0
  %v352 = vadd.f32 %v200, %v351
  %v353 = vpop.f32.mrb[0].mxu0
  %v354 = vpop.f32.mrb[0].mxu0
  %v355 = vadd.f32 %v200, %v354
  %v356 = vpop.f32.mrb[0].mxu0
  %357 = vmatprep.mubr.bf16.mxu0 0
  %358 = vmatmul.mubr.bf16.gmra.mrb[0].mxu0 %v243
  %v359 = vpop.f32.mrb[0].mxu0
  %v360 = vadd.f32 %v200, %v359
  %v361 = vpop.f32.mrb[0].mxu0
  %v362 = vpop.f32.mrb[0].mxu0
  %v363 = vadd.f32 %v200, %v362
  %v364 = vpop.f32.mrb[0].mxu0
  %365 = vmatprep.mubr.bf16.mxu0 0
  %366 = vmatmul.mubr.bf16.gmra.mrb[0].mxu0 %v246
  %v367 = vpop.f32.mrb[0].mxu0
  %v368 = vadd.f32 %v200, %v367
  %v369 = vpop.f32.mrb[0].mxu0
  %v370 = vpop.f32.mrb[0].mxu0
  %v371 = vadd.f32 %v200, %v370
  %v372 = vpop.f32.mrb[0].mxu0
  %373 = vmatprep.mubr.bf16.mxu0 0
  %374 = vmatmul.mubr.bf16.gmra.mrb[0].mxu0 %v249
  %v375 = vpop.f32.mrb[0].mxu0
  %v376 = vadd.f32 %v200, %v375
  %v377 = vpop.f32.mrb[0].mxu0
  %v378 = vpop.f32.mrb[0].mxu0
  %v379 = vadd.f32 %v200, %v378
  %v380 = vpop.f32.mrb[0].mxu0
  %381 = vmatprep.mubr.bf16.mxu0 0
  %382 = vmatmul.mubr.bf16.gmra.mrb[0].mxu0 %v252
  %v383 = vpop.f32.mrb[0].mxu0
  %v384 = vadd.f32 %v200, %v383
  %v385 = vpop.f32.mrb[0].mxu0
  %v386 = vpop.f32.mrb[0].mxu0
  %v387 = vadd.f32 %v200, %v386
  %v388 = vpop.f32.mrb[0].mxu0
  %389 = vmatprep.mubr.bf16.mxu0 0
  %390 = vmatmul.mubr.bf16.gmra.mrb[0].mxu0 %v255
  %v391 = vpop.f32.mrb[0].mxu0
  %v392 = vadd.f32 %v200, %v391
  %v393 = vpop.f32.mrb[0].mxu0
  %v394 = vpop.f32.mrb[0].mxu0
  %v395 = vadd.f32 %v200, %v394
  %v396 = vpop.f32.mrb[0].mxu0
  %397 = vmatprep.mubr.bf16.mxu0 0
  %398 = vmatmul.mubr.bf16.gmra.mrb[0].mxu0 %v258
  %v399 = vpop.f32.mrb[0].mxu0
  %v400 = vadd.f32 %v200, %v399
  %v401 = vpop.f32.mrb[0].mxu0
  %v402 = vpop.f32.mrb[0].mxu0
  %v403 = vadd.f32 %v200, %v402
  %v404 = vpop.f32.mrb[0].mxu0
  %405 = vmatprep.mubr.bf16.mxu0 0
  %406 = vmatmul.mubr.bf16.gmra.mrb[0].mxu0 %v261
  %v407 = vpop.f32.mrb[0].mxu0
  %v408 = vadd.f32 %v200, %v407
  %v409 = vpop.f32.mrb[0].mxu0
  %v410 = vpop.f32.mrb[0].mxu0
  %v411 = vadd.f32 %v200, %v410
  %v412 = vpop.f32.mrb[0].mxu0
  %413 = vmatprep.mubr.bf16.mxu0 0
  %414 = vmatmul.mubr.bf16.gmra.mrb[0].mxu0 %v264
  %v415 = vpop.f32.mrb[0].mxu0
  %v416 = vadd.f32 %v200, %v415
  %v417 = vpop.f32.mrb[0].mxu0
  %v418 = vpop.f32.mrb[0].mxu0
  %v419 = vadd.f32 %v200, %v418
  %v420 = vpop.f32.mrb[0].mxu0
  %421 = vmatprep.mubr.bf16.mxu0 0
  %422 = vmatmul.mubr.bf16.gmra.mrb[0].mxu0 %v267
  %v423 = vpop.f32.mrb[0].mxu0
  %v424 = vadd.f32 %v200, %v423
  %v425 = vpop.f32.mrb[0].mxu0
  %v426 = vpop.f32.mrb[0].mxu0
  %v427 = vadd.f32 %v200, %v426
  %v428 = vpop.f32.mrb[0].mxu0
  %429 = vdwg.mxu0
  %v430 = vmax.f32 %v304, 0.0
  %v431 = vmax.f32 %v307, 0.0
  %v432 = vmax.f32 %v312, 0.0
  %v433 = vmax.f32 %v315, 0.0
  %v434 = vmax.f32 %v320, 0.0
  %v435 = vmax.f32 %v323, 0.0
  %v436 = vmax.f32 %v328, 0.0
  %v437 = vmax.f32 %v331, 0.0
  %v438 = vmax.f32 %v336, 0.0
  %v439 = vmax.f32 %v339, 0.0
  %v440 = vmax.f32 %v344, 0.0
  %v441 = vmax.f32 %v347, 0.0
  %v442 = vmax.f32 %v352, 0.0
  %v443 = vmax.f32 %v355, 0.0
  %v444 = vmax.f32 %v360, 0.0
  %v445 = vmax.f32 %v363, 0.0
  %v446 = vmax.f32 %v368, 0.0
  %v447 = vmax.f32 %v371, 0.0
  %v448 = vmax.f32 %v376, 0.0
  %v449 = vmax.f32 %v379, 0.0
  %v450 = vmax.f32 %v384, 0.0
  %v451 = vmax.f32 %v387, 0.0
  %v452 = vmax.f32 %v392, 0.0
  %v453 = vmax.f32 %v395, 0.0
  %v454 = vmax.f32 %v400, 0.0
  %v455 = vmax.f32 %v403, 0.0
  %v456 = vmax.f32 %v408, 0.0
  %v457 = vmax.f32 %v411, 0.0
  %v458 = vmax.f32 %v416, 0.0
  %v459 = vmax.f32 %v419, 0.0
  %v460 = vmax.f32 %v424, 0.0
  %v461 = vmax.f32 %v427, 0.0
  %v462 = vpack.c.bf16 %v431, %v430
  %v463 = vpack.c.bf16 %v433, %v432
  %v464 = vpack.c.bf16 %v435, %v434
  %v465 = vpack.c.bf16 %v437, %v436
  %v466 = vpack.c.bf16 %v439, %v438
  %v467 = vpack.c.bf16 %v441, %v440
  %v468 = vpack.c.bf16 %v443, %v442
  %v469 = vpack.c.bf16 %v445, %v444
  %v470 = vpack.c.bf16 %v447, %v446
  %v471 = vpack.c.bf16 %v449, %v448
  %v472 = vpack.c.bf16 %v451, %v450
  %v473 = vpack.c.bf16 %v453, %v452
  %v474 = vpack.c.bf16 %v455, %v454
  %v475 = vpack.c.bf16 %v457, %v456
  %v476 = vpack.c.bf16 %v459, %v458
  %v477 = vpack.c.bf16 %v461, %v460
  %v478 = vld [vmem:[%s9] sm:$0xf]
  %v479 = vld [vmem:[%s9 + $0x4] sm:$0xf]
  %v480 = vld [vmem:[%s9 + $0x8] sm:$0xf]
  %v481 = vld [vmem:[%s9 + $0xc] sm:$0xf]
  %v482 = vld [vmem:[%s9 + $0x10] sm:$0xf]
  %v483 = vld [vmem:[%s9 + $0x14] sm:$0xf]
  %v484 = vld [vmem:[%s9 + $0x18] sm:$0xf]
  %v485 = vld [vmem:[%s9 + $0x1c] sm:$0xf]
  %v486 = vld [vmem:[%s11] sm:$0x1]
  %v488 = vlaneseq
  %v489 = vshrl.u32 %v488, 7
  %v490 = vsub.s32 0, %v489
  %v491 = vrot.slane %v486, %v490
  %v501 = vunpack.c.l.b16 %v478
  %v502 = vunpack.c.l.b16 %v479
  %v503 = vunpack.c.l.b16 %v480
  %v504 = vunpack.c.l.b16 %v481
  %v505 = vunpack.c.l.b16 %v482
  %v506 = vunpack.c.l.b16 %v483
  %v507 = vunpack.c.l.b16 %v484
  %v508 = vunpack.c.l.b16 %v485
  %v509 = vpack.c.b16 %v502, %v501
  %v510 = vpack.c.b16 %v504, %v503
  %v511 = vpack.c.b16 %v506, %v505
  %v512 = vpack.c.b16 %v508, %v507
  %vm517 = vcmask 523264
  %v519 = vsel %vm517, %v462, 0
  %v522 = vsel %vm517, %v463, 0
  %v525 = vsel %vm517, %v464, 0
  %v528 = vsel %vm517, %v465, 0
  %v531 = vsel %vm517, %v466, 0
  %v534 = vsel %vm517, %v467, 0
  %v537 = vsel %vm517, %v468, 0
  %v540 = vsel %vm517, %v469, 0
  %v543 = vsel %vm517, %v470, 0
  %v546 = vsel %vm517, %v471, 0
  %v549 = vsel %vm517, %v472, 0
  %v552 = vsel %vm517, %v473, 0
  %v555 = vsel %vm517, %v474, 0
  %v558 = vsel %vm517, %v475, 0
  %v561 = vsel %vm517, %v476, 0
  %v564 = vsel %vm517, %v477, 0
  %566 = vmatprep.subr.bf16.mxu0 0
  %567 = vmatpush1.bf16.msra.mxu0 %v509
  %568 = vmatprep.subr.bf16.mxu0 0
  %569 = vmatpush1.bf16.msra.mxu0 %v510
  %570 = vmatprep.subr.bf16.mxu0 0
  %571 = vmatpush1.bf16.msra.mxu0 %v511
  %572 = vmatprep.subr.bf16.mxu0 0
  %573 = vmatpush1.bf16.msra.mxu0 %v512
  %574 = vmatprep.subr.bf16.mxu0 0
  %575 = vmatpush1.bf16.msra.mxu0 0
  %576 = vmatprep.subr.bf16.mxu0 0
  %577 = vmatpush1.bf16.msra.mxu0 0
  %578 = vmatprep.subr.bf16.mxu0 0
  %579 = vmatpush1.bf16.msra.mxu0 0
  %580 = vmatprep.subr.bf16.mxu0 0
  %581 = vmatpush1.bf16.msra.mxu0 0
  %582 = vmatprep.subr.bf16.mxu0 0
  %583 = vmatpush1.bf16.msra.mxu0 0
  %584 = vmatprep.subr.bf16.mxu0 0
  %585 = vmatpush1.bf16.msra.mxu0 0
  %586 = vmatprep.subr.bf16.mxu0 0
  %587 = vmatpush1.bf16.msra.mxu0 0
  %588 = vmatprep.subr.bf16.mxu0 0
  %589 = vmatpush1.bf16.msra.mxu0 0
  %590 = vmatprep.subr.bf16.mxu0 0
  %591 = vmatpush1.bf16.msra.mxu0 0
  %592 = vmatprep.subr.bf16.mxu0 0
  %593 = vmatpush1.bf16.msra.mxu0 0
  %594 = vmatprep.subr.bf16.mxu0 0
  %595 = vmatpush1.bf16.msra.mxu0 0
  %596 = vmatprep.subr.bf16.mxu0 0
  %597 = vmatpush1.bf16.msra.mxu0 0
  %598 = vmatprep.mubr.bf16.mxu0 0
  %599 = vmatmul.mubr.bf16.gmra.mrb[0].mxu0 %v519
  %v600 = vpop.f32.mrb[0].mxu0
  %v601 = vadd.f32 %v491, %v600
  %v602 = vpop.f32.mrb[0].mxu0
  %v603 = vpop.f32.mrb[0].mxu0
  %v604 = vadd.f32 %v491, %v603
  %v605 = vpop.f32.mrb[0].mxu0
  %606 = vmatprep.mubr.bf16.mxu0 0
  %607 = vmatmul.mubr.bf16.gmra.mrb[0].mxu0 %v522
  %v608 = vpop.f32.mrb[0].mxu0
  %v609 = vadd.f32 %v491, %v608
  %v610 = vpop.f32.mrb[0].mxu0
  %v611 = vpop.f32.mrb[0].mxu0
  %v612 = vadd.f32 %v491, %v611
  %v613 = vpop.f32.mrb[0].mxu0
  %614 = vmatprep.mubr.bf16.mxu0 0
  %615 = vmatmul.mubr.bf16.gmra.mrb[0].mxu0 %v525
  %v616 = vpop.f32.mrb[0].mxu0
  %v617 = vadd.f32 %v491, %v616
  %v618 = vpop.f32.mrb[0].mxu0
  %v619 = vpop.f32.mrb[0].mxu0
  %v620 = vadd.f32 %v491, %v619
  %v621 = vpop.f32.mrb[0].mxu0
  %622 = vmatprep.mubr.bf16.mxu0 0
  %623 = vmatmul.mubr.bf16.gmra.mrb[0].mxu0 %v528
  %v624 = vpop.f32.mrb[0].mxu0
  %v625 = vadd.f32 %v491, %v624
  %v626 = vpop.f32.mrb[0].mxu0
  %v627 = vpop.f32.mrb[0].mxu0
  %v628 = vadd.f32 %v491, %v627
  %v629 = vpop.f32.mrb[0].mxu0
  %630 = vmatprep.mubr.bf16.mxu0 0
  %631 = vmatmul.mubr.bf16.gmra.mrb[0].mxu0 %v531
  %v632 = vpop.f32.mrb[0].mxu0
  %v633 = vadd.f32 %v491, %v632
  %v634 = vpop.f32.mrb[0].mxu0
  %v635 = vpop.f32.mrb[0].mxu0
  %v636 = vadd.f32 %v491, %v635
  %v637 = vpop.f32.mrb[0].mxu0
  %638 = vmatprep.mubr.bf16.mxu0 0
  %639 = vmatmul.mubr.bf16.gmra.mrb[0].mxu0 %v534
  %v640 = vpop.f32.mrb[0].mxu0
  %v641 = vadd.f32 %v491, %v640
  %v642 = vpop.f32.mrb[0].mxu0
  %v643 = vpop.f32.mrb[0].mxu0
  %v644 = vadd.f32 %v491, %v643
  %v645 = vpop.f32.mrb[0].mxu0
  %646 = vmatprep.mubr.bf16.mxu0 0
  %647 = vmatmul.mubr.bf16.gmra.mrb[0].mxu0 %v537
  %v648 = vpop.f32.mrb[0].mxu0
  %v649 = vadd.f32 %v491, %v648
  %v650 = vpop.f32.mrb[0].mxu0
  %v651 = vpop.f32.mrb[0].mxu0
  %v652 = vadd.f32 %v491, %v651
  %v653 = vpop.f32.mrb[0].mxu0
  %654 = vmatprep.mubr.bf16.mxu0 0
  %655 = vmatmul.mubr.bf16.gmra.mrb[0].mxu0 %v540
  %v656 = vpop.f32.mrb[0].mxu0
  %v657 = vadd.f32 %v491, %v656
  %v658 = vpop.f32.mrb[0].mxu0
  %v659 = vpop.f32.mrb[0].mxu0
  %v660 = vadd.f32 %v491, %v659
  %v661 = vpop.f32.mrb[0].mxu0
  %662 = vmatprep.mubr.bf16.mxu0 0
  %663 = vmatmul.mubr.bf16.gmra.mrb[0].mxu0 %v543
  %v664 = vpop.f32.mrb[0].mxu0
  %v665 = vadd.f32 %v491, %v664
  %v666 = vpop.f32.mrb[0].mxu0
  %v667 = vpop.f32.mrb[0].mxu0
  %v668 = vadd.f32 %v491, %v667
  %v669 = vpop.f32.mrb[0].mxu0
  %670 = vmatprep.mubr.bf16.mxu0 0
  %671 = vmatmul.mubr.bf16.gmra.mrb[0].mxu0 %v546
  %v672 = vpop.f32.mrb[0].mxu0
  %v673 = vadd.f32 %v491, %v672
  %v674 = vpop.f32.mrb[0].mxu0
  %v675 = vpop.f32.mrb[0].mxu0
  %v676 = vadd.f32 %v491, %v675
  %v677 = vpop.f32.mrb[0].mxu0
  %678 = vmatprep.mubr.bf16.mxu0 0
  %679 = vmatmul.mubr.bf16.gmra.mrb[0].mxu0 %v549
  %v680 = vpop.f32.mrb[0].mxu0
  %v681 = vadd.f32 %v491, %v680
  %v682 = vpop.f32.mrb[0].mxu0
  %v683 = vpop.f32.mrb[0].mxu0
  %v684 = vadd.f32 %v491, %v683
  %v685 = vpop.f32.mrb[0].mxu0
  %686 = vmatprep.mubr.bf16.mxu0 0
  %687 = vmatmul.mubr.bf16.gmra.mrb[0].mxu0 %v552
  %v688 = vpop.f32.mrb[0].mxu0
  %v689 = vadd.f32 %v491, %v688
  %v690 = vpop.f32.mrb[0].mxu0
  %v691 = vpop.f32.mrb[0].mxu0
  %v692 = vadd.f32 %v491, %v691
  %v693 = vpop.f32.mrb[0].mxu0
  %694 = vmatprep.mubr.bf16.mxu0 0
  %695 = vmatmul.mubr.bf16.gmra.mrb[0].mxu0 %v555
  %v696 = vpop.f32.mrb[0].mxu0
  %v697 = vadd.f32 %v491, %v696
  %v698 = vpop.f32.mrb[0].mxu0
  %v699 = vpop.f32.mrb[0].mxu0
  %v700 = vadd.f32 %v491, %v699
  %v701 = vpop.f32.mrb[0].mxu0
  %702 = vmatprep.mubr.bf16.mxu0 0
  %703 = vmatmul.mubr.bf16.gmra.mrb[0].mxu0 %v558
  %v704 = vpop.f32.mrb[0].mxu0
  %v705 = vadd.f32 %v491, %v704
  %v706 = vpop.f32.mrb[0].mxu0
  %v707 = vpop.f32.mrb[0].mxu0
  %v708 = vadd.f32 %v491, %v707
  %v709 = vpop.f32.mrb[0].mxu0
  %710 = vmatprep.mubr.bf16.mxu0 0
  %711 = vmatmul.mubr.bf16.gmra.mrb[0].mxu0 %v561
  %v712 = vpop.f32.mrb[0].mxu0
  %v713 = vadd.f32 %v491, %v712
  %v714 = vpop.f32.mrb[0].mxu0
  %v715 = vpop.f32.mrb[0].mxu0
  %v716 = vadd.f32 %v491, %v715
  %v717 = vpop.f32.mrb[0].mxu0
  %718 = vmatprep.mubr.bf16.mxu0 0
  %719 = vmatmul.mubr.bf16.gmra.mrb[0].mxu0 %v564
  %v720 = vpop.f32.mrb[0].mxu0
  %v721 = vadd.f32 %v491, %v720
  %v722 = vpop.f32.mrb[0].mxu0
  %v723 = vpop.f32.mrb[0].mxu0
  %v724 = vadd.f32 %v491, %v723
  %v725 = vpop.f32.mrb[0].mxu0
  %726 = vdwg.mxu0
  %v727 = vmax.f32 %v601, 0.0
  %v728 = vmax.f32 %v604, 0.0
  %v729 = vmax.f32 %v609, 0.0
  %v730 = vmax.f32 %v612, 0.0
  %v731 = vmax.f32 %v617, 0.0
  %v732 = vmax.f32 %v620, 0.0
  %v733 = vmax.f32 %v625, 0.0
  %v734 = vmax.f32 %v628, 0.0
  %v735 = vmax.f32 %v633, 0.0
  %v736 = vmax.f32 %v636, 0.0
  %v737 = vmax.f32 %v641, 0.0
  %v738 = vmax.f32 %v644, 0.0
  %v739 = vmax.f32 %v649, 0.0
  %v740 = vmax.f32 %v652, 0.0
  %v741 = vmax.f32 %v657, 0.0
  %v742 = vmax.f32 %v660, 0.0
  %v743 = vmax.f32 %v665, 0.0
  %v744 = vmax.f32 %v668, 0.0
  %v745 = vmax.f32 %v673, 0.0
  %v746 = vmax.f32 %v676, 0.0
  %v747 = vmax.f32 %v681, 0.0
  %v748 = vmax.f32 %v684, 0.0
  %v749 = vmax.f32 %v689, 0.0
  %v750 = vmax.f32 %v692, 0.0
  %v751 = vmax.f32 %v697, 0.0
  %v752 = vmax.f32 %v700, 0.0
  %v753 = vmax.f32 %v705, 0.0
  %v754 = vmax.f32 %v708, 0.0
  %v755 = vmax.f32 %v713, 0.0
  %v756 = vmax.f32 %v716, 0.0
  %v757 = vmax.f32 %v721, 0.0
  %v758 = vmax.f32 %v724, 0.0
  %v759 = vld [vmem:[%s13] sm:$0x1]
  %v761 = vlaneseq
  %v762 = vshrl.u32 %v761, 7
  %v763 = vsub.s32 0, %v762
  %v764 = vrot.slane %v759, %v763
  %v766 = vmul.f32 %v727, %v764
  %v767 = vmul.f32 %v728, %v764
  %v768 = vmul.f32 %v729, %v764
  %v769 = vmul.f32 %v730, %v764
  %v770 = vmul.f32 %v731, %v764
  %v771 = vmul.f32 %v732, %v764
  %v772 = vmul.f32 %v733, %v764
  %v773 = vmul.f32 %v734, %v764
  %v774 = vmul.f32 %v735, %v764
  %v775 = vmul.f32 %v736, %v764
  %v776 = vmul.f32 %v737, %v764
  %v777 = vmul.f32 %v738, %v764
  %v778 = vmul.f32 %v739, %v764
  %v779 = vmul.f32 %v740, %v764
  %v780 = vmul.f32 %v741, %v764
  %v781 = vmul.f32 %v742, %v764
  %v782 = vmul.f32 %v743, %v764
  %v783 = vmul.f32 %v744, %v764
  %v784 = vmul.f32 %v745, %v764
  %v785 = vmul.f32 %v746, %v764
  %v786 = vmul.f32 %v747, %v764
  %v787 = vmul.f32 %v748, %v764
  %v788 = vmul.f32 %v749, %v764
  %v789 = vmul.f32 %v750, %v764
  %v790 = vmul.f32 %v751, %v764
  %v791 = vmul.f32 %v752, %v764
  %v792 = vmul.f32 %v753, %v764
  %v793 = vmul.f32 %v754, %v764
  %v794 = vmul.f32 %v755, %v764
  %v795 = vmul.f32 %v756, %v764
  %v796 = vmul.f32 %v757, %v764
  %v797 = vmul.f32 %v758, %v764
  %vm798 = vcmask 261120
  %v799 = vsel %vm798, %v766, 0.0
  %800 = vadd.xlane.f32.xlu0 %v799
  %v801 = vpop.xlane.xlu0 %800
  %v802 = vsel %vm798, %v767, 0.0
  %803 = vadd.xlane.f32.xlu0 %v802
  %v804 = vpop.xlane.xlu0 %803
  %v805 = vsel %vm798, %v768, 0.0
  %806 = vadd.xlane.f32.xlu0 %v805
  %v807 = vpop.xlane.xlu0 %806
  %v808 = vsel %vm798, %v769, 0.0
  %809 = vadd.xlane.f32.xlu0 %v808
  %v810 = vpop.xlane.xlu0 %809
  %v811 = vsel %vm798, %v770, 0.0
  %812 = vadd.xlane.f32.xlu0 %v811
  %v813 = vpop.xlane.xlu0 %812
  %v814 = vsel %vm798, %v771, 0.0
  %815 = vadd.xlane.f32.xlu0 %v814
  %v816 = vpop.xlane.xlu0 %815
  %v817 = vsel %vm798, %v772, 0.0
  %818 = vadd.xlane.f32.xlu0 %v817
  %v819 = vpop.xlane.xlu0 %818
  %v820 = vsel %vm798, %v773, 0.0
  %821 = vadd.xlane.f32.xlu0 %v820
  %v822 = vpop.xlane.xlu0 %821
  %v823 = vsel %vm798, %v774, 0.0
  %824 = vadd.xlane.f32.xlu0 %v823
  %v825 = vpop.xlane.xlu0 %824
  %v826 = vsel %vm798, %v775, 0.0
  %827 = vadd.xlane.f32.xlu0 %v826
  %v828 = vpop.xlane.xlu0 %827
  %v829 = vsel %vm798, %v776, 0.0
  %830 = vadd.xlane.f32.xlu0 %v829
  %v831 = vpop.xlane.xlu0 %830
  %v832 = vsel %vm798, %v777, 0.0
  %833 = vadd.xlane.f32.xlu0 %v832
  %v834 = vpop.xlane.xlu0 %833
  %v835 = vsel %vm798, %v778, 0.0
  %836 = vadd.xlane.f32.xlu0 %v835
  %v837 = vpop.xlane.xlu0 %836
  %v838 = vsel %vm798, %v779, 0.0
  %839 = vadd.xlane.f32.xlu0 %v838
  %v840 = vpop.xlane.xlu0 %839
  %v841 = vsel %vm798, %v780, 0.0
  %842 = vadd.xlane.f32.xlu0 %v841
  %v843 = vpop.xlane.xlu0 %842
  %v844 = vsel %vm798, %v781, 0.0
  %845 = vadd.xlane.f32.xlu0 %v844
  %v846 = vpop.xlane.xlu0 %845
  %v847 = vsel %vm798, %v782, 0.0
  %848 = vadd.xlane.f32.xlu0 %v847
  %v849 = vpop.xlane.xlu0 %848
  %v850 = vsel %vm798, %v783, 0.0
  %851 = vadd.xlane.f32.xlu0 %v850
  %v852 = vpop.xlane.xlu0 %851
  %v853 = vsel %vm798, %v784, 0.0
  %854 = vadd.xlane.f32.xlu0 %v853
  %v855 = vpop.xlane.xlu0 %854
  %v856 = vsel %vm798, %v785, 0.0
  %857 = vadd.xlane.f32.xlu0 %v856
  %v858 = vpop.xlane.xlu0 %857
  %v859 = vsel %vm798, %v786, 0.0
  %860 = vadd.xlane.f32.xlu0 %v859
  %v861 = vpop.xlane.xlu0 %860
  %v862 = vsel %vm798, %v787, 0.0
  %863 = vadd.xlane.f32.xlu0 %v862
  %v864 = vpop.xlane.xlu0 %863
  %v865 = vsel %vm798, %v788, 0.0
  %866 = vadd.xlane.f32.xlu0 %v865
  %v867 = vpop.xlane.xlu0 %866
  %v868 = vsel %vm798, %v789, 0.0
  %869 = vadd.xlane.f32.xlu0 %v868
  %v870 = vpop.xlane.xlu0 %869
  %v871 = vsel %vm798, %v790, 0.0
  %872 = vadd.xlane.f32.xlu0 %v871
  %v873 = vpop.xlane.xlu0 %872
  %v874 = vsel %vm798, %v791, 0.0
  %875 = vadd.xlane.f32.xlu0 %v874
  %v876 = vpop.xlane.xlu0 %875
  %v877 = vsel %vm798, %v792, 0.0
  %878 = vadd.xlane.f32.xlu0 %v877
  %v879 = vpop.xlane.xlu0 %878
  %v880 = vsel %vm798, %v793, 0.0
  %881 = vadd.xlane.f32.xlu0 %v880
  %v882 = vpop.xlane.xlu0 %881
  %v883 = vsel %vm798, %v794, 0.0
  %884 = vadd.xlane.f32.xlu0 %v883
  %v885 = vpop.xlane.xlu0 %884
  %v886 = vsel %vm798, %v795, 0.0
  %887 = vadd.xlane.f32.xlu0 %v886
  %v888 = vpop.xlane.xlu0 %887
  %v889 = vsel %vm798, %v796, 0.0
  %890 = vadd.xlane.f32.xlu0 %v889
  %v891 = vpop.xlane.xlu0 %890
  %v892 = vsel %vm798, %v797, 0.0
  %893 = vadd.xlane.f32.xlu0 %v892
  %v894 = vpop.xlane.xlu0 %893
  %v895 = vld [vmem:[#allocation2] sm:$0x1]
  %v897 = vlaneseq
  %v898 = vshrl.u32 %v897, 7
  %v899 = vsub.s32 0, %v898
  %v900 = vrot.slane %v895, %v899
  %v902 = vadd.f32 %v801, %v900
  %v903 = vadd.f32 %v804, %v900
  %v904 = vadd.f32 %v807, %v900
  %v905 = vadd.f32 %v810, %v900
  %v906 = vadd.f32 %v813, %v900
  %v907 = vadd.f32 %v816, %v900
  %v908 = vadd.f32 %v819, %v900
  %v909 = vadd.f32 %v822, %v900
  %v910 = vadd.f32 %v825, %v900
  %v911 = vadd.f32 %v828, %v900
  %v912 = vadd.f32 %v831, %v900
  %v913 = vadd.f32 %v834, %v900
  %v914 = vadd.f32 %v837, %v900
  %v915 = vadd.f32 %v840, %v900
  %v916 = vadd.f32 %v843, %v900
  %v917 = vadd.f32 %v846, %v900
  %v918 = vadd.f32 %v849, %v900
  %v919 = vadd.f32 %v852, %v900
  %v920 = vadd.f32 %v855, %v900
  %v921 = vadd.f32 %v858, %v900
  %v922 = vadd.f32 %v861, %v900
  %v923 = vadd.f32 %v864, %v900
  %v924 = vadd.f32 %v867, %v900
  %v925 = vadd.f32 %v870, %v900
  %v926 = vadd.f32 %v873, %v900
  %v927 = vadd.f32 %v876, %v900
  %v928 = vadd.f32 %v879, %v900
  %v929 = vadd.f32 %v882, %v900
  %v930 = vadd.f32 %v885, %v900
  %v931 = vadd.f32 %v888, %v900
  %v932 = vadd.f32 %v891, %v900
  %v933 = vadd.f32 %v894, %v900
  %v934 = vxor.u32 %v902, 2147483648
  %v935 = vxor.u32 %v903, 2147483648
  %v936 = vxor.u32 %v904, 2147483648
  %v937 = vxor.u32 %v905, 2147483648
  %v938 = vxor.u32 %v906, 2147483648
  %v939 = vxor.u32 %v907, 2147483648
  %v940 = vxor.u32 %v908, 2147483648
  %v941 = vxor.u32 %v909, 2147483648
  %v942 = vxor.u32 %v910, 2147483648
  %v943 = vxor.u32 %v911, 2147483648
  %v944 = vxor.u32 %v912, 2147483648
  %v945 = vxor.u32 %v913, 2147483648
  %v946 = vxor.u32 %v914, 2147483648
  %v947 = vxor.u32 %v915, 2147483648
  %v948 = vxor.u32 %v916, 2147483648
  %v949 = vxor.u32 %v917, 2147483648
  %v950 = vxor.u32 %v918, 2147483648
  %v951 = vxor.u32 %v919, 2147483648
  %v952 = vxor.u32 %v920, 2147483648
  %v953 = vxor.u32 %v921, 2147483648
  %v954 = vxor.u32 %v922, 2147483648
  %v955 = vxor.u32 %v923, 2147483648
  %v956 = vxor.u32 %v924, 2147483648
  %v957 = vxor.u32 %v925, 2147483648
  %v958 = vxor.u32 %v926, 2147483648
  %v959 = vxor.u32 %v927, 2147483648
  %v960 = vxor.u32 %v928, 2147483648
  %v961 = vxor.u32 %v929, 2147483648
  %v962 = vxor.u32 %v930, 2147483648
  %v963 = vxor.u32 %v931, 2147483648
  %v964 = vxor.u32 %v932, 2147483648
  %v965 = vxor.u32 %v933, 2147483648
  %v966 = vmul.f32 %v934, 1.442695
  %v967 = vpow.pop %v966
  %v968 = vmul.f32 %v935, 1.442695
  %v969 = vpow.pop %v968
  %v970 = vmul.f32 %v936, 1.442695
  %v971 = vpow.pop %v970
  %v972 = vmul.f32 %v937, 1.442695
  %v973 = vpow.pop %v972
  %v974 = vmul.f32 %v938, 1.442695
  %v975 = vpow.pop %v974
  %v976 = vmul.f32 %v939, 1.442695
  %v977 = vpow.pop %v976
  %v978 = vmul.f32 %v940, 1.442695
  %v979 = vpow.pop %v978
  %v980 = vmul.f32 %v941, 1.442695
  %v981 = vpow.pop %v980
  %v982 = vmul.f32 %v942, 1.442695
  %v983 = vpow.pop %v982
  %v984 = vmul.f32 %v943, 1.442695
  %v985 = vpow.pop %v984
  %v986 = vmul.f32 %v944, 1.442695
  %v987 = vpow.pop %v986
  %v988 = vmul.f32 %v945, 1.442695
  %v989 = vpow.pop %v988
  %v990 = vmul.f32 %v946, 1.442695
  %v991 = vpow.pop %v990
  %v992 = vmul.f32 %v947, 1.442695
  %v993 = vpow.pop %v992
  %v994 = vmul.f32 %v948, 1.442695
  %v995 = vpow.pop %v994
  %v996 = vmul.f32 %v949, 1.442695
  %v997 = vpow.pop %v996
  %v998 = vmul.f32 %v950, 1.442695
  %v999 = vpow.pop %v998
  %v1000 = vmul.f32 %v951, 1.442695
  %v1001 = vpow.pop %v1000
  %v1002 = vmul.f32 %v952, 1.442695
  %v1003 = vpow.pop %v1002
  %v1004 = vmul.f32 %v953, 1.442695
  %v1005 = vpow.pop %v1004
  %v1006 = vmul.f32 %v954, 1.442695
  %v1007 = vpow.pop %v1006
  %v1008 = vmul.f32 %v955, 1.442695
  %v1009 = vpow.pop %v1008
  %v1010 = vmul.f32 %v956, 1.442695
  %v1011 = vpow.pop %v1010
  %v1012 = vmul.f32 %v957, 1.442695
  %v1013 = vpow.pop %v1012
  %v1014 = vmul.f32 %v958, 1.442695
  %v1015 = vpow.pop %v1014
  %v1016 = vmul.f32 %v959, 1.442695
  %v1017 = vpow.pop %v1016
  %v1018 = vmul.f32 %v960, 1.442695
  %v1019 = vpow.pop %v1018
  %v1020 = vmul.f32 %v961, 1.442695
  %v1021 = vpow.pop %v1020
  %v1022 = vmul.f32 %v962, 1.442695
  %v1023 = vpow.pop %v1022
  %v1024 = vmul.f32 %v963, 1.442695
  %v1025 = vpow.pop %v1024
  %v1026 = vmul.f32 %v964, 1.442695
  %v1027 = vpow.pop %v1026
  %v1028 = vmul.f32 %v965, 1.442695
  %v1029 = vpow.pop %v1028
  %v1030 = vadd.f32 %v967, 1.0
  %v1031 = vadd.f32 %v969, 1.0
  %v1032 = vadd.f32 %v971, 1.0
  %v1033 = vadd.f32 %v973, 1.0
  %v1034 = vadd.f32 %v975, 1.0
  %v1035 = vadd.f32 %v977, 1.0
  %v1036 = vadd.f32 %v979, 1.0
  %v1037 = vadd.f32 %v981, 1.0
  %v1038 = vadd.f32 %v983, 1.0
  %v1039 = vadd.f32 %v985, 1.0
  %v1040 = vadd.f32 %v987, 1.0
  %v1041 = vadd.f32 %v989, 1.0
  %v1042 = vadd.f32 %v991, 1.0
  %v1043 = vadd.f32 %v993, 1.0
  %v1044 = vadd.f32 %v995, 1.0
  %v1045 = vadd.f32 %v997, 1.0
  %v1046 = vadd.f32 %v999, 1.0
  %v1047 = vadd.f32 %v1001, 1.0
  %v1048 = vadd.f32 %v1003, 1.0
  %v1049 = vadd.f32 %v1005, 1.0
  %v1050 = vadd.f32 %v1007, 1.0
  %v1051 = vadd.f32 %v1009, 1.0
  %v1052 = vadd.f32 %v1011, 1.0
  %v1053 = vadd.f32 %v1013, 1.0
  %v1054 = vadd.f32 %v1015, 1.0
  %v1055 = vadd.f32 %v1017, 1.0
  %v1056 = vadd.f32 %v1019, 1.0
  %v1057 = vadd.f32 %v1021, 1.0
  %v1058 = vadd.f32 %v1023, 1.0
  %v1059 = vadd.f32 %v1025, 1.0
  %v1060 = vadd.f32 %v1027, 1.0
  %v1061 = vadd.f32 %v1029, 1.0
  %v1062 = vrcp.pop %v1030
  %v1063 = vmul.f32 1.0, %v1062
  %v1064 = vrcp.pop %v1031
  %v1065 = vmul.f32 1.0, %v1064
  %v1066 = vrcp.pop %v1032
  %v1067 = vmul.f32 1.0, %v1066
  %v1068 = vrcp.pop %v1033
  %v1069 = vmul.f32 1.0, %v1068
  %v1070 = vrcp.pop %v1034
  %v1071 = vmul.f32 1.0, %v1070
  %v1072 = vrcp.pop %v1035
  %v1073 = vmul.f32 1.0, %v1072
  %v1074 = vrcp.pop %v1036
  %v1075 = vmul.f32 1.0, %v1074
  %v1076 = vrcp.pop %v1037
  %v1077 = vmul.f32 1.0, %v1076
  %v1078 = vrcp.pop %v1038
  %v1079 = vmul.f32 1.0, %v1078
  %v1080 = vrcp.pop %v1039
  %v1081 = vmul.f32 1.0, %v1080
  %v1082 = vrcp.pop %v1040
  %v1083 = vmul.f32 1.0, %v1082
  %v1084 = vrcp.pop %v1041
  %v1085 = vmul.f32 1.0, %v1084
  %v1086 = vrcp.pop %v1042
  %v1087 = vmul.f32 1.0, %v1086
  %v1088 = vrcp.pop %v1043
  %v1089 = vmul.f32 1.0, %v1088
  %v1090 = vrcp.pop %v1044
  %v1091 = vmul.f32 1.0, %v1090
  %v1092 = vrcp.pop %v1045
  %v1093 = vmul.f32 1.0, %v1092
  %v1094 = vrcp.pop %v1046
  %v1095 = vmul.f32 1.0, %v1094
  %v1096 = vrcp.pop %v1047
  %v1097 = vmul.f32 1.0, %v1096
  %v1098 = vrcp.pop %v1048
  %v1099 = vmul.f32 1.0, %v1098
  %v1100 = vrcp.pop %v1049
  %v1101 = vmul.f32 1.0, %v1100
  %v1102 = vrcp.pop %v1050
  %v1103 = vmul.f32 1.0, %v1102
  %v1104 = vrcp.pop %v1051
  %v1105 = vmul.f32 1.0, %v1104
  %v1106 = vrcp.pop %v1052
  %v1107 = vmul.f32 1.0, %v1106
  %v1108 = vrcp.pop %v1053
  %v1109 = vmul.f32 1.0, %v1108
  %v1110 = vrcp.pop %v1054
  %v1111 = vmul.f32 1.0, %v1110
  %v1112 = vrcp.pop %v1055
  %v1113 = vmul.f32 1.0, %v1112
  %v1114 = vrcp.pop %v1056
  %v1115 = vmul.f32 1.0, %v1114
  %v1116 = vrcp.pop %v1057
  %v1117 = vmul.f32 1.0, %v1116
  %v1118 = vrcp.pop %v1058
  %v1119 = vmul.f32 1.0, %v1118
  %v1120 = vrcp.pop %v1059
  %v1121 = vmul.f32 1.0, %v1120
  %v1122 = vrcp.pop %v1060
  %v1123 = vmul.f32 1.0, %v1122
  %v1124 = vrcp.pop %v1061
  %v1125 = vmul.f32 1.0, %v1124
  %1127 = vset.pattern.permute.xlu0 0
  %1128 = vperm.xlu0 %1127, %v1063
  %v1129 = vpop.permute.xlu0 %1128
  %1132 = vset.pattern.permute.xlu0 0
  %1133 = vperm.xlu0 %1132, %v1065
  %v1134 = vpop.permute.xlu0 %1133
  %1137 = vset.pattern.permute.xlu0 0
  %1138 = vperm.xlu0 %1137, %v1067
  %v1139 = vpop.permute.xlu0 %1138
  %1142 = vset.pattern.permute.xlu0 0
  %1143 = vperm.xlu0 %1142, %v1069
  %v1144 = vpop.permute.xlu0 %1143
  %1147 = vset.pattern.permute.xlu0 0
  %1148 = vperm.xlu0 %1147, %v1071
  %v1149 = vpop.permute.xlu0 %1148
  %1152 = vset.pattern.permute.xlu0 0
  %1153 = vperm.xlu0 %1152, %v1073
  %v1154 = vpop.permute.xlu0 %1153
  %1157 = vset.pattern.permute.xlu0 0
  %1158 = vperm.xlu0 %1157, %v1075
  %v1159 = vpop.permute.xlu0 %1158
  %1162 = vset.pattern.permute.xlu0 0
  %1163 = vperm.xlu0 %1162, %v1077
  %v1164 = vpop.permute.xlu0 %1163
  %1167 = vset.pattern.permute.xlu0 0
  %1168 = vperm.xlu0 %1167, %v1079
  %v1169 = vpop.permute.xlu0 %1168
  %1172 = vset.pattern.permute.xlu0 0
  %1173 = vperm.xlu0 %1172, %v1081
  %v1174 = vpop.permute.xlu0 %1173
  %1177 = vset.pattern.permute.xlu0 0
  %1178 = vperm.xlu0 %1177, %v1083
  %v1179 = vpop.permute.xlu0 %1178
  %1182 = vset.pattern.permute.xlu0 0
  %1183 = vperm.xlu0 %1182, %v1085
  %v1184 = vpop.permute.xlu0 %1183
  %1187 = vset.pattern.permute.xlu0 0
  %1188 = vperm.xlu0 %1187, %v1087
  %v1189 = vpop.permute.xlu0 %1188
  %1192 = vset.pattern.permute.xlu0 0
  %1193 = vperm.xlu0 %1192, %v1089
  %v1194 = vpop.permute.xlu0 %1193
  %1197 = vset.pattern.permute.xlu0 0
  %1198 = vperm.xlu0 %1197, %v1091
  %v1199 = vpop.permute.xlu0 %1198
  %1202 = vset.pattern.permute.xlu0 0
  %1203 = vperm.xlu0 %1202, %v1093
  %v1204 = vpop.permute.xlu0 %1203
  %1207 = vset.pattern.permute.xlu0 0
  %1208 = vperm.xlu0 %1207, %v1095
  %v1209 = vpop.permute.xlu0 %1208
  %1212 = vset.pattern.permute.xlu0 0
  %1213 = vperm.xlu0 %1212, %v1097
  %v1214 = vpop.permute.xlu0 %1213
  %1217 = vset.pattern.permute.xlu0 0
  %1218 = vperm.xlu0 %1217, %v1099
  %v1219 = vpop.permute.xlu0 %1218
  %1222 = vset.pattern.permute.xlu0 0
  %1223 = vperm.xlu0 %1222, %v1101
  %v1224 = vpop.permute.xlu0 %1223
  %1227 = vset.pattern.permute.xlu0 0
  %1228 = vperm.xlu0 %1227, %v1103
  %v1229 = vpop.permute.xlu0 %1228
  %1232 = vset.pattern.permute.xlu0 0
  %1233 = vperm.xlu0 %1232, %v1105
  %v1234 = vpop.permute.xlu0 %1233
  %1237 = vset.pattern.permute.xlu0 0
  %1238 = vperm.xlu0 %1237, %v1107
  %v1239 = vpop.permute.xlu0 %1238
  %1242 = vset.pattern.permute.xlu0 0
  %1243 = vperm.xlu0 %1242, %v1109
  %v1244 = vpop.permute.xlu0 %1243
  %1247 = vset.pattern.permute.xlu0 0
  %1248 = vperm.xlu0 %1247, %v1111
  %v1249 = vpop.permute.xlu0 %1248
  %1252 = vset.pattern.permute.xlu0 0
  %1253 = vperm.xlu0 %1252, %v1113
  %v1254 = vpop.permute.xlu0 %1253
  %1257 = vset.pattern.permute.xlu0 0
  %1258 = vperm.xlu0 %1257, %v1115
  %v1259 = vpop.permute.xlu0 %1258
  %1262 = vset.pattern.permute.xlu0 0
  %1263 = vperm.xlu0 %1262, %v1117
  %v1264 = vpop.permute.xlu0 %1263
  %1267 = vset.pattern.permute.xlu0 0
  %1268 = vperm.xlu0 %1267, %v1119
  %v1269 = vpop.permute.xlu0 %1268
  %1272 = vset.pattern.permute.xlu0 0
  %1273 = vperm.xlu0 %1272, %v1121
  %v1274 = vpop.permute.xlu0 %1273
  %1277 = vset.pattern.permute.xlu0 0
  %1278 = vperm.xlu0 %1277, %v1123
  %v1279 = vpop.permute.xlu0 %1278
  %1282 = vset.pattern.permute.xlu0 0
  %1283 = vperm.xlu0 %1282, %v1125
  %v1284 = vpop.permute.xlu0 %1283
  %v1286 = vmul.f32 %v430, %v1129
  %v1287 = vmul.f32 %v431, %v1134
  %v1288 = vmul.f32 %v432, %v1139
  %v1289 = vmul.f32 %v433, %v1144
  %v1290 = vmul.f32 %v434, %v1149
  %v1291 = vmul.f32 %v435, %v1154
  %v1292 = vmul.f32 %v436, %v1159
  %v1293 = vmul.f32 %v437, %v1164
  %v1294 = vmul.f32 %v438, %v1169
  %v1295 = vmul.f32 %v439, %v1174
  %v1296 = vmul.f32 %v440, %v1179
  %v1297 = vmul.f32 %v441, %v1184
  %v1298 = vmul.f32 %v442, %v1189
  %v1299 = vmul.f32 %v443, %v1194
  %v1300 = vmul.f32 %v444, %v1199
  %v1301 = vmul.f32 %v445, %v1204
  %v1302 = vmul.f32 %v446, %v1209
  %v1303 = vmul.f32 %v447, %v1214
  %v1304 = vmul.f32 %v448, %v1219
  %v1305 = vmul.f32 %v449, %v1224
  %v1306 = vmul.f32 %v450, %v1229
  %v1307 = vmul.f32 %v451, %v1234
  %v1308 = vmul.f32 %v452, %v1239
  %v1309 = vmul.f32 %v453, %v1244
  %v1310 = vmul.f32 %v454, %v1249
  %v1311 = vmul.f32 %v455, %v1254
  %v1312 = vmul.f32 %v456, %v1259
  %v1313 = vmul.f32 %v457, %v1264
  %v1314 = vmul.f32 %v458, %v1269
  %v1315 = vmul.f32 %v459, %v1274
  %v1316 = vmul.f32 %v460, %v1279
  %v1317 = vmul.f32 %v461, %v1284
  %v1318 = vsel %vm517, %v1286, 0.0
  %v1319 = vsel %vm517, %v1287, 0.0
  %v1320 = vadd.f32 %v1318, %v1319
  %v1321 = vrot.slane %v1320, 4
  %v1322 = vadd.f32 %v1320, %v1321
  %v1323 = vrot.slane %v1322, 2
  %v1324 = vadd.f32 %v1322, %v1323
  %v1325 = vrot.slane %v1324, 1
  %v1326 = vadd.f32 %v1324, %v1325
  %v1327 = vsel %vm517, %v1288, 0.0
  %v1328 = vsel %vm517, %v1289, 0.0
  %v1329 = vadd.f32 %v1327, %v1328
  %v1330 = vrot.slane %v1329, 4
  %v1331 = vadd.f32 %v1329, %v1330
  %v1332 = vrot.slane %v1331, 2
  %v1333 = vadd.f32 %v1331, %v1332
  %v1334 = vrot.slane %v1333, 1
  %v1335 = vadd.f32 %v1333, %v1334
  %v1336 = vsel %vm517, %v1290, 0.0
  %v1337 = vsel %vm517, %v1291, 0.0
  %v1338 = vadd.f32 %v1336, %v1337
  %v1339 = vrot.slane %v1338, 4
  %v1340 = vadd.f32 %v1338, %v1339
  %v1341 = vrot.slane %v1340, 2
  %v1342 = vadd.f32 %v1340, %v1341
  %v1343 = vrot.slane %v1342, 1
  %v1344 = vadd.f32 %v1342, %v1343
  %v1345 = vsel %vm517, %v1292, 0.0
  %v1346 = vsel %vm517, %v1293, 0.0
  %v1347 = vadd.f32 %v1345, %v1346
  %v1348 = vrot.slane %v1347, 4
  %v1349 = vadd.f32 %v1347, %v1348
  %v1350 = vrot.slane %v1349, 2
  %v1351 = vadd.f32 %v1349, %v1350
  %v1352 = vrot.slane %v1351, 1
  %v1353 = vadd.f32 %v1351, %v1352
  %v1354 = vsel %vm517, %v1294, 0.0
  %v1355 = vsel %vm517, %v1295, 0.0
  %v1356 = vadd.f32 %v1354, %v1355
  %v1357 = vrot.slane %v1356, 4
  %v1358 = vadd.f32 %v1356, %v1357
  %v1359 = vrot.slane %v1358, 2
  %v1360 = vadd.f32 %v1358, %v1359
  %v1361 = vrot.slane %v1360, 1
  %v1362 = vadd.f32 %v1360, %v1361
  %v1363 = vsel %vm517, %v1296, 0.0
  %v1364 = vsel %vm517, %v1297, 0.0
  %v1365 = vadd.f32 %v1363, %v1364
  %v1366 = vrot.slane %v1365, 4
  %v1367 = vadd.f32 %v1365, %v1366
  %v1368 = vrot.slane %v1367, 2
  %v1369 = vadd.f32 %v1367, %v1368
  %v1370 = vrot.slane %v1369, 1
  %v1371 = vadd.f32 %v1369, %v1370
  %v1372 = vsel %vm517, %v1298, 0.0
  %v1373 = vsel %vm517, %v1299, 0.0
  %v1374 = vadd.f32 %v1372, %v1373
  %v1375 = vrot.slane %v1374, 4
  %v1376 = vadd.f32 %v1374, %v1375
  %v1377 = vrot.slane %v1376, 2
  %v1378 = vadd.f32 %v1376, %v1377
  %v1379 = vrot.slane %v1378, 1
  %v1380 = vadd.f32 %v1378, %v1379
  %v1381 = vsel %vm517, %v1300, 0.0
  %v1382 = vsel %vm517, %v1301, 0.0
  %v1383 = vadd.f32 %v1381, %v1382
  %v1384 = vrot.slane %v1383, 4
  %v1385 = vadd.f32 %v1383, %v1384
  %v1386 = vrot.slane %v1385, 2
  %v1387 = vadd.f32 %v1385, %v1386
  %v1388 = vrot.slane %v1387, 1
  %v1389 = vadd.f32 %v1387, %v1388
  %v1390 = vsel %vm517, %v1302, 0.0
  %v1391 = vsel %vm517, %v1303, 0.0
  %v1392 = vadd.f32 %v1390, %v1391
  %v1393 = vrot.slane %v1392, 4
  %v1394 = vadd.f32 %v1392, %v1393
  %v1395 = vrot.slane %v1394, 2
  %v1396 = vadd.f32 %v1394, %v1395
  %v1397 = vrot.slane %v1396, 1
  %v1398 = vadd.f32 %v1396, %v1397
  %v1399 = vsel %vm517, %v1304, 0.0
  %v1400 = vsel %vm517, %v1305, 0.0
  %v1401 = vadd.f32 %v1399, %v1400
  %v1402 = vrot.slane %v1401, 4
  %v1403 = vadd.f32 %v1401, %v1402
  %v1404 = vrot.slane %v1403, 2
  %v1405 = vadd.f32 %v1403, %v1404
  %v1406 = vrot.slane %v1405, 1
  %v1407 = vadd.f32 %v1405, %v1406
  %v1408 = vsel %vm517, %v1306, 0.0
  %v1409 = vsel %vm517, %v1307, 0.0
  %v1410 = vadd.f32 %v1408, %v1409
  %v1411 = vrot.slane %v1410, 4
  %v1412 = vadd.f32 %v1410, %v1411
  %v1413 = vrot.slane %v1412, 2
  %v1414 = vadd.f32 %v1412, %v1413
  %v1415 = vrot.slane %v1414, 1
  %v1416 = vadd.f32 %v1414, %v1415
  %v1417 = vsel %vm517, %v1308, 0.0
  %v1418 = vsel %vm517, %v1309, 0.0
  %v1419 = vadd.f32 %v1417, %v1418
  %v1420 = vrot.slane %v1419, 4
  %v1421 = vadd.f32 %v1419, %v1420
  %v1422 = vrot.slane %v1421, 2
  %v1423 = vadd.f32 %v1421, %v1422
  %v1424 = vrot.slane %v1423, 1
  %v1425 = vadd.f32 %v1423, %v1424
  %v1426 = vsel %vm517, %v1310, 0.0
  %v1427 = vsel %vm517, %v1311, 0.0
  %v1428 = vadd.f32 %v1426, %v1427
  %v1429 = vrot.slane %v1428, 4
  %v1430 = vadd.f32 %v1428, %v1429
  %v1431 = vrot.slane %v1430, 2
  %v1432 = vadd.f32 %v1430, %v1431
  %v1433 = vrot.slane %v1432, 1
  %v1434 = vadd.f32 %v1432, %v1433
  %v1435 = vsel %vm517, %v1312, 0.0
  %v1436 = vsel %vm517, %v1313, 0.0
  %v1437 = vadd.f32 %v1435, %v1436
  %v1438 = vrot.slane %v1437, 4
  %v1439 = vadd.f32 %v1437, %v1438
  %v1440 = vrot.slane %v1439, 2
  %v1441 = vadd.f32 %v1439, %v1440
  %v1442 = vrot.slane %v1441, 1
  %v1443 = vadd.f32 %v1441, %v1442
  %v1444 = vsel %vm517, %v1314, 0.0
  %v1445 = vsel %vm517, %v1315, 0.0
  %v1446 = vadd.f32 %v1444, %v1445
  %v1447 = vrot.slane %v1446, 4
  %v1448 = vadd.f32 %v1446, %v1447
  %v1449 = vrot.slane %v1448, 2
  %v1450 = vadd.f32 %v1448, %v1449
  %v1451 = vrot.slane %v1450, 1
  %v1452 = vadd.f32 %v1450, %v1451
  %v1453 = vsel %vm517, %v1316, 0.0
  %v1454 = vsel %vm517, %v1317, 0.0
  %v1455 = vadd.f32 %v1453, %v1454
  %v1456 = vrot.slane %v1455, 4
  %v1457 = vadd.f32 %v1455, %v1456
  %v1458 = vrot.slane %v1457, 2
  %v1459 = vadd.f32 %v1457, %v1458
  %v1460 = vrot.slane %v1459, 1
  %v1461 = vadd.f32 %v1459, %v1460
  %v1462 = vrcp.pop 16.0
  %v1463 = vmul.f32 %v1326, %v1462
  %v1464 = vmul.f32 %v1335, %v1462
  %v1465 = vmul.f32 %v1344, %v1462
  %v1466 = vmul.f32 %v1353, %v1462
  %v1467 = vmul.f32 %v1362, %v1462
  %v1468 = vmul.f32 %v1371, %v1462
  %v1469 = vmul.f32 %v1380, %v1462
  %v1470 = vmul.f32 %v1389, %v1462
  %v1471 = vmul.f32 %v1398, %v1462
  %v1472 = vmul.f32 %v1407, %v1462
  %v1473 = vmul.f32 %v1416, %v1462
  %v1474 = vmul.f32 %v1425, %v1462
  %v1475 = vmul.f32 %v1434, %v1462
  %v1476 = vmul.f32 %v1443, %v1462
  %v1477 = vmul.f32 %v1452, %v1462
  %v1478 = vmul.f32 %v1461, %v1462
  %v1479 = vpack.c.bf16 %v1463, %v1463
  %v1480 = vpack.c.bf16 %v1464, %v1464
  %v1481 = vpack.c.bf16 %v1465, %v1465
  %v1482 = vpack.c.bf16 %v1466, %v1466
  %v1483 = vpack.c.bf16 %v1467, %v1467
  %v1484 = vpack.c.bf16 %v1468, %v1468
  %v1485 = vpack.c.bf16 %v1469, %v1469
  %v1486 = vpack.c.bf16 %v1470, %v1470
  %v1487 = vpack.c.bf16 %v1471, %v1471
  %v1488 = vpack.c.bf16 %v1472, %v1472
  %v1489 = vpack.c.bf16 %v1473, %v1473
  %v1490 = vpack.c.bf16 %v1474, %v1474
  %v1491 = vpack.c.bf16 %v1475, %v1475
  %v1492 = vpack.c.bf16 %v1476, %v1476
  %v1493 = vpack.c.bf16 %v1477, %v1477
  %v1494 = vpack.c.bf16 %v1478, %v1478
  %v1495 = vld [vmem:[%s17] sm:$0xf]
  %v1496 = vld [vmem:[%s17 + $0x4] sm:$0xf]
  %v1497 = vld [vmem:[%s17 + $0x8] sm:$0xf]
  %v1498 = vld [vmem:[%s17 + $0xc] sm:$0xf]
  %v1499 = vld [vmem:[%s17 + $0x10] sm:$0xf]
  %v1500 = vld [vmem:[%s17 + $0x14] sm:$0xf]
  %v1501 = vld [vmem:[%s17 + $0x18] sm:$0xf]
  %v1502 = vld [vmem:[%s17 + $0x1c] sm:$0xf]
  %v1503 = vld [vmem:[%s19] sm:$0x1]
  %v1505 = vlaneseq
  %v1506 = vshrl.u32 %v1505, 7
  %v1507 = vsub.s32 0, %v1506
  %v1508 = vrot.slane %v1503, %v1507
  %v1526 = vunpack.c.l.b16 %v1479
  %v1527 = vunpack.c.l.b16 %v1480
  %v1528 = vunpack.c.l.b16 %v1481
  %v1529 = vunpack.c.l.b16 %v1482
  %v1530 = vunpack.c.l.b16 %v1483
  %v1531 = vunpack.c.l.b16 %v1484
  %v1532 = vunpack.c.l.b16 %v1485
  %v1533 = vunpack.c.l.b16 %v1486
  %v1534 = vunpack.c.l.b16 %v1487
  %v1535 = vunpack.c.l.b16 %v1488
  %v1536 = vunpack.c.l.b16 %v1489
  %v1537 = vunpack.c.l.b16 %v1490
  %v1538 = vunpack.c.l.b16 %v1491
  %v1539 = vunpack.c.l.b16 %v1492
  %v1540 = vunpack.c.l.b16 %v1493
  %v1541 = vunpack.c.l.b16 %v1494
  %vm1542 = vcmask 1041409
  %v1543 = vsel %vm1542, %v1527, %v1526
  %vm1544 = vcmask 1042434
  %v1545 = vsel %vm1544, %v1528, %v1543
  %vm1546 = vcmask 1043459
  %v1547 = vsel %vm1546, %v1529, %v1545
  %vm1548 = vcmask 1044484
  %v1549 = vsel %vm1548, %v1530, %v1547
  %vm1550 = vcmask 1045509
  %v1551 = vsel %vm1550, %v1531, %v1549
  %vm1552 = vcmask 1046534
  %v1553 = vsel %vm1552, %v1532, %v1551
  %vm1554 = vcmask 1047559
  %v1555 = vsel %vm1554, %v1533, %v1553
  %v1556 = vsel %vm1542, %v1535, %v1534
  %v1557 = vsel %vm1544, %v1536, %v1556
  %v1558 = vsel %vm1546, %v1537, %v1557
  %v1559 = vsel %vm1548, %v1538, %v1558
  %v1560 = vsel %vm1550, %v1539, %v1559
  %v1561 = vsel %vm1552, %v1540, %v1560
  %v1562 = vsel %vm1554, %v1541, %v1561
  %v1563 = vpack.c.b16 %v1562, %v1555
  %v1572 = vunpack.c.l.b16 %v1495
  %v1573 = vunpack.c.l.b16 %v1496
  %v1574 = vunpack.c.l.b16 %v1497
  %v1575 = vunpack.c.l.b16 %v1498
  %v1576 = vunpack.c.l.b16 %v1499
  %v1577 = vunpack.c.l.b16 %v1500
  %v1578 = vunpack.c.l.b16 %v1501
  %v1579 = vunpack.c.l.b16 %v1502
  %v1580 = vpack.c.b16 %v1573, %v1572
  %v1581 = vpack.c.b16 %v1575, %v1574
  %v1582 = vpack.c.b16 %v1577, %v1576
  %v1583 = vpack.c.b16 %v1579, %v1578
  %v1589 = vsel %vm517, %v1563, 0
  %1591 = vmatprep.subr.bf16.mxu0 0
  %1592 = vmatpush1.bf16.msra.mxu0 %v1580
  %1593 = vmatprep.subr.bf16.mxu0 0
  %1594 = vmatpush1.bf16.msra.mxu0 %v1581
  %1595 = vmatprep.subr.bf16.mxu0 0
  %1596 = vmatpush1.bf16.msra.mxu0 %v1582
  %1597 = vmatprep.subr.bf16.mxu0 0
  %1598 = vmatpush1.bf16.msra.mxu0 %v1583
  %1599 = vmatprep.subr.bf16.mxu0 0
  %1600 = vmatpush1.bf16.msra.mxu0 0
  %1601 = vmatprep.subr.bf16.mxu0 0
  %1602 = vmatpush1.bf16.msra.mxu0 0
  %1603 = vmatprep.subr.bf16.mxu0 0
  %1604 = vmatpush1.bf16.msra.mxu0 0
  %1605 = vmatprep.subr.bf16.mxu0 0
  %1606 = vmatpush1.bf16.msra.mxu0 0
  %1607 = vmatprep.subr.bf16.mxu0 0
  %1608 = vmatpush1.bf16.msra.mxu0 0
  %1609 = vmatprep.subr.bf16.mxu0 0
  %1610 = vmatpush1.bf16.msra.mxu0 0
  %1611 = vmatprep.subr.bf16.mxu0 0
  %1612 = vmatpush1.bf16.msra.mxu0 0
  %1613 = vmatprep.subr.bf16.mxu0 0
  %1614 = vmatpush1.bf16.msra.mxu0 0
  %1615 = vmatprep.subr.bf16.mxu0 0
  %1616 = vmatpush1.bf16.msra.mxu0 0
  %1617 = vmatprep.subr.bf16.mxu0 0
  %1618 = vmatpush1.bf16.msra.mxu0 0
  %1619 = vmatprep.subr.bf16.mxu0 0
  %1620 = vmatpush1.bf16.msra.mxu0 0
  %1621 = vmatprep.subr.bf16.mxu0 0
  %1622 = vmatpush1.bf16.msra.mxu0 0
  %1623 = vmatprep.mubr.bf16.mxu0 0
  %1624 = vmatmul.mubr.bf16.gmra.mrb[0].mxu0 %v1589
  %v1625 = vpop.f32.mrb[0].mxu0
  %v1626 = vadd.f32 %v1508, %v1625
  %v1627 = vpop.f32.mrb[0].mxu0
  %v1628 = vpop.f32.mrb[0].mxu0
  %v1629 = vadd.f32 %v1508, %v1628
  %v1630 = vpop.f32.mrb[0].mxu0
  %1631 = vdwg.mxu0
  %v1632 = vld [vmem:[%s3] sm:$0xff]
  %v1633 = vld [vmem:[%s3 + $0x8] sm:$0xff]
  %v1634 = vadd.f32 %v1626, %v1632
  %v1635 = vadd.f32 %v1629, %v1633
  %v1636 = vpack.c.bf16 %v1635, %v1634
  %v1637 = vld [vmem:[%s21] sm:$0xf]
  %v1638 = vld [vmem:[%s21 + $0x4] sm:$0xf]
  %v1639 = vld [vmem:[%s21 + $0x8] sm:$0xf]
  %v1640 = vld [vmem:[%s21 + $0xc] sm:$0xf]
  %v1641 = vld [vmem:[%s23] sm:$0x1]
  %v1643 = vlaneseq
  %v1644 = vshrl.u32 %v1643, 7
  %v1645 = vsub.s32 0, %v1644
  %v1646 = vrot.slane %v1641, %v1645
  %v1652 = vunpack.c.l.b16 %v1637
  %v1653 = vunpack.c.l.b16 %v1638
  %v1654 = vunpack.c.l.b16 %v1639
  %v1655 = vunpack.c.l.b16 %v1640
  %v1656 = vpack.c.b16 %v1653, %v1652
  %v1657 = vpack.c.b16 %v1655, %v1654
  %v1661 = vsel %vm798, %v1636, 0
  %1663 = vmatprep.subr.bf16.mxu0 0
  %1664 = vmatpush1.bf16.msra.mxu0 %v1656
  %1665 = vmatprep.subr.bf16.mxu0 0
  %1666 = vmatpush1.bf16.msra.mxu0 %v1657
  %1667 = vmatprep.subr.bf16.mxu0 0
  %1668 = vmatpush1.bf16.msra.mxu0 0
  %1669 = vmatprep.subr.bf16.mxu0 0
  %1670 = vmatpush1.bf16.msra.mxu0 0
  %1671 = vmatprep.subr.bf16.mxu0 0
  %1672 = vmatpush1.bf16.msra.mxu0 0
  %1673 = vmatprep.subr.bf16.mxu0 0
  %1674 = vmatpush1.bf16.msra.mxu0 0
  %1675 = vmatprep.subr.bf16.mxu0 0
  %1676 = vmatpush1.bf16.msra.mxu0 0
  %1677 = vmatprep.subr.bf16.mxu0 0
  %1678 = vmatpush1.bf16.msra.mxu0 0
  %1679 = vmatprep.subr.bf16.mxu0 0
  %1680 = vmatpush1.bf16.msra.mxu0 0
  %1681 = vmatprep.subr.bf16.mxu0 0
  %1682 = vmatpush1.bf16.msra.mxu0 0
  %1683 = vmatprep.subr.bf16.mxu0 0
  %1684 = vmatpush1.bf16.msra.mxu0 0
  %1685 = vmatprep.subr.bf16.mxu0 0
  %1686 = vmatpush1.bf16.msra.mxu0 0
  %1687 = vmatprep.subr.bf16.mxu0 0
  %1688 = vmatpush1.bf16.msra.mxu0 0
  %1689 = vmatprep.subr.bf16.mxu0 0
  %1690 = vmatpush1.bf16.msra.mxu0 0
  %1691 = vmatprep.subr.bf16.mxu0 0
  %1692 = vmatpush1.bf16.msra.mxu0 0
  %1693 = vmatprep.subr.bf16.mxu0 0
  %1694 = vmatpush1.bf16.msra.mxu0 0
  %1695 = vmatprep.mubr.bf16.mxu0 0
  %1696 = vmatmul.mubr.bf16.gmra.mrb[0].mxu0 %v1661
  %v1697 = vpop.f32.mrb[0].mxu0
  %v1698 = vadd.f32 %v1646, %v1697
  %v1699 = vpop.f32.mrb[0].mxu0
  %v1700 = vpop.f32.mrb[0].mxu0
  %v1701 = vadd.f32 %v1646, %v1700
  %v1702 = vpop.f32.mrb[0].mxu0
  %1703 = vdwg.mxu0
  %v1704 = vpack.c.bf16 %v1701, %v1698
  %v1706 = vcombine.high %v1704, %v1704
  %v1708 = vunpack.c.l.s4 1966171168
  %v1709 = vunpack.c.0.s8 %v1708
  %v1710 = vlaneseq
  %v1711 = vshrl.u32 %v1710, 7
  %v1712 = vsub.s32 %v1709, %v1711
  %v1713 = vrot.slane %v1704, %v1712
  %v1715 = vunpack.c.l.s4 1966171168
  %v1716 = vunpack.c.0.s8 %v1715
  %v1717 = vlaneseq
  %v1718 = vshrl.u32 %v1717, 7
  %v1719 = vsub.s32 %v1716, %v1718
  %v1720 = vrot.slane %v1706, %v1719
  %v1721 = vcombine.high %v1713, %v1713
  %v1722 = vcombine.high %v1720, %v1720
  %v1724 = vunpack.c.l.s4 1966171168
  %v1725 = vunpack.c.0.s8 %v1724
  %v1726 = vlaneseq
  %v1727 = vshrl.u32 %v1726, 7
  %v1728 = vsub.s32 %v1725, %v1727
  %v1729 = vrot.slane %v1713, %v1728
  %v1731 = vunpack.c.l.s4 1966171168
  %v1732 = vunpack.c.0.s8 %v1731
  %v1733 = vlaneseq
  %v1734 = vshrl.u32 %v1733, 7
  %v1735 = vsub.s32 %v1732, %v1734
  %v1736 = vrot.slane %v1720, %v1735
  %v1738 = vunpack.c.l.s4 1966171168
  %v1739 = vunpack.c.0.s8 %v1738
  %v1740 = vlaneseq
  %v1741 = vshrl.u32 %v1740, 7
  %v1742 = vsub.s32 %v1739, %v1741
  %v1743 = vrot.slane %v1721, %v1742
  %v1745 = vunpack.c.l.s4 1966171168
  %v1746 = vunpack.c.0.s8 %v1745
  %v1747 = vlaneseq
  %v1748 = vshrl.u32 %v1747, 7
  %v1749 = vsub.s32 %v1746, %v1748
  %v1750 = vrot.slane %v1722, %v1749
  %v1751 = vcombine.high %v1729, %v1729
  %v1752 = vcombine.high %v1736, %v1736
  %v1753 = vcombine.high %v1743, %v1743
  %v1754 = vcombine.high %v1750, %v1750
  %v1756 = vunpack.c.l.s4 1966171168
  %v1757 = vunpack.c.0.s8 %v1756
  %v1758 = vlaneseq
  %v1759 = vshrl.u32 %v1758, 7
  %v1760 = vsub.s32 %v1757, %v1759
  %v1761 = vrot.slane %v1729, %v1760
  %v1763 = vunpack.c.l.s4 1966171168
  %v1764 = vunpack.c.0.s8 %v1763
  %v1765 = vlaneseq
  %v1766 = vshrl.u32 %v1765, 7
  %v1767 = vsub.s32 %v1764, %v1766
  %v1768 = vrot.slane %v1761, %v1767
  %1769 = vrot.lane.b32.xlu0 %v1768, 96
  %v1770 = vpop.permute.xlu0 %1769
  %vm1771 = vcmask 64512
  %v1773 = vsel %vm1771, %v1729, 0
  %v1776 = vsel %vm1771, %v1770, 0
  %1778 = vmatprep.subr.bf16.mxu0 0
  %1779 = vmatpush1.bf16.xpose.msra.mxu0 %v1776
  %1780 = vmatprep.subr.bf16.mxu0 0
  %1781 = vmatpush1.bf16.xpose.msra.mxu0 0
  %1782 = vmatprep.subr.bf16.mxu0 0
  %1783 = vmatpush1.bf16.xpose.msra.mxu0 0
  %1784 = vmatprep.subr.bf16.mxu0 0
  %1785 = vmatpush1.bf16.xpose.msra.mxu0 0
  %1786 = vmatprep.subr.bf16.mxu0 0
  %1787 = vmatpush1.bf16.xpose.msra.mxu0 0
  %1788 = vmatprep.subr.bf16.mxu0 0
  %1789 = vmatpush1.bf16.xpose.msra.mxu0 0
  %1790 = vmatprep.subr.bf16.mxu0 0
  %1791 = vmatpush1.bf16.xpose.msra.mxu0 0
  %1792 = vmatprep.subr.bf16.mxu0 0
  %1793 = vmatpush1.bf16.xpose.msra.mxu0 0
  %1794 = vmatprep.subr.bf16.mxu0 0
  %1795 = vmatpush1.bf16.xpose.msra.mxu0 0
  %1796 = vmatprep.subr.bf16.mxu0 0
  %1797 = vmatpush1.bf16.xpose.msra.mxu0 0
  %1798 = vmatprep.subr.bf16.mxu0 0
  %1799 = vmatpush1.bf16.xpose.msra.mxu0 0
  %1800 = vmatprep.subr.bf16.mxu0 0
  %1801 = vmatpush1.bf16.xpose.msra.mxu0 0
  %1802 = vmatprep.subr.bf16.mxu0 0
  %1803 = vmatpush1.bf16.xpose.msra.mxu0 0
  %1804 = vmatprep.subr.bf16.mxu0 0
  %1805 = vmatpush1.bf16.xpose.msra.mxu0 0
  %1806 = vmatprep.subr.bf16.mxu0 0
  %1807 = vmatpush1.bf16.xpose.msra.mxu0 0
  %1808 = vmatprep.subr.bf16.mxu0 0
  %1809 = vmatpush1.bf16.xpose.msra.mxu0 0
  %1810 = vmatprep.mubr.bf16.mxu0 0
  %1811 = vmatmul.mubr.bf16.gmra.mrb[0].mxu0 %v1773
  %v1812 = vpop.f32.mrb[0].mxu0
  %v1813 = vadd.f32 0.0, %v1812
  %v1814 = vpop.f32.mrb[0].mxu0
  %v1815 = vpop.f32.mrb[0].mxu0
  %v1816 = vpop.f32.mrb[0].mxu0
  %1817 = vdwg.mxu0
  %v1819 = vunpack.c.l.s4 1966171168
  %v1820 = vunpack.c.0.s8 %v1819
  %v1821 = vlaneseq
  %v1822 = vshrl.u32 %v1821, 7
  %v1823 = vsub.s32 %v1820, %v1822
  %v1824 = vrot.slane %v1743, %v1823
  %v1826 = vunpack.c.l.s4 1966171168
  %v1827 = vunpack.c.0.s8 %v1826
  %v1828 = vlaneseq
  %v1829 = vshrl.u32 %v1828, 7
  %v1830 = vsub.s32 %v1827, %v1829
  %v1831 = vrot.slane %v1824, %v1830
  %1832 = vrot.lane.b32.xlu0 %v1831, 96
  %v1833 = vpop.permute.xlu0 %1832
  %v1835 = vsel %vm1771, %v1743, 0
  %v1838 = vsel %vm1771, %v1833, 0
  %1840 = vmatprep.subr.bf16.mxu0 0
  %1841 = vmatpush1.bf16.xpose.msra.mxu0 %v1838
  %1842 = vmatprep.subr.bf16.mxu0 0
  %1843 = vmatpush1.bf16.xpose.msra.mxu0 0
  %1844 = vmatprep.subr.bf16.mxu0 0
  %1845 = vmatpush1.bf16.xpose.msra.mxu0 0
  %1846 = vmatprep.subr.bf16.mxu0 0
  %1847 = vmatpush1.bf16.xpose.msra.mxu0 0
  %1848 = vmatprep.subr.bf16.mxu0 0
  %1849 = vmatpush1.bf16.xpose.msra.mxu0 0
  %1850 = vmatprep.subr.bf16.mxu0 0
  %1851 = vmatpush1.bf16.xpose.msra.mxu0 0
  %1852 = vmatprep.subr.bf16.mxu0 0
  %1853 = vmatpush1.bf16.xpose.msra.mxu0 0
  %1854 = vmatprep.subr.bf16.mxu0 0
  %1855 = vmatpush1.bf16.xpose.msra.mxu0 0
  %1856 = vmatprep.subr.bf16.mxu0 0
  %1857 = vmatpush1.bf16.xpose.msra.mxu0 0
  %1858 = vmatprep.subr.bf16.mxu0 0
  %1859 = vmatpush1.bf16.xpose.msra.mxu0 0
  %1860 = vmatprep.subr.bf16.mxu0 0
  %1861 = vmatpush1.bf16.xpose.msra.mxu0 0
  %1862 = vmatprep.subr.bf16.mxu0 0
  %1863 = vmatpush1.bf16.xpose.msra.mxu0 0
  %1864 = vmatprep.subr.bf16.mxu0 0
  %1865 = vmatpush1.bf16.xpose.msra.mxu0 0
  %1866 = vmatprep.subr.bf16.mxu0 0
  %1867 = vmatpush1.bf16.xpose.msra.mxu0 0
  %1868 = vmatprep.subr.bf16.mxu0 0
  %1869 = vmatpush1.bf16.xpose.msra.mxu0 0
  %1870 = vmatprep.subr.bf16.mxu0 0
  %1871 = vmatpush1.bf16.xpose.msra.mxu0 0
  %1872 = vmatprep.mubr.bf16.mxu0 0
  %1873 = vmatmul.mubr.bf16.gmra.mrb[0].mxu0 %v1835
  %v1874 = vpop.f32.mrb[0].mxu0
  %v1875 = vadd.f32 0.0, %v1874
  %v1876 = vpop.f32.mrb[0].mxu0
  %v1877 = vpop.f32.mrb[0].mxu0
  %v1878 = vpop.f32.mrb[0].mxu0
  %1879 = vdwg.mxu0
  %v1881 = vunpack.c.l.s4 1966171168
  %v1882 = vunpack.c.0.s8 %v1881
  %v1883 = vlaneseq
  %v1884 = vshrl.u32 %v1883, 7
  %v1885 = vsub.s32 %v1882, %v1884
  %v1886 = vrot.slane %v1751, %v1885
  %v1888 = vunpack.c.l.s4 1966171168
  %v1889 = vunpack.c.0.s8 %v1888
  %v1890 = vlaneseq
  %v1891 = vshrl.u32 %v1890, 7
  %v1892 = vsub.s32 %v1889, %v1891
  %v1893 = vrot.slane %v1886, %v1892
  %1894 = vrot.lane.b32.xlu0 %v1893, 96
  %v1895 = vpop.permute.xlu0 %1894
  %v1897 = vsel %vm1771, %v1751, 0
  %v1900 = vsel %vm1771, %v1895, 0
  %1902 = vmatprep.subr.bf16.mxu0 0
  %1903 = vmatpush1.bf16.xpose.msra.mxu0 %v1900
  %1904 = vmatprep.subr.bf16.mxu0 0
  %1905 = vmatpush1.bf16.xpose.msra.mxu0 0
  %1906 = vmatprep.subr.bf16.mxu0 0
  %1907 = vmatpush1.bf16.xpose.msra.mxu0 0
  %1908 = vmatprep.subr.bf16.mxu0 0
  %1909 = vmatpush1.bf16.xpose.msra.mxu0 0
  %1910 = vmatprep.subr.bf16.mxu0 0
  %1911 = vmatpush1.bf16.xpose.msra.mxu0 0
  %1912 = vmatprep.subr.bf16.mxu0 0
  %1913 = vmatpush1.bf16.xpose.msra.mxu0 0
  %1914 = vmatprep.subr.bf16.mxu0 0
  %1915 = vmatpush1.bf16.xpose.msra.mxu0 0
  %1916 = vmatprep.subr.bf16.mxu0 0
  %1917 = vmatpush1.bf16.xpose.msra.mxu0 0
  %1918 = vmatprep.subr.bf16.mxu0 0
  %1919 = vmatpush1.bf16.xpose.msra.mxu0 0
  %1920 = vmatprep.subr.bf16.mxu0 0
  %1921 = vmatpush1.bf16.xpose.msra.mxu0 0
  %1922 = vmatprep.subr.bf16.mxu0 0
  %1923 = vmatpush1.bf16.xpose.msra.mxu0 0
  %1924 = vmatprep.subr.bf16.mxu0 0
  %1925 = vmatpush1.bf16.xpose.msra.mxu0 0
  %1926 = vmatprep.subr.bf16.mxu0 0
  %1927 = vmatpush1.bf16.xpose.msra.mxu0 0
  %1928 = vmatprep.subr.bf16.mxu0 0
  %1929 = vmatpush1.bf16.xpose.msra.mxu0 0
  %1930 = vmatprep.subr.bf16.mxu0 0
  %1931 = vmatpush1.bf16.xpose.msra.mxu0 0
  %1932 = vmatprep.subr.bf16.mxu0 0
  %1933 = vmatpush1.bf16.xpose.msra.mxu0 0
  %1934 = vmatprep.mubr.bf16.mxu0 0
  %1935 = vmatmul.mubr.bf16.gmra.mrb[0].mxu0 %v1897
  %v1936 = vpop.f32.mrb[0].mxu0
  %v1937 = vadd.f32 0.0, %v1936
  %v1938 = vpop.f32.mrb[0].mxu0
  %v1939 = vpop.f32.mrb[0].mxu0
  %v1940 = vpop.f32.mrb[0].mxu0
  %1941 = vdwg.mxu0
  %v1943 = vunpack.c.l.s4 1966171168
  %v1944 = vunpack.c.0.s8 %v1943
  %v1945 = vlaneseq
  %v1946 = vshrl.u32 %v1945, 7
  %v1947 = vsub.s32 %v1944, %v1946
  %v1948 = vrot.slane %v1753, %v1947
  %v1950 = vunpack.c.l.s4 1966171168
  %v1951 = vunpack.c.0.s8 %v1950
  %v1952 = vlaneseq
  %v1953 = vshrl.u32 %v1952, 7
  %v1954 = vsub.s32 %v1951, %v1953
  %v1955 = vrot.slane %v1948, %v1954
  %1956 = vrot.lane.b32.xlu0 %v1955, 96
  %v1957 = vpop.permute.xlu0 %1956
  %v1959 = vsel %vm1771, %v1753, 0
  %v1962 = vsel %vm1771, %v1957, 0
  %1964 = vmatprep.subr.bf16.mxu0 0
  %1965 = vmatpush1.bf16.xpose.msra.mxu0 %v1962
  %1966 = vmatprep.subr.bf16.mxu0 0
  %1967 = vmatpush1.bf16.xpose.msra.mxu0 0
  %1968 = vmatprep.subr.bf16.mxu0 0
  %1969 = vmatpush1.bf16.xpose.msra.mxu0 0
  %1970 = vmatprep.subr.bf16.mxu0 0
  %1971 = vmatpush1.bf16.xpose.msra.mxu0 0
  %1972 = vmatprep.subr.bf16.mxu0 0
  %1973 = vmatpush1.bf16.xpose.msra.mxu0 0
  %1974 = vmatprep.subr.bf16.mxu0 0
  %1975 = vmatpush1.bf16.xpose.msra.mxu0 0
  %1976 = vmatprep.subr.bf16.mxu0 0
  %1977 = vmatpush1.bf16.xpose.msra.mxu0 0
  %1978 = vmatprep.subr.bf16.mxu0 0
  %1979 = vmatpush1.bf16.xpose.msra.mxu0 0
  %1980 = vmatprep.subr.bf16.mxu0 0
  %1981 = vmatpush1.bf16.xpose.msra.mxu0 0
  %1982 = vmatprep.subr.bf16.mxu0 0
  %1983 = vmatpush1.bf16.xpose.msra.mxu0 0
  %1984 = vmatprep.subr.bf16.mxu0 0
  %1985 = vmatpush1.bf16.xpose.msra.mxu0 0
  %1986 = vmatprep.subr.bf16.mxu0 0
  %1987 = vmatpush1.bf16.xpose.msra.mxu0 0
  %1988 = vmatprep.subr.bf16.mxu0 0
  %1989 = vmatpush1.bf16.xpose.msra.mxu0 0
  %1990 = vmatprep.subr.bf16.mxu0 0
  %1991 = vmatpush1.bf16.xpose.msra.mxu0 0
  %1992 = vmatprep.subr.bf16.mxu0 0
  %1993 = vmatpush1.bf16.xpose.msra.mxu0 0
  %1994 = vmatprep.subr.bf16.mxu0 0
  %1995 = vmatpush1.bf16.xpose.msra.mxu0 0
  %1996 = vmatprep.mubr.bf16.mxu0 0
  %1997 = vmatmul.mubr.bf16.gmra.mrb[0].mxu0 %v1959
  %v1998 = vpop.f32.mrb[0].mxu0
  %v1999 = vadd.f32 0.0, %v1998
  %v2000 = vpop.f32.mrb[0].mxu0
  %v2001 = vpop.f32.mrb[0].mxu0
  %v2002 = vpop.f32.mrb[0].mxu0
  %2003 = vdwg.mxu0
  %v2005 = vunpack.c.l.s4 1966171168
  %v2006 = vunpack.c.0.s8 %v2005
  %v2007 = vlaneseq
  %v2008 = vshrl.u32 %v2007, 7
  %v2009 = vsub.s32 %v2006, %v2008
  %v2010 = vrot.slane %v1736, %v2009
  %v2012 = vunpack.c.l.s4 1966171168
  %v2013 = vunpack.c.0.s8 %v2012
  %v2014 = vlaneseq
  %v2015 = vshrl.u32 %v2014, 7
  %v2016 = vsub.s32 %v2013, %v2015
  %v2017 = vrot.slane %v2010, %v2016
  %2018 = vrot.lane.b32.xlu0 %v2017, 96
  %v2019 = vpop.permute.xlu0 %2018
  %v2021 = vsel %vm1771, %v1736, 0
  %v2024 = vsel %vm1771, %v2019, 0
  %2026 = vmatprep.subr.bf16.mxu0 0
  %2027 = vmatpush1.bf16.xpose.msra.mxu0 %v2024
  %2028 = vmatprep.subr.bf16.mxu0 0
  %2029 = vmatpush1.bf16.xpose.msra.mxu0 0
  %2030 = vmatprep.subr.bf16.mxu0 0
  %2031 = vmatpush1.bf16.xpose.msra.mxu0 0
  %2032 = vmatprep.subr.bf16.mxu0 0
  %2033 = vmatpush1.bf16.xpose.msra.mxu0 0
  %2034 = vmatprep.subr.bf16.mxu0 0
  %2035 = vmatpush1.bf16.xpose.msra.mxu0 0
  %2036 = vmatprep.subr.bf16.mxu0 0
  %2037 = vmatpush1.bf16.xpose.msra.mxu0 0
  %2038 = vmatprep.subr.bf16.mxu0 0
  %2039 = vmatpush1.bf16.xpose.msra.mxu0 0
  %2040 = vmatprep.subr.bf16.mxu0 0
  %2041 = vmatpush1.bf16.xpose.msra.mxu0 0
  %2042 = vmatprep.subr.bf16.mxu0 0
  %2043 = vmatpush1.bf16.xpose.msra.mxu0 0
  %2044 = vmatprep.subr.bf16.mxu0 0
  %2045 = vmatpush1.bf16.xpose.msra.mxu0 0
  %2046 = vmatprep.subr.bf16.mxu0 0
  %2047 = vmatpush1.bf16.xpose.msra.mxu0 0
  %2048 = vmatprep.subr.bf16.mxu0 0
  %2049 = vmatpush1.bf16.xpose.msra.mxu0 0
  %2050 = vmatprep.subr.bf16.mxu0 0
  %2051 = vmatpush1.bf16.xpose.msra.mxu0 0
  %2052 = vmatprep.subr.bf16.mxu0 0
  %2053 = vmatpush1.bf16.xpose.msra.mxu0 0
  %2054 = vmatprep.subr.bf16.mxu0 0
  %2055 = vmatpush1.bf16.xpose.msra.mxu0 0
  %2056 = vmatprep.subr.bf16.mxu0 0
  %2057 = vmatpush1.bf16.xpose.msra.mxu0 0
  %2058 = vmatprep.mubr.bf16.mxu0 0
  %2059 = vmatmul.mubr.bf16.gmra.mrb[0].mxu0 %v2021
  %v2060 = vpop.f32.mrb[0].mxu0
  %v2061 = vadd.f32 0.0, %v2060
  %v2062 = vpop.f32.mrb[0].mxu0
  %v2063 = vpop.f32.mrb[0].mxu0
  %v2064 = vpop.f32.mrb[0].mxu0
  %2065 = vdwg.mxu0
  %v2067 = vunpack.c.l.s4 1966171168
  %v2068 = vunpack.c.0.s8 %v2067
  %v2069 = vlaneseq
  %v2070 = vshrl.u32 %v2069, 7
  %v2071 = vsub.s32 %v2068, %v2070
  %v2072 = vrot.slane %v1750, %v2071
  %v2074 = vunpack.c.l.s4 1966171168
  %v2075 = vunpack.c.0.s8 %v2074
  %v2076 = vlaneseq
  %v2077 = vshrl.u32 %v2076, 7
  %v2078 = vsub.s32 %v2075, %v2077
  %v2079 = vrot.slane %v2072, %v2078
  %2080 = vrot.lane.b32.xlu0 %v2079, 96
  %v2081 = vpop.permute.xlu0 %2080
  %v2083 = vsel %vm1771, %v1750, 0
  %v2086 = vsel %vm1771, %v2081, 0
  %2088 = vmatprep.subr.bf16.mxu0 0
  %2089 = vmatpush1.bf16.xpose.msra.mxu0 %v2086
  %2090 = vmatprep.subr.bf16.mxu0 0
  %2091 = vmatpush1.bf16.xpose.msra.mxu0 0
  %2092 = vmatprep.subr.bf16.mxu0 0
  %2093 = vmatpush1.bf16.xpose.msra.mxu0 0
  %2094 = vmatprep.subr.bf16.mxu0 0
  %2095 = vmatpush1.bf16.xpose.msra.mxu0 0
  %2096 = vmatprep.subr.bf16.mxu0 0
  %2097 = vmatpush1.bf16.xpose.msra.mxu0 0
  %2098 = vmatprep.subr.bf16.mxu0 0
  %2099 = vmatpush1.bf16.xpose.msra.mxu0 0
  %2100 = vmatprep.subr.bf16.mxu0 0
  %2101 = vmatpush1.bf16.xpose.msra.mxu0 0
  %2102 = vmatprep.subr.bf16.mxu0 0
  %2103 = vmatpush1.bf16.xpose.msra.mxu0 0
  %2104 = vmatprep.subr.bf16.mxu0 0
  %2105 = vmatpush1.bf16.xpose.msra.mxu0 0
  %2106 = vmatprep.subr.bf16.mxu0 0
  %2107 = vmatpush1.bf16.xpose.msra.mxu0 0
  %2108 = vmatprep.subr.bf16.mxu0 0
  %2109 = vmatpush1.bf16.xpose.msra.mxu0 0
  %2110 = vmatprep.subr.bf16.mxu0 0
  %2111 = vmatpush1.bf16.xpose.msra.mxu0 0
  %2112 = vmatprep.subr.bf16.mxu0 0
  %2113 = vmatpush1.bf16.xpose.msra.mxu0 0
  %2114 = vmatprep.subr.bf16.mxu0 0
  %2115 = vmatpush1.bf16.xpose.msra.mxu0 0
  %2116 = vmatprep.subr.bf16.mxu0 0
  %2117 = vmatpush1.bf16.xpose.msra.mxu0 0
  %2118 = vmatprep.subr.bf16.mxu0 0
  %2119 = vmatpush1.bf16.xpose.msra.mxu0 0
  %2120 = vmatprep.mubr.bf16.mxu0 0
  %2121 = vmatmul.mubr.bf16.gmra.mrb[0].mxu0 %v2083
  %v2122 = vpop.f32.mrb[0].mxu0
  %v2123 = vadd.f32 0.0, %v2122
  %v2124 = vpop.f32.mrb[0].mxu0
  %v2125 = vpop.f32.mrb[0].mxu0
  %v2126 = vpop.f32.mrb[0].mxu0
  %2127 = vdwg.mxu0
  %v2129 = vunpack.c.l.s4 1966171168
  %v2130 = vunpack.c.0.s8 %v2129
  %v2131 = vlaneseq
  %v2132 = vshrl.u32 %v2131, 7
  %v2133 = vsub.s32 %v2130, %v2132
  %v2134 = vrot.slane %v1752, %v2133
  %v2136 = vunpack.c.l.s4 1966171168
  %v2137 = vunpack.c.0.s8 %v2136
  %v2138 = vlaneseq
  %v2139 = vshrl.u32 %v2138, 7
  %v2140 = vsub.s32 %v2137, %v2139
  %v2141 = vrot.slane %v2134, %v2140
  %2142 = vrot.lane.b32.xlu0 %v2141, 96
  %v2143 = vpop.permute.xlu0 %2142
  %v2145 = vsel %vm1771, %v1752, 0
  %v2148 = vsel %vm1771, %v2143, 0
  %2150 = vmatprep.subr.bf16.mxu0 0
  %2151 = vmatpush1.bf16.xpose.msra.mxu0 %v2148
  %2152 = vmatprep.subr.bf16.mxu0 0
  %2153 = vmatpush1.bf16.xpose.msra.mxu0 0
  %2154 = vmatprep.subr.bf16.mxu0 0
  %2155 = vmatpush1.bf16.xpose.msra.mxu0 0
  %2156 = vmatprep.subr.bf16.mxu0 0
  %2157 = vmatpush1.bf16.xpose.msra.mxu0 0
  %2158 = vmatprep.subr.bf16.mxu0 0
  %2159 = vmatpush1.bf16.xpose.msra.mxu0 0
  %2160 = vmatprep.subr.bf16.mxu0 0
  %2161 = vmatpush1.bf16.xpose.msra.mxu0 0
  %2162 = vmatprep.subr.bf16.mxu0 0
  %2163 = vmatpush1.bf16.xpose.msra.mxu0 0
  %2164 = vmatprep.subr.bf16.mxu0 0
  %2165 = vmatpush1.bf16.xpose.msra.mxu0 0
  %2166 = vmatprep.subr.bf16.mxu0 0
  %2167 = vmatpush1.bf16.xpose.msra.mxu0 0
  %2168 = vmatprep.subr.bf16.mxu0 0
  %2169 = vmatpush1.bf16.xpose.msra.mxu0 0
  %2170 = vmatprep.subr.bf16.mxu0 0
  %2171 = vmatpush1.bf16.xpose.msra.mxu0 0
  %2172 = vmatprep.subr.bf16.mxu0 0
  %2173 = vmatpush1.bf16.xpose.msra.mxu0 0
  %2174 = vmatprep.subr.bf16.mxu0 0
  %2175 = vmatpush1.bf16.xpose.msra.mxu0 0
  %2176 = vmatprep.subr.bf16.mxu0 0
  %2177 = vmatpush1.bf16.xpose.msra.mxu0 0
  %2178 = vmatprep.subr.bf16.mxu0 0
  %2179 = vmatpush1.bf16.xpose.msra.mxu0 0
  %2180 = vmatprep.subr.bf16.mxu0 0
  %2181 = vmatpush1.bf16.xpose.msra.mxu0 0
  %2182 = vmatprep.mubr.bf16.mxu0 0
  %2183 = vmatmul.mubr.bf16.gmra.mrb[0].mxu0 %v2145
  %v2184 = vpop.f32.mrb[0].mxu0
  %v2185 = vadd.f32 0.0, %v2184
  %v2186 = vpop.f32.mrb[0].mxu0
  %v2187 = vpop.f32.mrb[0].mxu0
  %v2188 = vpop.f32.mrb[0].mxu0
  %2189 = vdwg.mxu0
  %v2191 = vunpack.c.l.s4 1966171168
  %v2192 = vunpack.c.0.s8 %v2191
  %v2193 = vlaneseq
  %v2194 = vshrl.u32 %v2193, 7
  %v2195 = vsub.s32 %v2192, %v2194
  %v2196 = vrot.slane %v1754, %v2195
  %v2198 = vunpack.c.l.s4 1966171168
  %v2199 = vunpack.c.0.s8 %v2198
  %v2200 = vlaneseq
  %v2201 = vshrl.u32 %v2200, 7
  %v2202 = vsub.s32 %v2199, %v2201
  %v2203 = vrot.slane %v2196, %v2202
  %2204 = vrot.lane.b32.xlu0 %v2203, 96
  %v2205 = vpop.permute.xlu0 %2204
  %v2207 = vsel %vm1771, %v1754, 0
  %v2210 = vsel %vm1771, %v2205, 0
  %2212 = vmatprep.subr.bf16.mxu0 0
  %2213 = vmatpush1.bf16.xpose.msra.mxu0 %v2210
  %2214 = vmatprep.subr.bf16.mxu0 0
  %2215 = vmatpush1.bf16.xpose.msra.mxu0 0
  %2216 = vmatprep.subr.bf16.mxu0 0
  %2217 = vmatpush1.bf16.xpose.msra.mxu0 0
  %2218 = vmatprep.subr.bf16.mxu0 0
  %2219 = vmatpush1.bf16.xpose.msra.mxu0 0
  %2220 = vmatprep.subr.bf16.mxu0 0
  %2221 = vmatpush1.bf16.xpose.msra.mxu0 0
  %2222 = vmatprep.subr.bf16.mxu0 0
  %2223 = vmatpush1.bf16.xpose.msra.mxu0 0
  %2224 = vmatprep.subr.bf16.mxu0 0
  %2225 = vmatpush1.bf16.xpose.msra.mxu0 0
  %2226 = vmatprep.subr.bf16.mxu0 0
  %2227 = vmatpush1.bf16.xpose.msra.mxu0 0
  %2228 = vmatprep.subr.bf16.mxu0 0
  %2229 = vmatpush1.bf16.xpose.msra.mxu0 0
  %2230 = vmatprep.subr.bf16.mxu0 0
  %2231 = vmatpush1.bf16.xpose.msra.mxu0 0
  %2232 = vmatprep.subr.bf16.mxu0 0
  %2233 = vmatpush1.bf16.xpose.msra.mxu0 0
  %2234 = vmatprep.subr.bf16.mxu0 0
  %2235 = vmatpush1.bf16.xpose.msra.mxu0 0
  %2236 = vmatprep.subr.bf16.mxu0 0
  %2237 = vmatpush1.bf16.xpose.msra.mxu0 0
  %2238 = vmatprep.subr.bf16.mxu0 0
  %2239 = vmatpush1.bf16.xpose.msra.mxu0 0
  %2240 = vmatprep.subr.bf16.mxu0 0
  %2241 = vmatpush1.bf16.xpose.msra.mxu0 0
  %2242 = vmatprep.subr.bf16.mxu0 0
  %2243 = vmatpush1.bf16.xpose.msra.mxu0 0
  %2244 = vmatprep.mubr.bf16.mxu0 0
  %2245 = vmatmul.mubr.bf16.gmra.mrb[0].mxu0 %v2207
  %v2246 = vpop.f32.mrb[0].mxu0
  %v2247 = vadd.f32 0.0, %v2246
  %v2248 = vpop.f32.mrb[0].mxu0
  %v2249 = vpop.f32.mrb[0].mxu0
  %v2250 = vpop.f32.mrb[0].mxu0
  %2251 = vdwg.mxu0
  %vm2252 = vcmask 9216
  %v2253 = vsel %vm2252, %v1813, -inf
  %2254 = vmax.xlane.f32.xlu0 %v2253
  %v2255 = vpop.xlane.xlu0 %2254
  %v2256 = vsel %vm2252, %v1875, -inf
  %2257 = vmax.xlane.f32.xlu0 %v2256
  %v2258 = vpop.xlane.xlu0 %2257
  %v2259 = vsel %vm2252, %v1937, -inf
  %2260 = vmax.xlane.f32.xlu0 %v2259
  %v2261 = vpop.xlane.xlu0 %2260
  %v2262 = vsel %vm2252, %v1999, -inf
  %2263 = vmax.xlane.f32.xlu0 %v2262
  %v2264 = vpop.xlane.xlu0 %2263
  %v2265 = vsel %vm2252, %v2061, -inf
  %2266 = vmax.xlane.f32.xlu0 %v2265
  %v2267 = vpop.xlane.xlu0 %2266
  %v2268 = vsel %vm2252, %v2123, -inf
  %2269 = vmax.xlane.f32.xlu0 %v2268
  %v2270 = vpop.xlane.xlu0 %2269
  %v2271 = vsel %vm2252, %v2185, -inf
  %2272 = vmax.xlane.f32.xlu0 %v2271
  %v2273 = vpop.xlane.xlu0 %2272
  %v2274 = vsel %vm2252, %v2247, -inf
  %2275 = vmax.xlane.f32.xlu0 %v2274
  %v2276 = vpop.xlane.xlu0 %2275
  %v2277 = vsub.f32 %v1813, %v2255
  %v2278 = vsub.f32 %v1875, %v2258
  %v2279 = vsub.f32 %v1937, %v2261
  %v2280 = vsub.f32 %v1999, %v2264
  %v2281 = vsub.f32 %v2061, %v2267
  %v2282 = vsub.f32 %v2123, %v2270
  %v2283 = vsub.f32 %v2185, %v2273
  %v2284 = vsub.f32 %v2247, %v2276
  %v2285 = vmul.f32 %v2277, 1.442695
  %v2286 = vpow.pop %v2285
  %v2287 = vmul.f32 %v2278, 1.442695
  %v2288 = vpow.pop %v2287
  %v2289 = vmul.f32 %v2279, 1.442695
  %v2290 = vpow.pop %v2289
  %v2291 = vmul.f32 %v2280, 1.442695
  %v2292 = vpow.pop %v2291
  %v2293 = vmul.f32 %v2281, 1.442695
  %v2294 = vpow.pop %v2293
  %v2295 = vmul.f32 %v2282, 1.442695
  %v2296 = vpow.pop %v2295
  %v2297 = vmul.f32 %v2283, 1.442695
  %v2298 = vpow.pop %v2297
  %v2299 = vmul.f32 %v2284, 1.442695
  %v2300 = vpow.pop %v2299
  %v2301 = vsel %vm2252, %v2286, 0.0
  %2302 = vadd.xlane.f32.xlu0 %v2301
  %v2303 = vpop.xlane.xlu0 %2302
  %v2304 = vsel %vm2252, %v2288, 0.0
  %2305 = vadd.xlane.f32.xlu0 %v2304
  %v2306 = vpop.xlane.xlu0 %2305
  %v2307 = vsel %vm2252, %v2290, 0.0
  %2308 = vadd.xlane.f32.xlu0 %v2307
  %v2309 = vpop.xlane.xlu0 %2308
  %v2310 = vsel %vm2252, %v2292, 0.0
  %2311 = vadd.xlane.f32.xlu0 %v2310
  %v2312 = vpop.xlane.xlu0 %2311
  %v2313 = vsel %vm2252, %v2294, 0.0
  %2314 = vadd.xlane.f32.xlu0 %v2313
  %v2315 = vpop.xlane.xlu0 %2314
  %v2316 = vsel %vm2252, %v2296, 0.0
  %2317 = vadd.xlane.f32.xlu0 %v2316
  %v2318 = vpop.xlane.xlu0 %2317
  %v2319 = vsel %vm2252, %v2298, 0.0
  %2320 = vadd.xlane.f32.xlu0 %v2319
  %v2321 = vpop.xlane.xlu0 %2320
  %v2322 = vsel %vm2252, %v2300, 0.0
  %2323 = vadd.xlane.f32.xlu0 %v2322
  %v2324 = vpop.xlane.xlu0 %2323
  %v2325 = vrcp.pop %v2303
  %v2326 = vmul.f32 %v2286, %v2325
  %v2327 = vrcp.pop %v2306
  %v2328 = vmul.f32 %v2288, %v2327
  %v2329 = vrcp.pop %v2309
  %v2330 = vmul.f32 %v2290, %v2329
  %v2331 = vrcp.pop %v2312
  %v2332 = vmul.f32 %v2292, %v2331
  %v2333 = vrcp.pop %v2315
  %v2334 = vmul.f32 %v2294, %v2333
  %v2335 = vrcp.pop %v2318
  %v2336 = vmul.f32 %v2296, %v2335
  %v2337 = vrcp.pop %v2321
  %v2338 = vmul.f32 %v2298, %v2337
  %v2339 = vrcp.pop %v2324
  %v2340 = vmul.f32 %v2300, %v2339
  %v2341 = vpack.c.bf16 %v2326, %v2326
  %v2342 = vpack.c.bf16 %v2328, %v2328
  %v2343 = vpack.c.bf16 %v2330, %v2330
  %v2344 = vpack.c.bf16 %v2332, %v2332
  %v2345 = vpack.c.bf16 %v2334, %v2334
  %v2346 = vpack.c.bf16 %v2336, %v2336
  %v2347 = vpack.c.bf16 %v2338, %v2338
  %v2348 = vpack.c.bf16 %v2340, %v2340
  %2349 = vrot.lane.b32.xlu0 %v1768, 64
  %v2350 = vpop.permute.xlu0 %2349
  %vm2351 = vcmask 15360
  %v2353 = vsel %vm2351, %v2341, 0
  %vm2355 = vcmask 1040384
  %v2357 = vsel %vm2355, %v2350, 0
  %2359 = vmatprep.subr.bf16.mxu0 0
  %2360 = vmatpush1.bf16.msra.mxu0 %v2357
  %2361 = vmatprep.subr.bf16.mxu0 0
  %2362 = vmatpush1.bf16.msra.mxu0 0
  %2363 = vmatprep.subr.bf16.mxu0 0
  %2364 = vmatpush1.bf16.msra.mxu0 0
  %2365 = vmatprep.subr.bf16.mxu0 0
  %2366 = vmatpush1.bf16.msra.mxu0 0
  %2367 = vmatprep.subr.bf16.mxu0 0
  %2368 = vmatpush1.bf16.msra.mxu0 0
  %2369 = vmatprep.subr.bf16.mxu0 0
  %2370 = vmatpush1.bf16.msra.mxu0 0
  %2371 = vmatprep.subr.bf16.mxu0 0
  %2372 = vmatpush1.bf16.msra.mxu0 0
  %2373 = vmatprep.subr.bf16.mxu0 0
  %2374 = vmatpush1.bf16.msra.mxu0 0
  %2375 = vmatprep.subr.bf16.mxu0 0
  %2376 = vmatpush1.bf16.msra.mxu0 0
  %2377 = vmatprep.subr.bf16.mxu0 0
  %2378 = vmatpush1.bf16.msra.mxu0 0
  %2379 = vmatprep.subr.bf16.mxu0 0
  %2380 = vmatpush1.bf16.msra.mxu0 0
  %2381 = vmatprep.subr.bf16.mxu0 0
  %2382 = vmatpush1.bf16.msra.mxu0 0
  %2383 = vmatprep.subr.bf16.mxu0 0
  %2384 = vmatpush1.bf16.msra.mxu0 0
  %2385 = vmatprep.subr.bf16.mxu0 0
  %2386 = vmatpush1.bf16.msra.mxu0 0
  %2387 = vmatprep.subr.bf16.mxu0 0
  %2388 = vmatpush1.bf16.msra.mxu0 0
  %2389 = vmatprep.subr.bf16.mxu0 0
  %2390 = vmatpush1.bf16.msra.mxu0 0
  %2391 = vmatprep.mubr.bf16.mxu0 0
  %2392 = vmatmul.mubr.bf16.gmra.mrb[0].mxu0 %v2353
  %v2393 = vpop.f32.mrb[0].mxu0
  %v2394 = vadd.f32 0.0, %v2393
  %v2395 = vpop.f32.mrb[0].mxu0
  %v2396 = vpop.f32.mrb[0].mxu0
  %v2397 = vpop.f32.mrb[0].mxu0
  %2398 = vdwg.mxu0
  %2399 = vrot.lane.b32.xlu0 %v1831, 64
  %v2400 = vpop.permute.xlu0 %2399
  %v2402 = vsel %vm2351, %v2342, 0
  %v2405 = vsel %vm2355, %v2400, 0
  %2407 = vmatprep.subr.bf16.mxu0 0
  %2408 = vmatpush1.bf16.msra.mxu0 %v2405
  %2409 = vmatprep.subr.bf16.mxu0 0
  %2410 = vmatpush1.bf16.msra.mxu0 0
  %2411 = vmatprep.subr.bf16.mxu0 0
  %2412 = vmatpush1.bf16.msra.mxu0 0
  %2413 = vmatprep.subr.bf16.mxu0 0
  %2414 = vmatpush1.bf16.msra.mxu0 0
  %2415 = vmatprep.subr.bf16.mxu0 0
  %2416 = vmatpush1.bf16.msra.mxu0 0
  %2417 = vmatprep.subr.bf16.mxu0 0
  %2418 = vmatpush1.bf16.msra.mxu0 0
  %2419 = vmatprep.subr.bf16.mxu0 0
  %2420 = vmatpush1.bf16.msra.mxu0 0
  %2421 = vmatprep.subr.bf16.mxu0 0
  %2422 = vmatpush1.bf16.msra.mxu0 0
  %2423 = vmatprep.subr.bf16.mxu0 0
  %2424 = vmatpush1.bf16.msra.mxu0 0
  %2425 = vmatprep.subr.bf16.mxu0 0
  %2426 = vmatpush1.bf16.msra.mxu0 0
  %2427 = vmatprep.subr.bf16.mxu0 0
  %2428 = vmatpush1.bf16.msra.mxu0 0
  %2429 = vmatprep.subr.bf16.mxu0 0
  %2430 = vmatpush1.bf16.msra.mxu0 0
  %2431 = vmatprep.subr.bf16.mxu0 0
  %2432 = vmatpush1.bf16.msra.mxu0 0
  %2433 = vmatprep.subr.bf16.mxu0 0
  %2434 = vmatpush1.bf16.msra.mxu0 0
  %2435 = vmatprep.subr.bf16.mxu0 0
  %2436 = vmatpush1.bf16.msra.mxu0 0
  %2437 = vmatprep.subr.bf16.mxu0 0
  %2438 = vmatpush1.bf16.msra.mxu0 0
  %2439 = vmatprep.mubr.bf16.mxu0 0
  %2440 = vmatmul.mubr.bf16.gmra.mrb[0].mxu0 %v2402
  %v2441 = vpop.f32.mrb[0].mxu0
  %v2442 = vadd.f32 0.0, %v2441
  %v2443 = vpop.f32.mrb[0].mxu0
  %v2444 = vpop.f32.mrb[0].mxu0
  %v2445 = vpop.f32.mrb[0].mxu0
  %2446 = vdwg.mxu0
  %2447 = vrot.lane.b32.xlu0 %v1893, 64
  %v2448 = vpop.permute.xlu0 %2447
  %v2450 = vsel %vm2351, %v2343, 0
  %v2453 = vsel %vm2355, %v2448, 0
  %2455 = vmatprep.subr.bf16.mxu0 0
  %2456 = vmatpush1.bf16.msra.mxu0 %v2453
  %2457 = vmatprep.subr.bf16.mxu0 0
  %2458 = vmatpush1.bf16.msra.mxu0 0
  %2459 = vmatprep.subr.bf16.mxu0 0
  %2460 = vmatpush1.bf16.msra.mxu0 0
  %2461 = vmatprep.subr.bf16.mxu0 0
  %2462 = vmatpush1.bf16.msra.mxu0 0
  %2463 = vmatprep.subr.bf16.mxu0 0
  %2464 = vmatpush1.bf16.msra.mxu0 0
  %2465 = vmatprep.subr.bf16.mxu0 0
  %2466 = vmatpush1.bf16.msra.mxu0 0
  %2467 = vmatprep.subr.bf16.mxu0 0
  %2468 = vmatpush1.bf16.msra.mxu0 0
  %2469 = vmatprep.subr.bf16.mxu0 0
  %2470 = vmatpush1.bf16.msra.mxu0 0
  %2471 = vmatprep.subr.bf16.mxu0 0
  %2472 = vmatpush1.bf16.msra.mxu0 0
  %2473 = vmatprep.subr.bf16.mxu0 0
  %2474 = vmatpush1.bf16.msra.mxu0 0
  %2475 = vmatprep.subr.bf16.mxu0 0
  %2476 = vmatpush1.bf16.msra.mxu0 0
  %2477 = vmatprep.subr.bf16.mxu0 0
  %2478 = vmatpush1.bf16.msra.mxu0 0
  %2479 = vmatprep.subr.bf16.mxu0 0
  %2480 = vmatpush1.bf16.msra.mxu0 0
  %2481 = vmatprep.subr.bf16.mxu0 0
  %2482 = vmatpush1.bf16.msra.mxu0 0
  %2483 = vmatprep.subr.bf16.mxu0 0
  %2484 = vmatpush1.bf16.msra.mxu0 0
  %2485 = vmatprep.subr.bf16.mxu0 0
  %2486 = vmatpush1.bf16.msra.mxu0 0
  %2487 = vmatprep.mubr.bf16.mxu0 0
  %2488 = vmatmul.mubr.bf16.gmra.mrb[0].mxu0 %v2450
  %v2489 = vpop.f32.mrb[0].mxu0
  %v2490 = vadd.f32 0.0, %v2489
  %v2491 = vpop.f32.mrb[0].mxu0
  %v2492 = vpop.f32.mrb[0].mxu0
  %v2493 = vpop.f32.mrb[0].mxu0
  %2494 = vdwg.mxu0
  %2495 = vrot.lane.b32.xlu0 %v1955, 64
  %v2496 = vpop.permute.xlu0 %2495
  %v2498 = vsel %vm2351, %v2344, 0
  %v2501 = vsel %vm2355, %v2496, 0
  %2503 = vmatprep.subr.bf16.mxu0 0
  %2504 = vmatpush1.bf16.msra.mxu0 %v2501
  %2505 = vmatprep.subr.bf16.mxu0 0
  %2506 = vmatpush1.bf16.msra.mxu0 0
  %2507 = vmatprep.subr.bf16.mxu0 0
  %2508 = vmatpush1.bf16.msra.mxu0 0
  %2509 = vmatprep.subr.bf16.mxu0 0
  %2510 = vmatpush1.bf16.msra.mxu0 0
  %2511 = vmatprep.subr.bf16.mxu0 0
  %2512 = vmatpush1.bf16.msra.mxu0 0
  %2513 = vmatprep.subr.bf16.mxu0 0
  %2514 = vmatpush1.bf16.msra.mxu0 0
  %2515 = vmatprep.subr.bf16.mxu0 0
  %2516 = vmatpush1.bf16.msra.mxu0 0
  %2517 = vmatprep.subr.bf16.mxu0 0
  %2518 = vmatpush1.bf16.msra.mxu0 0
  %2519 = vmatprep.subr.bf16.mxu0 0
  %2520 = vmatpush1.bf16.msra.mxu0 0
  %2521 = vmatprep.subr.bf16.mxu0 0
  %2522 = vmatpush1.bf16.msra.mxu0 0
  %2523 = vmatprep.subr.bf16.mxu0 0
  %2524 = vmatpush1.bf16.msra.mxu0 0
  %2525 = vmatprep.subr.bf16.mxu0 0
  %2526 = vmatpush1.bf16.msra.mxu0 0
  %2527 = vmatprep.subr.bf16.mxu0 0
  %2528 = vmatpush1.bf16.msra.mxu0 0
  %2529 = vmatprep.subr.bf16.mxu0 0
  %2530 = vmatpush1.bf16.msra.mxu0 0
  %2531 = vmatprep.subr.bf16.mxu0 0
  %2532 = vmatpush1.bf16.msra.mxu0 0
  %2533 = vmatprep.subr.bf16.mxu0 0
  %2534 = vmatpush1.bf16.msra.mxu0 0
  %2535 = vmatprep.mubr.bf16.mxu0 0
  %2536 = vmatmul.mubr.bf16.gmra.mrb[0].mxu0 %v2498
  %v2537 = vpop.f32.mrb[0].mxu0
  %v2538 = vadd.f32 0.0, %v2537
  %v2539 = vpop.f32.mrb[0].mxu0
  %v2540 = vpop.f32.mrb[0].mxu0
  %v2541 = vpop.f32.mrb[0].mxu0
  %2542 = vdwg.mxu0
  %2543 = vrot.lane.b32.xlu0 %v2017, 64
  %v2544 = vpop.permute.xlu0 %2543
  %v2546 = vsel %vm2351, %v2345, 0
  %v2549 = vsel %vm2355, %v2544, 0
  %2551 = vmatprep.subr.bf16.mxu0 0
  %2552 = vmatpush1.bf16.msra.mxu0 %v2549
  %2553 = vmatprep.subr.bf16.mxu0 0
  %2554 = vmatpush1.bf16.msra.mxu0 0
  %2555 = vmatprep.subr.bf16.mxu0 0
  %2556 = vmatpush1.bf16.msra.mxu0 0
  %2557 = vmatprep.subr.bf16.mxu0 0
  %2558 = vmatpush1.bf16.msra.mxu0 0
  %2559 = vmatprep.subr.bf16.mxu0 0
  %2560 = vmatpush1.bf16.msra.mxu0 0
  %2561 = vmatprep.subr.bf16.mxu0 0
  %2562 = vmatpush1.bf16.msra.mxu0 0
  %2563 = vmatprep.subr.bf16.mxu0 0
  %2564 = vmatpush1.bf16.msra.mxu0 0
  %2565 = vmatprep.subr.bf16.mxu0 0
  %2566 = vmatpush1.bf16.msra.mxu0 0
  %2567 = vmatprep.subr.bf16.mxu0 0
  %2568 = vmatpush1.bf16.msra.mxu0 0
  %2569 = vmatprep.subr.bf16.mxu0 0
  %2570 = vmatpush1.bf16.msra.mxu0 0
  %2571 = vmatprep.subr.bf16.mxu0 0
  %2572 = vmatpush1.bf16.msra.mxu0 0
  %2573 = vmatprep.subr.bf16.mxu0 0
  %2574 = vmatpush1.bf16.msra.mxu0 0
  %2575 = vmatprep.subr.bf16.mxu0 0
  %2576 = vmatpush1.bf16.msra.mxu0 0
  %2577 = vmatprep.subr.bf16.mxu0 0
  %2578 = vmatpush1.bf16.msra.mxu0 0
  %2579 = vmatprep.subr.bf16.mxu0 0
  %2580 = vmatpush1.bf16.msra.mxu0 0
  %2581 = vmatprep.subr.bf16.mxu0 0
  %2582 = vmatpush1.bf16.msra.mxu0 0
  %2583 = vmatprep.mubr.bf16.mxu0 0
  %2584 = vmatmul.mubr.bf16.gmra.mrb[0].mxu0 %v2546
  %v2585 = vpop.f32.mrb[0].mxu0
  %v2586 = vadd.f32 0.0, %v2585
  %v2587 = vpop.f32.mrb[0].mxu0
  %v2588 = vpop.f32.mrb[0].mxu0
  %v2589 = vpop.f32.mrb[0].mxu0
  %2590 = vdwg.mxu0
  %2591 = vrot.lane.b32.xlu0 %v2079, 64
  %v2592 = vpop.permute.xlu0 %2591
  %v2594 = vsel %vm2351, %v2346, 0
  %v2597 = vsel %vm2355, %v2592, 0
  %2599 = vmatprep.subr.bf16.mxu0 0
  %2600 = vmatpush1.bf16.msra.mxu0 %v2597
  %2601 = vmatprep.subr.bf16.mxu0 0
  %2602 = vmatpush1.bf16.msra.mxu0 0
  %2603 = vmatprep.subr.bf16.mxu0 0
  %2604 = vmatpush1.bf16.msra.mxu0 0
  %2605 = vmatprep.subr.bf16.mxu0 0
  %2606 = vmatpush1.bf16.msra.mxu0 0
  %2607 = vmatprep.subr.bf16.mxu0 0
  %2608 = vmatpush1.bf16.msra.mxu0 0
  %2609 = vmatprep.subr.bf16.mxu0 0
  %2610 = vmatpush1.bf16.msra.mxu0 0
  %2611 = vmatprep.subr.bf16.mxu0 0
  %2612 = vmatpush1.bf16.msra.mxu0 0
  %2613 = vmatprep.subr.bf16.mxu0 0
  %2614 = vmatpush1.bf16.msra.mxu0 0
  %2615 = vmatprep.subr.bf16.mxu0 0
  %2616 = vmatpush1.bf16.msra.mxu0 0
  %2617 = vmatprep.subr.bf16.mxu0 0
  %2618 = vmatpush1.bf16.msra.mxu0 0
  %2619 = vmatprep.subr.bf16.mxu0 0
  %2620 = vmatpush1.bf16.msra.mxu0 0
  %2621 = vmatprep.subr.bf16.mxu0 0
  %2622 = vmatpush1.bf16.msra.mxu0 0
  %2623 = vmatprep.subr.bf16.mxu0 0
  %2624 = vmatpush1.bf16.msra.mxu0 0
  %2625 = vmatprep.subr.bf16.mxu0 0
  %2626 = vmatpush1.bf16.msra.mxu0 0
  %2627 = vmatprep.subr.bf16.mxu0 0
  %2628 = vmatpush1.bf16.msra.mxu0 0
  %2629 = vmatprep.subr.bf16.mxu0 0
  %2630 = vmatpush1.bf16.msra.mxu0 0
  %2631 = vmatprep.mubr.bf16.mxu0 0
  %2632 = vmatmul.mubr.bf16.gmra.mrb[0].mxu0 %v2594
  %v2633 = vpop.f32.mrb[0].mxu0
  %v2634 = vadd.f32 0.0, %v2633
  %v2635 = vpop.f32.mrb[0].mxu0
  %v2636 = vpop.f32.mrb[0].mxu0
  %v2637 = vpop.f32.mrb[0].mxu0
  %2638 = vdwg.mxu0
  %2639 = vrot.lane.b32.xlu0 %v2141, 64
  %v2640 = vpop.permute.xlu0 %2639
  %v2642 = vsel %vm2351, %v2347, 0
  %v2645 = vsel %vm2355, %v2640, 0
  %2647 = vmatprep.subr.bf16.mxu0 0
  %2648 = vmatpush1.bf16.msra.mxu0 %v2645
  %2649 = vmatprep.subr.bf16.mxu0 0
  %2650 = vmatpush1.bf16.msra.mxu0 0
  %2651 = vmatprep.subr.bf16.mxu0 0
  %2652 = vmatpush1.bf16.msra.mxu0 0
  %2653 = vmatprep.subr.bf16.mxu0 0
  %2654 = vmatpush1.bf16.msra.mxu0 0
  %2655 = vmatprep.subr.bf16.mxu0 0
  %2656 = vmatpush1.bf16.msra.mxu0 0
  %2657 = vmatprep.subr.bf16.mxu0 0
  %2658 = vmatpush1.bf16.msra.mxu0 0
  %2659 = vmatprep.subr.bf16.mxu0 0
  %2660 = vmatpush1.bf16.msra.mxu0 0
  %2661 = vmatprep.subr.bf16.mxu0 0
  %2662 = vmatpush1.bf16.msra.mxu0 0
  %2663 = vmatprep.subr.bf16.mxu0 0
  %2664 = vmatpush1.bf16.msra.mxu0 0
  %2665 = vmatprep.subr.bf16.mxu0 0
  %2666 = vmatpush1.bf16.msra.mxu0 0
  %2667 = vmatprep.subr.bf16.mxu0 0
  %2668 = vmatpush1.bf16.msra.mxu0 0
  %2669 = vmatprep.subr.bf16.mxu0 0
  %2670 = vmatpush1.bf16.msra.mxu0 0
  %2671 = vmatprep.subr.bf16.mxu0 0
  %2672 = vmatpush1.bf16.msra.mxu0 0
  %2673 = vmatprep.subr.bf16.mxu0 0
  %2674 = vmatpush1.bf16.msra.mxu0 0
  %2675 = vmatprep.subr.bf16.mxu0 0
  %2676 = vmatpush1.bf16.msra.mxu0 0
  %2677 = vmatprep.subr.bf16.mxu0 0
  %2678 = vmatpush1.bf16.msra.mxu0 0
  %2679 = vmatprep.mubr.bf16.mxu0 0
  %2680 = vmatmul.mubr.bf16.gmra.mrb[0].mxu0 %v2642
  %v2681 = vpop.f32.mrb[0].mxu0
  %v2682 = vadd.f32 0.0, %v2681
  %v2683 = vpop.f32.mrb[0].mxu0
  %v2684 = vpop.f32.mrb[0].mxu0
  %v2685 = vpop.f32.mrb[0].mxu0
  %2686 = vdwg.mxu0
  %2687 = vrot.lane.b32.xlu0 %v2203, 64
  %v2688 = vpop.permute.xlu0 %2687
  %v2690 = vsel %vm2351, %v2348, 0
  %v2693 = vsel %vm2355, %v2688, 0
  %2695 = vmatprep.subr.bf16.mxu0 0
  %2696 = vmatpush1.bf16.msra.mxu0 %v2693
  %2697 = vmatprep.subr.bf16.mxu0 0
  %2698 = vmatpush1.bf16.msra.mxu0 0
  %2699 = vmatprep.subr.bf16.mxu0 0
  %2700 = vmatpush1.bf16.msra.mxu0 0
  %2701 = vmatprep.subr.bf16.mxu0 0
  %2702 = vmatpush1.bf16.msra.mxu0 0
  %2703 = vmatprep.subr.bf16.mxu0 0
  %2704 = vmatpush1.bf16.msra.mxu0 0
  %2705 = vmatprep.subr.bf16.mxu0 0
  %2706 = vmatpush1.bf16.msra.mxu0 0
  %2707 = vmatprep.subr.bf16.mxu0 0
  %2708 = vmatpush1.bf16.msra.mxu0 0
  %2709 = vmatprep.subr.bf16.mxu0 0
  %2710 = vmatpush1.bf16.msra.mxu0 0
  %2711 = vmatprep.subr.bf16.mxu0 0
  %2712 = vmatpush1.bf16.msra.mxu0 0
  %2713 = vmatprep.subr.bf16.mxu0 0
  %2714 = vmatpush1.bf16.msra.mxu0 0
  %2715 = vmatprep.subr.bf16.mxu0 0
  %2716 = vmatpush1.bf16.msra.mxu0 0
  %2717 = vmatprep.subr.bf16.mxu0 0
  %2718 = vmatpush1.bf16.msra.mxu0 0
  %2719 = vmatprep.subr.bf16.mxu0 0
  %2720 = vmatpush1.bf16.msra.mxu0 0
  %2721 = vmatprep.subr.bf16.mxu0 0
  %2722 = vmatpush1.bf16.msra.mxu0 0
  %2723 = vmatprep.subr.bf16.mxu0 0
  %2724 = vmatpush1.bf16.msra.mxu0 0
  %2725 = vmatprep.subr.bf16.mxu0 0
  %2726 = vmatpush1.bf16.msra.mxu0 0
  %2727 = vmatprep.mubr.bf16.mxu0 0
  %2728 = vmatmul.mubr.bf16.gmra.mrb[0].mxu0 %v2690
  %v2729 = vpop.f32.mrb[0].mxu0
  %v2730 = vadd.f32 0.0, %v2729
  %v2731 = vpop.f32.mrb[0].mxu0
  %v2732 = vpop.f32.mrb[0].mxu0
  %v2733 = vpop.f32.mrb[0].mxu0
  %2734 = vdwg.mxu0
  %2735 = vrot.lane.b32.xlu0 %v1768, 120
  %v2736 = vpop.permute.xlu0 %2735
  %2737 = vrot.lane.b32.xlu0 %v1768, 88
  %v2738 = vpop.permute.xlu0 %2737
  %v2740 = vsel %vm1771, %v2736, 0
  %v2743 = vsel %vm1771, %v2738, 0
  %2745 = vmatprep.subr.bf16.mxu0 0
  %2746 = vmatpush1.bf16.xpose.msra.mxu0 %v2743
  %2747 = vmatprep.subr.bf16.mxu0 0
  %2748 = vmatpush1.bf16.xpose.msra.mxu0 0
  %2749 = vmatprep.subr.bf16.mxu0 0
  %2750 = vmatpush1.bf16.xpose.msra.mxu0 0
  %2751 = vmatprep.subr.bf16.mxu0 0
  %2752 = vmatpush1.bf16.xpose.msra.mxu0 0
  %2753 = vmatprep.subr.bf16.mxu0 0
  %2754 = vmatpush1.bf16.xpose.msra.mxu0 0
  %2755 = vmatprep.subr.bf16.mxu0 0
  %2756 = vmatpush1.bf16.xpose.msra.mxu0 0
  %2757 = vmatprep.subr.bf16.mxu0 0
  %2758 = vmatpush1.bf16.xpose.msra.mxu0 0
  %2759 = vmatprep.subr.bf16.mxu0 0
  %2760 = vmatpush1.bf16.xpose.msra.mxu0 0
  %2761 = vmatprep.subr.bf16.mxu0 0
  %2762 = vmatpush1.bf16.xpose.msra.mxu0 0
  %2763 = vmatprep.subr.bf16.mxu0 0
  %2764 = vmatpush1.bf16.xpose.msra.mxu0 0
  %2765 = vmatprep.subr.bf16.mxu0 0
  %2766 = vmatpush1.bf16.xpose.msra.mxu0 0
  %2767 = vmatprep.subr.bf16.mxu0 0
  %2768 = vmatpush1.bf16.xpose.msra.mxu0 0
  %2769 = vmatprep.subr.bf16.mxu0 0
  %2770 = vmatpush1.bf16.xpose.msra.mxu0 0
  %2771 = vmatprep.subr.bf16.mxu0 0
  %2772 = vmatpush1.bf16.xpose.msra.mxu0 0
  %2773 = vmatprep.subr.bf16.mxu0 0
  %2774 = vmatpush1.bf16.xpose.msra.mxu0 0
  %2775 = vmatprep.subr.bf16.mxu0 0
  %2776 = vmatpush1.bf16.xpose.msra.mxu0 0
  %2777 = vmatprep.mubr.bf16.mxu0 0
  %2778 = vmatmul.mubr.bf16.gmra.mrb[0].mxu0 %v2740
  %v2779 = vpop.f32.mrb[0].mxu0
  %v2780 = vadd.f32 0.0, %v2779
  %v2781 = vpop.f32.mrb[0].mxu0
  %v2782 = vpop.f32.mrb[0].mxu0
  %v2783 = vpop.f32.mrb[0].mxu0
  %2784 = vdwg.mxu0
  %2785 = vrot.lane.b32.xlu0 %v1831, 120
  %v2786 = vpop.permute.xlu0 %2785
  %2787 = vrot.lane.b32.xlu0 %v1831, 88
  %v2788 = vpop.permute.xlu0 %2787
  %v2790 = vsel %vm1771, %v2786, 0
  %v2793 = vsel %vm1771, %v2788, 0
  %2795 = vmatprep.subr.bf16.mxu0 0
  %2796 = vmatpush1.bf16.xpose.msra.mxu0 %v2793
  %2797 = vmatprep.subr.bf16.mxu0 0
  %2798 = vmatpush1.bf16.xpose.msra.mxu0 0
  %2799 = vmatprep.subr.bf16.mxu0 0
  %2800 = vmatpush1.bf16.xpose.msra.mxu0 0
  %2801 = vmatprep.subr.bf16.mxu0 0
  %2802 = vmatpush1.bf16.xpose.msra.mxu0 0
  %2803 = vmatprep.subr.bf16.mxu0 0
  %2804 = vmatpush1.bf16.xpose.msra.mxu0 0
  %2805 = vmatprep.subr.bf16.mxu0 0
  %2806 = vmatpush1.bf16.xpose.msra.mxu0 0
  %2807 = vmatprep.subr.bf16.mxu0 0
  %2808 = vmatpush1.bf16.xpose.msra.mxu0 0
  %2809 = vmatprep.subr.bf16.mxu0 0
  %2810 = vmatpush1.bf16.xpose.msra.mxu0 0
  %2811 = vmatprep.subr.bf16.mxu0 0
  %2812 = vmatpush1.bf16.xpose.msra.mxu0 0
  %2813 = vmatprep.subr.bf16.mxu0 0
  %2814 = vmatpush1.bf16.xpose.msra.mxu0 0
  %2815 = vmatprep.subr.bf16.mxu0 0
  %2816 = vmatpush1.bf16.xpose.msra.mxu0 0
  %2817 = vmatprep.subr.bf16.mxu0 0
  %2818 = vmatpush1.bf16.xpose.msra.mxu0 0
  %2819 = vmatprep.subr.bf16.mxu0 0
  %2820 = vmatpush1.bf16.xpose.msra.mxu0 0
  %2821 = vmatprep.subr.bf16.mxu0 0
  %2822 = vmatpush1.bf16.xpose.msra.mxu0 0
  %2823 = vmatprep.subr.bf16.mxu0 0
  %2824 = vmatpush1.bf16.xpose.msra.mxu0 0
  %2825 = vmatprep.subr.bf16.mxu0 0
  %2826 = vmatpush1.bf16.xpose.msra.mxu0 0
  %2827 = vmatprep.mubr.bf16.mxu0 0
  %2828 = vmatmul.mubr.bf16.gmra.mrb[0].mxu0 %v2790
  %v2829 = vpop.f32.mrb[0].mxu0
  %v2830 = vadd.f32 0.0, %v2829
  %v2831 = vpop.f32.mrb[0].mxu0
  %v2832 = vpop.f32.mrb[0].mxu0
  %v2833 = vpop.f32.mrb[0].mxu0
  %2834 = vdwg.mxu0
  %2835 = vrot.lane.b32.xlu0 %v1893, 120
  %v2836 = vpop.permute.xlu0 %2835
  %2837 = vrot.lane.b32.xlu0 %v1893, 88
  %v2838 = vpop.permute.xlu0 %2837
  %v2840 = vsel %vm1771, %v2836, 0
  %v2843 = vsel %vm1771, %v2838, 0
  %2845 = vmatprep.subr.bf16.mxu0 0
  %2846 = vmatpush1.bf16.xpose.msra.mxu0 %v2843
  %2847 = vmatprep.subr.bf16.mxu0 0
  %2848 = vmatpush1.bf16.xpose.msra.mxu0 0
  %2849 = vmatprep.subr.bf16.mxu0 0
  %2850 = vmatpush1.bf16.xpose.msra.mxu0 0
  %2851 = vmatprep.subr.bf16.mxu0 0
  %2852 = vmatpush1.bf16.xpose.msra.mxu0 0
  %2853 = vmatprep.subr.bf16.mxu0 0
  %2854 = vmatpush1.bf16.xpose.msra.mxu0 0
  %2855 = vmatprep.subr.bf16.mxu0 0
  %2856 = vmatpush1.bf16.xpose.msra.mxu0 0
  %2857 = vmatprep.subr.bf16.mxu0 0
  %2858 = vmatpush1.bf16.xpose.msra.mxu0 0
  %2859 = vmatprep.subr.bf16.mxu0 0
  %2860 = vmatpush1.bf16.xpose.msra.mxu0 0
  %2861 = vmatprep.subr.bf16.mxu0 0
  %2862 = vmatpush1.bf16.xpose.msra.mxu0 0
  %2863 = vmatprep.subr.bf16.mxu0 0
  %2864 = vmatpush1.bf16.xpose.msra.mxu0 0
  %2865 = vmatprep.subr.bf16.mxu0 0
  %2866 = vmatpush1.bf16.xpose.msra.mxu0 0
  %2867 = vmatprep.subr.bf16.mxu0 0
  %2868 = vmatpush1.bf16.xpose.msra.mxu0 0
  %2869 = vmatprep.subr.bf16.mxu0 0
  %2870 = vmatpush1.bf16.xpose.msra.mxu0 0
  %2871 = vmatprep.subr.bf16.mxu0 0
  %2872 = vmatpush1.bf16.xpose.msra.mxu0 0
  %2873 = vmatprep.subr.bf16.mxu0 0
  %2874 = vmatpush1.bf16.xpose.msra.mxu0 0
  %2875 = vmatprep.subr.bf16.mxu0 0
  %2876 = vmatpush1.bf16.xpose.msra.mxu0 0
  %2877 = vmatprep.mubr.bf16.mxu0 0
  %2878 = vmatmul.mubr.bf16.gmra.mrb[0].mxu0 %v2840
  %v2879 = vpop.f32.mrb[0].mxu0
  %v2880 = vadd.f32 0.0, %v2879
  %v2881 = vpop.f32.mrb[0].mxu0
  %v2882 = vpop.f32.mrb[0].mxu0
  %v2883 = vpop.f32.mrb[0].mxu0
  %2884 = vdwg.mxu0
  %2885 = vrot.lane.b32.xlu0 %v1955, 120
  %v2886 = vpop.permute.xlu0 %2885
  %2887 = vrot.lane.b32.xlu0 %v1955, 88
  %v2888 = vpop.permute.xlu0 %2887
  %v2890 = vsel %vm1771, %v2886, 0
  %v2893 = vsel %vm1771, %v2888, 0
  %2895 = vmatprep.subr.bf16.mxu0 0
  %2896 = vmatpush1.bf16.xpose.msra.mxu0 %v2893
  %2897 = vmatprep.subr.bf16.mxu0 0
  %2898 = vmatpush1.bf16.xpose.msra.mxu0 0
  %2899 = vmatprep.subr.bf16.mxu0 0
  %2900 = vmatpush1.bf16.xpose.msra.mxu0 0
  %2901 = vmatprep.subr.bf16.mxu0 0
  %2902 = vmatpush1.bf16.xpose.msra.mxu0 0
  %2903 = vmatprep.subr.bf16.mxu0 0
  %2904 = vmatpush1.bf16.xpose.msra.mxu0 0
  %2905 = vmatprep.subr.bf16.mxu0 0
  %2906 = vmatpush1.bf16.xpose.msra.mxu0 0
  %2907 = vmatprep.subr.bf16.mxu0 0
  %2908 = vmatpush1.bf16.xpose.msra.mxu0 0
  %2909 = vmatprep.subr.bf16.mxu0 0
  %2910 = vmatpush1.bf16.xpose.msra.mxu0 0
  %2911 = vmatprep.subr.bf16.mxu0 0
  %2912 = vmatpush1.bf16.xpose.msra.mxu0 0
  %2913 = vmatprep.subr.bf16.mxu0 0
  %2914 = vmatpush1.bf16.xpose.msra.mxu0 0
  %2915 = vmatprep.subr.bf16.mxu0 0
  %2916 = vmatpush1.bf16.xpose.msra.mxu0 0
  %2917 = vmatprep.subr.bf16.mxu0 0
  %2918 = vmatpush1.bf16.xpose.msra.mxu0 0
  %2919 = vmatprep.subr.bf16.mxu0 0
  %2920 = vmatpush1.bf16.xpose.msra.mxu0 0
  %2921 = vmatprep.subr.bf16.mxu0 0
  %2922 = vmatpush1.bf16.xpose.msra.mxu0 0
  %2923 = vmatprep.subr.bf16.mxu0 0
  %2924 = vmatpush1.bf16.xpose.msra.mxu0 0
  %2925 = vmatprep.subr.bf16.mxu0 0
  %2926 = vmatpush1.bf16.xpose.msra.mxu0 0
  %2927 = vmatprep.mubr.bf16.mxu0 0
  %2928 = vmatmul.mubr.bf16.gmra.mrb[0].mxu0 %v2890
  %v2929 = vpop.f32.mrb[0].mxu0
  %v2930 = vadd.f32 0.0, %v2929
  %v2931 = vpop.f32.mrb[0].mxu0
  %v2932 = vpop.f32.mrb[0].mxu0
  %v2933 = vpop.f32.mrb[0].mxu0
  %2934 = vdwg.mxu0
  %2935 = vrot.lane.b32.xlu0 %v2017, 120
  %v2936 = vpop.permute.xlu0 %2935
  %2937 = vrot.lane.b32.xlu0 %v2017, 88
  %v2938 = vpop.permute.xlu0 %2937
  %v2940 = vsel %vm1771, %v2936, 0
  %v2943 = vsel %vm1771, %v2938, 0
  %2945 = vmatprep.subr.bf16.mxu0 0
  %2946 = vmatpush1.bf16.xpose.msra.mxu0 %v2943
  %2947 = vmatprep.subr.bf16.mxu0 0
  %2948 = vmatpush1.bf16.xpose.msra.mxu0 0
  %2949 = vmatprep.subr.bf16.mxu0 0
  %2950 = vmatpush1.bf16.xpose.msra.mxu0 0
  %2951 = vmatprep.subr.bf16.mxu0 0
  %2952 = vmatpush1.bf16.xpose.msra.mxu0 0
  %2953 = vmatprep.subr.bf16.mxu0 0
  %2954 = vmatpush1.bf16.xpose.msra.mxu0 0
  %2955 = vmatprep.subr.bf16.mxu0 0
  %2956 = vmatpush1.bf16.xpose.msra.mxu0 0
  %2957 = vmatprep.subr.bf16.mxu0 0
  %2958 = vmatpush1.bf16.xpose.msra.mxu0 0
  %2959 = vmatprep.subr.bf16.mxu0 0
  %2960 = vmatpush1.bf16.xpose.msra.mxu0 0
  %2961 = vmatprep.subr.bf16.mxu0 0
  %2962 = vmatpush1.bf16.xpose.msra.mxu0 0
  %2963 = vmatprep.subr.bf16.mxu0 0
  %2964 = vmatpush1.bf16.xpose.msra.mxu0 0
  %2965 = vmatprep.subr.bf16.mxu0 0
  %2966 = vmatpush1.bf16.xpose.msra.mxu0 0
  %2967 = vmatprep.subr.bf16.mxu0 0
  %2968 = vmatpush1.bf16.xpose.msra.mxu0 0
  %2969 = vmatprep.subr.bf16.mxu0 0
  %2970 = vmatpush1.bf16.xpose.msra.mxu0 0
  %2971 = vmatprep.subr.bf16.mxu0 0
  %2972 = vmatpush1.bf16.xpose.msra.mxu0 0
  %2973 = vmatprep.subr.bf16.mxu0 0
  %2974 = vmatpush1.bf16.xpose.msra.mxu0 0
  %2975 = vmatprep.subr.bf16.mxu0 0
  %2976 = vmatpush1.bf16.xpose.msra.mxu0 0
  %2977 = vmatprep.mubr.bf16.mxu0 0
  %2978 = vmatmul.mubr.bf16.gmra.mrb[0].mxu0 %v2940
  %v2979 = vpop.f32.mrb[0].mxu0
  %v2980 = vadd.f32 0.0, %v2979
  %v2981 = vpop.f32.mrb[0].mxu0
  %v2982 = vpop.f32.mrb[0].mxu0
  %v2983 = vpop.f32.mrb[0].mxu0
  %2984 = vdwg.mxu0
  %2985 = vrot.lane.b32.xlu0 %v2079, 120
  %v2986 = vpop.permute.xlu0 %2985
  %2987 = vrot.lane.b32.xlu0 %v2079, 88
  %v2988 = vpop.permute.xlu0 %2987
  %v2990 = vsel %vm1771, %v2986, 0
  %v2993 = vsel %vm1771, %v2988, 0
  %2995 = vmatprep.subr.bf16.mxu0 0
  %2996 = vmatpush1.bf16.xpose.msra.mxu0 %v2993
  %2997 = vmatprep.subr.bf16.mxu0 0
  %2998 = vmatpush1.bf16.xpose.msra.mxu0 0
  %2999 = vmatprep.subr.bf16.mxu0 0
  %3000 = vmatpush1.bf16.xpose.msra.mxu0 0
  %3001 = vmatprep.subr.bf16.mxu0 0
  %3002 = vmatpush1.bf16.xpose.msra.mxu0 0
  %3003 = vmatprep.subr.bf16.mxu0 0
  %3004 = vmatpush1.bf16.xpose.msra.mxu0 0
  %3005 = vmatprep.subr.bf16.mxu0 0
  %3006 = vmatpush1.bf16.xpose.msra.mxu0 0
  %3007 = vmatprep.subr.bf16.mxu0 0
  %3008 = vmatpush1.bf16.xpose.msra.mxu0 0
  %3009 = vmatprep.subr.bf16.mxu0 0
  %3010 = vmatpush1.bf16.xpose.msra.mxu0 0
  %3011 = vmatprep.subr.bf16.mxu0 0
  %3012 = vmatpush1.bf16.xpose.msra.mxu0 0
  %3013 = vmatprep.subr.bf16.mxu0 0
  %3014 = vmatpush1.bf16.xpose.msra.mxu0 0
  %3015 = vmatprep.subr.bf16.mxu0 0
  %3016 = vmatpush1.bf16.xpose.msra.mxu0 0
  %3017 = vmatprep.subr.bf16.mxu0 0
  %3018 = vmatpush1.bf16.xpose.msra.mxu0 0
  %3019 = vmatprep.subr.bf16.mxu0 0
  %3020 = vmatpush1.bf16.xpose.msra.mxu0 0
  %3021 = vmatprep.subr.bf16.mxu0 0
  %3022 = vmatpush1.bf16.xpose.msra.mxu0 0
  %3023 = vmatprep.subr.bf16.mxu0 0
  %3024 = vmatpush1.bf16.xpose.msra.mxu0 0
  %3025 = vmatprep.subr.bf16.mxu0 0
  %3026 = vmatpush1.bf16.xpose.msra.mxu0 0
  %3027 = vmatprep.mubr.bf16.mxu0 0
  %3028 = vmatmul.mubr.bf16.gmra.mrb[0].mxu0 %v2990
  %v3029 = vpop.f32.mrb[0].mxu0
  %v3030 = vadd.f32 0.0, %v3029
  %v3031 = vpop.f32.mrb[0].mxu0
  %v3032 = vpop.f32.mrb[0].mxu0
  %v3033 = vpop.f32.mrb[0].mxu0
  %3034 = vdwg.mxu0
  %3035 = vrot.lane.b32.xlu0 %v2141, 120
  %v3036 = vpop.permute.xlu0 %3035
  %3037 = vrot.lane.b32.xlu0 %v2141, 88
  %v3038 = vpop.permute.xlu0 %3037
  %v3040 = vsel %vm1771, %v3036, 0
  %v3043 = vsel %vm1771, %v3038, 0
  %3045 = vmatprep.subr.bf16.mxu0 0
  %3046 = vmatpush1.bf16.xpose.msra.mxu0 %v3043
  %3047 = vmatprep.subr.bf16.mxu0 0
  %3048 = vmatpush1.bf16.xpose.msra.mxu0 0
  %3049 = vmatprep.subr.bf16.mxu0 0
  %3050 = vmatpush1.bf16.xpose.msra.mxu0 0
  %3051 = vmatprep.subr.bf16.mxu0 0
  %3052 = vmatpush1.bf16.xpose.msra.mxu0 0
  %3053 = vmatprep.subr.bf16.mxu0 0
  %3054 = vmatpush1.bf16.xpose.msra.mxu0 0
  %3055 = vmatprep.subr.bf16.mxu0 0
  %3056 = vmatpush1.bf16.xpose.msra.mxu0 0
  %3057 = vmatprep.subr.bf16.mxu0 0
  %3058 = vmatpush1.bf16.xpose.msra.mxu0 0
  %3059 = vmatprep.subr.bf16.mxu0 0
  %3060 = vmatpush1.bf16.xpose.msra.mxu0 0
  %3061 = vmatprep.subr.bf16.mxu0 0
  %3062 = vmatpush1.bf16.xpose.msra.mxu0 0
  %3063 = vmatprep.subr.bf16.mxu0 0
  %3064 = vmatpush1.bf16.xpose.msra.mxu0 0
  %3065 = vmatprep.subr.bf16.mxu0 0
  %3066 = vmatpush1.bf16.xpose.msra.mxu0 0
  %3067 = vmatprep.subr.bf16.mxu0 0
  %3068 = vmatpush1.bf16.xpose.msra.mxu0 0
  %3069 = vmatprep.subr.bf16.mxu0 0
  %3070 = vmatpush1.bf16.xpose.msra.mxu0 0
  %3071 = vmatprep.subr.bf16.mxu0 0
  %3072 = vmatpush1.bf16.xpose.msra.mxu0 0
  %3073 = vmatprep.subr.bf16.mxu0 0
  %3074 = vmatpush1.bf16.xpose.msra.mxu0 0
  %3075 = vmatprep.subr.bf16.mxu0 0
  %3076 = vmatpush1.bf16.xpose.msra.mxu0 0
  %3077 = vmatprep.mubr.bf16.mxu0 0
  %3078 = vmatmul.mubr.bf16.gmra.mrb[0].mxu0 %v3040
  %v3079 = vpop.f32.mrb[0].mxu0
  %v3080 = vadd.f32 0.0, %v3079
  %v3081 = vpop.f32.mrb[0].mxu0
  %v3082 = vpop.f32.mrb[0].mxu0
  %v3083 = vpop.f32.mrb[0].mxu0
  %3084 = vdwg.mxu0
  %3085 = vrot.lane.b32.xlu0 %v2203, 120
  %v3086 = vpop.permute.xlu0 %3085
  %3087 = vrot.lane.b32.xlu0 %v2203, 88
  %v3088 = vpop.permute.xlu0 %3087
  %v3090 = vsel %vm1771, %v3086, 0
  %v3093 = vsel %vm1771, %v3088, 0
  %3095 = vmatprep.subr.bf16.mxu0 0
  %3096 = vmatpush1.bf16.xpose.msra.mxu0 %v3093
  %3097 = vmatprep.subr.bf16.mxu0 0
  %3098 = vmatpush1.bf16.xpose.msra.mxu0 0
  %3099 = vmatprep.subr.bf16.mxu0 0
  %3100 = vmatpush1.bf16.xpose.msra.mxu0 0
  %3101 = vmatprep.subr.bf16.mxu0 0
  %3102 = vmatpush1.bf16.xpose.msra.mxu0 0
  %3103 = vmatprep.subr.bf16.mxu0 0
  %3104 = vmatpush1.bf16.xpose.msra.mxu0 0
  %3105 = vmatprep.subr.bf16.mxu0 0
  %3106 = vmatpush1.bf16.xpose.msra.mxu0 0
  %3107 = vmatprep.subr.bf16.mxu0 0
  %3108 = vmatpush1.bf16.xpose.msra.mxu0 0
  %3109 = vmatprep.subr.bf16.mxu0 0
  %3110 = vmatpush1.bf16.xpose.msra.mxu0 0
  %3111 = vmatprep.subr.bf16.mxu0 0
  %3112 = vmatpush1.bf16.xpose.msra.mxu0 0
  %3113 = vmatprep.subr.bf16.mxu0 0
  %3114 = vmatpush1.bf16.xpose.msra.mxu0 0
  %3115 = vmatprep.subr.bf16.mxu0 0
  %3116 = vmatpush1.bf16.xpose.msra.mxu0 0
  %3117 = vmatprep.subr.bf16.mxu0 0
  %3118 = vmatpush1.bf16.xpose.msra.mxu0 0
  %3119 = vmatprep.subr.bf16.mxu0 0
  %3120 = vmatpush1.bf16.xpose.msra.mxu0 0
  %3121 = vmatprep.subr.bf16.mxu0 0
  %3122 = vmatpush1.bf16.xpose.msra.mxu0 0
  %3123 = vmatprep.subr.bf16.mxu0 0
  %3124 = vmatpush1.bf16.xpose.msra.mxu0 0
  %3125 = vmatprep.subr.bf16.mxu0 0
  %3126 = vmatpush1.bf16.xpose.msra.mxu0 0
  %3127 = vmatprep.mubr.bf16.mxu0 0
  %3128 = vmatmul.mubr.bf16.gmra.mrb[0].mxu0 %v3090
  %v3129 = vpop.f32.mrb[0].mxu0
  %v3130 = vadd.f32 0.0, %v3129
  %v3131 = vpop.f32.mrb[0].mxu0
  %v3132 = vpop.f32.mrb[0].mxu0
  %v3133 = vpop.f32.mrb[0].mxu0
  %3134 = vdwg.mxu0
  %v3135 = vsel %vm2252, %v2780, -inf
  %3136 = vmax.xlane.f32.xlu0 %v3135
  %v3137 = vpop.xlane.xlu0 %3136
  %v3138 = vsel %vm2252, %v2830, -inf
  %3139 = vmax.xlane.f32.xlu0 %v3138
  %v3140 = vpop.xlane.xlu0 %3139
  %v3141 = vsel %vm2252, %v2880, -inf
  %3142 = vmax.xlane.f32.xlu0 %v3141
  %v3143 = vpop.xlane.xlu0 %3142
  %v3144 = vsel %vm2252, %v2930, -inf
  %3145 = vmax.xlane.f32.xlu0 %v3144
  %v3146 = vpop.xlane.xlu0 %3145
  %v3147 = vsel %vm2252, %v2980, -inf
  %3148 = vmax.xlane.f32.xlu0 %v3147
  %v3149 = vpop.xlane.xlu0 %3148
  %v3150 = vsel %vm2252, %v3030, -inf
  %3151 = vmax.xlane.f32.xlu0 %v3150
  %v3152 = vpop.xlane.xlu0 %3151
  %v3153 = vsel %vm2252, %v3080, -inf
  %3154 = vmax.xlane.f32.xlu0 %v3153
  %v3155 = vpop.xlane.xlu0 %3154
  %v3156 = vsel %vm2252, %v3130, -inf
  %3157 = vmax.xlane.f32.xlu0 %v3156
  %v3158 = vpop.xlane.xlu0 %3157
  %v3159 = vsub.f32 %v2780, %v3137
  %v3160 = vsub.f32 %v2830, %v3140
  %v3161 = vsub.f32 %v2880, %v3143
  %v3162 = vsub.f32 %v2930, %v3146
  %v3163 = vsub.f32 %v2980, %v3149
  %v3164 = vsub.f32 %v3030, %v3152
  %v3165 = vsub.f32 %v3080, %v3155
  %v3166 = vsub.f32 %v3130, %v3158
  %v3167 = vmul.f32 %v3159, 1.442695
  %v3168 = vpow.pop %v3167
  %v3169 = vmul.f32 %v3160, 1.442695
  %v3170 = vpow.pop %v3169
  %v3171 = vmul.f32 %v3161, 1.442695
  %v3172 = vpow.pop %v3171
  %v3173 = vmul.f32 %v3162, 1.442695
  %v3174 = vpow.pop %v3173
  %v3175 = vmul.f32 %v3163, 1.442695
  %v3176 = vpow.pop %v3175
  %v3177 = vmul.f32 %v3164, 1.442695
  %v3178 = vpow.pop %v3177
  %v3179 = vmul.f32 %v3165, 1.442695
  %v3180 = vpow.pop %v3179
  %v3181 = vmul.f32 %v3166, 1.442695
  %v3182 = vpow.pop %v3181
  %v3183 = vsel %vm2252, %v3168, 0.0
  %3184 = vadd.xlane.f32.xlu0 %v3183
  %v3185 = vpop.xlane.xlu0 %3184
  %v3186 = vsel %vm2252, %v3170, 0.0
  %3187 = vadd.xlane.f32.xlu0 %v3186
  %v3188 = vpop.xlane.xlu0 %3187
  %v3189 = vsel %vm2252, %v3172, 0.0
  %3190 = vadd.xlane.f32.xlu0 %v3189
  %v3191 = vpop.xlane.xlu0 %3190
  %v3192 = vsel %vm2252, %v3174, 0.0
  %3193 = vadd.xlane.f32.xlu0 %v3192
  %v3194 = vpop.xlane.xlu0 %3193
  %v3195 = vsel %vm2252, %v3176, 0.0
  %3196 = vadd.xlane.f32.xlu0 %v3195
  %v3197 = vpop.xlane.xlu0 %3196
  %v3198 = vsel %vm2252, %v3178, 0.0
  %3199 = vadd.xlane.f32.xlu0 %v3198
  %v3200 = vpop.xlane.xlu0 %3199
  %v3201 = vsel %vm2252, %v3180, 0.0
  %3202 = vadd.xlane.f32.xlu0 %v3201
  %v3203 = vpop.xlane.xlu0 %3202
  %v3204 = vsel %vm2252, %v3182, 0.0
  %3205 = vadd.xlane.f32.xlu0 %v3204
  %v3206 = vpop.xlane.xlu0 %3205
  %v3207 = vrcp.pop %v3185
  %v3208 = vmul.f32 %v3168, %v3207
  %v3209 = vrcp.pop %v3188
  %v3210 = vmul.f32 %v3170, %v3209
  %v3211 = vrcp.pop %v3191
  %v3212 = vmul.f32 %v3172, %v3211
  %v3213 = vrcp.pop %v3194
  %v3214 = vmul.f32 %v3174, %v3213
  %v3215 = vrcp.pop %v3197
  %v3216 = vmul.f32 %v3176, %v3215
  %v3217 = vrcp.pop %v3200
  %v3218 = vmul.f32 %v3178, %v3217
  %v3219 = vrcp.pop %v3203
  %v3220 = vmul.f32 %v3180, %v3219
  %v3221 = vrcp.pop %v3206
  %v3222 = vmul.f32 %v3182, %v3221
  %v3223 = vpack.c.bf16 %v3208, %v3208
  %v3224 = vpack.c.bf16 %v3210, %v3210
  %v3225 = vpack.c.bf16 %v3212, %v3212
  %v3226 = vpack.c.bf16 %v3214, %v3214
  %v3227 = vpack.c.bf16 %v3216, %v3216
  %v3228 = vpack.c.bf16 %v3218, %v3218
  %v3229 = vpack.c.bf16 %v3220, %v3220
  %v3230 = vpack.c.bf16 %v3222, %v3222
  %3231 = vrot.lane.b32.xlu0 %v1768, 56
  %v3232 = vpop.permute.xlu0 %3231
  %v3234 = vsel %vm2351, %v3223, 0
  %v3237 = vsel %vm2355, %v3232, 0
  %3239 = vmatprep.subr.bf16.mxu0 0
  %3240 = vmatpush1.bf16.msra.mxu0 %v3237
  %3241 = vmatprep.subr.bf16.mxu0 0
  %3242 = vmatpush1.bf16.msra.mxu0 0
  %3243 = vmatprep.subr.bf16.mxu0 0
  %3244 = vmatpush1.bf16.msra.mxu0 0
  %3245 = vmatprep.subr.bf16.mxu0 0
  %3246 = vmatpush1.bf16.msra.mxu0 0
  %3247 = vmatprep.subr.bf16.mxu0 0
  %3248 = vmatpush1.bf16.msra.mxu0 0
  %3249 = vmatprep.subr.bf16.mxu0 0
  %3250 = vmatpush1.bf16.msra.mxu0 0
  %3251 = vmatprep.subr.bf16.mxu0 0
  %3252 = vmatpush1.bf16.msra.mxu0 0
  %3253 = vmatprep.subr.bf16.mxu0 0
  %3254 = vmatpush1.bf16.msra.mxu0 0
  %3255 = vmatprep.subr.bf16.mxu0 0
  %3256 = vmatpush1.bf16.msra.mxu0 0
  %3257 = vmatprep.subr.bf16.mxu0 0
  %3258 = vmatpush1.bf16.msra.mxu0 0
  %3259 = vmatprep.subr.bf16.mxu0 0
  %3260 = vmatpush1.bf16.msra.mxu0 0
  %3261 = vmatprep.subr.bf16.mxu0 0
  %3262 = vmatpush1.bf16.msra.mxu0 0
  %3263 = vmatprep.subr.bf16.mxu0 0
  %3264 = vmatpush1.bf16.msra.mxu0 0
  %3265 = vmatprep.subr.bf16.mxu0 0
  %3266 = vmatpush1.bf16.msra.mxu0 0
  %3267 = vmatprep.subr.bf16.mxu0 0
  %3268 = vmatpush1.bf16.msra.mxu0 0
  %3269 = vmatprep.subr.bf16.mxu0 0
  %3270 = vmatpush1.bf16.msra.mxu0 0
  %3271 = vmatprep.mubr.bf16.mxu0 0
  %3272 = vmatmul.mubr.bf16.gmra.mrb[0].mxu0 %v3234
  %v3273 = vpop.f32.mrb[0].mxu0
  %v3274 = vadd.f32 0.0, %v3273
  %v3275 = vpop.f32.mrb[0].mxu0
  %v3276 = vpop.f32.mrb[0].mxu0
  %v3277 = vpop.f32.mrb[0].mxu0
  %3278 = vdwg.mxu0
  %3279 = vrot.lane.b32.xlu0 %v1831, 56
  %v3280 = vpop.permute.xlu0 %3279
  %v3282 = vsel %vm2351, %v3224, 0
  %v3285 = vsel %vm2355, %v3280, 0
  %3287 = vmatprep.subr.bf16.mxu0 0
  %3288 = vmatpush1.bf16.msra.mxu0 %v3285
  %3289 = vmatprep.subr.bf16.mxu0 0
  %3290 = vmatpush1.bf16.msra.mxu0 0
  %3291 = vmatprep.subr.bf16.mxu0 0
  %3292 = vmatpush1.bf16.msra.mxu0 0
  %3293 = vmatprep.subr.bf16.mxu0 0
  %3294 = vmatpush1.bf16.msra.mxu0 0
  %3295 = vmatprep.subr.bf16.mxu0 0
  %3296 = vmatpush1.bf16.msra.mxu0 0
  %3297 = vmatprep.subr.bf16.mxu0 0
  %3298 = vmatpush1.bf16.msra.mxu0 0
  %3299 = vmatprep.subr.bf16.mxu0 0
  %3300 = vmatpush1.bf16.msra.mxu0 0
  %3301 = vmatprep.subr.bf16.mxu0 0
  %3302 = vmatpush1.bf16.msra.mxu0 0
  %3303 = vmatprep.subr.bf16.mxu0 0
  %3304 = vmatpush1.bf16.msra.mxu0 0
  %3305 = vmatprep.subr.bf16.mxu0 0
  %3306 = vmatpush1.bf16.msra.mxu0 0
  %3307 = vmatprep.subr.bf16.mxu0 0
  %3308 = vmatpush1.bf16.msra.mxu0 0
  %3309 = vmatprep.subr.bf16.mxu0 0
  %3310 = vmatpush1.bf16.msra.mxu0 0
  %3311 = vmatprep.subr.bf16.mxu0 0
  %3312 = vmatpush1.bf16.msra.mxu0 0
  %3313 = vmatprep.subr.bf16.mxu0 0
  %3314 = vmatpush1.bf16.msra.mxu0 0
  %3315 = vmatprep.subr.bf16.mxu0 0
  %3316 = vmatpush1.bf16.msra.mxu0 0
  %3317 = vmatprep.subr.bf16.mxu0 0
  %3318 = vmatpush1.bf16.msra.mxu0 0
  %3319 = vmatprep.mubr.bf16.mxu0 0
  %3320 = vmatmul.mubr.bf16.gmra.mrb[0].mxu0 %v3282
  %v3321 = vpop.f32.mrb[0].mxu0
  %v3322 = vadd.f32 0.0, %v3321
  %v3323 = vpop.f32.mrb[0].mxu0
  %v3324 = vpop.f32.mrb[0].mxu0
  %v3325 = vpop.f32.mrb[0].mxu0
  %3326 = vdwg.mxu0
  %3327 = vrot.lane.b32.xlu0 %v1893, 56
  %v3328 = vpop.permute.xlu0 %3327
  %v3330 = vsel %vm2351, %v3225, 0
  %v3333 = vsel %vm2355, %v3328, 0
  %3335 = vmatprep.subr.bf16.mxu0 0
  %3336 = vmatpush1.bf16.msra.mxu0 %v3333
  %3337 = vmatprep.subr.bf16.mxu0 0
  %3338 = vmatpush1.bf16.msra.mxu0 0
  %3339 = vmatprep.subr.bf16.mxu0 0
  %3340 = vmatpush1.bf16.msra.mxu0 0
  %3341 = vmatprep.subr.bf16.mxu0 0
  %3342 = vmatpush1.bf16.msra.mxu0 0
  %3343 = vmatprep.subr.bf16.mxu0 0
  %3344 = vmatpush1.bf16.msra.mxu0 0
  %3345 = vmatprep.subr.bf16.mxu0 0
  %3346 = vmatpush1.bf16.msra.mxu0 0
  %3347 = vmatprep.subr.bf16.mxu0 0
  %3348 = vmatpush1.bf16.msra.mxu0 0
  %3349 = vmatprep.subr.bf16.mxu0 0
  %3350 = vmatpush1.bf16.msra.mxu0 0
  %3351 = vmatprep.subr.bf16.mxu0 0
  %3352 = vmatpush1.bf16.msra.mxu0 0
  %3353 = vmatprep.subr.bf16.mxu0 0
  %3354 = vmatpush1.bf16.msra.mxu0 0
  %3355 = vmatprep.subr.bf16.mxu0 0
  %3356 = vmatpush1.bf16.msra.mxu0 0
  %3357 = vmatprep.subr.bf16.mxu0 0
  %3358 = vmatpush1.bf16.msra.mxu0 0
  %3359 = vmatprep.subr.bf16.mxu0 0
  %3360 = vmatpush1.bf16.msra.mxu0 0
  %3361 = vmatprep.subr.bf16.mxu0 0
  %3362 = vmatpush1.bf16.msra.mxu0 0
  %3363 = vmatprep.subr.bf16.mxu0 0
  %3364 = vmatpush1.bf16.msra.mxu0 0
  %3365 = vmatprep.subr.bf16.mxu0 0
  %3366 = vmatpush1.bf16.msra.mxu0 0
  %3367 = vmatprep.mubr.bf16.mxu0 0
  %3368 = vmatmul.mubr.bf16.gmra.mrb[0].mxu0 %v3330
  %v3369 = vpop.f32.mrb[0].mxu0
  %v3370 = vadd.f32 0.0, %v3369
  %v3371 = vpop.f32.mrb[0].mxu0
  %v3372 = vpop.f32.mrb[0].mxu0
  %v3373 = vpop.f32.mrb[0].mxu0
  %3374 = vdwg.mxu0
  %3375 = vrot.lane.b32.xlu0 %v1955, 56
  %v3376 = vpop.permute.xlu0 %3375
  %v3378 = vsel %vm2351, %v3226, 0
  %v3381 = vsel %vm2355, %v3376, 0
  %3383 = vmatprep.subr.bf16.mxu0 0
  %3384 = vmatpush1.bf16.msra.mxu0 %v3381
  %3385 = vmatprep.subr.bf16.mxu0 0
  %3386 = vmatpush1.bf16.msra.mxu0 0
  %3387 = vmatprep.subr.bf16.mxu0 0
  %3388 = vmatpush1.bf16.msra.mxu0 0
  %3389 = vmatprep.subr.bf16.mxu0 0
  %3390 = vmatpush1.bf16.msra.mxu0 0
  %3391 = vmatprep.subr.bf16.mxu0 0
  %3392 = vmatpush1.bf16.msra.mxu0 0
  %3393 = vmatprep.subr.bf16.mxu0 0
  %3394 = vmatpush1.bf16.msra.mxu0 0
  %3395 = vmatprep.subr.bf16.mxu0 0
  %3396 = vmatpush1.bf16.msra.mxu0 0
  %3397 = vmatprep.subr.bf16.mxu0 0
  %3398 = vmatpush1.bf16.msra.mxu0 0
  %3399 = vmatprep.subr.bf16.mxu0 0
  %3400 = vmatpush1.bf16.msra.mxu0 0
  %3401 = vmatprep.subr.bf16.mxu0 0
  %3402 = vmatpush1.bf16.msra.mxu0 0
  %3403 = vmatprep.subr.bf16.mxu0 0
  %3404 = vmatpush1.bf16.msra.mxu0 0
  %3405 = vmatprep.subr.bf16.mxu0 0
  %3406 = vmatpush1.bf16.msra.mxu0 0
  %3407 = vmatprep.subr.bf16.mxu0 0
  %3408 = vmatpush1.bf16.msra.mxu0 0
  %3409 = vmatprep.subr.bf16.mxu0 0
  %3410 = vmatpush1.bf16.msra.mxu0 0
  %3411 = vmatprep.subr.bf16.mxu0 0
  %3412 = vmatpush1.bf16.msra.mxu0 0
  %3413 = vmatprep.subr.bf16.mxu0 0
  %3414 = vmatpush1.bf16.msra.mxu0 0
  %3415 = vmatprep.mubr.bf16.mxu0 0
  %3416 = vmatmul.mubr.bf16.gmra.mrb[0].mxu0 %v3378
  %v3417 = vpop.f32.mrb[0].mxu0
  %v3418 = vadd.f32 0.0, %v3417
  %v3419 = vpop.f32.mrb[0].mxu0
  %v3420 = vpop.f32.mrb[0].mxu0
  %v3421 = vpop.f32.mrb[0].mxu0
  %3422 = vdwg.mxu0
  %3423 = vrot.lane.b32.xlu0 %v2017, 56
  %v3424 = vpop.permute.xlu0 %3423
  %v3426 = vsel %vm2351, %v3227, 0
  %v3429 = vsel %vm2355, %v3424, 0
  %3431 = vmatprep.subr.bf16.mxu0 0
  %3432 = vmatpush1.bf16.msra.mxu0 %v3429
  %3433 = vmatprep.subr.bf16.mxu0 0
  %3434 = vmatpush1.bf16.msra.mxu0 0
  %3435 = vmatprep.subr.bf16.mxu0 0
  %3436 = vmatpush1.bf16.msra.mxu0 0
  %3437 = vmatprep.subr.bf16.mxu0 0
  %3438 = vmatpush1.bf16.msra.mxu0 0
  %3439 = vmatprep.subr.bf16.mxu0 0
  %3440 = vmatpush1.bf16.msra.mxu0 0
  %3441 = vmatprep.subr.bf16.mxu0 0
  %3442 = vmatpush1.bf16.msra.mxu0 0
  %3443 = vmatprep.subr.bf16.mxu0 0
  %3444 = vmatpush1.bf16.msra.mxu0 0
  %3445 = vmatprep.subr.bf16.mxu0 0
  %3446 = vmatpush1.bf16.msra.mxu0 0
  %3447 = vmatprep.subr.bf16.mxu0 0
  %3448 = vmatpush1.bf16.msra.mxu0 0
  %3449 = vmatprep.subr.bf16.mxu0 0
  %3450 = vmatpush1.bf16.msra.mxu0 0
  %3451 = vmatprep.subr.bf16.mxu0 0
  %3452 = vmatpush1.bf16.msra.mxu0 0
  %3453 = vmatprep.subr.bf16.mxu0 0
  %3454 = vmatpush1.bf16.msra.mxu0 0
  %3455 = vmatprep.subr.bf16.mxu0 0
  %3456 = vmatpush1.bf16.msra.mxu0 0
  %3457 = vmatprep.subr.bf16.mxu0 0
  %3458 = vmatpush1.bf16.msra.mxu0 0
  %3459 = vmatprep.subr.bf16.mxu0 0
  %3460 = vmatpush1.bf16.msra.mxu0 0
  %3461 = vmatprep.subr.bf16.mxu0 0
  %3462 = vmatpush1.bf16.msra.mxu0 0
  %3463 = vmatprep.mubr.bf16.mxu0 0
  %3464 = vmatmul.mubr.bf16.gmra.mrb[0].mxu0 %v3426
  %v3465 = vpop.f32.mrb[0].mxu0
  %v3466 = vadd.f32 0.0, %v3465
  %v3467 = vpop.f32.mrb[0].mxu0
  %v3468 = vpop.f32.mrb[0].mxu0
  %v3469 = vpop.f32.mrb[0].mxu0
  %3470 = vdwg.mxu0
  %3471 = vrot.lane.b32.xlu0 %v2079, 56
  %v3472 = vpop.permute.xlu0 %3471
  %v3474 = vsel %vm2351, %v3228, 0
  %v3477 = vsel %vm2355, %v3472, 0
  %3479 = vmatprep.subr.bf16.mxu0 0
  %3480 = vmatpush1.bf16.msra.mxu0 %v3477
  %3481 = vmatprep.subr.bf16.mxu0 0
  %3482 = vmatpush1.bf16.msra.mxu0 0
  %3483 = vmatprep.subr.bf16.mxu0 0
  %3484 = vmatpush1.bf16.msra.mxu0 0
  %3485 = vmatprep.subr.bf16.mxu0 0
  %3486 = vmatpush1.bf16.msra.mxu0 0
  %3487 = vmatprep.subr.bf16.mxu0 0
  %3488 = vmatpush1.bf16.msra.mxu0 0
  %3489 = vmatprep.subr.bf16.mxu0 0
  %3490 = vmatpush1.bf16.msra.mxu0 0
  %3491 = vmatprep.subr.bf16.mxu0 0
  %3492 = vmatpush1.bf16.msra.mxu0 0
  %3493 = vmatprep.subr.bf16.mxu0 0
  %3494 = vmatpush1.bf16.msra.mxu0 0
  %3495 = vmatprep.subr.bf16.mxu0 0
  %3496 = vmatpush1.bf16.msra.mxu0 0
  %3497 = vmatprep.subr.bf16.mxu0 0
  %3498 = vmatpush1.bf16.msra.mxu0 0
  %3499 = vmatprep.subr.bf16.mxu0 0
  %3500 = vmatpush1.bf16.msra.mxu0 0
  %3501 = vmatprep.subr.bf16.mxu0 0
  %3502 = vmatpush1.bf16.msra.mxu0 0
  %3503 = vmatprep.subr.bf16.mxu0 0
  %3504 = vmatpush1.bf16.msra.mxu0 0
  %3505 = vmatprep.subr.bf16.mxu0 0
  %3506 = vmatpush1.bf16.msra.mxu0 0
  %3507 = vmatprep.subr.bf16.mxu0 0
  %3508 = vmatpush1.bf16.msra.mxu0 0
  %3509 = vmatprep.subr.bf16.mxu0 0
  %3510 = vmatpush1.bf16.msra.mxu0 0
  %3511 = vmatprep.mubr.bf16.mxu0 0
  %3512 = vmatmul.mubr.bf16.gmra.mrb[0].mxu0 %v3474
  %v3513 = vpop.f32.mrb[0].mxu0
  %v3514 = vadd.f32 0.0, %v3513
  %v3515 = vpop.f32.mrb[0].mxu0
  %v3516 = vpop.f32.mrb[0].mxu0
  %v3517 = vpop.f32.mrb[0].mxu0
  %3518 = vdwg.mxu0
  %3519 = vrot.lane.b32.xlu0 %v2141, 56
  %v3520 = vpop.permute.xlu0 %3519
  %v3522 = vsel %vm2351, %v3229, 0
  %v3525 = vsel %vm2355, %v3520, 0
  %3527 = vmatprep.subr.bf16.mxu0 0
  %3528 = vmatpush1.bf16.msra.mxu0 %v3525
  %3529 = vmatprep.subr.bf16.mxu0 0
  %3530 = vmatpush1.bf16.msra.mxu0 0
  %3531 = vmatprep.subr.bf16.mxu0 0
  %3532 = vmatpush1.bf16.msra.mxu0 0
  %3533 = vmatprep.subr.bf16.mxu0 0
  %3534 = vmatpush1.bf16.msra.mxu0 0
  %3535 = vmatprep.subr.bf16.mxu0 0
  %3536 = vmatpush1.bf16.msra.mxu0 0
  %3537 = vmatprep.subr.bf16.mxu0 0
  %3538 = vmatpush1.bf16.msra.mxu0 0
  %3539 = vmatprep.subr.bf16.mxu0 0
  %3540 = vmatpush1.bf16.msra.mxu0 0
  %3541 = vmatprep.subr.bf16.mxu0 0
  %3542 = vmatpush1.bf16.msra.mxu0 0
  %3543 = vmatprep.subr.bf16.mxu0 0
  %3544 = vmatpush1.bf16.msra.mxu0 0
  %3545 = vmatprep.subr.bf16.mxu0 0
  %3546 = vmatpush1.bf16.msra.mxu0 0
  %3547 = vmatprep.subr.bf16.mxu0 0
  %3548 = vmatpush1.bf16.msra.mxu0 0
  %3549 = vmatprep.subr.bf16.mxu0 0
  %3550 = vmatpush1.bf16.msra.mxu0 0
  %3551 = vmatprep.subr.bf16.mxu0 0
  %3552 = vmatpush1.bf16.msra.mxu0 0
  %3553 = vmatprep.subr.bf16.mxu0 0
  %3554 = vmatpush1.bf16.msra.mxu0 0
  %3555 = vmatprep.subr.bf16.mxu0 0
  %3556 = vmatpush1.bf16.msra.mxu0 0
  %3557 = vmatprep.subr.bf16.mxu0 0
  %3558 = vmatpush1.bf16.msra.mxu0 0
  %3559 = vmatprep.mubr.bf16.mxu0 0
  %3560 = vmatmul.mubr.bf16.gmra.mrb[0].mxu0 %v3522
  %v3561 = vpop.f32.mrb[0].mxu0
  %v3562 = vadd.f32 0.0, %v3561
  %v3563 = vpop.f32.mrb[0].mxu0
  %v3564 = vpop.f32.mrb[0].mxu0
  %v3565 = vpop.f32.mrb[0].mxu0
  %3566 = vdwg.mxu0
  %3567 = vrot.lane.b32.xlu0 %v2203, 56
  %v3568 = vpop.permute.xlu0 %3567
  %v3570 = vsel %vm2351, %v3230, 0
  %v3573 = vsel %vm2355, %v3568, 0
  %3575 = vmatprep.subr.bf16.mxu0 0
  %3576 = vmatpush1.bf16.msra.mxu0 %v3573
  %3577 = vmatprep.subr.bf16.mxu0 0
  %3578 = vmatpush1.bf16.msra.mxu0 0
  %3579 = vmatprep.subr.bf16.mxu0 0
  %3580 = vmatpush1.bf16.msra.mxu0 0
  %3581 = vmatprep.subr.bf16.mxu0 0
  %3582 = vmatpush1.bf16.msra.mxu0 0
  %3583 = vmatprep.subr.bf16.mxu0 0
  %3584 = vmatpush1.bf16.msra.mxu0 0
  %3585 = vmatprep.subr.bf16.mxu0 0
  %3586 = vmatpush1.bf16.msra.mxu0 0
  %3587 = vmatprep.subr.bf16.mxu0 0
  %3588 = vmatpush1.bf16.msra.mxu0 0
  %3589 = vmatprep.subr.bf16.mxu0 0
  %3590 = vmatpush1.bf16.msra.mxu0 0
  %3591 = vmatprep.subr.bf16.mxu0 0
  %3592 = vmatpush1.bf16.msra.mxu0 0
  %3593 = vmatprep.subr.bf16.mxu0 0
  %3594 = vmatpush1.bf16.msra.mxu0 0
  %3595 = vmatprep.subr.bf16.mxu0 0
  %3596 = vmatpush1.bf16.msra.mxu0 0
  %3597 = vmatprep.subr.bf16.mxu0 0
  %3598 = vmatpush1.bf16.msra.mxu0 0
  %3599 = vmatprep.subr.bf16.mxu0 0
  %3600 = vmatpush1.bf16.msra.mxu0 0
  %3601 = vmatprep.subr.bf16.mxu0 0
  %3602 = vmatpush1.bf16.msra.mxu0 0
  %3603 = vmatprep.subr.bf16.mxu0 0
  %3604 = vmatpush1.bf16.msra.mxu0 0
  %3605 = vmatprep.subr.bf16.mxu0 0
  %3606 = vmatpush1.bf16.msra.mxu0 0
  %3607 = vmatprep.mubr.bf16.mxu0 0
  %3608 = vmatmul.mubr.bf16.gmra.mrb[0].mxu0 %v3570
  %v3609 = vpop.f32.mrb[0].mxu0
  %v3610 = vadd.f32 0.0, %v3609
  %v3611 = vpop.f32.mrb[0].mxu0
  %v3612 = vpop.f32.mrb[0].mxu0
  %v3613 = vpop.f32.mrb[0].mxu0
  %3614 = vdwg.mxu0
  %3615 = vrot.lane.b32.xlu0 %v1768, 112
  %v3616 = vpop.permute.xlu0 %3615
  %3617 = vrot.lane.b32.xlu0 %v1768, 80
  %v3618 = vpop.permute.xlu0 %3617
  %v3620 = vsel %vm1771, %v3616, 0
  %v3623 = vsel %vm1771, %v3618, 0
  %3625 = vmatprep.subr.bf16.mxu0 0
  %3626 = vmatpush1.bf16.xpose.msra.mxu0 %v3623
  %3627 = vmatprep.subr.bf16.mxu0 0
  %3628 = vmatpush1.bf16.xpose.msra.mxu0 0
  %3629 = vmatprep.subr.bf16.mxu0 0
  %3630 = vmatpush1.bf16.xpose.msra.mxu0 0
  %3631 = vmatprep.subr.bf16.mxu0 0
  %3632 = vmatpush1.bf16.xpose.msra.mxu0 0
  %3633 = vmatprep.subr.bf16.mxu0 0
  %3634 = vmatpush1.bf16.xpose.msra.mxu0 0
  %3635 = vmatprep.subr.bf16.mxu0 0
  %3636 = vmatpush1.bf16.xpose.msra.mxu0 0
  %3637 = vmatprep.subr.bf16.mxu0 0
  %3638 = vmatpush1.bf16.xpose.msra.mxu0 0
  %3639 = vmatprep.subr.bf16.mxu0 0
  %3640 = vmatpush1.bf16.xpose.msra.mxu0 0
  %3641 = vmatprep.subr.bf16.mxu0 0
  %3642 = vmatpush1.bf16.xpose.msra.mxu0 0
  %3643 = vmatprep.subr.bf16.mxu0 0
  %3644 = vmatpush1.bf16.xpose.msra.mxu0 0
  %3645 = vmatprep.subr.bf16.mxu0 0
  %3646 = vmatpush1.bf16.xpose.msra.mxu0 0
  %3647 = vmatprep.subr.bf16.mxu0 0
  %3648 = vmatpush1.bf16.xpose.msra.mxu0 0
  %3649 = vmatprep.subr.bf16.mxu0 0
  %3650 = vmatpush1.bf16.xpose.msra.mxu0 0
  %3651 = vmatprep.subr.bf16.mxu0 0
  %3652 = vmatpush1.bf16.xpose.msra.mxu0 0
  %3653 = vmatprep.subr.bf16.mxu0 0
  %3654 = vmatpush1.bf16.xpose.msra.mxu0 0
  %3655 = vmatprep.subr.bf16.mxu0 0
  %3656 = vmatpush1.bf16.xpose.msra.mxu0 0
  %3657 = vmatprep.mubr.bf16.mxu0 0
  %3658 = vmatmul.mubr.bf16.gmra.mrb[0].mxu0 %v3620
  %v3659 = vpop.f32.mrb[0].mxu0
  %v3660 = vadd.f32 0.0, %v3659
  %v3661 = vpop.f32.mrb[0].mxu0
  %v3662 = vpop.f32.mrb[0].mxu0
  %v3663 = vpop.f32.mrb[0].mxu0
  %3664 = vdwg.mxu0
  %3665 = vrot.lane.b32.xlu0 %v1831, 112
  %v3666 = vpop.permute.xlu0 %3665
  %3667 = vrot.lane.b32.xlu0 %v1831, 80
  %v3668 = vpop.permute.xlu0 %3667
  %v3670 = vsel %vm1771, %v3666, 0
  %v3673 = vsel %vm1771, %v3668, 0
  %3675 = vmatprep.subr.bf16.mxu0 0
  %3676 = vmatpush1.bf16.xpose.msra.mxu0 %v3673
  %3677 = vmatprep.subr.bf16.mxu0 0
  %3678 = vmatpush1.bf16.xpose.msra.mxu0 0
  %3679 = vmatprep.subr.bf16.mxu0 0
  %3680 = vmatpush1.bf16.xpose.msra.mxu0 0
  %3681 = vmatprep.subr.bf16.mxu0 0
  %3682 = vmatpush1.bf16.xpose.msra.mxu0 0
  %3683 = vmatprep.subr.bf16.mxu0 0
  %3684 = vmatpush1.bf16.xpose.msra.mxu0 0
  %3685 = vmatprep.subr.bf16.mxu0 0
  %3686 = vmatpush1.bf16.xpose.msra.mxu0 0
  %3687 = vmatprep.subr.bf16.mxu0 0
  %3688 = vmatpush1.bf16.xpose.msra.mxu0 0
  %3689 = vmatprep.subr.bf16.mxu0 0
  %3690 = vmatpush1.bf16.xpose.msra.mxu0 0
  %3691 = vmatprep.subr.bf16.mxu0 0
  %3692 = vmatpush1.bf16.xpose.msra.mxu0 0
  %3693 = vmatprep.subr.bf16.mxu0 0
  %3694 = vmatpush1.bf16.xpose.msra.mxu0 0
  %3695 = vmatprep.subr.bf16.mxu0 0
  %3696 = vmatpush1.bf16.xpose.msra.mxu0 0
  %3697 = vmatprep.subr.bf16.mxu0 0
  %3698 = vmatpush1.bf16.xpose.msra.mxu0 0
  %3699 = vmatprep.subr.bf16.mxu0 0
  %3700 = vmatpush1.bf16.xpose.msra.mxu0 0
  %3701 = vmatprep.subr.bf16.mxu0 0
  %3702 = vmatpush1.bf16.xpose.msra.mxu0 0
  %3703 = vmatprep.subr.bf16.mxu0 0
  %3704 = vmatpush1.bf16.xpose.msra.mxu0 0
  %3705 = vmatprep.subr.bf16.mxu0 0
  %3706 = vmatpush1.bf16.xpose.msra.mxu0 0
  %3707 = vmatprep.mubr.bf16.mxu0 0
  %3708 = vmatmul.mubr.bf16.gmra.mrb[0].mxu0 %v3670
  %v3709 = vpop.f32.mrb[0].mxu0
  %v3710 = vadd.f32 0.0, %v3709
  %v3711 = vpop.f32.mrb[0].mxu0
  %v3712 = vpop.f32.mrb[0].mxu0
  %v3713 = vpop.f32.mrb[0].mxu0
  %3714 = vdwg.mxu0
  %3715 = vrot.lane.b32.xlu0 %v1893, 112
  %v3716 = vpop.permute.xlu0 %3715
  %3717 = vrot.lane.b32.xlu0 %v1893, 80
  %v3718 = vpop.permute.xlu0 %3717
  %v3720 = vsel %vm1771, %v3716, 0
  %v3723 = vsel %vm1771, %v3718, 0
  %3725 = vmatprep.subr.bf16.mxu0 0
  %3726 = vmatpush1.bf16.xpose.msra.mxu0 %v3723
  %3727 = vmatprep.subr.bf16.mxu0 0
  %3728 = vmatpush1.bf16.xpose.msra.mxu0 0
  %3729 = vmatprep.subr.bf16.mxu0 0
  %3730 = vmatpush1.bf16.xpose.msra.mxu0 0
  %3731 = vmatprep.subr.bf16.mxu0 0
  %3732 = vmatpush1.bf16.xpose.msra.mxu0 0
  %3733 = vmatprep.subr.bf16.mxu0 0
  %3734 = vmatpush1.bf16.xpose.msra.mxu0 0
  %3735 = vmatprep.subr.bf16.mxu0 0
  %3736 = vmatpush1.bf16.xpose.msra.mxu0 0
  %3737 = vmatprep.subr.bf16.mxu0 0
  %3738 = vmatpush1.bf16.xpose.msra.mxu0 0
  %3739 = vmatprep.subr.bf16.mxu0 0
  %3740 = vmatpush1.bf16.xpose.msra.mxu0 0
  %3741 = vmatprep.subr.bf16.mxu0 0
  %3742 = vmatpush1.bf16.xpose.msra.mxu0 0
  %3743 = vmatprep.subr.bf16.mxu0 0
  %3744 = vmatpush1.bf16.xpose.msra.mxu0 0
  %3745 = vmatprep.subr.bf16.mxu0 0
  %3746 = vmatpush1.bf16.xpose.msra.mxu0 0
  %3747 = vmatprep.subr.bf16.mxu0 0
  %3748 = vmatpush1.bf16.xpose.msra.mxu0 0
  %3749 = vmatprep.subr.bf16.mxu0 0
  %3750 = vmatpush1.bf16.xpose.msra.mxu0 0
  %3751 = vmatprep.subr.bf16.mxu0 0
  %3752 = vmatpush1.bf16.xpose.msra.mxu0 0
  %3753 = vmatprep.subr.bf16.mxu0 0
  %3754 = vmatpush1.bf16.xpose.msra.mxu0 0
  %3755 = vmatprep.subr.bf16.mxu0 0
  %3756 = vmatpush1.bf16.xpose.msra.mxu0 0
  %3757 = vmatprep.mubr.bf16.mxu0 0
  %3758 = vmatmul.mubr.bf16.gmra.mrb[0].mxu0 %v3720
  %v3759 = vpop.f32.mrb[0].mxu0
  %v3760 = vadd.f32 0.0, %v3759
  %v3761 = vpop.f32.mrb[0].mxu0
  %v3762 = vpop.f32.mrb[0].mxu0
  %v3763 = vpop.f32.mrb[0].mxu0
  %3764 = vdwg.mxu0
  %3765 = vrot.lane.b32.xlu0 %v1955, 112
  %v3766 = vpop.permute.xlu0 %3765
  %3767 = vrot.lane.b32.xlu0 %v1955, 80
  %v3768 = vpop.permute.xlu0 %3767
  %v3770 = vsel %vm1771, %v3766, 0
  %v3773 = vsel %vm1771, %v3768, 0
  %3775 = vmatprep.subr.bf16.mxu0 0
  %3776 = vmatpush1.bf16.xpose.msra.mxu0 %v3773
  %3777 = vmatprep.subr.bf16.mxu0 0
  %3778 = vmatpush1.bf16.xpose.msra.mxu0 0
  %3779 = vmatprep.subr.bf16.mxu0 0
  %3780 = vmatpush1.bf16.xpose.msra.mxu0 0
  %3781 = vmatprep.subr.bf16.mxu0 0
  %3782 = vmatpush1.bf16.xpose.msra.mxu0 0
  %3783 = vmatprep.subr.bf16.mxu0 0
  %3784 = vmatpush1.bf16.xpose.msra.mxu0 0
  %3785 = vmatprep.subr.bf16.mxu0 0
  %3786 = vmatpush1.bf16.xpose.msra.mxu0 0
  %3787 = vmatprep.subr.bf16.mxu0 0
  %3788 = vmatpush1.bf16.xpose.msra.mxu0 0
  %3789 = vmatprep.subr.bf16.mxu0 0
  %3790 = vmatpush1.bf16.xpose.msra.mxu0 0
  %3791 = vmatprep.subr.bf16.mxu0 0
  %3792 = vmatpush1.bf16.xpose.msra.mxu0 0
  %3793 = vmatprep.subr.bf16.mxu0 0
  %3794 = vmatpush1.bf16.xpose.msra.mxu0 0
  %3795 = vmatprep.subr.bf16.mxu0 0
  %3796 = vmatpush1.bf16.xpose.msra.mxu0 0
  %3797 = vmatprep.subr.bf16.mxu0 0
  %3798 = vmatpush1.bf16.xpose.msra.mxu0 0
  %3799 = vmatprep.subr.bf16.mxu0 0
  %3800 = vmatpush1.bf16.xpose.msra.mxu0 0
  %3801 = vmatprep.subr.bf16.mxu0 0
  %3802 = vmatpush1.bf16.xpose.msra.mxu0 0
  %3803 = vmatprep.subr.bf16.mxu0 0
  %3804 = vmatpush1.bf16.xpose.msra.mxu0 0
  %3805 = vmatprep.subr.bf16.mxu0 0
  %3806 = vmatpush1.bf16.xpose.msra.mxu0 0
  %3807 = vmatprep.mubr.bf16.mxu0 0
  %3808 = vmatmul.mubr.bf16.gmra.mrb[0].mxu0 %v3770
  %v3809 = vpop.f32.mrb[0].mxu0
  %v3810 = vadd.f32 0.0, %v3809
  %v3811 = vpop.f32.mrb[0].mxu0
  %v3812 = vpop.f32.mrb[0].mxu0
  %v3813 = vpop.f32.mrb[0].mxu0
  %3814 = vdwg.mxu0
  %3815 = vrot.lane.b32.xlu0 %v2017, 112
  %v3816 = vpop.permute.xlu0 %3815
  %3817 = vrot.lane.b32.xlu0 %v2017, 80
  %v3818 = vpop.permute.xlu0 %3817
  %v3820 = vsel %vm1771, %v3816, 0
  %v3823 = vsel %vm1771, %v3818, 0
  %3825 = vmatprep.subr.bf16.mxu0 0
  %3826 = vmatpush1.bf16.xpose.msra.mxu0 %v3823
  %3827 = vmatprep.subr.bf16.mxu0 0
  %3828 = vmatpush1.bf16.xpose.msra.mxu0 0
  %3829 = vmatprep.subr.bf16.mxu0 0
  %3830 = vmatpush1.bf16.xpose.msra.mxu0 0
  %3831 = vmatprep.subr.bf16.mxu0 0
  %3832 = vmatpush1.bf16.xpose.msra.mxu0 0
  %3833 = vmatprep.subr.bf16.mxu0 0
  %3834 = vmatpush1.bf16.xpose.msra.mxu0 0
  %3835 = vmatprep.subr.bf16.mxu0 0
  %3836 = vmatpush1.bf16.xpose.msra.mxu0 0
  %3837 = vmatprep.subr.bf16.mxu0 0
  %3838 = vmatpush1.bf16.xpose.msra.mxu0 0
  %3839 = vmatprep.subr.bf16.mxu0 0
  %3840 = vmatpush1.bf16.xpose.msra.mxu0 0
  %3841 = vmatprep.subr.bf16.mxu0 0
  %3842 = vmatpush1.bf16.xpose.msra.mxu0 0
  %3843 = vmatprep.subr.bf16.mxu0 0
  %3844 = vmatpush1.bf16.xpose.msra.mxu0 0
  %3845 = vmatprep.subr.bf16.mxu0 0
  %3846 = vmatpush1.bf16.xpose.msra.mxu0 0
  %3847 = vmatprep.subr.bf16.mxu0 0
  %3848 = vmatpush1.bf16.xpose.msra.mxu0 0
  %3849 = vmatprep.subr.bf16.mxu0 0
  %3850 = vmatpush1.bf16.xpose.msra.mxu0 0
  %3851 = vmatprep.subr.bf16.mxu0 0
  %3852 = vmatpush1.bf16.xpose.msra.mxu0 0
  %3853 = vmatprep.subr.bf16.mxu0 0
  %3854 = vmatpush1.bf16.xpose.msra.mxu0 0
  %3855 = vmatprep.subr.bf16.mxu0 0
  %3856 = vmatpush1.bf16.xpose.msra.mxu0 0
  %3857 = vmatprep.mubr.bf16.mxu0 0
  %3858 = vmatmul.mubr.bf16.gmra.mrb[0].mxu0 %v3820
  %v3859 = vpop.f32.mrb[0].mxu0
  %v3860 = vadd.f32 0.0, %v3859
  %v3861 = vpop.f32.mrb[0].mxu0
  %v3862 = vpop.f32.mrb[0].mxu0
  %v3863 = vpop.f32.mrb[0].mxu0
  %3864 = vdwg.mxu0
  %3865 = vrot.lane.b32.xlu0 %v2079, 112
  %v3866 = vpop.permute.xlu0 %3865
  %3867 = vrot.lane.b32.xlu0 %v2079, 80
  %v3868 = vpop.permute.xlu0 %3867
  %v3870 = vsel %vm1771, %v3866, 0
  %v3873 = vsel %vm1771, %v3868, 0
  %3875 = vmatprep.subr.bf16.mxu0 0
  %3876 = vmatpush1.bf16.xpose.msra.mxu0 %v3873
  %3877 = vmatprep.subr.bf16.mxu0 0
  %3878 = vmatpush1.bf16.xpose.msra.mxu0 0
  %3879 = vmatprep.subr.bf16.mxu0 0
  %3880 = vmatpush1.bf16.xpose.msra.mxu0 0
  %3881 = vmatprep.subr.bf16.mxu0 0
  %3882 = vmatpush1.bf16.xpose.msra.mxu0 0
  %3883 = vmatprep.subr.bf16.mxu0 0
  %3884 = vmatpush1.bf16.xpose.msra.mxu0 0
  %3885 = vmatprep.subr.bf16.mxu0 0
  %3886 = vmatpush1.bf16.xpose.msra.mxu0 0
  %3887 = vmatprep.subr.bf16.mxu0 0
  %3888 = vmatpush1.bf16.xpose.msra.mxu0 0
  %3889 = vmatprep.subr.bf16.mxu0 0
  %3890 = vmatpush1.bf16.xpose.msra.mxu0 0
  %3891 = vmatprep.subr.bf16.mxu0 0
  %3892 = vmatpush1.bf16.xpose.msra.mxu0 0
  %3893 = vmatprep.subr.bf16.mxu0 0
  %3894 = vmatpush1.bf16.xpose.msra.mxu0 0
  %3895 = vmatprep.subr.bf16.mxu0 0
  %3896 = vmatpush1.bf16.xpose.msra.mxu0 0
  %3897 = vmatprep.subr.bf16.mxu0 0
  %3898 = vmatpush1.bf16.xpose.msra.mxu0 0
  %3899 = vmatprep.subr.bf16.mxu0 0
  %3900 = vmatpush1.bf16.xpose.msra.mxu0 0
  %3901 = vmatprep.subr.bf16.mxu0 0
  %3902 = vmatpush1.bf16.xpose.msra.mxu0 0
  %3903 = vmatprep.subr.bf16.mxu0 0
  %3904 = vmatpush1.bf16.xpose.msra.mxu0 0
  %3905 = vmatprep.subr.bf16.mxu0 0
  %3906 = vmatpush1.bf16.xpose.msra.mxu0 0
  %3907 = vmatprep.mubr.bf16.mxu0 0
  %3908 = vmatmul.mubr.bf16.gmra.mrb[0].mxu0 %v3870
  %v3909 = vpop.f32.mrb[0].mxu0
  %v3910 = vadd.f32 0.0, %v3909
  %v3911 = vpop.f32.mrb[0].mxu0
  %v3912 = vpop.f32.mrb[0].mxu0
  %v3913 = vpop.f32.mrb[0].mxu0
  %3914 = vdwg.mxu0
  %3915 = vrot.lane.b32.xlu0 %v2141, 112
  %v3916 = vpop.permute.xlu0 %3915
  %3917 = vrot.lane.b32.xlu0 %v2141, 80
  %v3918 = vpop.permute.xlu0 %3917
  %v3920 = vsel %vm1771, %v3916, 0
  %v3923 = vsel %vm1771, %v3918, 0
  %3925 = vmatprep.subr.bf16.mxu0 0
  %3926 = vmatpush1.bf16.xpose.msra.mxu0 %v3923
  %3927 = vmatprep.subr.bf16.mxu0 0
  %3928 = vmatpush1.bf16.xpose.msra.mxu0 0
  %3929 = vmatprep.subr.bf16.mxu0 0
  %3930 = vmatpush1.bf16.xpose.msra.mxu0 0
  %3931 = vmatprep.subr.bf16.mxu0 0
  %3932 = vmatpush1.bf16.xpose.msra.mxu0 0
  %3933 = vmatprep.subr.bf16.mxu0 0
  %3934 = vmatpush1.bf16.xpose.msra.mxu0 0
  %3935 = vmatprep.subr.bf16.mxu0 0
  %3936 = vmatpush1.bf16.xpose.msra.mxu0 0
  %3937 = vmatprep.subr.bf16.mxu0 0
  %3938 = vmatpush1.bf16.xpose.msra.mxu0 0
  %3939 = vmatprep.subr.bf16.mxu0 0
  %3940 = vmatpush1.bf16.xpose.msra.mxu0 0
  %3941 = vmatprep.subr.bf16.mxu0 0
  %3942 = vmatpush1.bf16.xpose.msra.mxu0 0
  %3943 = vmatprep.subr.bf16.mxu0 0
  %3944 = vmatpush1.bf16.xpose.msra.mxu0 0
  %3945 = vmatprep.subr.bf16.mxu0 0
  %3946 = vmatpush1.bf16.xpose.msra.mxu0 0
  %3947 = vmatprep.subr.bf16.mxu0 0
  %3948 = vmatpush1.bf16.xpose.msra.mxu0 0
  %3949 = vmatprep.subr.bf16.mxu0 0
  %3950 = vmatpush1.bf16.xpose.msra.mxu0 0
  %3951 = vmatprep.subr.bf16.mxu0 0
  %3952 = vmatpush1.bf16.xpose.msra.mxu0 0
  %3953 = vmatprep.subr.bf16.mxu0 0
  %3954 = vmatpush1.bf16.xpose.msra.mxu0 0
  %3955 = vmatprep.subr.bf16.mxu0 0
  %3956 = vmatpush1.bf16.xpose.msra.mxu0 0
  %3957 = vmatprep.mubr.bf16.mxu0 0
  %3958 = vmatmul.mubr.bf16.gmra.mrb[0].mxu0 %v3920
  %v3959 = vpop.f32.mrb[0].mxu0
  %v3960 = vadd.f32 0.0, %v3959
  %v3961 = vpop.f32.mrb[0].mxu0
  %v3962 = vpop.f32.mrb[0].mxu0
  %v3963 = vpop.f32.mrb[0].mxu0
  %3964 = vdwg.mxu0
  %3965 = vrot.lane.b32.xlu0 %v2203, 112
  %v3966 = vpop.permute.xlu0 %3965
  %3967 = vrot.lane.b32.xlu0 %v2203, 80
  %v3968 = vpop.permute.xlu0 %3967
  %v3970 = vsel %vm1771, %v3966, 0
  %v3973 = vsel %vm1771, %v3968, 0
  %3975 = vmatprep.subr.bf16.mxu0 0
  %3976 = vmatpush1.bf16.xpose.msra.mxu0 %v3973
  %3977 = vmatprep.subr.bf16.mxu0 0
  %3978 = vmatpush1.bf16.xpose.msra.mxu0 0
  %3979 = vmatprep.subr.bf16.mxu0 0
  %3980 = vmatpush1.bf16.xpose.msra.mxu0 0
  %3981 = vmatprep.subr.bf16.mxu0 0
  %3982 = vmatpush1.bf16.xpose.msra.mxu0 0
  %3983 = vmatprep.subr.bf16.mxu0 0
  %3984 = vmatpush1.bf16.xpose.msra.mxu0 0
  %3985 = vmatprep.subr.bf16.mxu0 0
  %3986 = vmatpush1.bf16.xpose.msra.mxu0 0
  %3987 = vmatprep.subr.bf16.mxu0 0
  %3988 = vmatpush1.bf16.xpose.msra.mxu0 0
  %3989 = vmatprep.subr.bf16.mxu0 0
  %3990 = vmatpush1.bf16.xpose.msra.mxu0 0
  %3991 = vmatprep.subr.bf16.mxu0 0
  %3992 = vmatpush1.bf16.xpose.msra.mxu0 0
  %3993 = vmatprep.subr.bf16.mxu0 0
  %3994 = vmatpush1.bf16.xpose.msra.mxu0 0
  %3995 = vmatprep.subr.bf16.mxu0 0
  %3996 = vmatpush1.bf16.xpose.msra.mxu0 0
  %3997 = vmatprep.subr.bf16.mxu0 0
  %3998 = vmatpush1.bf16.xpose.msra.mxu0 0
  %3999 = vmatprep.subr.bf16.mxu0 0
  %4000 = vmatpush1.bf16.xpose.msra.mxu0 0
  %4001 = vmatprep.subr.bf16.mxu0 0
  %4002 = vmatpush1.bf16.xpose.msra.mxu0 0
  %4003 = vmatprep.subr.bf16.mxu0 0
  %4004 = vmatpush1.bf16.xpose.msra.mxu0 0
  %4005 = vmatprep.subr.bf16.mxu0 0
  %4006 = vmatpush1.bf16.xpose.msra.mxu0 0
  %4007 = vmatprep.mubr.bf16.mxu0 0
  %4008 = vmatmul.mubr.bf16.gmra.mrb[0].mxu0 %v3970
  %v4009 = vpop.f32.mrb[0].mxu0
  %v4010 = vadd.f32 0.0, %v4009
  %v4011 = vpop.f32.mrb[0].mxu0
  %v4012 = vpop.f32.mrb[0].mxu0
  %v4013 = vpop.f32.mrb[0].mxu0
  %4014 = vdwg.mxu0
  %v4015 = vsel %vm2252, %v3660, -inf
  %4016 = vmax.xlane.f32.xlu0 %v4015
  %v4017 = vpop.xlane.xlu0 %4016
  %v4018 = vsel %vm2252, %v3710, -inf
  %4019 = vmax.xlane.f32.xlu0 %v4018
  %v4020 = vpop.xlane.xlu0 %4019
  %v4021 = vsel %vm2252, %v3760, -inf
  %4022 = vmax.xlane.f32.xlu0 %v4021
  %v4023 = vpop.xlane.xlu0 %4022
  %v4024 = vsel %vm2252, %v3810, -inf
  %4025 = vmax.xlane.f32.xlu0 %v4024
  %v4026 = vpop.xlane.xlu0 %4025
  %v4027 = vsel %vm2252, %v3860, -inf
  %4028 = vmax.xlane.f32.xlu0 %v4027
  %v4029 = vpop.xlane.xlu0 %4028
  %v4030 = vsel %vm2252, %v3910, -inf
  %4031 = vmax.xlane.f32.xlu0 %v4030
  %v4032 = vpop.xlane.xlu0 %4031
  %v4033 = vsel %vm2252, %v3960, -inf
  %4034 = vmax.xlane.f32.xlu0 %v4033
  %v4035 = vpop.xlane.xlu0 %4034
  %v4036 = vsel %vm2252, %v4010, -inf
  %4037 = vmax.xlane.f32.xlu0 %v4036
  %v4038 = vpop.xlane.xlu0 %4037
  %v4039 = vsub.f32 %v3660, %v4017
  %v4040 = vsub.f32 %v3710, %v4020
  %v4041 = vsub.f32 %v3760, %v4023
  %v4042 = vsub.f32 %v3810, %v4026
  %v4043 = vsub.f32 %v3860, %v4029
  %v4044 = vsub.f32 %v3910, %v4032
  %v4045 = vsub.f32 %v3960, %v4035
  %v4046 = vsub.f32 %v4010, %v4038
  %v4047 = vmul.f32 %v4039, 1.442695
  %v4048 = vpow.pop %v4047
  %v4049 = vmul.f32 %v4040, 1.442695
  %v4050 = vpow.pop %v4049
  %v4051 = vmul.f32 %v4041, 1.442695
  %v4052 = vpow.pop %v4051
  %v4053 = vmul.f32 %v4042, 1.442695
  %v4054 = vpow.pop %v4053
  %v4055 = vmul.f32 %v4043, 1.442695
  %v4056 = vpow.pop %v4055
  %v4057 = vmul.f32 %v4044, 1.442695
  %v4058 = vpow.pop %v4057
  %v4059 = vmul.f32 %v4045, 1.442695
  %v4060 = vpow.pop %v4059
  %v4061 = vmul.f32 %v4046, 1.442695
  %v4062 = vpow.pop %v4061
  %v4063 = vsel %vm2252, %v4048, 0.0
  %4064 = vadd.xlane.f32.xlu0 %v4063
  %v4065 = vpop.xlane.xlu0 %4064
  %v4066 = vsel %vm2252, %v4050, 0.0
  %4067 = vadd.xlane.f32.xlu0 %v4066
  %v4068 = vpop.xlane.xlu0 %4067
  %v4069 = vsel %vm2252, %v4052, 0.0
  %4070 = vadd.xlane.f32.xlu0 %v4069
  %v4071 = vpop.xlane.xlu0 %4070
  %v4072 = vsel %vm2252, %v4054, 0.0
  %4073 = vadd.xlane.f32.xlu0 %v4072
  %v4074 = vpop.xlane.xlu0 %4073
  %v4075 = vsel %vm2252, %v4056, 0.0
  %4076 = vadd.xlane.f32.xlu0 %v4075
  %v4077 = vpop.xlane.xlu0 %4076
  %v4078 = vsel %vm2252, %v4058, 0.0
  %4079 = vadd.xlane.f32.xlu0 %v4078
  %v4080 = vpop.xlane.xlu0 %4079
  %v4081 = vsel %vm2252, %v4060, 0.0
  %4082 = vadd.xlane.f32.xlu0 %v4081
  %v4083 = vpop.xlane.xlu0 %4082
  %v4084 = vsel %vm2252, %v4062, 0.0
  %4085 = vadd.xlane.f32.xlu0 %v4084
  %v4086 = vpop.xlane.xlu0 %4085
  %v4087 = vrcp.pop %v4065
  %v4088 = vmul.f32 %v4048, %v4087
  %v4089 = vrcp.pop %v4068
  %v4090 = vmul.f32 %v4050, %v4089
  %v4091 = vrcp.pop %v4071
  %v4092 = vmul.f32 %v4052, %v4091
  %v4093 = vrcp.pop %v4074
  %v4094 = vmul.f32 %v4054, %v4093
  %v4095 = vrcp.pop %v4077
  %v4096 = vmul.f32 %v4056, %v4095
  %v4097 = vrcp.pop %v4080
  %v4098 = vmul.f32 %v4058, %v4097
  %v4099 = vrcp.pop %v4083
  %v4100 = vmul.f32 %v4060, %v4099
  %v4101 = vrcp.pop %v4086
  %v4102 = vmul.f32 %v4062, %v4101
  %v4103 = vpack.c.bf16 %v4088, %v4088
  %v4104 = vpack.c.bf16 %v4090, %v4090
  %v4105 = vpack.c.bf16 %v4092, %v4092
  %v4106 = vpack.c.bf16 %v4094, %v4094
  %v4107 = vpack.c.bf16 %v4096, %v4096
  %v4108 = vpack.c.bf16 %v4098, %v4098
  %v4109 = vpack.c.bf16 %v4100, %v4100
  %v4110 = vpack.c.bf16 %v4102, %v4102
  %4111 = vrot.lane.b32.xlu0 %v1768, 48
  %v4112 = vpop.permute.xlu0 %4111
  %v4114 = vsel %vm2351, %v4103, 0
  %v4117 = vsel %vm2355, %v4112, 0
  %4119 = vmatprep.subr.bf16.mxu0 0
  %4120 = vmatpush1.bf16.msra.mxu0 %v4117
  %4121 = vmatprep.subr.bf16.mxu0 0
  %4122 = vmatpush1.bf16.msra.mxu0 0
  %4123 = vmatprep.subr.bf16.mxu0 0
  %4124 = vmatpush1.bf16.msra.mxu0 0
  %4125 = vmatprep.subr.bf16.mxu0 0
  %4126 = vmatpush1.bf16.msra.mxu0 0
  %4127 = vmatprep.subr.bf16.mxu0 0
  %4128 = vmatpush1.bf16.msra.mxu0 0
  %4129 = vmatprep.subr.bf16.mxu0 0
  %4130 = vmatpush1.bf16.msra.mxu0 0
  %4131 = vmatprep.subr.bf16.mxu0 0
  %4132 = vmatpush1.bf16.msra.mxu0 0
  %4133 = vmatprep.subr.bf16.mxu0 0
  %4134 = vmatpush1.bf16.msra.mxu0 0
  %4135 = vmatprep.subr.bf16.mxu0 0
  %4136 = vmatpush1.bf16.msra.mxu0 0
  %4137 = vmatprep.subr.bf16.mxu0 0
  %4138 = vmatpush1.bf16.msra.mxu0 0
  %4139 = vmatprep.subr.bf16.mxu0 0
  %4140 = vmatpush1.bf16.msra.mxu0 0
  %4141 = vmatprep.subr.bf16.mxu0 0
  %4142 = vmatpush1.bf16.msra.mxu0 0
  %4143 = vmatprep.subr.bf16.mxu0 0
  %4144 = vmatpush1.bf16.msra.mxu0 0
  %4145 = vmatprep.subr.bf16.mxu0 0
  %4146 = vmatpush1.bf16.msra.mxu0 0
  %4147 = vmatprep.subr.bf16.mxu0 0
  %4148 = vmatpush1.bf16.msra.mxu0 0
  %4149 = vmatprep.subr.bf16.mxu0 0
  %4150 = vmatpush1.bf16.msra.mxu0 0
  %4151 = vmatprep.mubr.bf16.mxu0 0
  %4152 = vmatmul.mubr.bf16.gmra.mrb[0].mxu0 %v4114
  %v4153 = vpop.f32.mrb[0].mxu0
  %v4154 = vadd.f32 0.0, %v4153
  %v4155 = vpop.f32.mrb[0].mxu0
  %v4156 = vpop.f32.mrb[0].mxu0
  %v4157 = vpop.f32.mrb[0].mxu0
  %4158 = vdwg.mxu0
  %4159 = vrot.lane.b32.xlu0 %v1831, 48
  %v4160 = vpop.permute.xlu0 %4159
  %v4162 = vsel %vm2351, %v4104, 0
  %v4165 = vsel %vm2355, %v4160, 0
  %4167 = vmatprep.subr.bf16.mxu0 0
  %4168 = vmatpush1.bf16.msra.mxu0 %v4165
  %4169 = vmatprep.subr.bf16.mxu0 0
  %4170 = vmatpush1.bf16.msra.mxu0 0
  %4171 = vmatprep.subr.bf16.mxu0 0
  %4172 = vmatpush1.bf16.msra.mxu0 0
  %4173 = vmatprep.subr.bf16.mxu0 0
  %4174 = vmatpush1.bf16.msra.mxu0 0
  %4175 = vmatprep.subr.bf16.mxu0 0
  %4176 = vmatpush1.bf16.msra.mxu0 0
  %4177 = vmatprep.subr.bf16.mxu0 0
  %4178 = vmatpush1.bf16.msra.mxu0 0
  %4179 = vmatprep.subr.bf16.mxu0 0
  %4180 = vmatpush1.bf16.msra.mxu0 0
  %4181 = vmatprep.subr.bf16.mxu0 0
  %4182 = vmatpush1.bf16.msra.mxu0 0
  %4183 = vmatprep.subr.bf16.mxu0 0
  %4184 = vmatpush1.bf16.msra.mxu0 0
  %4185 = vmatprep.subr.bf16.mxu0 0
  %4186 = vmatpush1.bf16.msra.mxu0 0
  %4187 = vmatprep.subr.bf16.mxu0 0
  %4188 = vmatpush1.bf16.msra.mxu0 0
  %4189 = vmatprep.subr.bf16.mxu0 0
  %4190 = vmatpush1.bf16.msra.mxu0 0
  %4191 = vmatprep.subr.bf16.mxu0 0
  %4192 = vmatpush1.bf16.msra.mxu0 0
  %4193 = vmatprep.subr.bf16.mxu0 0
  %4194 = vmatpush1.bf16.msra.mxu0 0
  %4195 = vmatprep.subr.bf16.mxu0 0
  %4196 = vmatpush1.bf16.msra.mxu0 0
  %4197 = vmatprep.subr.bf16.mxu0 0
  %4198 = vmatpush1.bf16.msra.mxu0 0
  %4199 = vmatprep.mubr.bf16.mxu0 0
  %4200 = vmatmul.mubr.bf16.gmra.mrb[0].mxu0 %v4162
  %v4201 = vpop.f32.mrb[0].mxu0
  %v4202 = vadd.f32 0.0, %v4201
  %v4203 = vpop.f32.mrb[0].mxu0
  %v4204 = vpop.f32.mrb[0].mxu0
  %v4205 = vpop.f32.mrb[0].mxu0
  %4206 = vdwg.mxu0
  %4207 = vrot.lane.b32.xlu0 %v1893, 48
  %v4208 = vpop.permute.xlu0 %4207
  %v4210 = vsel %vm2351, %v4105, 0
  %v4213 = vsel %vm2355, %v4208, 0
  %4215 = vmatprep.subr.bf16.mxu0 0
  %4216 = vmatpush1.bf16.msra.mxu0 %v4213
  %4217 = vmatprep.subr.bf16.mxu0 0
  %4218 = vmatpush1.bf16.msra.mxu0 0
  %4219 = vmatprep.subr.bf16.mxu0 0
  %4220 = vmatpush1.bf16.msra.mxu0 0
  %4221 = vmatprep.subr.bf16.mxu0 0
  %4222 = vmatpush1.bf16.msra.mxu0 0
  %4223 = vmatprep.subr.bf16.mxu0 0
  %4224 = vmatpush1.bf16.msra.mxu0 0
  %4225 = vmatprep.subr.bf16.mxu0 0
  %4226 = vmatpush1.bf16.msra.mxu0 0
  %4227 = vmatprep.subr.bf16.mxu0 0
  %4228 = vmatpush1.bf16.msra.mxu0 0
  %4229 = vmatprep.subr.bf16.mxu0 0
  %4230 = vmatpush1.bf16.msra.mxu0 0
  %4231 = vmatprep.subr.bf16.mxu0 0
  %4232 = vmatpush1.bf16.msra.mxu0 0
  %4233 = vmatprep.subr.bf16.mxu0 0
  %4234 = vmatpush1.bf16.msra.mxu0 0
  %4235 = vmatprep.subr.bf16.mxu0 0
  %4236 = vmatpush1.bf16.msra.mxu0 0
  %4237 = vmatprep.subr.bf16.mxu0 0
  %4238 = vmatpush1.bf16.msra.mxu0 0
  %4239 = vmatprep.subr.bf16.mxu0 0
  %4240 = vmatpush1.bf16.msra.mxu0 0
  %4241 = vmatprep.subr.bf16.mxu0 0
  %4242 = vmatpush1.bf16.msra.mxu0 0
  %4243 = vmatprep.subr.bf16.mxu0 0
  %4244 = vmatpush1.bf16.msra.mxu0 0
  %4245 = vmatprep.subr.bf16.mxu0 0
  %4246 = vmatpush1.bf16.msra.mxu0 0
  %4247 = vmatprep.mubr.bf16.mxu0 0
  %4248 = vmatmul.mubr.bf16.gmra.mrb[0].mxu0 %v4210
  %v4249 = vpop.f32.mrb[0].mxu0
  %v4250 = vadd.f32 0.0, %v4249
  %v4251 = vpop.f32.mrb[0].mxu0
  %v4252 = vpop.f32.mrb[0].mxu0
  %v4253 = vpop.f32.mrb[0].mxu0
  %4254 = vdwg.mxu0
  %4255 = vrot.lane.b32.xlu0 %v1955, 48
  %v4256 = vpop.permute.xlu0 %4255
  %v4258 = vsel %vm2351, %v4106, 0
  %v4261 = vsel %vm2355, %v4256, 0
  %4263 = vmatprep.subr.bf16.mxu0 0
  %4264 = vmatpush1.bf16.msra.mxu0 %v4261
  %4265 = vmatprep.subr.bf16.mxu0 0
  %4266 = vmatpush1.bf16.msra.mxu0 0
  %4267 = vmatprep.subr.bf16.mxu0 0
  %4268 = vmatpush1.bf16.msra.mxu0 0
  %4269 = vmatprep.subr.bf16.mxu0 0
  %4270 = vmatpush1.bf16.msra.mxu0 0
  %4271 = vmatprep.subr.bf16.mxu0 0
  %4272 = vmatpush1.bf16.msra.mxu0 0
  %4273 = vmatprep.subr.bf16.mxu0 0
  %4274 = vmatpush1.bf16.msra.mxu0 0
  %4275 = vmatprep.subr.bf16.mxu0 0
  %4276 = vmatpush1.bf16.msra.mxu0 0
  %4277 = vmatprep.subr.bf16.mxu0 0
  %4278 = vmatpush1.bf16.msra.mxu0 0
  %4279 = vmatprep.subr.bf16.mxu0 0
  %4280 = vmatpush1.bf16.msra.mxu0 0
  %4281 = vmatprep.subr.bf16.mxu0 0
  %4282 = vmatpush1.bf16.msra.mxu0 0
  %4283 = vmatprep.subr.bf16.mxu0 0
  %4284 = vmatpush1.bf16.msra.mxu0 0
  %4285 = vmatprep.subr.bf16.mxu0 0
  %4286 = vmatpush1.bf16.msra.mxu0 0
  %4287 = vmatprep.subr.bf16.mxu0 0
  %4288 = vmatpush1.bf16.msra.mxu0 0
  %4289 = vmatprep.subr.bf16.mxu0 0
  %4290 = vmatpush1.bf16.msra.mxu0 0
  %4291 = vmatprep.subr.bf16.mxu0 0
  %4292 = vmatpush1.bf16.msra.mxu0 0
  %4293 = vmatprep.subr.bf16.mxu0 0
  %4294 = vmatpush1.bf16.msra.mxu0 0
  %4295 = vmatprep.mubr.bf16.mxu0 0
  %4296 = vmatmul.mubr.bf16.gmra.mrb[0].mxu0 %v4258
  %v4297 = vpop.f32.mrb[0].mxu0
  %v4298 = vadd.f32 0.0, %v4297
  %v4299 = vpop.f32.mrb[0].mxu0
  %v4300 = vpop.f32.mrb[0].mxu0
  %v4301 = vpop.f32.mrb[0].mxu0
  %4302 = vdwg.mxu0
  %4303 = vrot.lane.b32.xlu0 %v2017, 48
  %v4304 = vpop.permute.xlu0 %4303
  %v4306 = vsel %vm2351, %v4107, 0
  %v4309 = vsel %vm2355, %v4304, 0
  %4311 = vmatprep.subr.bf16.mxu0 0
  %4312 = vmatpush1.bf16.msra.mxu0 %v4309
  %4313 = vmatprep.subr.bf16.mxu0 0
  %4314 = vmatpush1.bf16.msra.mxu0 0
  %4315 = vmatprep.subr.bf16.mxu0 0
  %4316 = vmatpush1.bf16.msra.mxu0 0
  %4317 = vmatprep.subr.bf16.mxu0 0
  %4318 = vmatpush1.bf16.msra.mxu0 0
  %4319 = vmatprep.subr.bf16.mxu0 0
  %4320 = vmatpush1.bf16.msra.mxu0 0
  %4321 = vmatprep.subr.bf16.mxu0 0
  %4322 = vmatpush1.bf16.msra.mxu0 0
  %4323 = vmatprep.subr.bf16.mxu0 0
  %4324 = vmatpush1.bf16.msra.mxu0 0
  %4325 = vmatprep.subr.bf16.mxu0 0
  %4326 = vmatpush1.bf16.msra.mxu0 0
  %4327 = vmatprep.subr.bf16.mxu0 0
  %4328 = vmatpush1.bf16.msra.mxu0 0
  %4329 = vmatprep.subr.bf16.mxu0 0
  %4330 = vmatpush1.bf16.msra.mxu0 0
  %4331 = vmatprep.subr.bf16.mxu0 0
  %4332 = vmatpush1.bf16.msra.mxu0 0
  %4333 = vmatprep.subr.bf16.mxu0 0
  %4334 = vmatpush1.bf16.msra.mxu0 0
  %4335 = vmatprep.subr.bf16.mxu0 0
  %4336 = vmatpush1.bf16.msra.mxu0 0
  %4337 = vmatprep.subr.bf16.mxu0 0
  %4338 = vmatpush1.bf16.msra.mxu0 0
  %4339 = vmatprep.subr.bf16.mxu0 0
  %4340 = vmatpush1.bf16.msra.mxu0 0
  %4341 = vmatprep.subr.bf16.mxu0 0
  %4342 = vmatpush1.bf16.msra.mxu0 0
  %4343 = vmatprep.mubr.bf16.mxu0 0
  %4344 = vmatmul.mubr.bf16.gmra.mrb[0].mxu0 %v4306
  %v4345 = vpop.f32.mrb[0].mxu0
  %v4346 = vadd.f32 0.0, %v4345
  %v4347 = vpop.f32.mrb[0].mxu0
  %v4348 = vpop.f32.mrb[0].mxu0
  %v4349 = vpop.f32.mrb[0].mxu0
  %4350 = vdwg.mxu0
  %4351 = vrot.lane.b32.xlu0 %v2079, 48
  %v4352 = vpop.permute.xlu0 %4351
  %v4354 = vsel %vm2351, %v4108, 0
  %v4357 = vsel %vm2355, %v4352, 0
  %4359 = vmatprep.subr.bf16.mxu0 0
  %4360 = vmatpush1.bf16.msra.mxu0 %v4357
  %4361 = vmatprep.subr.bf16.mxu0 0
  %4362 = vmatpush1.bf16.msra.mxu0 0
  %4363 = vmatprep.subr.bf16.mxu0 0
  %4364 = vmatpush1.bf16.msra.mxu0 0
  %4365 = vmatprep.subr.bf16.mxu0 0
  %4366 = vmatpush1.bf16.msra.mxu0 0
  %4367 = vmatprep.subr.bf16.mxu0 0
  %4368 = vmatpush1.bf16.msra.mxu0 0
  %4369 = vmatprep.subr.bf16.mxu0 0
  %4370 = vmatpush1.bf16.msra.mxu0 0
  %4371 = vmatprep.subr.bf16.mxu0 0
  %4372 = vmatpush1.bf16.msra.mxu0 0
  %4373 = vmatprep.subr.bf16.mxu0 0
  %4374 = vmatpush1.bf16.msra.mxu0 0
  %4375 = vmatprep.subr.bf16.mxu0 0
  %4376 = vmatpush1.bf16.msra.mxu0 0
  %4377 = vmatprep.subr.bf16.mxu0 0
  %4378 = vmatpush1.bf16.msra.mxu0 0
  %4379 = vmatprep.subr.bf16.mxu0 0
  %4380 = vmatpush1.bf16.msra.mxu0 0
  %4381 = vmatprep.subr.bf16.mxu0 0
  %4382 = vmatpush1.bf16.msra.mxu0 0
  %4383 = vmatprep.subr.bf16.mxu0 0
  %4384 = vmatpush1.bf16.msra.mxu0 0
  %4385 = vmatprep.subr.bf16.mxu0 0
  %4386 = vmatpush1.bf16.msra.mxu0 0
  %4387 = vmatprep.subr.bf16.mxu0 0
  %4388 = vmatpush1.bf16.msra.mxu0 0
  %4389 = vmatprep.subr.bf16.mxu0 0
  %4390 = vmatpush1.bf16.msra.mxu0 0
  %4391 = vmatprep.mubr.bf16.mxu0 0
  %4392 = vmatmul.mubr.bf16.gmra.mrb[0].mxu0 %v4354
  %v4393 = vpop.f32.mrb[0].mxu0
  %v4394 = vadd.f32 0.0, %v4393
  %v4395 = vpop.f32.mrb[0].mxu0
  %v4396 = vpop.f32.mrb[0].mxu0
  %v4397 = vpop.f32.mrb[0].mxu0
  %4398 = vdwg.mxu0
  %4399 = vrot.lane.b32.xlu0 %v2141, 48
  %v4400 = vpop.permute.xlu0 %4399
  %v4402 = vsel %vm2351, %v4109, 0
  %v4405 = vsel %vm2355, %v4400, 0
  %4407 = vmatprep.subr.bf16.mxu0 0
  %4408 = vmatpush1.bf16.msra.mxu0 %v4405
  %4409 = vmatprep.subr.bf16.mxu0 0
  %4410 = vmatpush1.bf16.msra.mxu0 0
  %4411 = vmatprep.subr.bf16.mxu0 0
  %4412 = vmatpush1.bf16.msra.mxu0 0
  %4413 = vmatprep.subr.bf16.mxu0 0
  %4414 = vmatpush1.bf16.msra.mxu0 0
  %4415 = vmatprep.subr.bf16.mxu0 0
  %4416 = vmatpush1.bf16.msra.mxu0 0
  %4417 = vmatprep.subr.bf16.mxu0 0
  %4418 = vmatpush1.bf16.msra.mxu0 0
  %4419 = vmatprep.subr.bf16.mxu0 0
  %4420 = vmatpush1.bf16.msra.mxu0 0
  %4421 = vmatprep.subr.bf16.mxu0 0
  %4422 = vmatpush1.bf16.msra.mxu0 0
  %4423 = vmatprep.subr.bf16.mxu0 0
  %4424 = vmatpush1.bf16.msra.mxu0 0
  %4425 = vmatprep.subr.bf16.mxu0 0
  %4426 = vmatpush1.bf16.msra.mxu0 0
  %4427 = vmatprep.subr.bf16.mxu0 0
  %4428 = vmatpush1.bf16.msra.mxu0 0
  %4429 = vmatprep.subr.bf16.mxu0 0
  %4430 = vmatpush1.bf16.msra.mxu0 0
  %4431 = vmatprep.subr.bf16.mxu0 0
  %4432 = vmatpush1.bf16.msra.mxu0 0
  %4433 = vmatprep.subr.bf16.mxu0 0
  %4434 = vmatpush1.bf16.msra.mxu0 0
  %4435 = vmatprep.subr.bf16.mxu0 0
  %4436 = vmatpush1.bf16.msra.mxu0 0
  %4437 = vmatprep.subr.bf16.mxu0 0
  %4438 = vmatpush1.bf16.msra.mxu0 0
  %4439 = vmatprep.mubr.bf16.mxu0 0
  %4440 = vmatmul.mubr.bf16.gmra.mrb[0].mxu0 %v4402
  %v4441 = vpop.f32.mrb[0].mxu0
  %v4442 = vadd.f32 0.0, %v4441
  %v4443 = vpop.f32.mrb[0].mxu0
  %v4444 = vpop.f32.mrb[0].mxu0
  %v4445 = vpop.f32.mrb[0].mxu0
  %4446 = vdwg.mxu0
  %4447 = vrot.lane.b32.xlu0 %v2203, 48
  %v4448 = vpop.permute.xlu0 %4447
  %v4450 = vsel %vm2351, %v4110, 0
  %v4453 = vsel %vm2355, %v4448, 0
  %4455 = vmatprep.subr.bf16.mxu0 0
  %4456 = vmatpush1.bf16.msra.mxu0 %v4453
  %4457 = vmatprep.subr.bf16.mxu0 0
  %4458 = vmatpush1.bf16.msra.mxu0 0
  %4459 = vmatprep.subr.bf16.mxu0 0
  %4460 = vmatpush1.bf16.msra.mxu0 0
  %4461 = vmatprep.subr.bf16.mxu0 0
  %4462 = vmatpush1.bf16.msra.mxu0 0
  %4463 = vmatprep.subr.bf16.mxu0 0
  %4464 = vmatpush1.bf16.msra.mxu0 0
  %4465 = vmatprep.subr.bf16.mxu0 0
  %4466 = vmatpush1.bf16.msra.mxu0 0
  %4467 = vmatprep.subr.bf16.mxu0 0
  %4468 = vmatpush1.bf16.msra.mxu0 0
  %4469 = vmatprep.subr.bf16.mxu0 0
  %4470 = vmatpush1.bf16.msra.mxu0 0
  %4471 = vmatprep.subr.bf16.mxu0 0
  %4472 = vmatpush1.bf16.msra.mxu0 0
  %4473 = vmatprep.subr.bf16.mxu0 0
  %4474 = vmatpush1.bf16.msra.mxu0 0
  %4475 = vmatprep.subr.bf16.mxu0 0
  %4476 = vmatpush1.bf16.msra.mxu0 0
  %4477 = vmatprep.subr.bf16.mxu0 0
  %4478 = vmatpush1.bf16.msra.mxu0 0
  %4479 = vmatprep.subr.bf16.mxu0 0
  %4480 = vmatpush1.bf16.msra.mxu0 0
  %4481 = vmatprep.subr.bf16.mxu0 0
  %4482 = vmatpush1.bf16.msra.mxu0 0
  %4483 = vmatprep.subr.bf16.mxu0 0
  %4484 = vmatpush1.bf16.msra.mxu0 0
  %4485 = vmatprep.subr.bf16.mxu0 0
  %4486 = vmatpush1.bf16.msra.mxu0 0
  %4487 = vmatprep.mubr.bf16.mxu0 0
  %4488 = vmatmul.mubr.bf16.gmra.mrb[0].mxu0 %v4450
  %v4489 = vpop.f32.mrb[0].mxu0
  %v4490 = vadd.f32 0.0, %v4489
  %v4491 = vpop.f32.mrb[0].mxu0
  %v4492 = vpop.f32.mrb[0].mxu0
  %v4493 = vpop.f32.mrb[0].mxu0
  %4494 = vdwg.mxu0
  %4495 = vrot.lane.b32.xlu0 %v1768, 104
  %v4496 = vpop.permute.xlu0 %4495
  %4497 = vrot.lane.b32.xlu0 %v1768, 72
  %v4498 = vpop.permute.xlu0 %4497
  %v4500 = vsel %vm1771, %v4496, 0
  %v4503 = vsel %vm1771, %v4498, 0
  %4505 = vmatprep.subr.bf16.mxu0 0
  %4506 = vmatpush1.bf16.xpose.msra.mxu0 %v4503
  %4507 = vmatprep.subr.bf16.mxu0 0
  %4508 = vmatpush1.bf16.xpose.msra.mxu0 0
  %4509 = vmatprep.subr.bf16.mxu0 0
  %4510 = vmatpush1.bf16.xpose.msra.mxu0 0
  %4511 = vmatprep.subr.bf16.mxu0 0
  %4512 = vmatpush1.bf16.xpose.msra.mxu0 0
  %4513 = vmatprep.subr.bf16.mxu0 0
  %4514 = vmatpush1.bf16.xpose.msra.mxu0 0
  %4515 = vmatprep.subr.bf16.mxu0 0
  %4516 = vmatpush1.bf16.xpose.msra.mxu0 0
  %4517 = vmatprep.subr.bf16.mxu0 0
  %4518 = vmatpush1.bf16.xpose.msra.mxu0 0
  %4519 = vmatprep.subr.bf16.mxu0 0
  %4520 = vmatpush1.bf16.xpose.msra.mxu0 0
  %4521 = vmatprep.subr.bf16.mxu0 0
  %4522 = vmatpush1.bf16.xpose.msra.mxu0 0
  %4523 = vmatprep.subr.bf16.mxu0 0
  %4524 = vmatpush1.bf16.xpose.msra.mxu0 0
  %4525 = vmatprep.subr.bf16.mxu0 0
  %4526 = vmatpush1.bf16.xpose.msra.mxu0 0
  %4527 = vmatprep.subr.bf16.mxu0 0
  %4528 = vmatpush1.bf16.xpose.msra.mxu0 0
  %4529 = vmatprep.subr.bf16.mxu0 0
  %4530 = vmatpush1.bf16.xpose.msra.mxu0 0
  %4531 = vmatprep.subr.bf16.mxu0 0
  %4532 = vmatpush1.bf16.xpose.msra.mxu0 0
  %4533 = vmatprep.subr.bf16.mxu0 0
  %4534 = vmatpush1.bf16.xpose.msra.mxu0 0
  %4535 = vmatprep.subr.bf16.mxu0 0
  %4536 = vmatpush1.bf16.xpose.msra.mxu0 0
  %4537 = vmatprep.mubr.bf16.mxu0 0
  %4538 = vmatmul.mubr.bf16.gmra.mrb[0].mxu0 %v4500
  %v4539 = vpop.f32.mrb[0].mxu0
  %v4540 = vadd.f32 0.0, %v4539
  %v4541 = vpop.f32.mrb[0].mxu0
  %v4542 = vpop.f32.mrb[0].mxu0
  %v4543 = vpop.f32.mrb[0].mxu0
  %4544 = vdwg.mxu0
  %4545 = vrot.lane.b32.xlu0 %v1831, 104
  %v4546 = vpop.permute.xlu0 %4545
  %4547 = vrot.lane.b32.xlu0 %v1831, 72
  %v4548 = vpop.permute.xlu0 %4547
  %v4550 = vsel %vm1771, %v4546, 0
  %v4553 = vsel %vm1771, %v4548, 0
  %4555 = vmatprep.subr.bf16.mxu0 0
  %4556 = vmatpush1.bf16.xpose.msra.mxu0 %v4553
  %4557 = vmatprep.subr.bf16.mxu0 0
  %4558 = vmatpush1.bf16.xpose.msra.mxu0 0
  %4559 = vmatprep.subr.bf16.mxu0 0
  %4560 = vmatpush1.bf16.xpose.msra.mxu0 0
  %4561 = vmatprep.subr.bf16.mxu0 0
  %4562 = vmatpush1.bf16.xpose.msra.mxu0 0
  %4563 = vmatprep.subr.bf16.mxu0 0
  %4564 = vmatpush1.bf16.xpose.msra.mxu0 0
  %4565 = vmatprep.subr.bf16.mxu0 0
  %4566 = vmatpush1.bf16.xpose.msra.mxu0 0
  %4567 = vmatprep.subr.bf16.mxu0 0
  %4568 = vmatpush1.bf16.xpose.msra.mxu0 0
  %4569 = vmatprep.subr.bf16.mxu0 0
  %4570 = vmatpush1.bf16.xpose.msra.mxu0 0
  %4571 = vmatprep.subr.bf16.mxu0 0
  %4572 = vmatpush1.bf16.xpose.msra.mxu0 0
  %4573 = vmatprep.subr.bf16.mxu0 0
  %4574 = vmatpush1.bf16.xpose.msra.mxu0 0
  %4575 = vmatprep.subr.bf16.mxu0 0
  %4576 = vmatpush1.bf16.xpose.msra.mxu0 0
  %4577 = vmatprep.subr.bf16.mxu0 0
  %4578 = vmatpush1.bf16.xpose.msra.mxu0 0
  %4579 = vmatprep.subr.bf16.mxu0 0
  %4580 = vmatpush1.bf16.xpose.msra.mxu0 0
  %4581 = vmatprep.subr.bf16.mxu0 0
  %4582 = vmatpush1.bf16.xpose.msra.mxu0 0
  %4583 = vmatprep.subr.bf16.mxu0 0
  %4584 = vmatpush1.bf16.xpose.msra.mxu0 0
  %4585 = vmatprep.subr.bf16.mxu0 0
  %4586 = vmatpush1.bf16.xpose.msra.mxu0 0
  %4587 = vmatprep.mubr.bf16.mxu0 0
  %4588 = vmatmul.mubr.bf16.gmra.mrb[0].mxu0 %v4550
  %v4589 = vpop.f32.mrb[0].mxu0
  %v4590 = vadd.f32 0.0, %v4589
  %v4591 = vpop.f32.mrb[0].mxu0
  %v4592 = vpop.f32.mrb[0].mxu0
  %v4593 = vpop.f32.mrb[0].mxu0
  %4594 = vdwg.mxu0
  %4595 = vrot.lane.b32.xlu0 %v1893, 104
  %v4596 = vpop.permute.xlu0 %4595
  %4597 = vrot.lane.b32.xlu0 %v1893, 72
  %v4598 = vpop.permute.xlu0 %4597
  %v4600 = vsel %vm1771, %v4596, 0
  %v4603 = vsel %vm1771, %v4598, 0
  %4605 = vmatprep.subr.bf16.mxu0 0
  %4606 = vmatpush1.bf16.xpose.msra.mxu0 %v4603
  %4607 = vmatprep.subr.bf16.mxu0 0
  %4608 = vmatpush1.bf16.xpose.msra.mxu0 0
  %4609 = vmatprep.subr.bf16.mxu0 0
  %4610 = vmatpush1.bf16.xpose.msra.mxu0 0
  %4611 = vmatprep.subr.bf16.mxu0 0
  %4612 = vmatpush1.bf16.xpose.msra.mxu0 0
  %4613 = vmatprep.subr.bf16.mxu0 0
  %4614 = vmatpush1.bf16.xpose.msra.mxu0 0
  %4615 = vmatprep.subr.bf16.mxu0 0
  %4616 = vmatpush1.bf16.xpose.msra.mxu0 0
  %4617 = vmatprep.subr.bf16.mxu0 0
  %4618 = vmatpush1.bf16.xpose.msra.mxu0 0
  %4619 = vmatprep.subr.bf16.mxu0 0
  %4620 = vmatpush1.bf16.xpose.msra.mxu0 0
  %4621 = vmatprep.subr.bf16.mxu0 0
  %4622 = vmatpush1.bf16.xpose.msra.mxu0 0
  %4623 = vmatprep.subr.bf16.mxu0 0
  %4624 = vmatpush1.bf16.xpose.msra.mxu0 0
  %4625 = vmatprep.subr.bf16.mxu0 0
  %4626 = vmatpush1.bf16.xpose.msra.mxu0 0
  %4627 = vmatprep.subr.bf16.mxu0 0
  %4628 = vmatpush1.bf16.xpose.msra.mxu0 0
  %4629 = vmatprep.subr.bf16.mxu0 0
  %4630 = vmatpush1.bf16.xpose.msra.mxu0 0
  %4631 = vmatprep.subr.bf16.mxu0 0
  %4632 = vmatpush1.bf16.xpose.msra.mxu0 0
  %4633 = vmatprep.subr.bf16.mxu0 0
  %4634 = vmatpush1.bf16.xpose.msra.mxu0 0
  %4635 = vmatprep.subr.bf16.mxu0 0
  %4636 = vmatpush1.bf16.xpose.msra.mxu0 0
  %4637 = vmatprep.mubr.bf16.mxu0 0
  %4638 = vmatmul.mubr.bf16.gmra.mrb[0].mxu0 %v4600
  %v4639 = vpop.f32.mrb[0].mxu0
  %v4640 = vadd.f32 0.0, %v4639
  %v4641 = vpop.f32.mrb[0].mxu0
  %v4642 = vpop.f32.mrb[0].mxu0
  %v4643 = vpop.f32.mrb[0].mxu0
  %4644 = vdwg.mxu0
  %4645 = vrot.lane.b32.xlu0 %v1955, 104
  %v4646 = vpop.permute.xlu0 %4645
  %4647 = vrot.lane.b32.xlu0 %v1955, 72
  %v4648 = vpop.permute.xlu0 %4647
  %v4650 = vsel %vm1771, %v4646, 0
  %v4653 = vsel %vm1771, %v4648, 0
  %4655 = vmatprep.subr.bf16.mxu0 0
  %4656 = vmatpush1.bf16.xpose.msra.mxu0 %v4653
  %4657 = vmatprep.subr.bf16.mxu0 0
  %4658 = vmatpush1.bf16.xpose.msra.mxu0 0
  %4659 = vmatprep.subr.bf16.mxu0 0
  %4660 = vmatpush1.bf16.xpose.msra.mxu0 0
  %4661 = vmatprep.subr.bf16.mxu0 0
  %4662 = vmatpush1.bf16.xpose.msra.mxu0 0
  %4663 = vmatprep.subr.bf16.mxu0 0
  %4664 = vmatpush1.bf16.xpose.msra.mxu0 0
  %4665 = vmatprep.subr.bf16.mxu0 0
  %4666 = vmatpush1.bf16.xpose.msra.mxu0 0
  %4667 = vmatprep.subr.bf16.mxu0 0
  %4668 = vmatpush1.bf16.xpose.msra.mxu0 0
  %4669 = vmatprep.subr.bf16.mxu0 0
  %4670 = vmatpush1.bf16.xpose.msra.mxu0 0
  %4671 = vmatprep.subr.bf16.mxu0 0
  %4672 = vmatpush1.bf16.xpose.msra.mxu0 0
  %4673 = vmatprep.subr.bf16.mxu0 0
  %4674 = vmatpush1.bf16.xpose.msra.mxu0 0
  %4675 = vmatprep.subr.bf16.mxu0 0
  %4676 = vmatpush1.bf16.xpose.msra.mxu0 0
  %4677 = vmatprep.subr.bf16.mxu0 0
  %4678 = vmatpush1.bf16.xpose.msra.mxu0 0
  %4679 = vmatprep.subr.bf16.mxu0 0
  %4680 = vmatpush1.bf16.xpose.msra.mxu0 0
  %4681 = vmatprep.subr.bf16.mxu0 0
  %4682 = vmatpush1.bf16.xpose.msra.mxu0 0
  %4683 = vmatprep.subr.bf16.mxu0 0
  %4684 = vmatpush1.bf16.xpose.msra.mxu0 0
  %4685 = vmatprep.subr.bf16.mxu0 0
  %4686 = vmatpush1.bf16.xpose.msra.mxu0 0
  %4687 = vmatprep.mubr.bf16.mxu0 0
  %4688 = vmatmul.mubr.bf16.gmra.mrb[0].mxu0 %v4650
  %v4689 = vpop.f32.mrb[0].mxu0
  %v4690 = vadd.f32 0.0, %v4689
  %v4691 = vpop.f32.mrb[0].mxu0
  %v4692 = vpop.f32.mrb[0].mxu0
  %v4693 = vpop.f32.mrb[0].mxu0
  %4694 = vdwg.mxu0
  %4695 = vrot.lane.b32.xlu0 %v2017, 104
  %v4696 = vpop.permute.xlu0 %4695
  %4697 = vrot.lane.b32.xlu0 %v2017, 72
  %v4698 = vpop.permute.xlu0 %4697
  %v4700 = vsel %vm1771, %v4696, 0
  %v4703 = vsel %vm1771, %v4698, 0
  %4705 = vmatprep.subr.bf16.mxu0 0
  %4706 = vmatpush1.bf16.xpose.msra.mxu0 %v4703
  %4707 = vmatprep.subr.bf16.mxu0 0
  %4708 = vmatpush1.bf16.xpose.msra.mxu0 0
  %4709 = vmatprep.subr.bf16.mxu0 0
  %4710 = vmatpush1.bf16.xpose.msra.mxu0 0
  %4711 = vmatprep.subr.bf16.mxu0 0
  %4712 = vmatpush1.bf16.xpose.msra.mxu0 0
  %4713 = vmatprep.subr.bf16.mxu0 0
  %4714 = vmatpush1.bf16.xpose.msra.mxu0 0
  %4715 = vmatprep.subr.bf16.mxu0 0
  %4716 = vmatpush1.bf16.xpose.msra.mxu0 0
  %4717 = vmatprep.subr.bf16.mxu0 0
  %4718 = vmatpush1.bf16.xpose.msra.mxu0 0
  %4719 = vmatprep.subr.bf16.mxu0 0
  %4720 = vmatpush1.bf16.xpose.msra.mxu0 0
  %4721 = vmatprep.subr.bf16.mxu0 0
  %4722 = vmatpush1.bf16.xpose.msra.mxu0 0
  %4723 = vmatprep.subr.bf16.mxu0 0
  %4724 = vmatpush1.bf16.xpose.msra.mxu0 0
  %4725 = vmatprep.subr.bf16.mxu0 0
  %4726 = vmatpush1.bf16.xpose.msra.mxu0 0
  %4727 = vmatprep.subr.bf16.mxu0 0
  %4728 = vmatpush1.bf16.xpose.msra.mxu0 0
  %4729 = vmatprep.subr.bf16.mxu0 0
  %4730 = vmatpush1.bf16.xpose.msra.mxu0 0
  %4731 = vmatprep.subr.bf16.mxu0 0
  %4732 = vmatpush1.bf16.xpose.msra.mxu0 0
  %4733 = vmatprep.subr.bf16.mxu0 0
  %4734 = vmatpush1.bf16.xpose.msra.mxu0 0
  %4735 = vmatprep.subr.bf16.mxu0 0
  %4736 = vmatpush1.bf16.xpose.msra.mxu0 0
  %4737 = vmatprep.mubr.bf16.mxu0 0
  %4738 = vmatmul.mubr.bf16.gmra.mrb[0].mxu0 %v4700
  %v4739 = vpop.f32.mrb[0].mxu0
  %v4740 = vadd.f32 0.0, %v4739
  %v4741 = vpop.f32.mrb[0].mxu0
  %v4742 = vpop.f32.mrb[0].mxu0
  %v4743 = vpop.f32.mrb[0].mxu0
  %4744 = vdwg.mxu0
  %4745 = vrot.lane.b32.xlu0 %v2079, 104
  %v4746 = vpop.permute.xlu0 %4745
  %4747 = vrot.lane.b32.xlu0 %v2079, 72
  %v4748 = vpop.permute.xlu0 %4747
  %v4750 = vsel %vm1771, %v4746, 0
  %v4753 = vsel %vm1771, %v4748, 0
  %4755 = vmatprep.subr.bf16.mxu0 0
  %4756 = vmatpush1.bf16.xpose.msra.mxu0 %v4753
  %4757 = vmatprep.subr.bf16.mxu0 0
  %4758 = vmatpush1.bf16.xpose.msra.mxu0 0
  %4759 = vmatprep.subr.bf16.mxu0 0
  %4760 = vmatpush1.bf16.xpose.msra.mxu0 0
  %4761 = vmatprep.subr.bf16.mxu0 0
  %4762 = vmatpush1.bf16.xpose.msra.mxu0 0
  %4763 = vmatprep.subr.bf16.mxu0 0
  %4764 = vmatpush1.bf16.xpose.msra.mxu0 0
  %4765 = vmatprep.subr.bf16.mxu0 0
  %4766 = vmatpush1.bf16.xpose.msra.mxu0 0
  %4767 = vmatprep.subr.bf16.mxu0 0
  %4768 = vmatpush1.bf16.xpose.msra.mxu0 0
  %4769 = vmatprep.subr.bf16.mxu0 0
  %4770 = vmatpush1.bf16.xpose.msra.mxu0 0
  %4771 = vmatprep.subr.bf16.mxu0 0
  %4772 = vmatpush1.bf16.xpose.msra.mxu0 0
  %4773 = vmatprep.subr.bf16.mxu0 0
  %4774 = vmatpush1.bf16.xpose.msra.mxu0 0
  %4775 = vmatprep.subr.bf16.mxu0 0
  %4776 = vmatpush1.bf16.xpose.msra.mxu0 0
  %4777 = vmatprep.subr.bf16.mxu0 0
  %4778 = vmatpush1.bf16.xpose.msra.mxu0 0
  %4779 = vmatprep.subr.bf16.mxu0 0
  %4780 = vmatpush1.bf16.xpose.msra.mxu0 0
  %4781 = vmatprep.subr.bf16.mxu0 0
  %4782 = vmatpush1.bf16.xpose.msra.mxu0 0
  %4783 = vmatprep.subr.bf16.mxu0 0
  %4784 = vmatpush1.bf16.xpose.msra.mxu0 0
  %4785 = vmatprep.subr.bf16.mxu0 0
  %4786 = vmatpush1.bf16.xpose.msra.mxu0 0
  %4787 = vmatprep.mubr.bf16.mxu0 0
  %4788 = vmatmul.mubr.bf16.gmra.mrb[0].mxu0 %v4750
  %v4789 = vpop.f32.mrb[0].mxu0
  %v4790 = vadd.f32 0.0, %v4789
  %v4791 = vpop.f32.mrb[0].mxu0
  %v4792 = vpop.f32.mrb[0].mxu0
  %v4793 = vpop.f32.mrb[0].mxu0
  %4794 = vdwg.mxu0
  %4795 = vrot.lane.b32.xlu0 %v2141, 104
  %v4796 = vpop.permute.xlu0 %4795
  %4797 = vrot.lane.b32.xlu0 %v2141, 72
  %v4798 = vpop.permute.xlu0 %4797
  %v4800 = vsel %vm1771, %v4796, 0
  %v4803 = vsel %vm1771, %v4798, 0
  %4805 = vmatprep.subr.bf16.mxu0 0
  %4806 = vmatpush1.bf16.xpose.msra.mxu0 %v4803
  %4807 = vmatprep.subr.bf16.mxu0 0
  %4808 = vmatpush1.bf16.xpose.msra.mxu0 0
  %4809 = vmatprep.subr.bf16.mxu0 0
  %4810 = vmatpush1.bf16.xpose.msra.mxu0 0
  %4811 = vmatprep.subr.bf16.mxu0 0
  %4812 = vmatpush1.bf16.xpose.msra.mxu0 0
  %4813 = vmatprep.subr.bf16.mxu0 0
  %4814 = vmatpush1.bf16.xpose.msra.mxu0 0
  %4815 = vmatprep.subr.bf16.mxu0 0
  %4816 = vmatpush1.bf16.xpose.msra.mxu0 0
  %4817 = vmatprep.subr.bf16.mxu0 0
  %4818 = vmatpush1.bf16.xpose.msra.mxu0 0
  %4819 = vmatprep.subr.bf16.mxu0 0
  %4820 = vmatpush1.bf16.xpose.msra.mxu0 0
  %4821 = vmatprep.subr.bf16.mxu0 0
  %4822 = vmatpush1.bf16.xpose.msra.mxu0 0
  %4823 = vmatprep.subr.bf16.mxu0 0
  %4824 = vmatpush1.bf16.xpose.msra.mxu0 0
  %4825 = vmatprep.subr.bf16.mxu0 0
  %4826 = vmatpush1.bf16.xpose.msra.mxu0 0
  %4827 = vmatprep.subr.bf16.mxu0 0
  %4828 = vmatpush1.bf16.xpose.msra.mxu0 0
  %4829 = vmatprep.subr.bf16.mxu0 0
  %4830 = vmatpush1.bf16.xpose.msra.mxu0 0
  %4831 = vmatprep.subr.bf16.mxu0 0
  %4832 = vmatpush1.bf16.xpose.msra.mxu0 0
  %4833 = vmatprep.subr.bf16.mxu0 0
  %4834 = vmatpush1.bf16.xpose.msra.mxu0 0
  %4835 = vmatprep.subr.bf16.mxu0 0
  %4836 = vmatpush1.bf16.xpose.msra.mxu0 0
  %4837 = vmatprep.mubr.bf16.mxu0 0
  %4838 = vmatmul.mubr.bf16.gmra.mrb[0].mxu0 %v4800
  %v4839 = vpop.f32.mrb[0].mxu0
  %v4840 = vadd.f32 0.0, %v4839
  %v4841 = vpop.f32.mrb[0].mxu0
  %v4842 = vpop.f32.mrb[0].mxu0
  %v4843 = vpop.f32.mrb[0].mxu0
  %4844 = vdwg.mxu0
  %4845 = vrot.lane.b32.xlu0 %v2203, 104
  %v4846 = vpop.permute.xlu0 %4845
  %4847 = vrot.lane.b32.xlu0 %v2203, 72
  %v4848 = vpop.permute.xlu0 %4847
  %v4850 = vsel %vm1771, %v4846, 0
  %v4853 = vsel %vm1771, %v4848, 0
  %4855 = vmatprep.subr.bf16.mxu0 0
  %4856 = vmatpush1.bf16.xpose.msra.mxu0 %v4853
  %4857 = vmatprep.subr.bf16.mxu0 0
  %4858 = vmatpush1.bf16.xpose.msra.mxu0 0
  %4859 = vmatprep.subr.bf16.mxu0 0
  %4860 = vmatpush1.bf16.xpose.msra.mxu0 0
  %4861 = vmatprep.subr.bf16.mxu0 0
  %4862 = vmatpush1.bf16.xpose.msra.mxu0 0
  %4863 = vmatprep.subr.bf16.mxu0 0
  %4864 = vmatpush1.bf16.xpose.msra.mxu0 0
  %4865 = vmatprep.subr.bf16.mxu0 0
  %4866 = vmatpush1.bf16.xpose.msra.mxu0 0
  %4867 = vmatprep.subr.bf16.mxu0 0
  %4868 = vmatpush1.bf16.xpose.msra.mxu0 0
  %4869 = vmatprep.subr.bf16.mxu0 0
  %4870 = vmatpush1.bf16.xpose.msra.mxu0 0
  %4871 = vmatprep.subr.bf16.mxu0 0
  %4872 = vmatpush1.bf16.xpose.msra.mxu0 0
  %4873 = vmatprep.subr.bf16.mxu0 0
  %4874 = vmatpush1.bf16.xpose.msra.mxu0 0
  %4875 = vmatprep.subr.bf16.mxu0 0
  %4876 = vmatpush1.bf16.xpose.msra.mxu0 0
  %4877 = vmatprep.subr.bf16.mxu0 0
  %4878 = vmatpush1.bf16.xpose.msra.mxu0 0
  %4879 = vmatprep.subr.bf16.mxu0 0
  %4880 = vmatpush1.bf16.xpose.msra.mxu0 0
  %4881 = vmatprep.subr.bf16.mxu0 0
  %4882 = vmatpush1.bf16.xpose.msra.mxu0 0
  %4883 = vmatprep.subr.bf16.mxu0 0
  %4884 = vmatpush1.bf16.xpose.msra.mxu0 0
  %4885 = vmatprep.subr.bf16.mxu0 0
  %4886 = vmatpush1.bf16.xpose.msra.mxu0 0
  %4887 = vmatprep.mubr.bf16.mxu0 0
  %4888 = vmatmul.mubr.bf16.gmra.mrb[0].mxu0 %v4850
  %v4889 = vpop.f32.mrb[0].mxu0
  %v4890 = vadd.f32 0.0, %v4889
  %v4891 = vpop.f32.mrb[0].mxu0
  %v4892 = vpop.f32.mrb[0].mxu0
  %v4893 = vpop.f32.mrb[0].mxu0
  %4894 = vdwg.mxu0
  %v4895 = vsel %vm2252, %v4540, -inf
  %4896 = vmax.xlane.f32.xlu0 %v4895
  %v4897 = vpop.xlane.xlu0 %4896
  %v4898 = vsel %vm2252, %v4590, -inf
  %4899 = vmax.xlane.f32.xlu0 %v4898
  %v4900 = vpop.xlane.xlu0 %4899
  %v4901 = vsel %vm2252, %v4640, -inf
  %4902 = vmax.xlane.f32.xlu0 %v4901
  %v4903 = vpop.xlane.xlu0 %4902
  %v4904 = vsel %vm2252, %v4690, -inf
  %4905 = vmax.xlane.f32.xlu0 %v4904
  %v4906 = vpop.xlane.xlu0 %4905
  %v4907 = vsel %vm2252, %v4740, -inf
  %4908 = vmax.xlane.f32.xlu0 %v4907
  %v4909 = vpop.xlane.xlu0 %4908
  %v4910 = vsel %vm2252, %v4790, -inf
  %4911 = vmax.xlane.f32.xlu0 %v4910
  %v4912 = vpop.xlane.xlu0 %4911
  %v4913 = vsel %vm2252, %v4840, -inf
  %4914 = vmax.xlane.f32.xlu0 %v4913
  %v4915 = vpop.xlane.xlu0 %4914
  %v4916 = vsel %vm2252, %v4890, -inf
  %4917 = vmax.xlane.f32.xlu0 %v4916
  %v4918 = vpop.xlane.xlu0 %4917
  %v4919 = vsub.f32 %v4540, %v4897
  %v4920 = vsub.f32 %v4590, %v4900
  %v4921 = vsub.f32 %v4640, %v4903
  %v4922 = vsub.f32 %v4690, %v4906
  %v4923 = vsub.f32 %v4740, %v4909
  %v4924 = vsub.f32 %v4790, %v4912
  %v4925 = vsub.f32 %v4840, %v4915
  %v4926 = vsub.f32 %v4890, %v4918
  %v4927 = vmul.f32 %v4919, 1.442695
  %v4928 = vpow.pop %v4927
  %v4929 = vmul.f32 %v4920, 1.442695
  %v4930 = vpow.pop %v4929
  %v4931 = vmul.f32 %v4921, 1.442695
  %v4932 = vpow.pop %v4931
  %v4933 = vmul.f32 %v4922, 1.442695
  %v4934 = vpow.pop %v4933
  %v4935 = vmul.f32 %v4923, 1.442695
  %v4936 = vpow.pop %v4935
  %v4937 = vmul.f32 %v4924, 1.442695
  %v4938 = vpow.pop %v4937
  %v4939 = vmul.f32 %v4925, 1.442695
  %v4940 = vpow.pop %v4939
  %v4941 = vmul.f32 %v4926, 1.442695
  %v4942 = vpow.pop %v4941
  %v4943 = vsel %vm2252, %v4928, 0.0
  %4944 = vadd.xlane.f32.xlu0 %v4943
  %v4945 = vpop.xlane.xlu0 %4944
  %v4946 = vsel %vm2252, %v4930, 0.0
  %4947 = vadd.xlane.f32.xlu0 %v4946
  %v4948 = vpop.xlane.xlu0 %4947
  %v4949 = vsel %vm2252, %v4932, 0.0
  %4950 = vadd.xlane.f32.xlu0 %v4949
  %v4951 = vpop.xlane.xlu0 %4950
  %v4952 = vsel %vm2252, %v4934, 0.0
  %4953 = vadd.xlane.f32.xlu0 %v4952
  %v4954 = vpop.xlane.xlu0 %4953
  %v4955 = vsel %vm2252, %v4936, 0.0
  %4956 = vadd.xlane.f32.xlu0 %v4955
  %v4957 = vpop.xlane.xlu0 %4956
  %v4958 = vsel %vm2252, %v4938, 0.0
  %4959 = vadd.xlane.f32.xlu0 %v4958
  %v4960 = vpop.xlane.xlu0 %4959
  %v4961 = vsel %vm2252, %v4940, 0.0
  %4962 = vadd.xlane.f32.xlu0 %v4961
  %v4963 = vpop.xlane.xlu0 %4962
  %v4964 = vsel %vm2252, %v4942, 0.0
  %4965 = vadd.xlane.f32.xlu0 %v4964
  %v4966 = vpop.xlane.xlu0 %4965
  %v4967 = vrcp.pop %v4945
  %v4968 = vmul.f32 %v4928, %v4967
  %v4969 = vrcp.pop %v4948
  %v4970 = vmul.f32 %v4930, %v4969
  %v4971 = vrcp.pop %v4951
  %v4972 = vmul.f32 %v4932, %v4971
  %v4973 = vrcp.pop %v4954
  %v4974 = vmul.f32 %v4934, %v4973
  %v4975 = vrcp.pop %v4957
  %v4976 = vmul.f32 %v4936, %v4975
  %v4977 = vrcp.pop %v4960
  %v4978 = vmul.f32 %v4938, %v4977
  %v4979 = vrcp.pop %v4963
  %v4980 = vmul.f32 %v4940, %v4979
  %v4981 = vrcp.pop %v4966
  %v4982 = vmul.f32 %v4942, %v4981
  %v4983 = vpack.c.bf16 %v4968, %v4968
  %v4984 = vpack.c.bf16 %v4970, %v4970
  %v4985 = vpack.c.bf16 %v4972, %v4972
  %v4986 = vpack.c.bf16 %v4974, %v4974
  %v4987 = vpack.c.bf16 %v4976, %v4976
  %v4988 = vpack.c.bf16 %v4978, %v4978
  %v4989 = vpack.c.bf16 %v4980, %v4980
  %v4990 = vpack.c.bf16 %v4982, %v4982
  %4991 = vrot.lane.b32.xlu0 %v1768, 40
  %v4992 = vpop.permute.xlu0 %4991
  %v4994 = vsel %vm2351, %v4983, 0
  %v4997 = vsel %vm2355, %v4992, 0
  %4999 = vmatprep.subr.bf16.mxu0 0
  %5000 = vmatpush1.bf16.msra.mxu0 %v4997
  %5001 = vmatprep.subr.bf16.mxu0 0
  %5002 = vmatpush1.bf16.msra.mxu0 0
  %5003 = vmatprep.subr.bf16.mxu0 0
  %5004 = vmatpush1.bf16.msra.mxu0 0
  %5005 = vmatprep.subr.bf16.mxu0 0
  %5006 = vmatpush1.bf16.msra.mxu0 0
  %5007 = vmatprep.subr.bf16.mxu0 0
  %5008 = vmatpush1.bf16.msra.mxu0 0
  %5009 = vmatprep.subr.bf16.mxu0 0
  %5010 = vmatpush1.bf16.msra.mxu0 0
  %5011 = vmatprep.subr.bf16.mxu0 0
  %5012 = vmatpush1.bf16.msra.mxu0 0
  %5013 = vmatprep.subr.bf16.mxu0 0
  %5014 = vmatpush1.bf16.msra.mxu0 0
  %5015 = vmatprep.subr.bf16.mxu0 0
  %5016 = vmatpush1.bf16.msra.mxu0 0
  %5017 = vmatprep.subr.bf16.mxu0 0
  %5018 = vmatpush1.bf16.msra.mxu0 0
  %5019 = vmatprep.subr.bf16.mxu0 0
  %5020 = vmatpush1.bf16.msra.mxu0 0
  %5021 = vmatprep.subr.bf16.mxu0 0
  %5022 = vmatpush1.bf16.msra.mxu0 0
  %5023 = vmatprep.subr.bf16.mxu0 0
  %5024 = vmatpush1.bf16.msra.mxu0 0
  %5025 = vmatprep.subr.bf16.mxu0 0
  %5026 = vmatpush1.bf16.msra.mxu0 0
  %5027 = vmatprep.subr.bf16.mxu0 0
  %5028 = vmatpush1.bf16.msra.mxu0 0
  %5029 = vmatprep.subr.bf16.mxu0 0
  %5030 = vmatpush1.bf16.msra.mxu0 0
  %5031 = vmatprep.mubr.bf16.mxu0 0
  %5032 = vmatmul.mubr.bf16.gmra.mrb[0].mxu0 %v4994
  %v5033 = vpop.f32.mrb[0].mxu0
  %v5034 = vadd.f32 0.0, %v5033
  %v5035 = vpop.f32.mrb[0].mxu0
  %v5036 = vpop.f32.mrb[0].mxu0
  %v5037 = vpop.f32.mrb[0].mxu0
  %5038 = vdwg.mxu0
  %5039 = vrot.lane.b32.xlu0 %v1831, 40
  %v5040 = vpop.permute.xlu0 %5039
  %v5042 = vsel %vm2351, %v4984, 0
  %v5045 = vsel %vm2355, %v5040, 0
  %5047 = vmatprep.subr.bf16.mxu0 0
  %5048 = vmatpush1.bf16.msra.mxu0 %v5045
  %5049 = vmatprep.subr.bf16.mxu0 0
  %5050 = vmatpush1.bf16.msra.mxu0 0
  %5051 = vmatprep.subr.bf16.mxu0 0
  %5052 = vmatpush1.bf16.msra.mxu0 0
  %5053 = vmatprep.subr.bf16.mxu0 0
  %5054 = vmatpush1.bf16.msra.mxu0 0
  %5055 = vmatprep.subr.bf16.mxu0 0
  %5056 = vmatpush1.bf16.msra.mxu0 0
  %5057 = vmatprep.subr.bf16.mxu0 0
  %5058 = vmatpush1.bf16.msra.mxu0 0
  %5059 = vmatprep.subr.bf16.mxu0 0
  %5060 = vmatpush1.bf16.msra.mxu0 0
  %5061 = vmatprep.subr.bf16.mxu0 0
  %5062 = vmatpush1.bf16.msra.mxu0 0
  %5063 = vmatprep.subr.bf16.mxu0 0
  %5064 = vmatpush1.bf16.msra.mxu0 0
  %5065 = vmatprep.subr.bf16.mxu0 0
  %5066 = vmatpush1.bf16.msra.mxu0 0
  %5067 = vmatprep.subr.bf16.mxu0 0
  %5068 = vmatpush1.bf16.msra.mxu0 0
  %5069 = vmatprep.subr.bf16.mxu0 0
  %5070 = vmatpush1.bf16.msra.mxu0 0
  %5071 = vmatprep.subr.bf16.mxu0 0
  %5072 = vmatpush1.bf16.msra.mxu0 0
  %5073 = vmatprep.subr.bf16.mxu0 0
  %5074 = vmatpush1.bf16.msra.mxu0 0
  %5075 = vmatprep.subr.bf16.mxu0 0
  %5076 = vmatpush1.bf16.msra.mxu0 0
  %5077 = vmatprep.subr.bf16.mxu0 0
  %5078 = vmatpush1.bf16.msra.mxu0 0
  %5079 = vmatprep.mubr.bf16.mxu0 0
  %5080 = vmatmul.mubr.bf16.gmra.mrb[0].mxu0 %v5042
  %v5081 = vpop.f32.mrb[0].mxu0
  %v5082 = vadd.f32 0.0, %v5081
  %v5083 = vpop.f32.mrb[0].mxu0
  %v5084 = vpop.f32.mrb[0].mxu0
  %v5085 = vpop.f32.mrb[0].mxu0
  %5086 = vdwg.mxu0
  %5087 = vrot.lane.b32.xlu0 %v1893, 40
  %v5088 = vpop.permute.xlu0 %5087
  %v5090 = vsel %vm2351, %v4985, 0
  %v5093 = vsel %vm2355, %v5088, 0
  %5095 = vmatprep.subr.bf16.mxu0 0
  %5096 = vmatpush1.bf16.msra.mxu0 %v5093
  %5097 = vmatprep.subr.bf16.mxu0 0
  %5098 = vmatpush1.bf16.msra.mxu0 0
  %5099 = vmatprep.subr.bf16.mxu0 0
  %5100 = vmatpush1.bf16.msra.mxu0 0
  %5101 = vmatprep.subr.bf16.mxu0 0
  %5102 = vmatpush1.bf16.msra.mxu0 0
  %5103 = vmatprep.subr.bf16.mxu0 0
  %5104 = vmatpush1.bf16.msra.mxu0 0
  %5105 = vmatprep.subr.bf16.mxu0 0
  %5106 = vmatpush1.bf16.msra.mxu0 0
  %5107 = vmatprep.subr.bf16.mxu0 0
  %5108 = vmatpush1.bf16.msra.mxu0 0
  %5109 = vmatprep.subr.bf16.mxu0 0
  %5110 = vmatpush1.bf16.msra.mxu0 0
  %5111 = vmatprep.subr.bf16.mxu0 0
  %5112 = vmatpush1.bf16.msra.mxu0 0
  %5113 = vmatprep.subr.bf16.mxu0 0
  %5114 = vmatpush1.bf16.msra.mxu0 0
  %5115 = vmatprep.subr.bf16.mxu0 0
  %5116 = vmatpush1.bf16.msra.mxu0 0
  %5117 = vmatprep.subr.bf16.mxu0 0
  %5118 = vmatpush1.bf16.msra.mxu0 0
  %5119 = vmatprep.subr.bf16.mxu0 0
  %5120 = vmatpush1.bf16.msra.mxu0 0
  %5121 = vmatprep.subr.bf16.mxu0 0
  %5122 = vmatpush1.bf16.msra.mxu0 0
  %5123 = vmatprep.subr.bf16.mxu0 0
  %5124 = vmatpush1.bf16.msra.mxu0 0
  %5125 = vmatprep.subr.bf16.mxu0 0
  %5126 = vmatpush1.bf16.msra.mxu0 0
  %5127 = vmatprep.mubr.bf16.mxu0 0
  %5128 = vmatmul.mubr.bf16.gmra.mrb[0].mxu0 %v5090
  %v5129 = vpop.f32.mrb[0].mxu0
  %v5130 = vadd.f32 0.0, %v5129
  %v5131 = vpop.f32.mrb[0].mxu0
  %v5132 = vpop.f32.mrb[0].mxu0
  %v5133 = vpop.f32.mrb[0].mxu0
  %5134 = vdwg.mxu0
  %5135 = vrot.lane.b32.xlu0 %v1955, 40
  %v5136 = vpop.permute.xlu0 %5135
  %v5138 = vsel %vm2351, %v4986, 0
  %v5141 = vsel %vm2355, %v5136, 0
  %5143 = vmatprep.subr.bf16.mxu0 0
  %5144 = vmatpush1.bf16.msra.mxu0 %v5141
  %5145 = vmatprep.subr.bf16.mxu0 0
  %5146 = vmatpush1.bf16.msra.mxu0 0
  %5147 = vmatprep.subr.bf16.mxu0 0
  %5148 = vmatpush1.bf16.msra.mxu0 0
  %5149 = vmatprep.subr.bf16.mxu0 0
  %5150 = vmatpush1.bf16.msra.mxu0 0
  %5151 = vmatprep.subr.bf16.mxu0 0
  %5152 = vmatpush1.bf16.msra.mxu0 0
  %5153 = vmatprep.subr.bf16.mxu0 0
  %5154 = vmatpush1.bf16.msra.mxu0 0
  %5155 = vmatprep.subr.bf16.mxu0 0
  %5156 = vmatpush1.bf16.msra.mxu0 0
  %5157 = vmatprep.subr.bf16.mxu0 0
  %5158 = vmatpush1.bf16.msra.mxu0 0
  %5159 = vmatprep.subr.bf16.mxu0 0
  %5160 = vmatpush1.bf16.msra.mxu0 0
  %5161 = vmatprep.subr.bf16.mxu0 0
  %5162 = vmatpush1.bf16.msra.mxu0 0
  %5163 = vmatprep.subr.bf16.mxu0 0
  %5164 = vmatpush1.bf16.msra.mxu0 0
  %5165 = vmatprep.subr.bf16.mxu0 0
  %5166 = vmatpush1.bf16.msra.mxu0 0
  %5167 = vmatprep.subr.bf16.mxu0 0
  %5168 = vmatpush1.bf16.msra.mxu0 0
  %5169 = vmatprep.subr.bf16.mxu0 0
  %5170 = vmatpush1.bf16.msra.mxu0 0
  %5171 = vmatprep.subr.bf16.mxu0 0
  %5172 = vmatpush1.bf16.msra.mxu0 0
  %5173 = vmatprep.subr.bf16.mxu0 0
  %5174 = vmatpush1.bf16.msra.mxu0 0
  %5175 = vmatprep.mubr.bf16.mxu0 0
  %5176 = vmatmul.mubr.bf16.gmra.mrb[0].mxu0 %v5138
  %v5177 = vpop.f32.mrb[0].mxu0
  %v5178 = vadd.f32 0.0, %v5177
  %v5179 = vpop.f32.mrb[0].mxu0
  %v5180 = vpop.f32.mrb[0].mxu0
  %v5181 = vpop.f32.mrb[0].mxu0
  %5182 = vdwg.mxu0
  %5183 = vrot.lane.b32.xlu0 %v2017, 40
  %v5184 = vpop.permute.xlu0 %5183
  %v5186 = vsel %vm2351, %v4987, 0
  %v5189 = vsel %vm2355, %v5184, 0
  %5191 = vmatprep.subr.bf16.mxu0 0
  %5192 = vmatpush1.bf16.msra.mxu0 %v5189
  %5193 = vmatprep.subr.bf16.mxu0 0
  %5194 = vmatpush1.bf16.msra.mxu0 0
  %5195 = vmatprep.subr.bf16.mxu0 0
  %5196 = vmatpush1.bf16.msra.mxu0 0
  %5197 = vmatprep.subr.bf16.mxu0 0
  %5198 = vmatpush1.bf16.msra.mxu0 0
  %5199 = vmatprep.subr.bf16.mxu0 0
  %5200 = vmatpush1.bf16.msra.mxu0 0
  %5201 = vmatprep.subr.bf16.mxu0 0
  %5202 = vmatpush1.bf16.msra.mxu0 0
  %5203 = vmatprep.subr.bf16.mxu0 0
  %5204 = vmatpush1.bf16.msra.mxu0 0
  %5205 = vmatprep.subr.bf16.mxu0 0
  %5206 = vmatpush1.bf16.msra.mxu0 0
  %5207 = vmatprep.subr.bf16.mxu0 0
  %5208 = vmatpush1.bf16.msra.mxu0 0
  %5209 = vmatprep.subr.bf16.mxu0 0
  %5210 = vmatpush1.bf16.msra.mxu0 0
  %5211 = vmatprep.subr.bf16.mxu0 0
  %5212 = vmatpush1.bf16.msra.mxu0 0
  %5213 = vmatprep.subr.bf16.mxu0 0
  %5214 = vmatpush1.bf16.msra.mxu0 0
  %5215 = vmatprep.subr.bf16.mxu0 0
  %5216 = vmatpush1.bf16.msra.mxu0 0
  %5217 = vmatprep.subr.bf16.mxu0 0
  %5218 = vmatpush1.bf16.msra.mxu0 0
  %5219 = vmatprep.subr.bf16.mxu0 0
  %5220 = vmatpush1.bf16.msra.mxu0 0
  %5221 = vmatprep.subr.bf16.mxu0 0
  %5222 = vmatpush1.bf16.msra.mxu0 0
  %5223 = vmatprep.mubr.bf16.mxu0 0
  %5224 = vmatmul.mubr.bf16.gmra.mrb[0].mxu0 %v5186
  %v5225 = vpop.f32.mrb[0].mxu0
  %v5226 = vadd.f32 0.0, %v5225
  %v5227 = vpop.f32.mrb[0].mxu0
  %v5228 = vpop.f32.mrb[0].mxu0
  %v5229 = vpop.f32.mrb[0].mxu0
  %5230 = vdwg.mxu0
  %5231 = vrot.lane.b32.xlu0 %v2079, 40
  %v5232 = vpop.permute.xlu0 %5231
  %v5234 = vsel %vm2351, %v4988, 0
  %v5237 = vsel %vm2355, %v5232, 0
  %5239 = vmatprep.subr.bf16.mxu0 0
  %5240 = vmatpush1.bf16.msra.mxu0 %v5237
  %5241 = vmatprep.subr.bf16.mxu0 0
  %5242 = vmatpush1.bf16.msra.mxu0 0
  %5243 = vmatprep.subr.bf16.mxu0 0
  %5244 = vmatpush1.bf16.msra.mxu0 0
  %5245 = vmatprep.subr.bf16.mxu0 0
  %5246 = vmatpush1.bf16.msra.mxu0 0
  %5247 = vmatprep.subr.bf16.mxu0 0
  %5248 = vmatpush1.bf16.msra.mxu0 0
  %5249 = vmatprep.subr.bf16.mxu0 0
  %5250 = vmatpush1.bf16.msra.mxu0 0
  %5251 = vmatprep.subr.bf16.mxu0 0
  %5252 = vmatpush1.bf16.msra.mxu0 0
  %5253 = vmatprep.subr.bf16.mxu0 0
  %5254 = vmatpush1.bf16.msra.mxu0 0
  %5255 = vmatprep.subr.bf16.mxu0 0
  %5256 = vmatpush1.bf16.msra.mxu0 0
  %5257 = vmatprep.subr.bf16.mxu0 0
  %5258 = vmatpush1.bf16.msra.mxu0 0
  %5259 = vmatprep.subr.bf16.mxu0 0
  %5260 = vmatpush1.bf16.msra.mxu0 0
  %5261 = vmatprep.subr.bf16.mxu0 0
  %5262 = vmatpush1.bf16.msra.mxu0 0
  %5263 = vmatprep.subr.bf16.mxu0 0
  %5264 = vmatpush1.bf16.msra.mxu0 0
  %5265 = vmatprep.subr.bf16.mxu0 0
  %5266 = vmatpush1.bf16.msra.mxu0 0
  %5267 = vmatprep.subr.bf16.mxu0 0
  %5268 = vmatpush1.bf16.msra.mxu0 0
  %5269 = vmatprep.subr.bf16.mxu0 0
  %5270 = vmatpush1.bf16.msra.mxu0 0
  %5271 = vmatprep.mubr.bf16.mxu0 0
  %5272 = vmatmul.mubr.bf16.gmra.mrb[0].mxu0 %v5234
  %v5273 = vpop.f32.mrb[0].mxu0
  %v5274 = vadd.f32 0.0, %v5273
  %v5275 = vpop.f32.mrb[0].mxu0
  %v5276 = vpop.f32.mrb[0].mxu0
  %v5277 = vpop.f32.mrb[0].mxu0
  %5278 = vdwg.mxu0
  %5279 = vrot.lane.b32.xlu0 %v2141, 40
  %v5280 = vpop.permute.xlu0 %5279
  %v5282 = vsel %vm2351, %v4989, 0
  %v5285 = vsel %vm2355, %v5280, 0
  %5287 = vmatprep.subr.bf16.mxu0 0
  %5288 = vmatpush1.bf16.msra.mxu0 %v5285
  %5289 = vmatprep.subr.bf16.mxu0 0
  %5290 = vmatpush1.bf16.msra.mxu0 0
  %5291 = vmatprep.subr.bf16.mxu0 0
  %5292 = vmatpush1.bf16.msra.mxu0 0
  %5293 = vmatprep.subr.bf16.mxu0 0
  %5294 = vmatpush1.bf16.msra.mxu0 0
  %5295 = vmatprep.subr.bf16.mxu0 0
  %5296 = vmatpush1.bf16.msra.mxu0 0
  %5297 = vmatprep.subr.bf16.mxu0 0
  %5298 = vmatpush1.bf16.msra.mxu0 0
  %5299 = vmatprep.subr.bf16.mxu0 0
  %5300 = vmatpush1.bf16.msra.mxu0 0
  %5301 = vmatprep.subr.bf16.mxu0 0
  %5302 = vmatpush1.bf16.msra.mxu0 0
  %5303 = vmatprep.subr.bf16.mxu0 0
  %5304 = vmatpush1.bf16.msra.mxu0 0
  %5305 = vmatprep.subr.bf16.mxu0 0
  %5306 = vmatpush1.bf16.msra.mxu0 0
  %5307 = vmatprep.subr.bf16.mxu0 0
  %5308 = vmatpush1.bf16.msra.mxu0 0
  %5309 = vmatprep.subr.bf16.mxu0 0
  %5310 = vmatpush1.bf16.msra.mxu0 0
  %5311 = vmatprep.subr.bf16.mxu0 0
  %5312 = vmatpush1.bf16.msra.mxu0 0
  %5313 = vmatprep.subr.bf16.mxu0 0
  %5314 = vmatpush1.bf16.msra.mxu0 0
  %5315 = vmatprep.subr.bf16.mxu0 0
  %5316 = vmatpush1.bf16.msra.mxu0 0
  %5317 = vmatprep.subr.bf16.mxu0 0
  %5318 = vmatpush1.bf16.msra.mxu0 0
  %5319 = vmatprep.mubr.bf16.mxu0 0
  %5320 = vmatmul.mubr.bf16.gmra.mrb[0].mxu0 %v5282
  %v5321 = vpop.f32.mrb[0].mxu0
  %v5322 = vadd.f32 0.0, %v5321
  %v5323 = vpop.f32.mrb[0].mxu0
  %v5324 = vpop.f32.mrb[0].mxu0
  %v5325 = vpop.f32.mrb[0].mxu0
  %5326 = vdwg.mxu0
  %5327 = vrot.lane.b32.xlu0 %v2203, 40
  %v5328 = vpop.permute.xlu0 %5327
  %v5330 = vsel %vm2351, %v4990, 0
  %v5333 = vsel %vm2355, %v5328, 0
  %5335 = vmatprep.subr.bf16.mxu0 0
  %5336 = vmatpush1.bf16.msra.mxu0 %v5333
  %5337 = vmatprep.subr.bf16.mxu0 0
  %5338 = vmatpush1.bf16.msra.mxu0 0
  %5339 = vmatprep.subr.bf16.mxu0 0
  %5340 = vmatpush1.bf16.msra.mxu0 0
  %5341 = vmatprep.subr.bf16.mxu0 0
  %5342 = vmatpush1.bf16.msra.mxu0 0
  %5343 = vmatprep.subr.bf16.mxu0 0
  %5344 = vmatpush1.bf16.msra.mxu0 0
  %5345 = vmatprep.subr.bf16.mxu0 0
  %5346 = vmatpush1.bf16.msra.mxu0 0
  %5347 = vmatprep.subr.bf16.mxu0 0
  %5348 = vmatpush1.bf16.msra.mxu0 0
  %5349 = vmatprep.subr.bf16.mxu0 0
  %5350 = vmatpush1.bf16.msra.mxu0 0
  %5351 = vmatprep.subr.bf16.mxu0 0
  %5352 = vmatpush1.bf16.msra.mxu0 0
  %5353 = vmatprep.subr.bf16.mxu0 0
  %5354 = vmatpush1.bf16.msra.mxu0 0
  %5355 = vmatprep.subr.bf16.mxu0 0
  %5356 = vmatpush1.bf16.msra.mxu0 0
  %5357 = vmatprep.subr.bf16.mxu0 0
  %5358 = vmatpush1.bf16.msra.mxu0 0
  %5359 = vmatprep.subr.bf16.mxu0 0
  %5360 = vmatpush1.bf16.msra.mxu0 0
  %5361 = vmatprep.subr.bf16.mxu0 0
  %5362 = vmatpush1.bf16.msra.mxu0 0
  %5363 = vmatprep.subr.bf16.mxu0 0
  %5364 = vmatpush1.bf16.msra.mxu0 0
  %5365 = vmatprep.subr.bf16.mxu0 0
  %5366 = vmatpush1.bf16.msra.mxu0 0
  %5367 = vmatprep.mubr.bf16.mxu0 0
  %5368 = vmatmul.mubr.bf16.gmra.mrb[0].mxu0 %v5330
  %v5369 = vpop.f32.mrb[0].mxu0
  %v5370 = vadd.f32 0.0, %v5369
  %v5371 = vpop.f32.mrb[0].mxu0
  %v5372 = vpop.f32.mrb[0].mxu0
  %v5373 = vpop.f32.mrb[0].mxu0
  %5374 = vdwg.mxu0
  %v5383 = vcombine.low %v2394, %v2442
  %v5384 = vcombine.low %v2490, %v2538
  %v5386 = vunpack.c.l.s4 1983009808
  %v5387 = vunpack.c.0.s8 %v5386
  %v5388 = vlaneseq
  %v5389 = vshrl.u32 %v5388, 7
  %v5390 = vsub.s32 %v5387, %v5389
  %v5391 = vrot.slane %v5383, %v5390
  %v5393 = vunpack.c.l.s4 1983009808
  %v5394 = vunpack.c.0.s8 %v5393
  %v5395 = vlaneseq
  %v5396 = vshrl.u32 %v5395, 7
  %v5397 = vsub.s32 %v5394, %v5396
  %v5398 = vrot.slane %v5384, %v5397
  %v5399 = vcombine.low %v5391, %v5398
  %v5400 = vcombine.low %v2586, %v2634
  %v5401 = vcombine.low %v2682, %v2730
  %v5403 = vunpack.c.l.s4 1983009808
  %v5404 = vunpack.c.0.s8 %v5403
  %v5405 = vlaneseq
  %v5406 = vshrl.u32 %v5405, 7
  %v5407 = vsub.s32 %v5404, %v5406
  %v5408 = vrot.slane %v5400, %v5407
  %v5410 = vunpack.c.l.s4 1983009808
  %v5411 = vunpack.c.0.s8 %v5410
  %v5412 = vlaneseq
  %v5413 = vshrl.u32 %v5412, 7
  %v5414 = vsub.s32 %v5411, %v5413
  %v5415 = vrot.slane %v5401, %v5414
  %v5416 = vcombine.low %v5408, %v5415
  %v5427 = vcombine.low %v3274, %v3322
  %v5428 = vcombine.low %v3370, %v3418
  %v5430 = vunpack.c.l.s4 1983009808
  %v5431 = vunpack.c.0.s8 %v5430
  %v5432 = vlaneseq
  %v5433 = vshrl.u32 %v5432, 7
  %v5434 = vsub.s32 %v5431, %v5433
  %v5435 = vrot.slane %v5427, %v5434
  %v5437 = vunpack.c.l.s4 1983009808
  %v5438 = vunpack.c.0.s8 %v5437
  %v5439 = vlaneseq
  %v5440 = vshrl.u32 %v5439, 7
  %v5441 = vsub.s32 %v5438, %v5440
  %v5442 = vrot.slane %v5428, %v5441
  %v5443 = vcombine.low %v5435, %v5442
  %v5444 = vcombine.low %v3466, %v3514
  %v5445 = vcombine.low %v3562, %v3610
  %v5447 = vunpack.c.l.s4 1983009808
  %v5448 = vunpack.c.0.s8 %v5447
  %v5449 = vlaneseq
  %v5450 = vshrl.u32 %v5449, 7
  %v5451 = vsub.s32 %v5448, %v5450
  %v5452 = vrot.slane %v5444, %v5451
  %v5454 = vunpack.c.l.s4 1983009808
  %v5455 = vunpack.c.0.s8 %v5454
  %v5456 = vlaneseq
  %v5457 = vshrl.u32 %v5456, 7
  %v5458 = vsub.s32 %v5455, %v5457
  %v5459 = vrot.slane %v5445, %v5458
  %v5460 = vcombine.low %v5452, %v5459
  %5461 = vrot.lane.b32.xlu0 %v5443, 8
  %v5462 = vpop.permute.xlu0 %5461
  %5463 = vrot.lane.b32.xlu0 %v5460, 8
  %v5464 = vpop.permute.xlu0 %5463
  %v5475 = vcombine.low %v4154, %v4202
  %v5476 = vcombine.low %v4250, %v4298
  %v5478 = vunpack.c.l.s4 1983009808
  %v5479 = vunpack.c.0.s8 %v5478
  %v5480 = vlaneseq
  %v5481 = vshrl.u32 %v5480, 7
  %v5482 = vsub.s32 %v5479, %v5481
  %v5483 = vrot.slane %v5475, %v5482
  %v5485 = vunpack.c.l.s4 1983009808
  %v5486 = vunpack.c.0.s8 %v5485
  %v5487 = vlaneseq
  %v5488 = vshrl.u32 %v5487, 7
  %v5489 = vsub.s32 %v5486, %v5488
  %v5490 = vrot.slane %v5476, %v5489
  %v5491 = vcombine.low %v5483, %v5490
  %v5492 = vcombine.low %v4346, %v4394
  %v5493 = vcombine.low %v4442, %v4490
  %v5495 = vunpack.c.l.s4 1983009808
  %v5496 = vunpack.c.0.s8 %v5495
  %v5497 = vlaneseq
  %v5498 = vshrl.u32 %v5497, 7
  %v5499 = vsub.s32 %v5496, %v5498
  %v5500 = vrot.slane %v5492, %v5499
  %v5502 = vunpack.c.l.s4 1983009808
  %v5503 = vunpack.c.0.s8 %v5502
  %v5504 = vlaneseq
  %v5505 = vshrl.u32 %v5504, 7
  %v5506 = vsub.s32 %v5503, %v5505
  %v5507 = vrot.slane %v5493, %v5506
  %v5508 = vcombine.low %v5500, %v5507
  %5509 = vrot.lane.b32.xlu0 %v5491, 16
  %v5510 = vpop.permute.xlu0 %5509
  %5511 = vrot.lane.b32.xlu0 %v5508, 16
  %v5512 = vpop.permute.xlu0 %5511
  %v5523 = vcombine.low %v5034, %v5082
  %v5524 = vcombine.low %v5130, %v5178
  %v5526 = vunpack.c.l.s4 1983009808
  %v5527 = vunpack.c.0.s8 %v5526
  %v5528 = vlaneseq
  %v5529 = vshrl.u32 %v5528, 7
  %v5530 = vsub.s32 %v5527, %v5529
  %v5531 = vrot.slane %v5523, %v5530
  %v5533 = vunpack.c.l.s4 1983009808
  %v5534 = vunpack.c.0.s8 %v5533
  %v5535 = vlaneseq
  %v5536 = vshrl.u32 %v5535, 7
  %v5537 = vsub.s32 %v5534, %v5536
  %v5538 = vrot.slane %v5524, %v5537
  %v5539 = vcombine.low %v5531, %v5538
  %v5540 = vcombine.low %v5226, %v5274
  %v5541 = vcombine.low %v5322, %v5370
  %v5543 = vunpack.c.l.s4 1983009808
  %v5544 = vunpack.c.0.s8 %v5543
  %v5545 = vlaneseq
  %v5546 = vshrl.u32 %v5545, 7
  %v5547 = vsub.s32 %v5544, %v5546
  %v5548 = vrot.slane %v5540, %v5547
  %v5550 = vunpack.c.l.s4 1983009808
  %v5551 = vunpack.c.0.s8 %v5550
  %v5552 = vlaneseq
  %v5553 = vshrl.u32 %v5552, 7
  %v5554 = vsub.s32 %v5551, %v5553
  %v5555 = vrot.slane %v5541, %v5554
  %v5556 = vcombine.low %v5548, %v5555
  %5557 = vrot.lane.b32.xlu0 %v5539, 24
  %v5558 = vpop.permute.xlu0 %5557
  %5559 = vrot.lane.b32.xlu0 %v5556, 24
  %v5560 = vpop.permute.xlu0 %5559
  %v5563 = vsel %vm1771, %v5399, %v5462
  %v5564 = vsel %vm1771, %v5416, %v5464
  %vm5565 = vcmask 130048
  %v5566 = vsel %vm5565, %v5563, %v5510
  %v5567 = vsel %vm5565, %v5564, %v5512
  %vm5568 = vcmask 195584
  %v5569 = vsel %vm5568, %v5566, %v5558
  %v5570 = vsel %vm5568, %v5567, %v5560
  %v5571 = vpack.c.bf16 %v5570, %v5569
  %v5572 = vld [vmem:[%s25] sm:$0xf]
  %v5573 = vld [vmem:[%s25 + $0x4] sm:$0xf]
  %v5574 = vld [vmem:[%s25 + $0x8] sm:$0xf]
  %v5575 = vld [vmem:[%s25 + $0xc] sm:$0xf]
  %v5576 = vld [vmem:[%s27] sm:$0x1]
  %v5578 = vlaneseq
  %v5579 = vshrl.u32 %v5578, 7
  %v5580 = vsub.s32 0, %v5579
  %v5581 = vrot.slane %v5576, %v5580
  %v5587 = vunpack.c.l.b16 %v5572
  %v5588 = vunpack.c.l.b16 %v5573
  %v5589 = vunpack.c.l.b16 %v5574
  %v5590 = vunpack.c.l.b16 %v5575
  %v5591 = vpack.c.b16 %v5588, %v5587
  %v5592 = vpack.c.b16 %v5590, %v5589
  %v5596 = vsel %vm798, %v5571, 0
  %5598 = vmatprep.subr.bf16.mxu0 0
  %5599 = vmatpush1.bf16.msra.mxu0 %v5591
  %5600 = vmatprep.subr.bf16.mxu0 0
  %5601 = vmatpush1.bf16.msra.mxu0 %v5592
  %5602 = vmatprep.subr.bf16.mxu0 0
  %5603 = vmatpush1.bf16.msra.mxu0 0
  %5604 = vmatprep.subr.bf16.mxu0 0
  %5605 = vmatpush1.bf16.msra.mxu0 0
  %5606 = vmatprep.subr.bf16.mxu0 0
  %5607 = vmatpush1.bf16.msra.mxu0 0
  %5608 = vmatprep.subr.bf16.mxu0 0
  %5609 = vmatpush1.bf16.msra.mxu0 0
  %5610 = vmatprep.subr.bf16.mxu0 0
  %5611 = vmatpush1.bf16.msra.mxu0 0
  %5612 = vmatprep.subr.bf16.mxu0 0
  %5613 = vmatpush1.bf16.msra.mxu0 0
  %5614 = vmatprep.subr.bf16.mxu0 0
  %5615 = vmatpush1.bf16.msra.mxu0 0
  %5616 = vmatprep.subr.bf16.mxu0 0
  %5617 = vmatpush1.bf16.msra.mxu0 0
  %5618 = vmatprep.subr.bf16.mxu0 0
  %5619 = vmatpush1.bf16.msra.mxu0 0
  %5620 = vmatprep.subr.bf16.mxu0 0
  %5621 = vmatpush1.bf16.msra.mxu0 0
  %5622 = vmatprep.subr.bf16.mxu0 0
  %5623 = vmatpush1.bf16.msra.mxu0 0
  %5624 = vmatprep.subr.bf16.mxu0 0
  %5625 = vmatpush1.bf16.msra.mxu0 0
  %5626 = vmatprep.subr.bf16.mxu0 0
  %5627 = vmatpush1.bf16.msra.mxu0 0
  %5628 = vmatprep.subr.bf16.mxu0 0
  %5629 = vmatpush1.bf16.msra.mxu0 0
  %5630 = vmatprep.mubr.bf16.mxu0 0
  %5631 = vmatmul.mubr.bf16.gmra.mrb[0].mxu0 %v5596
  %v5632 = vpop.f32.mrb[0].mxu0
  %v5633 = vadd.f32 %v5581, %v5632
  %v5634 = vpop.f32.mrb[0].mxu0
  %v5635 = vpop.f32.mrb[0].mxu0
  %v5636 = vadd.f32 %v5581, %v5635
  %v5637 = vpop.f32.mrb[0].mxu0
  %5638 = vdwg.mxu0
  %v5639 = vadd.f32 %v1634, %v5633
  %v5640 = vadd.f32 %v1635, %v5636
  %v5641 = vsel %vm798, %v5639, 0.0
  %5642 = vadd.xlane.f32.xlu0 %v5641
  %v5643 = vpop.xlane.xlu0 %5642
  %v5644 = vsel %vm798, %v5640, 0.0
  %5645 = vadd.xlane.f32.xlu0 %v5644
  %v5646 = vpop.xlane.xlu0 %5645
  %v5647 = vrcp.pop 32.0
  %v5648 = vmul.f32 %v5643, %v5647
  %v5649 = vmul.f32 %v5646, %v5647
  %v5650 = vsub.f32 %v5639, %v5648
  %v5651 = vsub.f32 %v5640, %v5649
  %v5652 = vmul.f32 %v5650, %v5650
  %v5653 = vmul.f32 %v5651, %v5651
  %v5654 = vsel %vm798, %v5652, 0.0
  %5655 = vadd.xlane.f32.xlu0 %v5654
  %v5656 = vpop.xlane.xlu0 %5655
  %v5657 = vsel %vm798, %v5653, 0.0
  %5658 = vadd.xlane.f32.xlu0 %v5657
  %v5659 = vpop.xlane.xlu0 %5658
  %v5660 = vmul.f32 %v5656, %v5647
  %v5661 = vmul.f32 %v5659, %v5647
  %v5662 = vadd.f32 %v5660, 1e-05
  %v5663 = vadd.f32 %v5661, 1e-05
  %v5664 = vrsqrt.pop %v5662
  %v5665 = vrsqrt.pop %v5663
  %v5666 = vmul.f32 %v5650, %v5664
  %v5667 = vmul.f32 %v5651, %v5665
  %v5668 = vld [vmem:[%s29] sm:$0x1]
  %v5670 = vlaneseq
  %v5671 = vshrl.u32 %v5670, 7
  %v5672 = vsub.s32 0, %v5671
  %v5673 = vrot.slane %v5668, %v5672
  %v5675 = vmul.f32 %v5666, %v5673
  %v5676 = vmul.f32 %v5667, %v5673
  %v5677 = vld [vmem:[%s31] sm:$0x1]
  %v5679 = vlaneseq
  %v5680 = vshrl.u32 %v5679, 7
  %v5681 = vsub.s32 0, %v5680
  %v5682 = vrot.slane %v5677, %v5681
  %v5684 = vadd.f32 %v5675, %v5682
  %v5685 = vadd.f32 %v5676, %v5682
  %v5686 = vpack.c.bf16 %v5685, %v5684
  %v5687 = vld [vmem:[%s33] sm:$0xf]
  %v5688 = vld [vmem:[%s33 + $0x4] sm:$0xf]
  %v5689 = vld [vmem:[%s33 + $0x8] sm:$0xf]
  %v5690 = vld [vmem:[%s33 + $0xc] sm:$0xf]
  %v5691 = vld [vmem:[%s35] sm:$0x1]
  %v5693 = vlaneseq
  %v5694 = vshrl.u32 %v5693, 7
  %v5695 = vsub.s32 0, %v5694
  %v5696 = vrot.slane %v5691, %v5695
  %v5702 = vunpack.c.l.b16 %v5687
  %v5703 = vunpack.c.l.b16 %v5688
  %v5704 = vunpack.c.l.b16 %v5689
  %v5705 = vunpack.c.l.b16 %v5690
  %v5706 = vpack.c.b16 %v5703, %v5702
  %v5707 = vpack.c.b16 %v5705, %v5704
  %v5711 = vsel %vm798, %v5686, 0
  %5713 = vmatprep.subr.bf16.mxu0 0
  %5714 = vmatpush1.bf16.msra.mxu0 %v5706
  %5715 = vmatprep.subr.bf16.mxu0 0
  %5716 = vmatpush1.bf16.msra.mxu0 %v5707
  %5717 = vmatprep.subr.bf16.mxu0 0
  %5718 = vmatpush1.bf16.msra.mxu0 0
  %5719 = vmatprep.subr.bf16.mxu0 0
  %5720 = vmatpush1.bf16.msra.mxu0 0
  %5721 = vmatprep.subr.bf16.mxu0 0
  %5722 = vmatpush1.bf16.msra.mxu0 0
  %5723 = vmatprep.subr.bf16.mxu0 0
  %5724 = vmatpush1.bf16.msra.mxu0 0
  %5725 = vmatprep.subr.bf16.mxu0 0
  %5726 = vmatpush1.bf16.msra.mxu0 0
  %5727 = vmatprep.subr.bf16.mxu0 0
  %5728 = vmatpush1.bf16.msra.mxu0 0
  %5729 = vmatprep.subr.bf16.mxu0 0
  %5730 = vmatpush1.bf16.msra.mxu0 0
  %5731 = vmatprep.subr.bf16.mxu0 0
  %5732 = vmatpush1.bf16.msra.mxu0 0
  %5733 = vmatprep.subr.bf16.mxu0 0
  %5734 = vmatpush1.bf16.msra.mxu0 0
  %5735 = vmatprep.subr.bf16.mxu0 0
  %5736 = vmatpush1.bf16.msra.mxu0 0
  %5737 = vmatprep.subr.bf16.mxu0 0
  %5738 = vmatpush1.bf16.msra.mxu0 0
  %5739 = vmatprep.subr.bf16.mxu0 0
  %5740 = vmatpush1.bf16.msra.mxu0 0
  %5741 = vmatprep.subr.bf16.mxu0 0
  %5742 = vmatpush1.bf16.msra.mxu0 0
  %5743 = vmatprep.subr.bf16.mxu0 0
  %5744 = vmatpush1.bf16.msra.mxu0 0
  %5745 = vmatprep.mubr.bf16.mxu0 0
  %5746 = vmatmul.mubr.bf16.gmra.mrb[0].mxu0 %v5711
  %v5747 = vpop.f32.mrb[0].mxu0
  %v5748 = vadd.f32 %v5696, %v5747
  %v5749 = vpop.f32.mrb[0].mxu0
  %v5750 = vpop.f32.mrb[0].mxu0
  %v5751 = vadd.f32 %v5696, %v5750
  %v5752 = vpop.f32.mrb[0].mxu0
  %5753 = vdwg.mxu0
  %v5754 = vmax.f32 %v5748, 0.0
  %v5755 = vmax.f32 %v5751, 0.0
  %v5756 = vpack.c.bf16 %v5755, %v5754
  %v5757 = vld [vmem:[%s37] sm:$0xf]
  %v5758 = vld [vmem:[%s37 + $0x4] sm:$0xf]
  %v5759 = vld [vmem:[%s37 + $0x8] sm:$0xf]
  %v5760 = vld [vmem:[%s37 + $0xc] sm:$0xf]
  %v5761 = vld [vmem:[%s37 + $0x10] sm:$0xf]
  %v5762 = vld [vmem:[%s37 + $0x14] sm:$0xf]
  %v5763 = vld [vmem:[%s37 + $0x18] sm:$0xf]
  %v5764 = vld [vmem:[%s37 + $0x1c] sm:$0xf]
  %v5765 = vld [vmem:[%s39] sm:$0x1]
  %v5767 = vlaneseq
  %v5768 = vshrl.u32 %v5767, 7
  %v5769 = vsub.s32 0, %v5768
  %v5770 = vrot.slane %v5765, %v5769
  %v5780 = vunpack.c.l.b16 %v5757
  %v5781 = vunpack.c.l.b16 %v5758
  %v5782 = vunpack.c.l.b16 %v5759
  %v5783 = vunpack.c.l.b16 %v5760
  %v5784 = vunpack.c.l.b16 %v5761
  %v5785 = vunpack.c.l.b16 %v5762
  %v5786 = vunpack.c.l.b16 %v5763
  %v5787 = vunpack.c.l.b16 %v5764
  %v5788 = vpack.c.b16 %v5781, %v5780
  %v5789 = vpack.c.b16 %v5783, %v5782
  %v5790 = vpack.c.b16 %v5785, %v5784
  %v5791 = vpack.c.b16 %v5787, %v5786
  %v5797 = vsel %vm517, %v5756, 0
  %5799 = vmatprep.subr.bf16.mxu0 0
  %5800 = vmatpush1.bf16.msra.mxu0 %v5788
  %5801 = vmatprep.subr.bf16.mxu0 0
  %5802 = vmatpush1.bf16.msra.mxu0 %v5789
  %5803 = vmatprep.subr.bf16.mxu0 0
  %5804 = vmatpush1.bf16.msra.mxu0 %v5790
  %5805 = vmatprep.subr.bf16.mxu0 0
  %5806 = vmatpush1.bf16.msra.mxu0 %v5791
  %5807 = vmatprep.subr.bf16.mxu0 0
  %5808 = vmatpush1.bf16.msra.mxu0 0
  %5809 = vmatprep.subr.bf16.mxu0 0
  %5810 = vmatpush1.bf16.msra.mxu0 0
  %5811 = vmatprep.subr.bf16.mxu0 0
  %5812 = vmatpush1.bf16.msra.mxu0 0
  %5813 = vmatprep.subr.bf16.mxu0 0
  %5814 = vmatpush1.bf16.msra.mxu0 0
  %5815 = vmatprep.subr.bf16.mxu0 0
  %5816 = vmatpush1.bf16.msra.mxu0 0
  %5817 = vmatprep.subr.bf16.mxu0 0
  %5818 = vmatpush1.bf16.msra.mxu0 0
  %5819 = vmatprep.subr.bf16.mxu0 0
  %5820 = vmatpush1.bf16.msra.mxu0 0
  %5821 = vmatprep.subr.bf16.mxu0 0
  %5822 = vmatpush1.bf16.msra.mxu0 0
  %5823 = vmatprep.subr.bf16.mxu0 0
  %5824 = vmatpush1.bf16.msra.mxu0 0
  %5825 = vmatprep.subr.bf16.mxu0 0
  %5826 = vmatpush1.bf16.msra.mxu0 0
  %5827 = vmatprep.subr.bf16.mxu0 0
  %5828 = vmatpush1.bf16.msra.mxu0 0
  %5829 = vmatprep.subr.bf16.mxu0 0
  %5830 = vmatpush1.bf16.msra.mxu0 0
  %5831 = vmatprep.mubr.bf16.mxu0 0
  %5832 = vmatmul.mubr.bf16.gmra.mrb[0].mxu0 %v5797
  %v5833 = vpop.f32.mrb[0].mxu0
  %v5834 = vadd.f32 %v5770, %v5833
  %v5835 = vpop.f32.mrb[0].mxu0
  %v5836 = vpop.f32.mrb[0].mxu0
  %v5837 = vadd.f32 %v5770, %v5836
  %v5838 = vpop.f32.mrb[0].mxu0
  %5839 = vdwg.mxu0
  %v5840 = vadd.f32 %v5684, %v5834
  %v5841 = vadd.f32 %v5685, %v5837
  %v5842 = vsel %vm798, %v5840, 0.0
  %5843 = vadd.xlane.f32.xlu0 %v5842
  %v5844 = vpop.xlane.xlu0 %5843
  %v5845 = vsel %vm798, %v5841, 0.0
  %5846 = vadd.xlane.f32.xlu0 %v5845
  %v5847 = vpop.xlane.xlu0 %5846
  %v5848 = vmul.f32 %v5844, %v5647
  %v5849 = vmul.f32 %v5847, %v5647
  %v5850 = vsub.f32 %v5840, %v5848
  %v5851 = vsub.f32 %v5841, %v5849
  %v5852 = vmul.f32 %v5850, %v5850
  %v5853 = vmul.f32 %v5851, %v5851
  %v5854 = vsel %vm798, %v5852, 0.0
  %5855 = vadd.xlane.f32.xlu0 %v5854
  %v5856 = vpop.xlane.xlu0 %5855
  %v5857 = vsel %vm798, %v5853, 0.0
  %5858 = vadd.xlane.f32.xlu0 %v5857
  %v5859 = vpop.xlane.xlu0 %5858
  %v5860 = vmul.f32 %v5856, %v5647
  %v5861 = vmul.f32 %v5859, %v5647
  %v5862 = vadd.f32 %v5860, 1e-05
  %v5863 = vadd.f32 %v5861, 1e-05
  %v5864 = vrsqrt.pop %v5862
  %v5865 = vrsqrt.pop %v5863
  %v5866 = vmul.f32 %v5850, %v5864
  %v5867 = vmul.f32 %v5851, %v5865
  %v5868 = vld [vmem:[%s41] sm:$0x1]
  %v5870 = vlaneseq
  %v5871 = vshrl.u32 %v5870, 7
  %v5872 = vsub.s32 0, %v5871
  %v5873 = vrot.slane %v5868, %v5872
  %v5875 = vmul.f32 %v5866, %v5873
  %v5876 = vmul.f32 %v5867, %v5873
  %v5877 = vld [vmem:[%s43] sm:$0x1]
  %v5879 = vlaneseq
  %v5880 = vshrl.u32 %v5879, 7
  %v5881 = vsub.s32 0, %v5880
  %v5882 = vrot.slane %v5877, %v5881
  %v5884 = vadd.f32 %v5875, %v5882
  %v5885 = vadd.f32 %v5876, %v5882
  %v5886 = vpack.c.bf16 %v5885, %v5884
  %s5887 = scalar_lea.vmem %s21, 16
  %v5888 = vld [vmem:[%s5887] sm:$0xf]
  %v5889 = vld [vmem:[%s5887 + $0x4] sm:$0xf]
  %v5890 = vld [vmem:[%s5887 + $0x8] sm:$0xf]
  %v5891 = vld [vmem:[%s5887 + $0xc] sm:$0xf]
  %s5892 = scalar_lea.vmem %s23, 1
  %v5893 = vld [vmem:[%s5892] sm:$0x1]
  %v5895 = vlaneseq
  %v5896 = vshrl.u32 %v5895, 7
  %v5897 = vsub.s32 0, %v5896
  %v5898 = vrot.slane %v5893, %v5897
  %v5904 = vunpack.c.l.b16 %v5888
  %v5905 = vunpack.c.l.b16 %v5889
  %v5906 = vunpack.c.l.b16 %v5890
  %v5907 = vunpack.c.l.b16 %v5891
  %v5908 = vpack.c.b16 %v5905, %v5904
  %v5909 = vpack.c.b16 %v5907, %v5906
  %v5913 = vsel %vm798, %v5886, 0
  %5915 = vmatprep.subr.bf16.mxu0 0
  %5916 = vmatpush1.bf16.msra.mxu0 %v5908
  %5917 = vmatprep.subr.bf16.mxu0 0
  %5918 = vmatpush1.bf16.msra.mxu0 %v5909
  %5919 = vmatprep.subr.bf16.mxu0 0
  %5920 = vmatpush1.bf16.msra.mxu0 0
  %5921 = vmatprep.subr.bf16.mxu0 0
  %5922 = vmatpush1.bf16.msra.mxu0 0
  %5923 = vmatprep.subr.bf16.mxu0 0
  %5924 = vmatpush1.bf16.msra.mxu0 0
  %5925 = vmatprep.subr.bf16.mxu0 0
  %5926 = vmatpush1.bf16.msra.mxu0 0
  %5927 = vmatprep.subr.bf16.mxu0 0
  %5928 = vmatpush1.bf16.msra.mxu0 0
  %5929 = vmatprep.subr.bf16.mxu0 0
  %5930 = vmatpush1.bf16.msra.mxu0 0
  %5931 = vmatprep.subr.bf16.mxu0 0
  %5932 = vmatpush1.bf16.msra.mxu0 0
  %5933 = vmatprep.subr.bf16.mxu0 0
  %5934 = vmatpush1.bf16.msra.mxu0 0
  %5935 = vmatprep.subr.bf16.mxu0 0
  %5936 = vmatpush1.bf16.msra.mxu0 0
  %5937 = vmatprep.subr.bf16.mxu0 0
  %5938 = vmatpush1.bf16.msra.mxu0 0
  %5939 = vmatprep.subr.bf16.mxu0 0
  %5940 = vmatpush1.bf16.msra.mxu0 0
  %5941 = vmatprep.subr.bf16.mxu0 0
  %5942 = vmatpush1.bf16.msra.mxu0 0
  %5943 = vmatprep.subr.bf16.mxu0 0
  %5944 = vmatpush1.bf16.msra.mxu0 0
  %5945 = vmatprep.subr.bf16.mxu0 0
  %5946 = vmatpush1.bf16.msra.mxu0 0
  %5947 = vmatprep.mubr.bf16.mxu0 0
  %5948 = vmatmul.mubr.bf16.gmra.mrb[0].mxu0 %v5913
  %v5949 = vpop.f32.mrb[0].mxu0
  %v5950 = vadd.f32 %v5898, %v5949
  %v5951 = vpop.f32.mrb[0].mxu0
  %v5952 = vpop.f32.mrb[0].mxu0
  %v5953 = vadd.f32 %v5898, %v5952
  %v5954 = vpop.f32.mrb[0].mxu0
  %5955 = vdwg.mxu0
  %v5956 = vpack.c.bf16 %v5953, %v5950
  %v5958 = vcombine.high %v5956, %v5956
  %v5960 = vunpack.c.l.s4 1966171168
  %v5961 = vunpack.c.0.s8 %v5960
  %v5962 = vlaneseq
  %v5963 = vshrl.u32 %v5962, 7
  %v5964 = vsub.s32 %v5961, %v5963
  %v5965 = vrot.slane %v5956, %v5964
  %v5967 = vunpack.c.l.s4 1966171168
  %v5968 = vunpack.c.0.s8 %v5967
  %v5969 = vlaneseq
  %v5970 = vshrl.u32 %v5969, 7
  %v5971 = vsub.s32 %v5968, %v5970
  %v5972 = vrot.slane %v5958, %v5971
  %v5973 = vcombine.high %v5965, %v5965
  %v5974 = vcombine.high %v5972, %v5972
  %v5976 = vunpack.c.l.s4 1966171168
  %v5977 = vunpack.c.0.s8 %v5976
  %v5978 = vlaneseq
  %v5979 = vshrl.u32 %v5978, 7
  %v5980 = vsub.s32 %v5977, %v5979
  %v5981 = vrot.slane %v5965, %v5980
  %v5983 = vunpack.c.l.s4 1966171168
  %v5984 = vunpack.c.0.s8 %v5983
  %v5985 = vlaneseq
  %v5986 = vshrl.u32 %v5985, 7
  %v5987 = vsub.s32 %v5984, %v5986
  %v5988 = vrot.slane %v5972, %v5987
  %v5990 = vunpack.c.l.s4 1966171168
  %v5991 = vunpack.c.0.s8 %v5990
  %v5992 = vlaneseq
  %v5993 = vshrl.u32 %v5992, 7
  %v5994 = vsub.s32 %v5991, %v5993
  %v5995 = vrot.slane %v5973, %v5994
  %v5997 = vunpack.c.l.s4 1966171168
  %v5998 = vunpack.c.0.s8 %v5997
  %v5999 = vlaneseq
  %v6000 = vshrl.u32 %v5999, 7
  %v6001 = vsub.s32 %v5998, %v6000
  %v6002 = vrot.slane %v5974, %v6001
  %v6003 = vcombine.high %v5981, %v5981
  %v6004 = vcombine.high %v5988, %v5988
  %v6005 = vcombine.high %v5995, %v5995
  %v6006 = vcombine.high %v6002, %v6002
  %v6008 = vunpack.c.l.s4 1966171168
  %v6009 = vunpack.c.0.s8 %v6008
  %v6010 = vlaneseq
  %v6011 = vshrl.u32 %v6010, 7
  %v6012 = vsub.s32 %v6009, %v6011
  %v6013 = vrot.slane %v5981, %v6012
  %v6015 = vunpack.c.l.s4 1966171168
  %v6016 = vunpack.c.0.s8 %v6015
  %v6017 = vlaneseq
  %v6018 = vshrl.u32 %v6017, 7
  %v6019 = vsub.s32 %v6016, %v6018
  %v6020 = vrot.slane %v6013, %v6019
  %6021 = vrot.lane.b32.xlu0 %v6020, 96
  %v6022 = vpop.permute.xlu0 %6021
  %v6024 = vsel %vm1771, %v5981, 0
  %v6027 = vsel %vm1771, %v6022, 0
  %6029 = vmatprep.subr.bf16.mxu0 0
  %6030 = vmatpush1.bf16.xpose.msra.mxu0 %v6027
  %6031 = vmatprep.subr.bf16.mxu0 0
  %6032 = vmatpush1.bf16.xpose.msra.mxu0 0
  %6033 = vmatprep.subr.bf16.mxu0 0
  %6034 = vmatpush1.bf16.xpose.msra.mxu0 0
  %6035 = vmatprep.subr.bf16.mxu0 0
  %6036 = vmatpush1.bf16.xpose.msra.mxu0 0
  %6037 = vmatprep.subr.bf16.mxu0 0
  %6038 = vmatpush1.bf16.xpose.msra.mxu0 0
  %6039 = vmatprep.subr.bf16.mxu0 0
  %6040 = vmatpush1.bf16.xpose.msra.mxu0 0
  %6041 = vmatprep.subr.bf16.mxu0 0
  %6042 = vmatpush1.bf16.xpose.msra.mxu0 0
  %6043 = vmatprep.subr.bf16.mxu0 0
  %6044 = vmatpush1.bf16.xpose.msra.mxu0 0
  %6045 = vmatprep.subr.bf16.mxu0 0
  %6046 = vmatpush1.bf16.xpose.msra.mxu0 0
  %6047 = vmatprep.subr.bf16.mxu0 0
  %6048 = vmatpush1.bf16.xpose.msra.mxu0 0
  %6049 = vmatprep.subr.bf16.mxu0 0
  %6050 = vmatpush1.bf16.xpose.msra.mxu0 0
  %6051 = vmatprep.subr.bf16.mxu0 0
  %6052 = vmatpush1.bf16.xpose.msra.mxu0 0
  %6053 = vmatprep.subr.bf16.mxu0 0
  %6054 = vmatpush1.bf16.xpose.msra.mxu0 0
  %6055 = vmatprep.subr.bf16.mxu0 0
  %6056 = vmatpush1.bf16.xpose.msra.mxu0 0
  %6057 = vmatprep.subr.bf16.mxu0 0
  %6058 = vmatpush1.bf16.xpose.msra.mxu0 0
  %6059 = vmatprep.subr.bf16.mxu0 0
  %6060 = vmatpush1.bf16.xpose.msra.mxu0 0
  %6061 = vmatprep.mubr.bf16.mxu0 0
  %6062 = vmatmul.mubr.bf16.gmra.mrb[0].mxu0 %v6024
  %v6063 = vpop.f32.mrb[0].mxu0
  %v6064 = vadd.f32 0.0, %v6063
  %v6065 = vpop.f32.mrb[0].mxu0
  %v6066 = vpop.f32.mrb[0].mxu0
  %v6067 = vpop.f32.mrb[0].mxu0
  %6068 = vdwg.mxu0
  %v6070 = vunpack.c.l.s4 1966171168
  %v6071 = vunpack.c.0.s8 %v6070
  %v6072 = vlaneseq
  %v6073 = vshrl.u32 %v6072, 7
  %v6074 = vsub.s32 %v6071, %v6073
  %v6075 = vrot.slane %v5995, %v6074
  %v6077 = vunpack.c.l.s4 1966171168
  %v6078 = vunpack.c.0.s8 %v6077
  %v6079 = vlaneseq
  %v6080 = vshrl.u32 %v6079, 7
  %v6081 = vsub.s32 %v6078, %v6080
  %v6082 = vrot.slane %v6075, %v6081
  %6083 = vrot.lane.b32.xlu0 %v6082, 96
  %v6084 = vpop.permute.xlu0 %6083
  %v6086 = vsel %vm1771, %v5995, 0
  %v6089 = vsel %vm1771, %v6084, 0
  %6091 = vmatprep.subr.bf16.mxu0 0
  %6092 = vmatpush1.bf16.xpose.msra.mxu0 %v6089
  %6093 = vmatprep.subr.bf16.mxu0 0
  %6094 = vmatpush1.bf16.xpose.msra.mxu0 0
  %6095 = vmatprep.subr.bf16.mxu0 0
  %6096 = vmatpush1.bf16.xpose.msra.mxu0 0
  %6097 = vmatprep.subr.bf16.mxu0 0
  %6098 = vmatpush1.bf16.xpose.msra.mxu0 0
  %6099 = vmatprep.subr.bf16.mxu0 0
  %6100 = vmatpush1.bf16.xpose.msra.mxu0 0
  %6101 = vmatprep.subr.bf16.mxu0 0
  %6102 = vmatpush1.bf16.xpose.msra.mxu0 0
  %6103 = vmatprep.subr.bf16.mxu0 0
  %6104 = vmatpush1.bf16.xpose.msra.mxu0 0
  %6105 = vmatprep.subr.bf16.mxu0 0
  %6106 = vmatpush1.bf16.xpose.msra.mxu0 0
  %6107 = vmatprep.subr.bf16.mxu0 0
  %6108 = vmatpush1.bf16.xpose.msra.mxu0 0
  %6109 = vmatprep.subr.bf16.mxu0 0
  %6110 = vmatpush1.bf16.xpose.msra.mxu0 0
  %6111 = vmatprep.subr.bf16.mxu0 0
  %6112 = vmatpush1.bf16.xpose.msra.mxu0 0
  %6113 = vmatprep.subr.bf16.mxu0 0
  %6114 = vmatpush1.bf16.xpose.msra.mxu0 0
  %6115 = vmatprep.subr.bf16.mxu0 0
  %6116 = vmatpush1.bf16.xpose.msra.mxu0 0
  %6117 = vmatprep.subr.bf16.mxu0 0
  %6118 = vmatpush1.bf16.xpose.msra.mxu0 0
  %6119 = vmatprep.subr.bf16.mxu0 0
  %6120 = vmatpush1.bf16.xpose.msra.mxu0 0
  %6121 = vmatprep.subr.bf16.mxu0 0
  %6122 = vmatpush1.bf16.xpose.msra.mxu0 0
  %6123 = vmatprep.mubr.bf16.mxu0 0
  %6124 = vmatmul.mubr.bf16.gmra.mrb[0].mxu0 %v6086
  %v6125 = vpop.f32.mrb[0].mxu0
  %v6126 = vadd.f32 0.0, %v6125
  %v6127 = vpop.f32.mrb[0].mxu0
  %v6128 = vpop.f32.mrb[0].mxu0
  %v6129 = vpop.f32.mrb[0].mxu0
  %6130 = vdwg.mxu0
  %v6132 = vunpack.c.l.s4 1966171168
  %v6133 = vunpack.c.0.s8 %v6132
  %v6134 = vlaneseq
  %v6135 = vshrl.u32 %v6134, 7
  %v6136 = vsub.s32 %v6133, %v6135
  %v6137 = vrot.slane %v6003, %v6136
  %v6139 = vunpack.c.l.s4 1966171168
  %v6140 = vunpack.c.0.s8 %v6139
  %v6141 = vlaneseq
  %v6142 = vshrl.u32 %v6141, 7
  %v6143 = vsub.s32 %v6140, %v6142
  %v6144 = vrot.slane %v6137, %v6143
  %6145 = vrot.lane.b32.xlu0 %v6144, 96
  %v6146 = vpop.permute.xlu0 %6145
  %v6148 = vsel %vm1771, %v6003, 0
  %v6151 = vsel %vm1771, %v6146, 0
  %6153 = vmatprep.subr.bf16.mxu0 0
  %6154 = vmatpush1.bf16.xpose.msra.mxu0 %v6151
  %6155 = vmatprep.subr.bf16.mxu0 0
  %6156 = vmatpush1.bf16.xpose.msra.mxu0 0
  %6157 = vmatprep.subr.bf16.mxu0 0
  %6158 = vmatpush1.bf16.xpose.msra.mxu0 0
  %6159 = vmatprep.subr.bf16.mxu0 0
  %6160 = vmatpush1.bf16.xpose.msra.mxu0 0
  %6161 = vmatprep.subr.bf16.mxu0 0
  %6162 = vmatpush1.bf16.xpose.msra.mxu0 0
  %6163 = vmatprep.subr.bf16.mxu0 0
  %6164 = vmatpush1.bf16.xpose.msra.mxu0 0
  %6165 = vmatprep.subr.bf16.mxu0 0
  %6166 = vmatpush1.bf16.xpose.msra.mxu0 0
  %6167 = vmatprep.subr.bf16.mxu0 0
  %6168 = vmatpush1.bf16.xpose.msra.mxu0 0
  %6169 = vmatprep.subr.bf16.mxu0 0
  %6170 = vmatpush1.bf16.xpose.msra.mxu0 0
  %6171 = vmatprep.subr.bf16.mxu0 0
  %6172 = vmatpush1.bf16.xpose.msra.mxu0 0
  %6173 = vmatprep.subr.bf16.mxu0 0
  %6174 = vmatpush1.bf16.xpose.msra.mxu0 0
  %6175 = vmatprep.subr.bf16.mxu0 0
  %6176 = vmatpush1.bf16.xpose.msra.mxu0 0
  %6177 = vmatprep.subr.bf16.mxu0 0
  %6178 = vmatpush1.bf16.xpose.msra.mxu0 0
  %6179 = vmatprep.subr.bf16.mxu0 0
  %6180 = vmatpush1.bf16.xpose.msra.mxu0 0
  %6181 = vmatprep.subr.bf16.mxu0 0
  %6182 = vmatpush1.bf16.xpose.msra.mxu0 0
  %6183 = vmatprep.subr.bf16.mxu0 0
  %6184 = vmatpush1.bf16.xpose.msra.mxu0 0
  %6185 = vmatprep.mubr.bf16.mxu0 0
  %6186 = vmatmul.mubr.bf16.gmra.mrb[0].mxu0 %v6148
  %v6187 = vpop.f32.mrb[0].mxu0
  %v6188 = vadd.f32 0.0, %v6187
  %v6189 = vpop.f32.mrb[0].mxu0
  %v6190 = vpop.f32.mrb[0].mxu0
  %v6191 = vpop.f32.mrb[0].mxu0
  %6192 = vdwg.mxu0
  %v6194 = vunpack.c.l.s4 1966171168
  %v6195 = vunpack.c.0.s8 %v6194
  %v6196 = vlaneseq
  %v6197 = vshrl.u32 %v6196, 7
  %v6198 = vsub.s32 %v6195, %v6197
  %v6199 = vrot.slane %v6005, %v6198
  %v6201 = vunpack.c.l.s4 1966171168
  %v6202 = vunpack.c.0.s8 %v6201
  %v6203 = vlaneseq
  %v6204 = vshrl.u32 %v6203, 7
  %v6205 = vsub.s32 %v6202, %v6204
  %v6206 = vrot.slane %v6199, %v6205
  %6207 = vrot.lane.b32.xlu0 %v6206, 96
  %v6208 = vpop.permute.xlu0 %6207
  %v6210 = vsel %vm1771, %v6005, 0
  %v6213 = vsel %vm1771, %v6208, 0
  %6215 = vmatprep.subr.bf16.mxu0 0
  %6216 = vmatpush1.bf16.xpose.msra.mxu0 %v6213
  %6217 = vmatprep.subr.bf16.mxu0 0
  %6218 = vmatpush1.bf16.xpose.msra.mxu0 0
  %6219 = vmatprep.subr.bf16.mxu0 0
  %6220 = vmatpush1.bf16.xpose.msra.mxu0 0
  %6221 = vmatprep.subr.bf16.mxu0 0
  %6222 = vmatpush1.bf16.xpose.msra.mxu0 0
  %6223 = vmatprep.subr.bf16.mxu0 0
  %6224 = vmatpush1.bf16.xpose.msra.mxu0 0
  %6225 = vmatprep.subr.bf16.mxu0 0
  %6226 = vmatpush1.bf16.xpose.msra.mxu0 0
  %6227 = vmatprep.subr.bf16.mxu0 0
  %6228 = vmatpush1.bf16.xpose.msra.mxu0 0
  %6229 = vmatprep.subr.bf16.mxu0 0
  %6230 = vmatpush1.bf16.xpose.msra.mxu0 0
  %6231 = vmatprep.subr.bf16.mxu0 0
  %6232 = vmatpush1.bf16.xpose.msra.mxu0 0
  %6233 = vmatprep.subr.bf16.mxu0 0
  %6234 = vmatpush1.bf16.xpose.msra.mxu0 0
  %6235 = vmatprep.subr.bf16.mxu0 0
  %6236 = vmatpush1.bf16.xpose.msra.mxu0 0
  %6237 = vmatprep.subr.bf16.mxu0 0
  %6238 = vmatpush1.bf16.xpose.msra.mxu0 0
  %6239 = vmatprep.subr.bf16.mxu0 0
  %6240 = vmatpush1.bf16.xpose.msra.mxu0 0
  %6241 = vmatprep.subr.bf16.mxu0 0
  %6242 = vmatpush1.bf16.xpose.msra.mxu0 0
  %6243 = vmatprep.subr.bf16.mxu0 0
  %6244 = vmatpush1.bf16.xpose.msra.mxu0 0
  %6245 = vmatprep.subr.bf16.mxu0 0
  %6246 = vmatpush1.bf16.xpose.msra.mxu0 0
  %6247 = vmatprep.mubr.bf16.mxu0 0
  %6248 = vmatmul.mubr.bf16.gmra.mrb[0].mxu0 %v6210
  %v6249 = vpop.f32.mrb[0].mxu0
  %v6250 = vadd.f32 0.0, %v6249
  %v6251 = vpop.f32.mrb[0].mxu0
  %v6252 = vpop.f32.mrb[0].mxu0
  %v6253 = vpop.f32.mrb[0].mxu0
  %6254 = vdwg.mxu0
  %v6256 = vunpack.c.l.s4 1966171168
  %v6257 = vunpack.c.0.s8 %v6256
  %v6258 = vlaneseq
  %v6259 = vshrl.u32 %v6258, 7
  %v6260 = vsub.s32 %v6257, %v6259
  %v6261 = vrot.slane %v5988, %v6260
  %v6263 = vunpack.c.l.s4 1966171168
  %v6264 = vunpack.c.0.s8 %v6263
  %v6265 = vlaneseq
  %v6266 = vshrl.u32 %v6265, 7
  %v6267 = vsub.s32 %v6264, %v6266
  %v6268 = vrot.slane %v6261, %v6267
  %6269 = vrot.lane.b32.xlu0 %v6268, 96
  %v6270 = vpop.permute.xlu0 %6269
  %v6272 = vsel %vm1771, %v5988, 0
  %v6275 = vsel %vm1771, %v6270, 0
  %6277 = vmatprep.subr.bf16.mxu0 0
  %6278 = vmatpush1.bf16.xpose.msra.mxu0 %v6275
  %6279 = vmatprep.subr.bf16.mxu0 0
  %6280 = vmatpush1.bf16.xpose.msra.mxu0 0
  %6281 = vmatprep.subr.bf16.mxu0 0
  %6282 = vmatpush1.bf16.xpose.msra.mxu0 0
  %6283 = vmatprep.subr.bf16.mxu0 0
  %6284 = vmatpush1.bf16.xpose.msra.mxu0 0
  %6285 = vmatprep.subr.bf16.mxu0 0
  %6286 = vmatpush1.bf16.xpose.msra.mxu0 0
  %6287 = vmatprep.subr.bf16.mxu0 0
  %6288 = vmatpush1.bf16.xpose.msra.mxu0 0
  %6289 = vmatprep.subr.bf16.mxu0 0
  %6290 = vmatpush1.bf16.xpose.msra.mxu0 0
  %6291 = vmatprep.subr.bf16.mxu0 0
  %6292 = vmatpush1.bf16.xpose.msra.mxu0 0
  %6293 = vmatprep.subr.bf16.mxu0 0
  %6294 = vmatpush1.bf16.xpose.msra.mxu0 0
  %6295 = vmatprep.subr.bf16.mxu0 0
  %6296 = vmatpush1.bf16.xpose.msra.mxu0 0
  %6297 = vmatprep.subr.bf16.mxu0 0
  %6298 = vmatpush1.bf16.xpose.msra.mxu0 0
  %6299 = vmatprep.subr.bf16.mxu0 0
  %6300 = vmatpush1.bf16.xpose.msra.mxu0 0
  %6301 = vmatprep.subr.bf16.mxu0 0
  %6302 = vmatpush1.bf16.xpose.msra.mxu0 0
  %6303 = vmatprep.subr.bf16.mxu0 0
  %6304 = vmatpush1.bf16.xpose.msra.mxu0 0
  %6305 = vmatprep.subr.bf16.mxu0 0
  %6306 = vmatpush1.bf16.xpose.msra.mxu0 0
  %6307 = vmatprep.subr.bf16.mxu0 0
  %6308 = vmatpush1.bf16.xpose.msra.mxu0 0
  %6309 = vmatprep.mubr.bf16.mxu0 0
  %6310 = vmatmul.mubr.bf16.gmra.mrb[0].mxu0 %v6272
  %v6311 = vpop.f32.mrb[0].mxu0
  %v6312 = vadd.f32 0.0, %v6311
  %v6313 = vpop.f32.mrb[0].mxu0
  %v6314 = vpop.f32.mrb[0].mxu0
  %v6315 = vpop.f32.mrb[0].mxu0
  %6316 = vdwg.mxu0
  %v6318 = vunpack.c.l.s4 1966171168
  %v6319 = vunpack.c.0.s8 %v6318
  %v6320 = vlaneseq
  %v6321 = vshrl.u32 %v6320, 7
  %v6322 = vsub.s32 %v6319, %v6321
  %v6323 = vrot.slane %v6002, %v6322
  %v6325 = vunpack.c.l.s4 1966171168
  %v6326 = vunpack.c.0.s8 %v6325
  %v6327 = vlaneseq
  %v6328 = vshrl.u32 %v6327, 7
  %v6329 = vsub.s32 %v6326, %v6328
  %v6330 = vrot.slane %v6323, %v6329
  %6331 = vrot.lane.b32.xlu0 %v6330, 96
  %v6332 = vpop.permute.xlu0 %6331
  %v6334 = vsel %vm1771, %v6002, 0
  %v6337 = vsel %vm1771, %v6332, 0
  %6339 = vmatprep.subr.bf16.mxu0 0
  %6340 = vmatpush1.bf16.xpose.msra.mxu0 %v6337
  %6341 = vmatprep.subr.bf16.mxu0 0
  %6342 = vmatpush1.bf16.xpose.msra.mxu0 0
  %6343 = vmatprep.subr.bf16.mxu0 0
  %6344 = vmatpush1.bf16.xpose.msra.mxu0 0
  %6345 = vmatprep.subr.bf16.mxu0 0
  %6346 = vmatpush1.bf16.xpose.msra.mxu0 0
  %6347 = vmatprep.subr.bf16.mxu0 0
  %6348 = vmatpush1.bf16.xpose.msra.mxu0 0
  %6349 = vmatprep.subr.bf16.mxu0 0
  %6350 = vmatpush1.bf16.xpose.msra.mxu0 0
  %6351 = vmatprep.subr.bf16.mxu0 0
  %6352 = vmatpush1.bf16.xpose.msra.mxu0 0
  %6353 = vmatprep.subr.bf16.mxu0 0
  %6354 = vmatpush1.bf16.xpose.msra.mxu0 0
  %6355 = vmatprep.subr.bf16.mxu0 0
  %6356 = vmatpush1.bf16.xpose.msra.mxu0 0
  %6357 = vmatprep.subr.bf16.mxu0 0
  %6358 = vmatpush1.bf16.xpose.msra.mxu0 0
  %6359 = vmatprep.subr.bf16.mxu0 0
  %6360 = vmatpush1.bf16.xpose.msra.mxu0 0
  %6361 = vmatprep.subr.bf16.mxu0 0
  %6362 = vmatpush1.bf16.xpose.msra.mxu0 0
  %6363 = vmatprep.subr.bf16.mxu0 0
  %6364 = vmatpush1.bf16.xpose.msra.mxu0 0
  %6365 = vmatprep.subr.bf16.mxu0 0
  %6366 = vmatpush1.bf16.xpose.msra.mxu0 0
  %6367 = vmatprep.subr.bf16.mxu0 0
  %6368 = vmatpush1.bf16.xpose.msra.mxu0 0
  %6369 = vmatprep.subr.bf16.mxu0 0
  %6370 = vmatpush1.bf16.xpose.msra.mxu0 0
  %6371 = vmatprep.mubr.bf16.mxu0 0
  %6372 = vmatmul.mubr.bf16.gmra.mrb[0].mxu0 %v6334
  %v6373 = vpop.f32.mrb[0].mxu0
  %v6374 = vadd.f32 0.0, %v6373
  %v6375 = vpop.f32.mrb[0].mxu0
  %v6376 = vpop.f32.mrb[0].mxu0
  %v6377 = vpop.f32.mrb[0].mxu0
  %6378 = vdwg.mxu0
  %v6380 = vunpack.c.l.s4 1966171168
  %v6381 = vunpack.c.0.s8 %v6380
  %v6382 = vlaneseq
  %v6383 = vshrl.u32 %v6382, 7
  %v6384 = vsub.s32 %v6381, %v6383
  %v6385 = vrot.slane %v6004, %v6384
  %v6387 = vunpack.c.l.s4 1966171168
  %v6388 = vunpack.c.0.s8 %v6387
  %v6389 = vlaneseq
  %v6390 = vshrl.u32 %v6389, 7
  %v6391 = vsub.s32 %v6388, %v6390
  %v6392 = vrot.slane %v6385, %v6391
  %6393 = vrot.lane.b32.xlu0 %v6392, 96
  %v6394 = vpop.permute.xlu0 %6393
  %v6396 = vsel %vm1771, %v6004, 0
  %v6399 = vsel %vm1771, %v6394, 0
  %6401 = vmatprep.subr.bf16.mxu0 0
  %6402 = vmatpush1.bf16.xpose.msra.mxu0 %v6399
  %6403 = vmatprep.subr.bf16.mxu0 0
  %6404 = vmatpush1.bf16.xpose.msra.mxu0 0
  %6405 = vmatprep.subr.bf16.mxu0 0
  %6406 = vmatpush1.bf16.xpose.msra.mxu0 0
  %6407 = vmatprep.subr.bf16.mxu0 0
  %6408 = vmatpush1.bf16.xpose.msra.mxu0 0
  %6409 = vmatprep.subr.bf16.mxu0 0
  %6410 = vmatpush1.bf16.xpose.msra.mxu0 0
  %6411 = vmatprep.subr.bf16.mxu0 0
  %6412 = vmatpush1.bf16.xpose.msra.mxu0 0
  %6413 = vmatprep.subr.bf16.mxu0 0
  %6414 = vmatpush1.bf16.xpose.msra.mxu0 0
  %6415 = vmatprep.subr.bf16.mxu0 0
  %6416 = vmatpush1.bf16.xpose.msra.mxu0 0
  %6417 = vmatprep.subr.bf16.mxu0 0
  %6418 = vmatpush1.bf16.xpose.msra.mxu0 0
  %6419 = vmatprep.subr.bf16.mxu0 0
  %6420 = vmatpush1.bf16.xpose.msra.mxu0 0
  %6421 = vmatprep.subr.bf16.mxu0 0
  %6422 = vmatpush1.bf16.xpose.msra.mxu0 0
  %6423 = vmatprep.subr.bf16.mxu0 0
  %6424 = vmatpush1.bf16.xpose.msra.mxu0 0
  %6425 = vmatprep.subr.bf16.mxu0 0
  %6426 = vmatpush1.bf16.xpose.msra.mxu0 0
  %6427 = vmatprep.subr.bf16.mxu0 0
  %6428 = vmatpush1.bf16.xpose.msra.mxu0 0
  %6429 = vmatprep.subr.bf16.mxu0 0
  %6430 = vmatpush1.bf16.xpose.msra.mxu0 0
  %6431 = vmatprep.subr.bf16.mxu0 0
  %6432 = vmatpush1.bf16.xpose.msra.mxu0 0
  %6433 = vmatprep.mubr.bf16.mxu0 0
  %6434 = vmatmul.mubr.bf16.gmra.mrb[0].mxu0 %v6396
  %v6435 = vpop.f32.mrb[0].mxu0
  %v6436 = vadd.f32 0.0, %v6435
  %v6437 = vpop.f32.mrb[0].mxu0
  %v6438 = vpop.f32.mrb[0].mxu0
  %v6439 = vpop.f32.mrb[0].mxu0
  %6440 = vdwg.mxu0
  %v6442 = vunpack.c.l.s4 1966171168
  %v6443 = vunpack.c.0.s8 %v6442
  %v6444 = vlaneseq
  %v6445 = vshrl.u32 %v6444, 7
  %v6446 = vsub.s32 %v6443, %v6445
  %v6447 = vrot.slane %v6006, %v6446
  %v6449 = vunpack.c.l.s4 1966171168
  %v6450 = vunpack.c.0.s8 %v6449
  %v6451 = vlaneseq
  %v6452 = vshrl.u32 %v6451, 7
  %v6453 = vsub.s32 %v6450, %v6452
  %v6454 = vrot.slane %v6447, %v6453
  %6455 = vrot.lane.b32.xlu0 %v6454, 96
  %v6456 = vpop.permute.xlu0 %6455
  %v6458 = vsel %vm1771, %v6006, 0
  %v6461 = vsel %vm1771, %v6456, 0
  %6463 = vmatprep.subr.bf16.mxu0 0
  %6464 = vmatpush1.bf16.xpose.msra.mxu0 %v6461
  %6465 = vmatprep.subr.bf16.mxu0 0
  %6466 = vmatpush1.bf16.xpose.msra.mxu0 0
  %6467 = vmatprep.subr.bf16.mxu0 0
  %6468 = vmatpush1.bf16.xpose.msra.mxu0 0
  %6469 = vmatprep.subr.bf16.mxu0 0
  %6470 = vmatpush1.bf16.xpose.msra.mxu0 0
  %6471 = vmatprep.subr.bf16.mxu0 0
  %6472 = vmatpush1.bf16.xpose.msra.mxu0 0
  %6473 = vmatprep.subr.bf16.mxu0 0
  %6474 = vmatpush1.bf16.xpose.msra.mxu0 0
  %6475 = vmatprep.subr.bf16.mxu0 0
  %6476 = vmatpush1.bf16.xpose.msra.mxu0 0
  %6477 = vmatprep.subr.bf16.mxu0 0
  %6478 = vmatpush1.bf16.xpose.msra.mxu0 0
  %6479 = vmatprep.subr.bf16.mxu0 0
  %6480 = vmatpush1.bf16.xpose.msra.mxu0 0
  %6481 = vmatprep.subr.bf16.mxu0 0
  %6482 = vmatpush1.bf16.xpose.msra.mxu0 0
  %6483 = vmatprep.subr.bf16.mxu0 0
  %6484 = vmatpush1.bf16.xpose.msra.mxu0 0
  %6485 = vmatprep.subr.bf16.mxu0 0
  %6486 = vmatpush1.bf16.xpose.msra.mxu0 0
  %6487 = vmatprep.subr.bf16.mxu0 0
  %6488 = vmatpush1.bf16.xpose.msra.mxu0 0
  %6489 = vmatprep.subr.bf16.mxu0 0
  %6490 = vmatpush1.bf16.xpose.msra.mxu0 0
  %6491 = vmatprep.subr.bf16.mxu0 0
  %6492 = vmatpush1.bf16.xpose.msra.mxu0 0
  %6493 = vmatprep.subr.bf16.mxu0 0
  %6494 = vmatpush1.bf16.xpose.msra.mxu0 0
  %6495 = vmatprep.mubr.bf16.mxu0 0
  %6496 = vmatmul.mubr.bf16.gmra.mrb[0].mxu0 %v6458
  %v6497 = vpop.f32.mrb[0].mxu0
  %v6498 = vadd.f32 0.0, %v6497
  %v6499 = vpop.f32.mrb[0].mxu0
  %v6500 = vpop.f32.mrb[0].mxu0
  %v6501 = vpop.f32.mrb[0].mxu0
  %6502 = vdwg.mxu0
  %v6503 = vsel %vm2252, %v6064, -inf
  %6504 = vmax.xlane.f32.xlu0 %v6503
  %v6505 = vpop.xlane.xlu0 %6504
  %v6506 = vsel %vm2252, %v6126, -inf
  %6507 = vmax.xlane.f32.xlu0 %v6506
  %v6508 = vpop.xlane.xlu0 %6507
  %v6509 = vsel %vm2252, %v6188, -inf
  %6510 = vmax.xlane.f32.xlu0 %v6509
  %v6511 = vpop.xlane.xlu0 %6510
  %v6512 = vsel %vm2252, %v6250, -inf
  %6513 = vmax.xlane.f32.xlu0 %v6512
  %v6514 = vpop.xlane.xlu0 %6513
  %v6515 = vsel %vm2252, %v6312, -inf
  %6516 = vmax.xlane.f32.xlu0 %v6515
  %v6517 = vpop.xlane.xlu0 %6516
  %v6518 = vsel %vm2252, %v6374, -inf
  %6519 = vmax.xlane.f32.xlu0 %v6518
  %v6520 = vpop.xlane.xlu0 %6519
  %v6521 = vsel %vm2252, %v6436, -inf
  %6522 = vmax.xlane.f32.xlu0 %v6521
  %v6523 = vpop.xlane.xlu0 %6522
  %v6524 = vsel %vm2252, %v6498, -inf
  %6525 = vmax.xlane.f32.xlu0 %v6524
  %v6526 = vpop.xlane.xlu0 %6525
  %v6527 = vsub.f32 %v6064, %v6505
  %v6528 = vsub.f32 %v6126, %v6508
  %v6529 = vsub.f32 %v6188, %v6511
  %v6530 = vsub.f32 %v6250, %v6514
  %v6531 = vsub.f32 %v6312, %v6517
  %v6532 = vsub.f32 %v6374, %v6520
  %v6533 = vsub.f32 %v6436, %v6523
  %v6534 = vsub.f32 %v6498, %v6526
  %v6535 = vmul.f32 %v6527, 1.442695
  %v6536 = vpow.pop %v6535
  %v6537 = vmul.f32 %v6528, 1.442695
  %v6538 = vpow.pop %v6537
  %v6539 = vmul.f32 %v6529, 1.442695
  %v6540 = vpow.pop %v6539
  %v6541 = vmul.f32 %v6530, 1.442695
  %v6542 = vpow.pop %v6541
  %v6543 = vmul.f32 %v6531, 1.442695
  %v6544 = vpow.pop %v6543
  %v6545 = vmul.f32 %v6532, 1.442695
  %v6546 = vpow.pop %v6545
  %v6547 = vmul.f32 %v6533, 1.442695
  %v6548 = vpow.pop %v6547
  %v6549 = vmul.f32 %v6534, 1.442695
  %v6550 = vpow.pop %v6549
  %v6551 = vsel %vm2252, %v6536, 0.0
  %6552 = vadd.xlane.f32.xlu0 %v6551
  %v6553 = vpop.xlane.xlu0 %6552
  %v6554 = vsel %vm2252, %v6538, 0.0
  %6555 = vadd.xlane.f32.xlu0 %v6554
  %v6556 = vpop.xlane.xlu0 %6555
  %v6557 = vsel %vm2252, %v6540, 0.0
  %6558 = vadd.xlane.f32.xlu0 %v6557
  %v6559 = vpop.xlane.xlu0 %6558
  %v6560 = vsel %vm2252, %v6542, 0.0
  %6561 = vadd.xlane.f32.xlu0 %v6560
  %v6562 = vpop.xlane.xlu0 %6561
  %v6563 = vsel %vm2252, %v6544, 0.0
  %6564 = vadd.xlane.f32.xlu0 %v6563
  %v6565 = vpop.xlane.xlu0 %6564
  %v6566 = vsel %vm2252, %v6546, 0.0
  %6567 = vadd.xlane.f32.xlu0 %v6566
  %v6568 = vpop.xlane.xlu0 %6567
  %v6569 = vsel %vm2252, %v6548, 0.0
  %6570 = vadd.xlane.f32.xlu0 %v6569
  %v6571 = vpop.xlane.xlu0 %6570
  %v6572 = vsel %vm2252, %v6550, 0.0
  %6573 = vadd.xlane.f32.xlu0 %v6572
  %v6574 = vpop.xlane.xlu0 %6573
  %v6575 = vrcp.pop %v6553
  %v6576 = vmul.f32 %v6536, %v6575
  %v6577 = vrcp.pop %v6556
  %v6578 = vmul.f32 %v6538, %v6577
  %v6579 = vrcp.pop %v6559
  %v6580 = vmul.f32 %v6540, %v6579
  %v6581 = vrcp.pop %v6562
  %v6582 = vmul.f32 %v6542, %v6581
  %v6583 = vrcp.pop %v6565
  %v6584 = vmul.f32 %v6544, %v6583
  %v6585 = vrcp.pop %v6568
  %v6586 = vmul.f32 %v6546, %v6585
  %v6587 = vrcp.pop %v6571
  %v6588 = vmul.f32 %v6548, %v6587
  %v6589 = vrcp.pop %v6574
  %v6590 = vmul.f32 %v6550, %v6589
  %v6591 = vpack.c.bf16 %v6576, %v6576
  %v6592 = vpack.c.bf16 %v6578, %v6578
  %v6593 = vpack.c.bf16 %v6580, %v6580
  %v6594 = vpack.c.bf16 %v6582, %v6582
  %v6595 = vpack.c.bf16 %v6584, %v6584
  %v6596 = vpack.c.bf16 %v6586, %v6586
  %v6597 = vpack.c.bf16 %v6588, %v6588
  %v6598 = vpack.c.bf16 %v6590, %v6590
  %6599 = vrot.lane.b32.xlu0 %v6020, 64
  %v6600 = vpop.permute.xlu0 %6599
  %v6602 = vsel %vm2351, %v6591, 0
  %v6605 = vsel %vm2355, %v6600, 0
  %6607 = vmatprep.subr.bf16.mxu0 0
  %6608 = vmatpush1.bf16.msra.mxu0 %v6605
  %6609 = vmatprep.subr.bf16.mxu0 0
  %6610 = vmatpush1.bf16.msra.mxu0 0
  %6611 = vmatprep.subr.bf16.mxu0 0
  %6612 = vmatpush1.bf16.msra.mxu0 0
  %6613 = vmatprep.subr.bf16.mxu0 0
  %6614 = vmatpush1.bf16.msra.mxu0 0
  %6615 = vmatprep.subr.bf16.mxu0 0
  %6616 = vmatpush1.bf16.msra.mxu0 0
  %6617 = vmatprep.subr.bf16.mxu0 0
  %6618 = vmatpush1.bf16.msra.mxu0 0
  %6619 = vmatprep.subr.bf16.mxu0 0
  %6620 = vmatpush1.bf16.msra.mxu0 0
  %6621 = vmatprep.subr.bf16.mxu0 0
  %6622 = vmatpush1.bf16.msra.mxu0 0
  %6623 = vmatprep.subr.bf16.mxu0 0
  %6624 = vmatpush1.bf16.msra.mxu0 0
  %6625 = vmatprep.subr.bf16.mxu0 0
  %6626 = vmatpush1.bf16.msra.mxu0 0
  %6627 = vmatprep.subr.bf16.mxu0 0
  %6628 = vmatpush1.bf16.msra.mxu0 0
  %6629 = vmatprep.subr.bf16.mxu0 0
  %6630 = vmatpush1.bf16.msra.mxu0 0
  %6631 = vmatprep.subr.bf16.mxu0 0
  %6632 = vmatpush1.bf16.msra.mxu0 0
  %6633 = vmatprep.subr.bf16.mxu0 0
  %6634 = vmatpush1.bf16.msra.mxu0 0
  %6635 = vmatprep.subr.bf16.mxu0 0
  %6636 = vmatpush1.bf16.msra.mxu0 0
  %6637 = vmatprep.subr.bf16.mxu0 0
  %6638 = vmatpush1.bf16.msra.mxu0 0
  %6639 = vmatprep.mubr.bf16.mxu0 0
  %6640 = vmatmul.mubr.bf16.gmra.mrb[0].mxu0 %v6602
  %v6641 = vpop.f32.mrb[0].mxu0
  %v6642 = vadd.f32 0.0, %v6641
  %v6643 = vpop.f32.mrb[0].mxu0
  %v6644 = vpop.f32.mrb[0].mxu0
  %v6645 = vpop.f32.mrb[0].mxu0
  %6646 = vdwg.mxu0
  %6647 = vrot.lane.b32.xlu0 %v6082, 64
  %v6648 = vpop.permute.xlu0 %6647
  %v6650 = vsel %vm2351, %v6592, 0
  %v6653 = vsel %vm2355, %v6648, 0
  %6655 = vmatprep.subr.bf16.mxu0 0
  %6656 = vmatpush1.bf16.msra.mxu0 %v6653
  %6657 = vmatprep.subr.bf16.mxu0 0
  %6658 = vmatpush1.bf16.msra.mxu0 0
  %6659 = vmatprep.subr.bf16.mxu0 0
  %6660 = vmatpush1.bf16.msra.mxu0 0
  %6661 = vmatprep.subr.bf16.mxu0 0
  %6662 = vmatpush1.bf16.msra.mxu0 0
  %6663 = vmatprep.subr.bf16.mxu0 0
  %6664 = vmatpush1.bf16.msra.mxu0 0
  %6665 = vmatprep.subr.bf16.mxu0 0
  %6666 = vmatpush1.bf16.msra.mxu0 0
  %6667 = vmatprep.subr.bf16.mxu0 0
  %6668 = vmatpush1.bf16.msra.mxu0 0
  %6669 = vmatprep.subr.bf16.mxu0 0
  %6670 = vmatpush1.bf16.msra.mxu0 0
  %6671 = vmatprep.subr.bf16.mxu0 0
  %6672 = vmatpush1.bf16.msra.mxu0 0
  %6673 = vmatprep.subr.bf16.mxu0 0
  %6674 = vmatpush1.bf16.msra.mxu0 0
  %6675 = vmatprep.subr.bf16.mxu0 0
  %6676 = vmatpush1.bf16.msra.mxu0 0
  %6677 = vmatprep.subr.bf16.mxu0 0
  %6678 = vmatpush1.bf16.msra.mxu0 0
  %6679 = vmatprep.subr.bf16.mxu0 0
  %6680 = vmatpush1.bf16.msra.mxu0 0
  %6681 = vmatprep.subr.bf16.mxu0 0
  %6682 = vmatpush1.bf16.msra.mxu0 0
  %6683 = vmatprep.subr.bf16.mxu0 0
  %6684 = vmatpush1.bf16.msra.mxu0 0
  %6685 = vmatprep.subr.bf16.mxu0 0
  %6686 = vmatpush1.bf16.msra.mxu0 0
  %6687 = vmatprep.mubr.bf16.mxu0 0
  %6688 = vmatmul.mubr.bf16.gmra.mrb[0].mxu0 %v6650
  %v6689 = vpop.f32.mrb[0].mxu0
  %v6690 = vadd.f32 0.0, %v6689
  %v6691 = vpop.f32.mrb[0].mxu0
  %v6692 = vpop.f32.mrb[0].mxu0
  %v6693 = vpop.f32.mrb[0].mxu0
  %6694 = vdwg.mxu0
  %6695 = vrot.lane.b32.xlu0 %v6144, 64
  %v6696 = vpop.permute.xlu0 %6695
  %v6698 = vsel %vm2351, %v6593, 0
  %v6701 = vsel %vm2355, %v6696, 0
  %6703 = vmatprep.subr.bf16.mxu0 0
  %6704 = vmatpush1.bf16.msra.mxu0 %v6701
  %6705 = vmatprep.subr.bf16.mxu0 0
  %6706 = vmatpush1.bf16.msra.mxu0 0
  %6707 = vmatprep.subr.bf16.mxu0 0
  %6708 = vmatpush1.bf16.msra.mxu0 0
  %6709 = vmatprep.subr.bf16.mxu0 0
  %6710 = vmatpush1.bf16.msra.mxu0 0
  %6711 = vmatprep.subr.bf16.mxu0 0
  %6712 = vmatpush1.bf16.msra.mxu0 0
  %6713 = vmatprep.subr.bf16.mxu0 0
  %6714 = vmatpush1.bf16.msra.mxu0 0
  %6715 = vmatprep.subr.bf16.mxu0 0
  %6716 = vmatpush1.bf16.msra.mxu0 0
  %6717 = vmatprep.subr.bf16.mxu0 0
  %6718 = vmatpush1.bf16.msra.mxu0 0
  %6719 = vmatprep.subr.bf16.mxu0 0
  %6720 = vmatpush1.bf16.msra.mxu0 0
  %6721 = vmatprep.subr.bf16.mxu0 0
  %6722 = vmatpush1.bf16.msra.mxu0 0
  %6723 = vmatprep.subr.bf16.mxu0 0
  %6724 = vmatpush1.bf16.msra.mxu0 0
  %6725 = vmatprep.subr.bf16.mxu0 0
  %6726 = vmatpush1.bf16.msra.mxu0 0
  %6727 = vmatprep.subr.bf16.mxu0 0
  %6728 = vmatpush1.bf16.msra.mxu0 0
  %6729 = vmatprep.subr.bf16.mxu0 0
  %6730 = vmatpush1.bf16.msra.mxu0 0
  %6731 = vmatprep.subr.bf16.mxu0 0
  %6732 = vmatpush1.bf16.msra.mxu0 0
  %6733 = vmatprep.subr.bf16.mxu0 0
  %6734 = vmatpush1.bf16.msra.mxu0 0
  %6735 = vmatprep.mubr.bf16.mxu0 0
  %6736 = vmatmul.mubr.bf16.gmra.mrb[0].mxu0 %v6698
  %v6737 = vpop.f32.mrb[0].mxu0
  %v6738 = vadd.f32 0.0, %v6737
  %v6739 = vpop.f32.mrb[0].mxu0
  %v6740 = vpop.f32.mrb[0].mxu0
  %v6741 = vpop.f32.mrb[0].mxu0
  %6742 = vdwg.mxu0
  %6743 = vrot.lane.b32.xlu0 %v6206, 64
  %v6744 = vpop.permute.xlu0 %6743
  %v6746 = vsel %vm2351, %v6594, 0
  %v6749 = vsel %vm2355, %v6744, 0
  %6751 = vmatprep.subr.bf16.mxu0 0
  %6752 = vmatpush1.bf16.msra.mxu0 %v6749
  %6753 = vmatprep.subr.bf16.mxu0 0
  %6754 = vmatpush1.bf16.msra.mxu0 0
  %6755 = vmatprep.subr.bf16.mxu0 0
  %6756 = vmatpush1.bf16.msra.mxu0 0
  %6757 = vmatprep.subr.bf16.mxu0 0
  %6758 = vmatpush1.bf16.msra.mxu0 0
  %6759 = vmatprep.subr.bf16.mxu0 0
  %6760 = vmatpush1.bf16.msra.mxu0 0
  %6761 = vmatprep.subr.bf16.mxu0 0
  %6762 = vmatpush1.bf16.msra.mxu0 0
  %6763 = vmatprep.subr.bf16.mxu0 0
  %6764 = vmatpush1.bf16.msra.mxu0 0
  %6765 = vmatprep.subr.bf16.mxu0 0
  %6766 = vmatpush1.bf16.msra.mxu0 0
  %6767 = vmatprep.subr.bf16.mxu0 0
  %6768 = vmatpush1.bf16.msra.mxu0 0
  %6769 = vmatprep.subr.bf16.mxu0 0
  %6770 = vmatpush1.bf16.msra.mxu0 0
  %6771 = vmatprep.subr.bf16.mxu0 0
  %6772 = vmatpush1.bf16.msra.mxu0 0
  %6773 = vmatprep.subr.bf16.mxu0 0
  %6774 = vmatpush1.bf16.msra.mxu0 0
  %6775 = vmatprep.subr.bf16.mxu0 0
  %6776 = vmatpush1.bf16.msra.mxu0 0
  %6777 = vmatprep.subr.bf16.mxu0 0
  %6778 = vmatpush1.bf16.msra.mxu0 0
  %6779 = vmatprep.subr.bf16.mxu0 0
  %6780 = vmatpush1.bf16.msra.mxu0 0
  %6781 = vmatprep.subr.bf16.mxu0 0
  %6782 = vmatpush1.bf16.msra.mxu0 0
  %6783 = vmatprep.mubr.bf16.mxu0 0
  %6784 = vmatmul.mubr.bf16.gmra.mrb[0].mxu0 %v6746
  %v6785 = vpop.f32.mrb[0].mxu0
  %v6786 = vadd.f32 0.0, %v6785
  %v6787 = vpop.f32.mrb[0].mxu0
  %v6788 = vpop.f32.mrb[0].mxu0
  %v6789 = vpop.f32.mrb[0].mxu0
  %6790 = vdwg.mxu0
  %6791 = vrot.lane.b32.xlu0 %v6268, 64
  %v6792 = vpop.permute.xlu0 %6791
  %v6794 = vsel %vm2351, %v6595, 0
  %v6797 = vsel %vm2355, %v6792, 0
  %6799 = vmatprep.subr.bf16.mxu0 0
  %6800 = vmatpush1.bf16.msra.mxu0 %v6797
  %6801 = vmatprep.subr.bf16.mxu0 0
  %6802 = vmatpush1.bf16.msra.mxu0 0
  %6803 = vmatprep.subr.bf16.mxu0 0
  %6804 = vmatpush1.bf16.msra.mxu0 0
  %6805 = vmatprep.subr.bf16.mxu0 0
  %6806 = vmatpush1.bf16.msra.mxu0 0
  %6807 = vmatprep.subr.bf16.mxu0 0
  %6808 = vmatpush1.bf16.msra.mxu0 0
  %6809 = vmatprep.subr.bf16.mxu0 0
  %6810 = vmatpush1.bf16.msra.mxu0 0
  %6811 = vmatprep.subr.bf16.mxu0 0
  %6812 = vmatpush1.bf16.msra.mxu0 0
  %6813 = vmatprep.subr.bf16.mxu0 0
  %6814 = vmatpush1.bf16.msra.mxu0 0
  %6815 = vmatprep.subr.bf16.mxu0 0
  %6816 = vmatpush1.bf16.msra.mxu0 0
  %6817 = vmatprep.subr.bf16.mxu0 0
  %6818 = vmatpush1.bf16.msra.mxu0 0
  %6819 = vmatprep.subr.bf16.mxu0 0
  %6820 = vmatpush1.bf16.msra.mxu0 0
  %6821 = vmatprep.subr.bf16.mxu0 0
  %6822 = vmatpush1.bf16.msra.mxu0 0
  %6823 = vmatprep.subr.bf16.mxu0 0
  %6824 = vmatpush1.bf16.msra.mxu0 0
  %6825 = vmatprep.subr.bf16.mxu0 0
  %6826 = vmatpush1.bf16.msra.mxu0 0
  %6827 = vmatprep.subr.bf16.mxu0 0
  %6828 = vmatpush1.bf16.msra.mxu0 0
  %6829 = vmatprep.subr.bf16.mxu0 0
  %6830 = vmatpush1.bf16.msra.mxu0 0
  %6831 = vmatprep.mubr.bf16.mxu0 0
  %6832 = vmatmul.mubr.bf16.gmra.mrb[0].mxu0 %v6794
  %v6833 = vpop.f32.mrb[0].mxu0
  %v6834 = vadd.f32 0.0, %v6833
  %v6835 = vpop.f32.mrb[0].mxu0
  %v6836 = vpop.f32.mrb[0].mxu0
  %v6837 = vpop.f32.mrb[0].mxu0
  %6838 = vdwg.mxu0
  %6839 = vrot.lane.b32.xlu0 %v6330, 64
  %v6840 = vpop.permute.xlu0 %6839
  %v6842 = vsel %vm2351, %v6596, 0
  %v6845 = vsel %vm2355, %v6840, 0
  %6847 = vmatprep.subr.bf16.mxu0 0
  %6848 = vmatpush1.bf16.msra.mxu0 %v6845
  %6849 = vmatprep.subr.bf16.mxu0 0
  %6850 = vmatpush1.bf16.msra.mxu0 0
  %6851 = vmatprep.subr.bf16.mxu0 0
  %6852 = vmatpush1.bf16.msra.mxu0 0
  %6853 = vmatprep.subr.bf16.mxu0 0
  %6854 = vmatpush1.bf16.msra.mxu0 0
  %6855 = vmatprep.subr.bf16.mxu0 0
  %6856 = vmatpush1.bf16.msra.mxu0 0
  %6857 = vmatprep.subr.bf16.mxu0 0
  %6858 = vmatpush1.bf16.msra.mxu0 0
  %6859 = vmatprep.subr.bf16.mxu0 0
  %6860 = vmatpush1.bf16.msra.mxu0 0
  %6861 = vmatprep.subr.bf16.mxu0 0
  %6862 = vmatpush1.bf16.msra.mxu0 0
  %6863 = vmatprep.subr.bf16.mxu0 0
  %6864 = vmatpush1.bf16.msra.mxu0 0
  %6865 = vmatprep.subr.bf16.mxu0 0
  %6866 = vmatpush1.bf16.msra.mxu0 0
  %6867 = vmatprep.subr.bf16.mxu0 0
  %6868 = vmatpush1.bf16.msra.mxu0 0
  %6869 = vmatprep.subr.bf16.mxu0 0
  %6870 = vmatpush1.bf16.msra.mxu0 0
  %6871 = vmatprep.subr.bf16.mxu0 0
  %6872 = vmatpush1.bf16.msra.mxu0 0
  %6873 = vmatprep.subr.bf16.mxu0 0
  %6874 = vmatpush1.bf16.msra.mxu0 0
  %6875 = vmatprep.subr.bf16.mxu0 0
  %6876 = vmatpush1.bf16.msra.mxu0 0
  %6877 = vmatprep.subr.bf16.mxu0 0
  %6878 = vmatpush1.bf16.msra.mxu0 0
  %6879 = vmatprep.mubr.bf16.mxu0 0
  %6880 = vmatmul.mubr.bf16.gmra.mrb[0].mxu0 %v6842
  %v6881 = vpop.f32.mrb[0].mxu0
  %v6882 = vadd.f32 0.0, %v6881
  %v6883 = vpop.f32.mrb[0].mxu0
  %v6884 = vpop.f32.mrb[0].mxu0
  %v6885 = vpop.f32.mrb[0].mxu0
  %6886 = vdwg.mxu0
  %6887 = vrot.lane.b32.xlu0 %v6392, 64
  %v6888 = vpop.permute.xlu0 %6887
  %v6890 = vsel %vm2351, %v6597, 0
  %v6893 = vsel %vm2355, %v6888, 0
  %6895 = vmatprep.subr.bf16.mxu0 0
  %6896 = vmatpush1.bf16.msra.mxu0 %v6893
  %6897 = vmatprep.subr.bf16.mxu0 0
  %6898 = vmatpush1.bf16.msra.mxu0 0
  %6899 = vmatprep.subr.bf16.mxu0 0
  %6900 = vmatpush1.bf16.msra.mxu0 0
  %6901 = vmatprep.subr.bf16.mxu0 0
  %6902 = vmatpush1.bf16.msra.mxu0 0
  %6903 = vmatprep.subr.bf16.mxu0 0
  %6904 = vmatpush1.bf16.msra.mxu0 0
  %6905 = vmatprep.subr.bf16.mxu0 0
  %6906 = vmatpush1.bf16.msra.mxu0 0
  %6907 = vmatprep.subr.bf16.mxu0 0
  %6908 = vmatpush1.bf16.msra.mxu0 0
  %6909 = vmatprep.subr.bf16.mxu0 0
  %6910 = vmatpush1.bf16.msra.mxu0 0
  %6911 = vmatprep.subr.bf16.mxu0 0
  %6912 = vmatpush1.bf16.msra.mxu0 0
  %6913 = vmatprep.subr.bf16.mxu0 0
  %6914 = vmatpush1.bf16.msra.mxu0 0
  %6915 = vmatprep.subr.bf16.mxu0 0
  %6916 = vmatpush1.bf16.msra.mxu0 0
  %6917 = vmatprep.subr.bf16.mxu0 0
  %6918 = vmatpush1.bf16.msra.mxu0 0
  %6919 = vmatprep.subr.bf16.mxu0 0
  %6920 = vmatpush1.bf16.msra.mxu0 0
  %6921 = vmatprep.subr.bf16.mxu0 0
  %6922 = vmatpush1.bf16.msra.mxu0 0
  %6923 = vmatprep.subr.bf16.mxu0 0
  %6924 = vmatpush1.bf16.msra.mxu0 0
  %6925 = vmatprep.subr.bf16.mxu0 0
  %6926 = vmatpush1.bf16.msra.mxu0 0
  %6927 = vmatprep.mubr.bf16.mxu0 0
  %6928 = vmatmul.mubr.bf16.gmra.mrb[0].mxu0 %v6890
  %v6929 = vpop.f32.mrb[0].mxu0
  %v6930 = vadd.f32 0.0, %v6929
  %v6931 = vpop.f32.mrb[0].mxu0
  %v6932 = vpop.f32.mrb[0].mxu0
  %v6933 = vpop.f32.mrb[0].mxu0
  %6934 = vdwg.mxu0
  %6935 = vrot.lane.b32.xlu0 %v6454, 64
  %v6936 = vpop.permute.xlu0 %6935
  %v6938 = vsel %vm2351, %v6598, 0
  %v6941 = vsel %vm2355, %v6936, 0
  %6943 = vmatprep.subr.bf16.mxu0 0
  %6944 = vmatpush1.bf16.msra.mxu0 %v6941
  %6945 = vmatprep.subr.bf16.mxu0 0
  %6946 = vmatpush1.bf16.msra.mxu0 0
  %6947 = vmatprep.subr.bf16.mxu0 0
  %6948 = vmatpush1.bf16.msra.mxu0 0
  %6949 = vmatprep.subr.bf16.mxu0 0
  %6950 = vmatpush1.bf16.msra.mxu0 0
  %6951 = vmatprep.subr.bf16.mxu0 0
  %6952 = vmatpush1.bf16.msra.mxu0 0
  %6953 = vmatprep.subr.bf16.mxu0 0
  %6954 = vmatpush1.bf16.msra.mxu0 0
  %6955 = vmatprep.subr.bf16.mxu0 0
  %6956 = vmatpush1.bf16.msra.mxu0 0
  %6957 = vmatprep.subr.bf16.mxu0 0
  %6958 = vmatpush1.bf16.msra.mxu0 0
  %6959 = vmatprep.subr.bf16.mxu0 0
  %6960 = vmatpush1.bf16.msra.mxu0 0
  %6961 = vmatprep.subr.bf16.mxu0 0
  %6962 = vmatpush1.bf16.msra.mxu0 0
  %6963 = vmatprep.subr.bf16.mxu0 0
  %6964 = vmatpush1.bf16.msra.mxu0 0
  %6965 = vmatprep.subr.bf16.mxu0 0
  %6966 = vmatpush1.bf16.msra.mxu0 0
  %6967 = vmatprep.subr.bf16.mxu0 0
  %6968 = vmatpush1.bf16.msra.mxu0 0
  %6969 = vmatprep.subr.bf16.mxu0 0
  %6970 = vmatpush1.bf16.msra.mxu0 0
  %6971 = vmatprep.subr.bf16.mxu0 0
  %6972 = vmatpush1.bf16.msra.mxu0 0
  %6973 = vmatprep.subr.bf16.mxu0 0
  %6974 = vmatpush1.bf16.msra.mxu0 0
  %6975 = vmatprep.mubr.bf16.mxu0 0
  %6976 = vmatmul.mubr.bf16.gmra.mrb[0].mxu0 %v6938
  %v6977 = vpop.f32.mrb[0].mxu0
  %v6978 = vadd.f32 0.0, %v6977
  %v6979 = vpop.f32.mrb[0].mxu0
  %v6980 = vpop.f32.mrb[0].mxu0
  %v6981 = vpop.f32.mrb[0].mxu0
  %6982 = vdwg.mxu0
  %6983 = vrot.lane.b32.xlu0 %v6020, 120
  %v6984 = vpop.permute.xlu0 %6983
  %6985 = vrot.lane.b32.xlu0 %v6020, 88
  %v6986 = vpop.permute.xlu0 %6985
  %v6988 = vsel %vm1771, %v6984, 0
  %v6991 = vsel %vm1771, %v6986, 0
  %6993 = vmatprep.subr.bf16.mxu0 0
  %6994 = vmatpush1.bf16.xpose.msra.mxu0 %v6991
  %6995 = vmatprep.subr.bf16.mxu0 0
  %6996 = vmatpush1.bf16.xpose.msra.mxu0 0
  %6997 = vmatprep.subr.bf16.mxu0 0
  %6998 = vmatpush1.bf16.xpose.msra.mxu0 0
  %6999 = vmatprep.subr.bf16.mxu0 0
  %7000 = vmatpush1.bf16.xpose.msra.mxu0 0
  %7001 = vmatprep.subr.bf16.mxu0 0
  %7002 = vmatpush1.bf16.xpose.msra.mxu0 0
  %7003 = vmatprep.subr.bf16.mxu0 0
  %7004 = vmatpush1.bf16.xpose.msra.mxu0 0
  %7005 = vmatprep.subr.bf16.mxu0 0
  %7006 = vmatpush1.bf16.xpose.msra.mxu0 0
  %7007 = vmatprep.subr.bf16.mxu0 0
  %7008 = vmatpush1.bf16.xpose.msra.mxu0 0
  %7009 = vmatprep.subr.bf16.mxu0 0
  %7010 = vmatpush1.bf16.xpose.msra.mxu0 0
  %7011 = vmatprep.subr.bf16.mxu0 0
  %7012 = vmatpush1.bf16.xpose.msra.mxu0 0
  %7013 = vmatprep.subr.bf16.mxu0 0
  %7014 = vmatpush1.bf16.xpose.msra.mxu0 0
  %7015 = vmatprep.subr.bf16.mxu0 0
  %7016 = vmatpush1.bf16.xpose.msra.mxu0 0
  %7017 = vmatprep.subr.bf16.mxu0 0
  %7018 = vmatpush1.bf16.xpose.msra.mxu0 0
  %7019 = vmatprep.subr.bf16.mxu0 0
  %7020 = vmatpush1.bf16.xpose.msra.mxu0 0
  %7021 = vmatprep.subr.bf16.mxu0 0
  %7022 = vmatpush1.bf16.xpose.msra.mxu0 0
  %7023 = vmatprep.subr.bf16.mxu0 0
  %7024 = vmatpush1.bf16.xpose.msra.mxu0 0
  %7025 = vmatprep.mubr.bf16.mxu0 0
  %7026 = vmatmul.mubr.bf16.gmra.mrb[0].mxu0 %v6988
  %v7027 = vpop.f32.mrb[0].mxu0
  %v7028 = vadd.f32 0.0, %v7027
  %v7029 = vpop.f32.mrb[0].mxu0
  %v7030 = vpop.f32.mrb[0].mxu0
  %v7031 = vpop.f32.mrb[0].mxu0
  %7032 = vdwg.mxu0
  %7033 = vrot.lane.b32.xlu0 %v6082, 120
  %v7034 = vpop.permute.xlu0 %7033
  %7035 = vrot.lane.b32.xlu0 %v6082, 88
  %v7036 = vpop.permute.xlu0 %7035
  %v7038 = vsel %vm1771, %v7034, 0
  %v7041 = vsel %vm1771, %v7036, 0
  %7043 = vmatprep.subr.bf16.mxu0 0
  %7044 = vmatpush1.bf16.xpose.msra.mxu0 %v7041
  %7045 = vmatprep.subr.bf16.mxu0 0
  %7046 = vmatpush1.bf16.xpose.msra.mxu0 0
  %7047 = vmatprep.subr.bf16.mxu0 0
  %7048 = vmatpush1.bf16.xpose.msra.mxu0 0
  %7049 = vmatprep.subr.bf16.mxu0 0
  %7050 = vmatpush1.bf16.xpose.msra.mxu0 0
  %7051 = vmatprep.subr.bf16.mxu0 0
  %7052 = vmatpush1.bf16.xpose.msra.mxu0 0
  %7053 = vmatprep.subr.bf16.mxu0 0
  %7054 = vmatpush1.bf16.xpose.msra.mxu0 0
  %7055 = vmatprep.subr.bf16.mxu0 0
  %7056 = vmatpush1.bf16.xpose.msra.mxu0 0
  %7057 = vmatprep.subr.bf16.mxu0 0
  %7058 = vmatpush1.bf16.xpose.msra.mxu0 0
  %7059 = vmatprep.subr.bf16.mxu0 0
  %7060 = vmatpush1.bf16.xpose.msra.mxu0 0
  %7061 = vmatprep.subr.bf16.mxu0 0
  %7062 = vmatpush1.bf16.xpose.msra.mxu0 0
  %7063 = vmatprep.subr.bf16.mxu0 0
  %7064 = vmatpush1.bf16.xpose.msra.mxu0 0
  %7065 = vmatprep.subr.bf16.mxu0 0
  %7066 = vmatpush1.bf16.xpose.msra.mxu0 0
  %7067 = vmatprep.subr.bf16.mxu0 0
  %7068 = vmatpush1.bf16.xpose.msra.mxu0 0
  %7069 = vmatprep.subr.bf16.mxu0 0
  %7070 = vmatpush1.bf16.xpose.msra.mxu0 0
  %7071 = vmatprep.subr.bf16.mxu0 0
  %7072 = vmatpush1.bf16.xpose.msra.mxu0 0
  %7073 = vmatprep.subr.bf16.mxu0 0
  %7074 = vmatpush1.bf16.xpose.msra.mxu0 0
  %7075 = vmatprep.mubr.bf16.mxu0 0
  %7076 = vmatmul.mubr.bf16.gmra.mrb[0].mxu0 %v7038
  %v7077 = vpop.f32.mrb[0].mxu0
  %v7078 = vadd.f32 0.0, %v7077
  %v7079 = vpop.f32.mrb[0].mxu0
  %v7080 = vpop.f32.mrb[0].mxu0
  %v7081 = vpop.f32.mrb[0].mxu0
  %7082 = vdwg.mxu0
  %7083 = vrot.lane.b32.xlu0 %v6144, 120
  %v7084 = vpop.permute.xlu0 %7083
  %7085 = vrot.lane.b32.xlu0 %v6144, 88
  %v7086 = vpop.permute.xlu0 %7085
  %v7088 = vsel %vm1771, %v7084, 0
  %v7091 = vsel %vm1771, %v7086, 0
  %7093 = vmatprep.subr.bf16.mxu0 0
  %7094 = vmatpush1.bf16.xpose.msra.mxu0 %v7091
  %7095 = vmatprep.subr.bf16.mxu0 0
  %7096 = vmatpush1.bf16.xpose.msra.mxu0 0
  %7097 = vmatprep.subr.bf16.mxu0 0
  %7098 = vmatpush1.bf16.xpose.msra.mxu0 0
  %7099 = vmatprep.subr.bf16.mxu0 0
  %7100 = vmatpush1.bf16.xpose.msra.mxu0 0
  %7101 = vmatprep.subr.bf16.mxu0 0
  %7102 = vmatpush1.bf16.xpose.msra.mxu0 0
  %7103 = vmatprep.subr.bf16.mxu0 0
  %7104 = vmatpush1.bf16.xpose.msra.mxu0 0
  %7105 = vmatprep.subr.bf16.mxu0 0
  %7106 = vmatpush1.bf16.xpose.msra.mxu0 0
  %7107 = vmatprep.subr.bf16.mxu0 0
  %7108 = vmatpush1.bf16.xpose.msra.mxu0 0
  %7109 = vmatprep.subr.bf16.mxu0 0
  %7110 = vmatpush1.bf16.xpose.msra.mxu0 0
  %7111 = vmatprep.subr.bf16.mxu0 0
  %7112 = vmatpush1.bf16.xpose.msra.mxu0 0
  %7113 = vmatprep.subr.bf16.mxu0 0
  %7114 = vmatpush1.bf16.xpose.msra.mxu0 0
  %7115 = vmatprep.subr.bf16.mxu0 0
  %7116 = vmatpush1.bf16.xpose.msra.mxu0 0
  %7117 = vmatprep.subr.bf16.mxu0 0
  %7118 = vmatpush1.bf16.xpose.msra.mxu0 0
  %7119 = vmatprep.subr.bf16.mxu0 0
  %7120 = vmatpush1.bf16.xpose.msra.mxu0 0
  %7121 = vmatprep.subr.bf16.mxu0 0
  %7122 = vmatpush1.bf16.xpose.msra.mxu0 0
  %7123 = vmatprep.subr.bf16.mxu0 0
  %7124 = vmatpush1.bf16.xpose.msra.mxu0 0
  %7125 = vmatprep.mubr.bf16.mxu0 0
  %7126 = vmatmul.mubr.bf16.gmra.mrb[0].mxu0 %v7088
  %v7127 = vpop.f32.mrb[0].mxu0
  %v7128 = vadd.f32 0.0, %v7127
  %v7129 = vpop.f32.mrb[0].mxu0
  %v7130 = vpop.f32.mrb[0].mxu0
  %v7131 = vpop.f32.mrb[0].mxu0
  %7132 = vdwg.mxu0
  %7133 = vrot.lane.b32.xlu0 %v6206, 120
  %v7134 = vpop.permute.xlu0 %7133
  %7135 = vrot.lane.b32.xlu0 %v6206, 88
  %v7136 = vpop.permute.xlu0 %7135
  %v7138 = vsel %vm1771, %v7134, 0
  %v7141 = vsel %vm1771, %v7136, 0
  %7143 = vmatprep.subr.bf16.mxu0 0
  %7144 = vmatpush1.bf16.xpose.msra.mxu0 %v7141
  %7145 = vmatprep.subr.bf16.mxu0 0
  %7146 = vmatpush1.bf16.xpose.msra.mxu0 0
  %7147 = vmatprep.subr.bf16.mxu0 0
  %7148 = vmatpush1.bf16.xpose.msra.mxu0 0
  %7149 = vmatprep.subr.bf16.mxu0 0
  %7150 = vmatpush1.bf16.xpose.msra.mxu0 0
  %7151 = vmatprep.subr.bf16.mxu0 0
  %7152 = vmatpush1.bf16.xpose.msra.mxu0 0
  %7153 = vmatprep.subr.bf16.mxu0 0
  %7154 = vmatpush1.bf16.xpose.msra.mxu0 0
  %7155 = vmatprep.subr.bf16.mxu0 0
  %7156 = vmatpush1.bf16.xpose.msra.mxu0 0
  %7157 = vmatprep.subr.bf16.mxu0 0
  %7158 = vmatpush1.bf16.xpose.msra.mxu0 0
  %7159 = vmatprep.subr.bf16.mxu0 0
  %7160 = vmatpush1.bf16.xpose.msra.mxu0 0
  %7161 = vmatprep.subr.bf16.mxu0 0
  %7162 = vmatpush1.bf16.xpose.msra.mxu0 0
  %7163 = vmatprep.subr.bf16.mxu0 0
  %7164 = vmatpush1.bf16.xpose.msra.mxu0 0
  %7165 = vmatprep.subr.bf16.mxu0 0
  %7166 = vmatpush1.bf16.xpose.msra.mxu0 0
  %7167 = vmatprep.subr.bf16.mxu0 0
  %7168 = vmatpush1.bf16.xpose.msra.mxu0 0
  %7169 = vmatprep.subr.bf16.mxu0 0
  %7170 = vmatpush1.bf16.xpose.msra.mxu0 0
  %7171 = vmatprep.subr.bf16.mxu0 0
  %7172 = vmatpush1.bf16.xpose.msra.mxu0 0
  %7173 = vmatprep.subr.bf16.mxu0 0
  %7174 = vmatpush1.bf16.xpose.msra.mxu0 0
  %7175 = vmatprep.mubr.bf16.mxu0 0
  %7176 = vmatmul.mubr.bf16.gmra.mrb[0].mxu0 %v7138
  %v7177 = vpop.f32.mrb[0].mxu0
  %v7178 = vadd.f32 0.0, %v7177
  %v7179 = vpop.f32.mrb[0].mxu0
  %v7180 = vpop.f32.mrb[0].mxu0
  %v7181 = vpop.f32.mrb[0].mxu0
  %7182 = vdwg.mxu0
  %7183 = vrot.lane.b32.xlu0 %v6268, 120
  %v7184 = vpop.permute.xlu0 %7183
  %7185 = vrot.lane.b32.xlu0 %v6268, 88
  %v7186 = vpop.permute.xlu0 %7185
  %v7188 = vsel %vm1771, %v7184, 0
  %v7191 = vsel %vm1771, %v7186, 0
  %7193 = vmatprep.subr.bf16.mxu0 0
  %7194 = vmatpush1.bf16.xpose.msra.mxu0 %v7191
  %7195 = vmatprep.subr.bf16.mxu0 0
  %7196 = vmatpush1.bf16.xpose.msra.mxu0 0
  %7197 = vmatprep.subr.bf16.mxu0 0
  %7198 = vmatpush1.bf16.xpose.msra.mxu0 0
  %7199 = vmatprep.subr.bf16.mxu0 0
  %7200 = vmatpush1.bf16.xpose.msra.mxu0 0
  %7201 = vmatprep.subr.bf16.mxu0 0
  %7202 = vmatpush1.bf16.xpose.msra.mxu0 0
  %7203 = vmatprep.subr.bf16.mxu0 0
  %7204 = vmatpush1.bf16.xpose.msra.mxu0 0
  %7205 = vmatprep.subr.bf16.mxu0 0
  %7206 = vmatpush1.bf16.xpose.msra.mxu0 0
  %7207 = vmatprep.subr.bf16.mxu0 0
  %7208 = vmatpush1.bf16.xpose.msra.mxu0 0
  %7209 = vmatprep.subr.bf16.mxu0 0
  %7210 = vmatpush1.bf16.xpose.msra.mxu0 0
  %7211 = vmatprep.subr.bf16.mxu0 0
  %7212 = vmatpush1.bf16.xpose.msra.mxu0 0
  %7213 = vmatprep.subr.bf16.mxu0 0
  %7214 = vmatpush1.bf16.xpose.msra.mxu0 0
  %7215 = vmatprep.subr.bf16.mxu0 0
  %7216 = vmatpush1.bf16.xpose.msra.mxu0 0
  %7217 = vmatprep.subr.bf16.mxu0 0
  %7218 = vmatpush1.bf16.xpose.msra.mxu0 0
  %7219 = vmatprep.subr.bf16.mxu0 0
  %7220 = vmatpush1.bf16.xpose.msra.mxu0 0
  %7221 = vmatprep.subr.bf16.mxu0 0
  %7222 = vmatpush1.bf16.xpose.msra.mxu0 0
  %7223 = vmatprep.subr.bf16.mxu0 0
  %7224 = vmatpush1.bf16.xpose.msra.mxu0 0
  %7225 = vmatprep.mubr.bf16.mxu0 0
  %7226 = vmatmul.mubr.bf16.gmra.mrb[0].mxu0 %v7188
  %v7227 = vpop.f32.mrb[0].mxu0
  %v7228 = vadd.f32 0.0, %v7227
  %v7229 = vpop.f32.mrb[0].mxu0
  %v7230 = vpop.f32.mrb[0].mxu0
  %v7231 = vpop.f32.mrb[0].mxu0
  %7232 = vdwg.mxu0
  %7233 = vrot.lane.b32.xlu0 %v6330, 120
  %v7234 = vpop.permute.xlu0 %7233
  %7235 = vrot.lane.b32.xlu0 %v6330, 88
  %v7236 = vpop.permute.xlu0 %7235
  %v7238 = vsel %vm1771, %v7234, 0
  %v7241 = vsel %vm1771, %v7236, 0
  %7243 = vmatprep.subr.bf16.mxu0 0
  %7244 = vmatpush1.bf16.xpose.msra.mxu0 %v7241
  %7245 = vmatprep.subr.bf16.mxu0 0
  %7246 = vmatpush1.bf16.xpose.msra.mxu0 0
  %7247 = vmatprep.subr.bf16.mxu0 0
  %7248 = vmatpush1.bf16.xpose.msra.mxu0 0
  %7249 = vmatprep.subr.bf16.mxu0 0
  %7250 = vmatpush1.bf16.xpose.msra.mxu0 0
  %7251 = vmatprep.subr.bf16.mxu0 0
  %7252 = vmatpush1.bf16.xpose.msra.mxu0 0
  %7253 = vmatprep.subr.bf16.mxu0 0
  %7254 = vmatpush1.bf16.xpose.msra.mxu0 0
  %7255 = vmatprep.subr.bf16.mxu0 0
  %7256 = vmatpush1.bf16.xpose.msra.mxu0 0
  %7257 = vmatprep.subr.bf16.mxu0 0
  %7258 = vmatpush1.bf16.xpose.msra.mxu0 0
  %7259 = vmatprep.subr.bf16.mxu0 0
  %7260 = vmatpush1.bf16.xpose.msra.mxu0 0
  %7261 = vmatprep.subr.bf16.mxu0 0
  %7262 = vmatpush1.bf16.xpose.msra.mxu0 0
  %7263 = vmatprep.subr.bf16.mxu0 0
  %7264 = vmatpush1.bf16.xpose.msra.mxu0 0
  %7265 = vmatprep.subr.bf16.mxu0 0
  %7266 = vmatpush1.bf16.xpose.msra.mxu0 0
  %7267 = vmatprep.subr.bf16.mxu0 0
  %7268 = vmatpush1.bf16.xpose.msra.mxu0 0
  %7269 = vmatprep.subr.bf16.mxu0 0
  %7270 = vmatpush1.bf16.xpose.msra.mxu0 0
  %7271 = vmatprep.subr.bf16.mxu0 0
  %7272 = vmatpush1.bf16.xpose.msra.mxu0 0
  %7273 = vmatprep.subr.bf16.mxu0 0
  %7274 = vmatpush1.bf16.xpose.msra.mxu0 0
  %7275 = vmatprep.mubr.bf16.mxu0 0
  %7276 = vmatmul.mubr.bf16.gmra.mrb[0].mxu0 %v7238
  %v7277 = vpop.f32.mrb[0].mxu0
  %v7278 = vadd.f32 0.0, %v7277
  %v7279 = vpop.f32.mrb[0].mxu0
  %v7280 = vpop.f32.mrb[0].mxu0
  %v7281 = vpop.f32.mrb[0].mxu0
  %7282 = vdwg.mxu0
  %7283 = vrot.lane.b32.xlu0 %v6392, 120
  %v7284 = vpop.permute.xlu0 %7283
  %7285 = vrot.lane.b32.xlu0 %v6392, 88
  %v7286 = vpop.permute.xlu0 %7285
  %v7288 = vsel %vm1771, %v7284, 0
  %v7291 = vsel %vm1771, %v7286, 0
  %7293 = vmatprep.subr.bf16.mxu0 0
  %7294 = vmatpush1.bf16.xpose.msra.mxu0 %v7291
  %7295 = vmatprep.subr.bf16.mxu0 0
  %7296 = vmatpush1.bf16.xpose.msra.mxu0 0
  %7297 = vmatprep.subr.bf16.mxu0 0
  %7298 = vmatpush1.bf16.xpose.msra.mxu0 0
  %7299 = vmatprep.subr.bf16.mxu0 0
  %7300 = vmatpush1.bf16.xpose.msra.mxu0 0
  %7301 = vmatprep.subr.bf16.mxu0 0
  %7302 = vmatpush1.bf16.xpose.msra.mxu0 0
  %7303 = vmatprep.subr.bf16.mxu0 0
  %7304 = vmatpush1.bf16.xpose.msra.mxu0 0
  %7305 = vmatprep.subr.bf16.mxu0 0
  %7306 = vmatpush1.bf16.xpose.msra.mxu0 0
  %7307 = vmatprep.subr.bf16.mxu0 0
  %7308 = vmatpush1.bf16.xpose.msra.mxu0 0
  %7309 = vmatprep.subr.bf16.mxu0 0
  %7310 = vmatpush1.bf16.xpose.msra.mxu0 0
  %7311 = vmatprep.subr.bf16.mxu0 0
  %7312 = vmatpush1.bf16.xpose.msra.mxu0 0
  %7313 = vmatprep.subr.bf16.mxu0 0
  %7314 = vmatpush1.bf16.xpose.msra.mxu0 0
  %7315 = vmatprep.subr.bf16.mxu0 0
  %7316 = vmatpush1.bf16.xpose.msra.mxu0 0
  %7317 = vmatprep.subr.bf16.mxu0 0
  %7318 = vmatpush1.bf16.xpose.msra.mxu0 0
  %7319 = vmatprep.subr.bf16.mxu0 0
  %7320 = vmatpush1.bf16.xpose.msra.mxu0 0
  %7321 = vmatprep.subr.bf16.mxu0 0
  %7322 = vmatpush1.bf16.xpose.msra.mxu0 0
  %7323 = vmatprep.subr.bf16.mxu0 0
  %7324 = vmatpush1.bf16.xpose.msra.mxu0 0
  %7325 = vmatprep.mubr.bf16.mxu0 0
  %7326 = vmatmul.mubr.bf16.gmra.mrb[0].mxu0 %v7288
  %v7327 = vpop.f32.mrb[0].mxu0
  %v7328 = vadd.f32 0.0, %v7327
  %v7329 = vpop.f32.mrb[0].mxu0
  %v7330 = vpop.f32.mrb[0].mxu0
  %v7331 = vpop.f32.mrb[0].mxu0
  %7332 = vdwg.mxu0
  %7333 = vrot.lane.b32.xlu0 %v6454, 120
  %v7334 = vpop.permute.xlu0 %7333
  %7335 = vrot.lane.b32.xlu0 %v6454, 88
  %v7336 = vpop.permute.xlu0 %7335
  %v7338 = vsel %vm1771, %v7334, 0
  %v7341 = vsel %vm1771, %v7336, 0
  %7343 = vmatprep.subr.bf16.mxu0 0
  %7344 = vmatpush1.bf16.xpose.msra.mxu0 %v7341
  %7345 = vmatprep.subr.bf16.mxu0 0
  %7346 = vmatpush1.bf16.xpose.msra.mxu0 0
  %7347 = vmatprep.subr.bf16.mxu0 0
  %7348 = vmatpush1.bf16.xpose.msra.mxu0 0
  %7349 = vmatprep.subr.bf16.mxu0 0
  %7350 = vmatpush1.bf16.xpose.msra.mxu0 0
  %7351 = vmatprep.subr.bf16.mxu0 0
  %7352 = vmatpush1.bf16.xpose.msra.mxu0 0
  %7353 = vmatprep.subr.bf16.mxu0 0
  %7354 = vmatpush1.bf16.xpose.msra.mxu0 0
  %7355 = vmatprep.subr.bf16.mxu0 0
  %7356 = vmatpush1.bf16.xpose.msra.mxu0 0
  %7357 = vmatprep.subr.bf16.mxu0 0
  %7358 = vmatpush1.bf16.xpose.msra.mxu0 0
  %7359 = vmatprep.subr.bf16.mxu0 0
  %7360 = vmatpush1.bf16.xpose.msra.mxu0 0
  %7361 = vmatprep.subr.bf16.mxu0 0
  %7362 = vmatpush1.bf16.xpose.msra.mxu0 0
  %7363 = vmatprep.subr.bf16.mxu0 0
  %7364 = vmatpush1.bf16.xpose.msra.mxu0 0
  %7365 = vmatprep.subr.bf16.mxu0 0
  %7366 = vmatpush1.bf16.xpose.msra.mxu0 0
  %7367 = vmatprep.subr.bf16.mxu0 0
  %7368 = vmatpush1.bf16.xpose.msra.mxu0 0
  %7369 = vmatprep.subr.bf16.mxu0 0
  %7370 = vmatpush1.bf16.xpose.msra.mxu0 0
  %7371 = vmatprep.subr.bf16.mxu0 0
  %7372 = vmatpush1.bf16.xpose.msra.mxu0 0
  %7373 = vmatprep.subr.bf16.mxu0 0
  %7374 = vmatpush1.bf16.xpose.msra.mxu0 0
  %7375 = vmatprep.mubr.bf16.mxu0 0
  %7376 = vmatmul.mubr.bf16.gmra.mrb[0].mxu0 %v7338
  %v7377 = vpop.f32.mrb[0].mxu0
  %v7378 = vadd.f32 0.0, %v7377
  %v7379 = vpop.f32.mrb[0].mxu0
  %v7380 = vpop.f32.mrb[0].mxu0
  %v7381 = vpop.f32.mrb[0].mxu0
  %7382 = vdwg.mxu0
  %v7383 = vsel %vm2252, %v7028, -inf
  %7384 = vmax.xlane.f32.xlu0 %v7383
  %v7385 = vpop.xlane.xlu0 %7384
  %v7386 = vsel %vm2252, %v7078, -inf
  %7387 = vmax.xlane.f32.xlu0 %v7386
  %v7388 = vpop.xlane.xlu0 %7387
  %v7389 = vsel %vm2252, %v7128, -inf
  %7390 = vmax.xlane.f32.xlu0 %v7389
  %v7391 = vpop.xlane.xlu0 %7390
  %v7392 = vsel %vm2252, %v7178, -inf
  %7393 = vmax.xlane.f32.xlu0 %v7392
  %v7394 = vpop.xlane.xlu0 %7393
  %v7395 = vsel %vm2252, %v7228, -inf
  %7396 = vmax.xlane.f32.xlu0 %v7395
  %v7397 = vpop.xlane.xlu0 %7396
  %v7398 = vsel %vm2252, %v7278, -inf
  %7399 = vmax.xlane.f32.xlu0 %v7398
  %v7400 = vpop.xlane.xlu0 %7399
  %v7401 = vsel %vm2252, %v7328, -inf
  %7402 = vmax.xlane.f32.xlu0 %v7401
  %v7403 = vpop.xlane.xlu0 %7402
  %v7404 = vsel %vm2252, %v7378, -inf
  %7405 = vmax.xlane.f32.xlu0 %v7404
  %v7406 = vpop.xlane.xlu0 %7405
  %v7407 = vsub.f32 %v7028, %v7385
  %v7408 = vsub.f32 %v7078, %v7388
  %v7409 = vsub.f32 %v7128, %v7391
  %v7410 = vsub.f32 %v7178, %v7394
  %v7411 = vsub.f32 %v7228, %v7397
  %v7412 = vsub.f32 %v7278, %v7400
  %v7413 = vsub.f32 %v7328, %v7403
  %v7414 = vsub.f32 %v7378, %v7406
  %v7415 = vmul.f32 %v7407, 1.442695
  %v7416 = vpow.pop %v7415
  %v7417 = vmul.f32 %v7408, 1.442695
  %v7418 = vpow.pop %v7417
  %v7419 = vmul.f32 %v7409, 1.442695
  %v7420 = vpow.pop %v7419
  %v7421 = vmul.f32 %v7410, 1.442695
  %v7422 = vpow.pop %v7421
  %v7423 = vmul.f32 %v7411, 1.442695
  %v7424 = vpow.pop %v7423
  %v7425 = vmul.f32 %v7412, 1.442695
  %v7426 = vpow.pop %v7425
  %v7427 = vmul.f32 %v7413, 1.442695
  %v7428 = vpow.pop %v7427
  %v7429 = vmul.f32 %v7414, 1.442695
  %v7430 = vpow.pop %v7429
  %v7431 = vsel %vm2252, %v7416, 0.0
  %7432 = vadd.xlane.f32.xlu0 %v7431
  %v7433 = vpop.xlane.xlu0 %7432
  %v7434 = vsel %vm2252, %v7418, 0.0
  %7435 = vadd.xlane.f32.xlu0 %v7434
  %v7436 = vpop.xlane.xlu0 %7435
  %v7437 = vsel %vm2252, %v7420, 0.0
  %7438 = vadd.xlane.f32.xlu0 %v7437
  %v7439 = vpop.xlane.xlu0 %7438
  %v7440 = vsel %vm2252, %v7422, 0.0
  %7441 = vadd.xlane.f32.xlu0 %v7440
  %v7442 = vpop.xlane.xlu0 %7441
  %v7443 = vsel %vm2252, %v7424, 0.0
  %7444 = vadd.xlane.f32.xlu0 %v7443
  %v7445 = vpop.xlane.xlu0 %7444
  %v7446 = vsel %vm2252, %v7426, 0.0
  %7447 = vadd.xlane.f32.xlu0 %v7446
  %v7448 = vpop.xlane.xlu0 %7447
  %v7449 = vsel %vm2252, %v7428, 0.0
  %7450 = vadd.xlane.f32.xlu0 %v7449
  %v7451 = vpop.xlane.xlu0 %7450
  %v7452 = vsel %vm2252, %v7430, 0.0
  %7453 = vadd.xlane.f32.xlu0 %v7452
  %v7454 = vpop.xlane.xlu0 %7453
  %v7455 = vrcp.pop %v7433
  %v7456 = vmul.f32 %v7416, %v7455
  %v7457 = vrcp.pop %v7436
  %v7458 = vmul.f32 %v7418, %v7457
  %v7459 = vrcp.pop %v7439
  %v7460 = vmul.f32 %v7420, %v7459
  %v7461 = vrcp.pop %v7442
  %v7462 = vmul.f32 %v7422, %v7461
  %v7463 = vrcp.pop %v7445
  %v7464 = vmul.f32 %v7424, %v7463
  %v7465 = vrcp.pop %v7448
  %v7466 = vmul.f32 %v7426, %v7465
  %v7467 = vrcp.pop %v7451
  %v7468 = vmul.f32 %v7428, %v7467
  %v7469 = vrcp.pop %v7454
  %v7470 = vmul.f32 %v7430, %v7469
  %v7471 = vpack.c.bf16 %v7456, %v7456
  %v7472 = vpack.c.bf16 %v7458, %v7458
  %v7473 = vpack.c.bf16 %v7460, %v7460
  %v7474 = vpack.c.bf16 %v7462, %v7462
  %v7475 = vpack.c.bf16 %v7464, %v7464
  %v7476 = vpack.c.bf16 %v7466, %v7466
  %v7477 = vpack.c.bf16 %v7468, %v7468
  %v7478 = vpack.c.bf16 %v7470, %v7470
  %7479 = vrot.lane.b32.xlu0 %v6020, 56
  %v7480 = vpop.permute.xlu0 %7479
  %v7482 = vsel %vm2351, %v7471, 0
  %v7485 = vsel %vm2355, %v7480, 0
  %7487 = vmatprep.subr.bf16.mxu0 0
  %7488 = vmatpush1.bf16.msra.mxu0 %v7485
  %7489 = vmatprep.subr.bf16.mxu0 0
  %7490 = vmatpush1.bf16.msra.mxu0 0
  %7491 = vmatprep.subr.bf16.mxu0 0
  %7492 = vmatpush1.bf16.msra.mxu0 0
  %7493 = vmatprep.subr.bf16.mxu0 0
  %7494 = vmatpush1.bf16.msra.mxu0 0
  %7495 = vmatprep.subr.bf16.mxu0 0
  %7496 = vmatpush1.bf16.msra.mxu0 0
  %7497 = vmatprep.subr.bf16.mxu0 0
  %7498 = vmatpush1.bf16.msra.mxu0 0
  %7499 = vmatprep.subr.bf16.mxu0 0
  %7500 = vmatpush1.bf16.msra.mxu0 0
  %7501 = vmatprep.subr.bf16.mxu0 0
  %7502 = vmatpush1.bf16.msra.mxu0 0
  %7503 = vmatprep.subr.bf16.mxu0 0
  %7504 = vmatpush1.bf16.msra.mxu0 0
  %7505 = vmatprep.subr.bf16.mxu0 0
  %7506 = vmatpush1.bf16.msra.mxu0 0
  %7507 = vmatprep.subr.bf16.mxu0 0
  %7508 = vmatpush1.bf16.msra.mxu0 0
  %7509 = vmatprep.subr.bf16.mxu0 0
  %7510 = vmatpush1.bf16.msra.mxu0 0
  %7511 = vmatprep.subr.bf16.mxu0 0
  %7512 = vmatpush1.bf16.msra.mxu0 0
  %7513 = vmatprep.subr.bf16.mxu0 0
  %7514 = vmatpush1.bf16.msra.mxu0 0
  %7515 = vmatprep.subr.bf16.mxu0 0
  %7516 = vmatpush1.bf16.msra.mxu0 0
  %7517 = vmatprep.subr.bf16.mxu0 0
  %7518 = vmatpush1.bf16.msra.mxu0 0
  %7519 = vmatprep.mubr.bf16.mxu0 0
  %7520 = vmatmul.mubr.bf16.gmra.mrb[0].mxu0 %v7482
  %v7521 = vpop.f32.mrb[0].mxu0
  %v7522 = vadd.f32 0.0, %v7521
  %v7523 = vpop.f32.mrb[0].mxu0
  %v7524 = vpop.f32.mrb[0].mxu0
  %v7525 = vpop.f32.mrb[0].mxu0
  %7526 = vdwg.mxu0
  %7527 = vrot.lane.b32.xlu0 %v6082, 56
  %v7528 = vpop.permute.xlu0 %7527
  %v7530 = vsel %vm2351, %v7472, 0
  %v7533 = vsel %vm2355, %v7528, 0
  %7535 = vmatprep.subr.bf16.mxu0 0
  %7536 = vmatpush1.bf16.msra.mxu0 %v7533
  %7537 = vmatprep.subr.bf16.mxu0 0
  %7538 = vmatpush1.bf16.msra.mxu0 0
  %7539 = vmatprep.subr.bf16.mxu0 0
  %7540 = vmatpush1.bf16.msra.mxu0 0
  %7541 = vmatprep.subr.bf16.mxu0 0
  %7542 = vmatpush1.bf16.msra.mxu0 0
  %7543 = vmatprep.subr.bf16.mxu0 0
  %7544 = vmatpush1.bf16.msra.mxu0 0
  %7545 = vmatprep.subr.bf16.mxu0 0
  %7546 = vmatpush1.bf16.msra.mxu0 0
  %7547 = vmatprep.subr.bf16.mxu0 0
  %7548 = vmatpush1.bf16.msra.mxu0 0
  %7549 = vmatprep.subr.bf16.mxu0 0
  %7550 = vmatpush1.bf16.msra.mxu0 0
  %7551 = vmatprep.subr.bf16.mxu0 0
  %7552 = vmatpush1.bf16.msra.mxu0 0
  %7553 = vmatprep.subr.bf16.mxu0 0
  %7554 = vmatpush1.bf16.msra.mxu0 0
  %7555 = vmatprep.subr.bf16.mxu0 0
  %7556 = vmatpush1.bf16.msra.mxu0 0
  %7557 = vmatprep.subr.bf16.mxu0 0
  %7558 = vmatpush1.bf16.msra.mxu0 0
  %7559 = vmatprep.subr.bf16.mxu0 0
  %7560 = vmatpush1.bf16.msra.mxu0 0
  %7561 = vmatprep.subr.bf16.mxu0 0
  %7562 = vmatpush1.bf16.msra.mxu0 0
  %7563 = vmatprep.subr.bf16.mxu0 0
  %7564 = vmatpush1.bf16.msra.mxu0 0
  %7565 = vmatprep.subr.bf16.mxu0 0
  %7566 = vmatpush1.bf16.msra.mxu0 0
  %7567 = vmatprep.mubr.bf16.mxu0 0
  %7568 = vmatmul.mubr.bf16.gmra.mrb[0].mxu0 %v7530
  %v7569 = vpop.f32.mrb[0].mxu0
  %v7570 = vadd.f32 0.0, %v7569
  %v7571 = vpop.f32.mrb[0].mxu0
  %v7572 = vpop.f32.mrb[0].mxu0
  %v7573 = vpop.f32.mrb[0].mxu0
  %7574 = vdwg.mxu0
  %7575 = vrot.lane.b32.xlu0 %v6144, 56
  %v7576 = vpop.permute.xlu0 %7575
  %v7578 = vsel %vm2351, %v7473, 0
  %v7581 = vsel %vm2355, %v7576, 0
  %7583 = vmatprep.subr.bf16.mxu0 0
  %7584 = vmatpush1.bf16.msra.mxu0 %v7581
  %7585 = vmatprep.subr.bf16.mxu0 0
  %7586 = vmatpush1.bf16.msra.mxu0 0
  %7587 = vmatprep.subr.bf16.mxu0 0
  %7588 = vmatpush1.bf16.msra.mxu0 0
  %7589 = vmatprep.subr.bf16.mxu0 0
  %7590 = vmatpush1.bf16.msra.mxu0 0
  %7591 = vmatprep.subr.bf16.mxu0 0
  %7592 = vmatpush1.bf16.msra.mxu0 0
  %7593 = vmatprep.subr.bf16.mxu0 0
  %7594 = vmatpush1.bf16.msra.mxu0 0
  %7595 = vmatprep.subr.bf16.mxu0 0
  %7596 = vmatpush1.bf16.msra.mxu0 0
  %7597 = vmatprep.subr.bf16.mxu0 0
  %7598 = vmatpush1.bf16.msra.mxu0 0
  %7599 = vmatprep.subr.bf16.mxu0 0
  %7600 = vmatpush1.bf16.msra.mxu0 0
  %7601 = vmatprep.subr.bf16.mxu0 0
  %7602 = vmatpush1.bf16.msra.mxu0 0
  %7603 = vmatprep.subr.bf16.mxu0 0
  %7604 = vmatpush1.bf16.msra.mxu0 0
  %7605 = vmatprep.subr.bf16.mxu0 0
  %7606 = vmatpush1.bf16.msra.mxu0 0
  %7607 = vmatprep.subr.bf16.mxu0 0
  %7608 = vmatpush1.bf16.msra.mxu0 0
  %7609 = vmatprep.subr.bf16.mxu0 0
  %7610 = vmatpush1.bf16.msra.mxu0 0
  %7611 = vmatprep.subr.bf16.mxu0 0
  %7612 = vmatpush1.bf16.msra.mxu0 0
  %7613 = vmatprep.subr.bf16.mxu0 0
  %7614 = vmatpush1.bf16.msra.mxu0 0
  %7615 = vmatprep.mubr.bf16.mxu0 0
  %7616 = vmatmul.mubr.bf16.gmra.mrb[0].mxu0 %v7578
  %v7617 = vpop.f32.mrb[0].mxu0
  %v7618 = vadd.f32 0.0, %v7617
  %v7619 = vpop.f32.mrb[0].mxu0
  %v7620 = vpop.f32.mrb[0].mxu0
  %v7621 = vpop.f32.mrb[0].mxu0
  %7622 = vdwg.mxu0
  %7623 = vrot.lane.b32.xlu0 %v6206, 56
  %v7624 = vpop.permute.xlu0 %7623
  %v7626 = vsel %vm2351, %v7474, 0
  %v7629 = vsel %vm2355, %v7624, 0
  %7631 = vmatprep.subr.bf16.mxu0 0
  %7632 = vmatpush1.bf16.msra.mxu0 %v7629
  %7633 = vmatprep.subr.bf16.mxu0 0
  %7634 = vmatpush1.bf16.msra.mxu0 0
  %7635 = vmatprep.subr.bf16.mxu0 0
  %7636 = vmatpush1.bf16.msra.mxu0 0
  %7637 = vmatprep.subr.bf16.mxu0 0
  %7638 = vmatpush1.bf16.msra.mxu0 0
  %7639 = vmatprep.subr.bf16.mxu0 0
  %7640 = vmatpush1.bf16.msra.mxu0 0
  %7641 = vmatprep.subr.bf16.mxu0 0
  %7642 = vmatpush1.bf16.msra.mxu0 0
  %7643 = vmatprep.subr.bf16.mxu0 0
  %7644 = vmatpush1.bf16.msra.mxu0 0
  %7645 = vmatprep.subr.bf16.mxu0 0
  %7646 = vmatpush1.bf16.msra.mxu0 0
  %7647 = vmatprep.subr.bf16.mxu0 0
  %7648 = vmatpush1.bf16.msra.mxu0 0
  %7649 = vmatprep.subr.bf16.mxu0 0
  %7650 = vmatpush1.bf16.msra.mxu0 0
  %7651 = vmatprep.subr.bf16.mxu0 0
  %7652 = vmatpush1.bf16.msra.mxu0 0
  %7653 = vmatprep.subr.bf16.mxu0 0
  %7654 = vmatpush1.bf16.msra.mxu0 0
  %7655 = vmatprep.subr.bf16.mxu0 0
  %7656 = vmatpush1.bf16.msra.mxu0 0
  %7657 = vmatprep.subr.bf16.mxu0 0
  %7658 = vmatpush1.bf16.msra.mxu0 0
  %7659 = vmatprep.subr.bf16.mxu0 0
  %7660 = vmatpush1.bf16.msra.mxu0 0
  %7661 = vmatprep.subr.bf16.mxu0 0
  %7662 = vmatpush1.bf16.msra.mxu0 0
  %7663 = vmatprep.mubr.bf16.mxu0 0
  %7664 = vmatmul.mubr.bf16.gmra.mrb[0].mxu0 %v7626
  %v7665 = vpop.f32.mrb[0].mxu0
  %v7666 = vadd.f32 0.0, %v7665
  %v7667 = vpop.f32.mrb[0].mxu0
  %v7668 = vpop.f32.mrb[0].mxu0
  %v7669 = vpop.f32.mrb[0].mxu0
  %7670 = vdwg.mxu0
  %7671 = vrot.lane.b32.xlu0 %v6268, 56
  %v7672 = vpop.permute.xlu0 %7671
  %v7674 = vsel %vm2351, %v7475, 0
  %v7677 = vsel %vm2355, %v7672, 0
  %7679 = vmatprep.subr.bf16.mxu0 0
  %7680 = vmatpush1.bf16.msra.mxu0 %v7677
  %7681 = vmatprep.subr.bf16.mxu0 0
  %7682 = vmatpush1.bf16.msra.mxu0 0
  %7683 = vmatprep.subr.bf16.mxu0 0
  %7684 = vmatpush1.bf16.msra.mxu0 0
  %7685 = vmatprep.subr.bf16.mxu0 0
  %7686 = vmatpush1.bf16.msra.mxu0 0
  %7687 = vmatprep.subr.bf16.mxu0 0
  %7688 = vmatpush1.bf16.msra.mxu0 0
  %7689 = vmatprep.subr.bf16.mxu0 0
  %7690 = vmatpush1.bf16.msra.mxu0 0
  %7691 = vmatprep.subr.bf16.mxu0 0
  %7692 = vmatpush1.bf16.msra.mxu0 0
  %7693 = vmatprep.subr.bf16.mxu0 0
  %7694 = vmatpush1.bf16.msra.mxu0 0
  %7695 = vmatprep.subr.bf16.mxu0 0
  %7696 = vmatpush1.bf16.msra.mxu0 0
  %7697 = vmatprep.subr.bf16.mxu0 0
  %7698 = vmatpush1.bf16.msra.mxu0 0
  %7699 = vmatprep.subr.bf16.mxu0 0
  %7700 = vmatpush1.bf16.msra.mxu0 0
  %7701 = vmatprep.subr.bf16.mxu0 0
  %7702 = vmatpush1.bf16.msra.mxu0 0
  %7703 = vmatprep.subr.bf16.mxu0 0
  %7704 = vmatpush1.bf16.msra.mxu0 0
  %7705 = vmatprep.subr.bf16.mxu0 0
  %7706 = vmatpush1.bf16.msra.mxu0 0
  %7707 = vmatprep.subr.bf16.mxu0 0
  %7708 = vmatpush1.bf16.msra.mxu0 0
  %7709 = vmatprep.subr.bf16.mxu0 0
  %7710 = vmatpush1.bf16.msra.mxu0 0
  %7711 = vmatprep.mubr.bf16.mxu0 0
  %7712 = vmatmul.mubr.bf16.gmra.mrb[0].mxu0 %v7674
  %v7713 = vpop.f32.mrb[0].mxu0
  %v7714 = vadd.f32 0.0, %v7713
  %v7715 = vpop.f32.mrb[0].mxu0
  %v7716 = vpop.f32.mrb[0].mxu0
  %v7717 = vpop.f32.mrb[0].mxu0
  %7718 = vdwg.mxu0
  %7719 = vrot.lane.b32.xlu0 %v6330, 56
  %v7720 = vpop.permute.xlu0 %7719
  %v7722 = vsel %vm2351, %v7476, 0
  %v7725 = vsel %vm2355, %v7720, 0
  %7727 = vmatprep.subr.bf16.mxu0 0
  %7728 = vmatpush1.bf16.msra.mxu0 %v7725
  %7729 = vmatprep.subr.bf16.mxu0 0
  %7730 = vmatpush1.bf16.msra.mxu0 0
  %7731 = vmatprep.subr.bf16.mxu0 0
  %7732 = vmatpush1.bf16.msra.mxu0 0
  %7733 = vmatprep.subr.bf16.mxu0 0
  %7734 = vmatpush1.bf16.msra.mxu0 0
  %7735 = vmatprep.subr.bf16.mxu0 0
  %7736 = vmatpush1.bf16.msra.mxu0 0
  %7737 = vmatprep.subr.bf16.mxu0 0
  %7738 = vmatpush1.bf16.msra.mxu0 0
  %7739 = vmatprep.subr.bf16.mxu0 0
  %7740 = vmatpush1.bf16.msra.mxu0 0
  %7741 = vmatprep.subr.bf16.mxu0 0
  %7742 = vmatpush1.bf16.msra.mxu0 0
  %7743 = vmatprep.subr.bf16.mxu0 0
  %7744 = vmatpush1.bf16.msra.mxu0 0
  %7745 = vmatprep.subr.bf16.mxu0 0
  %7746 = vmatpush1.bf16.msra.mxu0 0
  %7747 = vmatprep.subr.bf16.mxu0 0
  %7748 = vmatpush1.bf16.msra.mxu0 0
  %7749 = vmatprep.subr.bf16.mxu0 0
  %7750 = vmatpush1.bf16.msra.mxu0 0
  %7751 = vmatprep.subr.bf16.mxu0 0
  %7752 = vmatpush1.bf16.msra.mxu0 0
  %7753 = vmatprep.subr.bf16.mxu0 0
  %7754 = vmatpush1.bf16.msra.mxu0 0
  %7755 = vmatprep.subr.bf16.mxu0 0
  %7756 = vmatpush1.bf16.msra.mxu0 0
  %7757 = vmatprep.subr.bf16.mxu0 0
  %7758 = vmatpush1.bf16.msra.mxu0 0
  %7759 = vmatprep.mubr.bf16.mxu0 0
  %7760 = vmatmul.mubr.bf16.gmra.mrb[0].mxu0 %v7722
  %v7761 = vpop.f32.mrb[0].mxu0
  %v7762 = vadd.f32 0.0, %v7761
  %v7763 = vpop.f32.mrb[0].mxu0
  %v7764 = vpop.f32.mrb[0].mxu0
  %v7765 = vpop.f32.mrb[0].mxu0
  %7766 = vdwg.mxu0
  %7767 = vrot.lane.b32.xlu0 %v6392, 56
  %v7768 = vpop.permute.xlu0 %7767
  %v7770 = vsel %vm2351, %v7477, 0
  %v7773 = vsel %vm2355, %v7768, 0
  %7775 = vmatprep.subr.bf16.mxu0 0
  %7776 = vmatpush1.bf16.msra.mxu0 %v7773
  %7777 = vmatprep.subr.bf16.mxu0 0
  %7778 = vmatpush1.bf16.msra.mxu0 0
  %7779 = vmatprep.subr.bf16.mxu0 0
  %7780 = vmatpush1.bf16.msra.mxu0 0
  %7781 = vmatprep.subr.bf16.mxu0 0
  %7782 = vmatpush1.bf16.msra.mxu0 0
  %7783 = vmatprep.subr.bf16.mxu0 0
  %7784 = vmatpush1.bf16.msra.mxu0 0
  %7785 = vmatprep.subr.bf16.mxu0 0
  %7786 = vmatpush1.bf16.msra.mxu0 0
  %7787 = vmatprep.subr.bf16.mxu0 0
  %7788 = vmatpush1.bf16.msra.mxu0 0
  %7789 = vmatprep.subr.bf16.mxu0 0
  %7790 = vmatpush1.bf16.msra.mxu0 0
  %7791 = vmatprep.subr.bf16.mxu0 0
  %7792 = vmatpush1.bf16.msra.mxu0 0
  %7793 = vmatprep.subr.bf16.mxu0 0
  %7794 = vmatpush1.bf16.msra.mxu0 0
  %7795 = vmatprep.subr.bf16.mxu0 0
  %7796 = vmatpush1.bf16.msra.mxu0 0
  %7797 = vmatprep.subr.bf16.mxu0 0
  %7798 = vmatpush1.bf16.msra.mxu0 0
  %7799 = vmatprep.subr.bf16.mxu0 0
  %7800 = vmatpush1.bf16.msra.mxu0 0
  %7801 = vmatprep.subr.bf16.mxu0 0
  %7802 = vmatpush1.bf16.msra.mxu0 0
  %7803 = vmatprep.subr.bf16.mxu0 0
  %7804 = vmatpush1.bf16.msra.mxu0 0
  %7805 = vmatprep.subr.bf16.mxu0 0
  %7806 = vmatpush1.bf16.msra.mxu0 0
  %7807 = vmatprep.mubr.bf16.mxu0 0
  %7808 = vmatmul.mubr.bf16.gmra.mrb[0].mxu0 %v7770
  %v7809 = vpop.f32.mrb[0].mxu0
  %v7810 = vadd.f32 0.0, %v7809
  %v7811 = vpop.f32.mrb[0].mxu0
  %v7812 = vpop.f32.mrb[0].mxu0
  %v7813 = vpop.f32.mrb[0].mxu0
  %7814 = vdwg.mxu0
  %7815 = vrot.lane.b32.xlu0 %v6454, 56
  %v7816 = vpop.permute.xlu0 %7815
  %v7818 = vsel %vm2351, %v7478, 0
  %v7821 = vsel %vm2355, %v7816, 0
  %7823 = vmatprep.subr.bf16.mxu0 0
  %7824 = vmatpush1.bf16.msra.mxu0 %v7821
  %7825 = vmatprep.subr.bf16.mxu0 0
  %7826 = vmatpush1.bf16.msra.mxu0 0
  %7827 = vmatprep.subr.bf16.mxu0 0
  %7828 = vmatpush1.bf16.msra.mxu0 0
  %7829 = vmatprep.subr.bf16.mxu0 0
  %7830 = vmatpush1.bf16.msra.mxu0 0
  %7831 = vmatprep.subr.bf16.mxu0 0
  %7832 = vmatpush1.bf16.msra.mxu0 0
  %7833 = vmatprep.subr.bf16.mxu0 0
  %7834 = vmatpush1.bf16.msra.mxu0 0
  %7835 = vmatprep.subr.bf16.mxu0 0
  %7836 = vmatpush1.bf16.msra.mxu0 0
  %7837 = vmatprep.subr.bf16.mxu0 0
  %7838 = vmatpush1.bf16.msra.mxu0 0
  %7839 = vmatprep.subr.bf16.mxu0 0
  %7840 = vmatpush1.bf16.msra.mxu0 0
  %7841 = vmatprep.subr.bf16.mxu0 0
  %7842 = vmatpush1.bf16.msra.mxu0 0
  %7843 = vmatprep.subr.bf16.mxu0 0
  %7844 = vmatpush1.bf16.msra.mxu0 0
  %7845 = vmatprep.subr.bf16.mxu0 0
  %7846 = vmatpush1.bf16.msra.mxu0 0
  %7847 = vmatprep.subr.bf16.mxu0 0
  %7848 = vmatpush1.bf16.msra.mxu0 0
  %7849 = vmatprep.subr.bf16.mxu0 0
  %7850 = vmatpush1.bf16.msra.mxu0 0
  %7851 = vmatprep.subr.bf16.mxu0 0
  %7852 = vmatpush1.bf16.msra.mxu0 0
  %7853 = vmatprep.subr.bf16.mxu0 0
  %7854 = vmatpush1.bf16.msra.mxu0 0
  %7855 = vmatprep.mubr.bf16.mxu0 0
  %7856 = vmatmul.mubr.bf16.gmra.mrb[0].mxu0 %v7818
  %v7857 = vpop.f32.mrb[0].mxu0
  %v7858 = vadd.f32 0.0, %v7857
  %v7859 = vpop.f32.mrb[0].mxu0
  %v7860 = vpop.f32.mrb[0].mxu0
  %v7861 = vpop.f32.mrb[0].mxu0
  %7862 = vdwg.mxu0
  %7863 = vrot.lane.b32.xlu0 %v6020, 112
  %v7864 = vpop.permute.xlu0 %7863
  %7865 = vrot.lane.b32.xlu0 %v6020, 80
  %v7866 = vpop.permute.xlu0 %7865
  %v7868 = vsel %vm1771, %v7864, 0
  %v7871 = vsel %vm1771, %v7866, 0
  %7873 = vmatprep.subr.bf16.mxu0 0
  %7874 = vmatpush1.bf16.xpose.msra.mxu0 %v7871
  %7875 = vmatprep.subr.bf16.mxu0 0
  %7876 = vmatpush1.bf16.xpose.msra.mxu0 0
  %7877 = vmatprep.subr.bf16.mxu0 0
  %7878 = vmatpush1.bf16.xpose.msra.mxu0 0
  %7879 = vmatprep.subr.bf16.mxu0 0
  %7880 = vmatpush1.bf16.xpose.msra.mxu0 0
  %7881 = vmatprep.subr.bf16.mxu0 0
  %7882 = vmatpush1.bf16.xpose.msra.mxu0 0
  %7883 = vmatprep.subr.bf16.mxu0 0
  %7884 = vmatpush1.bf16.xpose.msra.mxu0 0
  %7885 = vmatprep.subr.bf16.mxu0 0
  %7886 = vmatpush1.bf16.xpose.msra.mxu0 0
  %7887 = vmatprep.subr.bf16.mxu0 0
  %7888 = vmatpush1.bf16.xpose.msra.mxu0 0
  %7889 = vmatprep.subr.bf16.mxu0 0
  %7890 = vmatpush1.bf16.xpose.msra.mxu0 0
  %7891 = vmatprep.subr.bf16.mxu0 0
  %7892 = vmatpush1.bf16.xpose.msra.mxu0 0
  %7893 = vmatprep.subr.bf16.mxu0 0
  %7894 = vmatpush1.bf16.xpose.msra.mxu0 0
  %7895 = vmatprep.subr.bf16.mxu0 0
  %7896 = vmatpush1.bf16.xpose.msra.mxu0 0
  %7897 = vmatprep.subr.bf16.mxu0 0
  %7898 = vmatpush1.bf16.xpose.msra.mxu0 0
  %7899 = vmatprep.subr.bf16.mxu0 0
  %7900 = vmatpush1.bf16.xpose.msra.mxu0 0
  %7901 = vmatprep.subr.bf16.mxu0 0
  %7902 = vmatpush1.bf16.xpose.msra.mxu0 0
  %7903 = vmatprep.subr.bf16.mxu0 0
  %7904 = vmatpush1.bf16.xpose.msra.mxu0 0
  %7905 = vmatprep.mubr.bf16.mxu0 0
  %7906 = vmatmul.mubr.bf16.gmra.mrb[0].mxu0 %v7868
  %v7907 = vpop.f32.mrb[0].mxu0
  %v7908 = vadd.f32 0.0, %v7907
  %v7909 = vpop.f32.mrb[0].mxu0
  %v7910 = vpop.f32.mrb[0].mxu0
  %v7911 = vpop.f32.mrb[0].mxu0
  %7912 = vdwg.mxu0
  %7913 = vrot.lane.b32.xlu0 %v6082, 112
  %v7914 = vpop.permute.xlu0 %7913
  %7915 = vrot.lane.b32.xlu0 %v6082, 80
  %v7916 = vpop.permute.xlu0 %7915
  %v7918 = vsel %vm1771, %v7914, 0
  %v7921 = vsel %vm1771, %v7916, 0
  %7923 = vmatprep.subr.bf16.mxu0 0
  %7924 = vmatpush1.bf16.xpose.msra.mxu0 %v7921
  %7925 = vmatprep.subr.bf16.mxu0 0
  %7926 = vmatpush1.bf16.xpose.msra.mxu0 0
  %7927 = vmatprep.subr.bf16.mxu0 0
  %7928 = vmatpush1.bf16.xpose.msra.mxu0 0
  %7929 = vmatprep.subr.bf16.mxu0 0
  %7930 = vmatpush1.bf16.xpose.msra.mxu0 0
  %7931 = vmatprep.subr.bf16.mxu0 0
  %7932 = vmatpush1.bf16.xpose.msra.mxu0 0
  %7933 = vmatprep.subr.bf16.mxu0 0
  %7934 = vmatpush1.bf16.xpose.msra.mxu0 0
  %7935 = vmatprep.subr.bf16.mxu0 0
  %7936 = vmatpush1.bf16.xpose.msra.mxu0 0
  %7937 = vmatprep.subr.bf16.mxu0 0
  %7938 = vmatpush1.bf16.xpose.msra.mxu0 0
  %7939 = vmatprep.subr.bf16.mxu0 0
  %7940 = vmatpush1.bf16.xpose.msra.mxu0 0
  %7941 = vmatprep.subr.bf16.mxu0 0
  %7942 = vmatpush1.bf16.xpose.msra.mxu0 0
  %7943 = vmatprep.subr.bf16.mxu0 0
  %7944 = vmatpush1.bf16.xpose.msra.mxu0 0
  %7945 = vmatprep.subr.bf16.mxu0 0
  %7946 = vmatpush1.bf16.xpose.msra.mxu0 0
  %7947 = vmatprep.subr.bf16.mxu0 0
  %7948 = vmatpush1.bf16.xpose.msra.mxu0 0
  %7949 = vmatprep.subr.bf16.mxu0 0
  %7950 = vmatpush1.bf16.xpose.msra.mxu0 0
  %7951 = vmatprep.subr.bf16.mxu0 0
  %7952 = vmatpush1.bf16.xpose.msra.mxu0 0
  %7953 = vmatprep.subr.bf16.mxu0 0
  %7954 = vmatpush1.bf16.xpose.msra.mxu0 0
  %7955 = vmatprep.mubr.bf16.mxu0 0
  %7956 = vmatmul.mubr.bf16.gmra.mrb[0].mxu0 %v7918
  %v7957 = vpop.f32.mrb[0].mxu0
  %v7958 = vadd.f32 0.0, %v7957
  %v7959 = vpop.f32.mrb[0].mxu0
  %v7960 = vpop.f32.mrb[0].mxu0
  %v7961 = vpop.f32.mrb[0].mxu0
  %7962 = vdwg.mxu0
  %7963 = vrot.lane.b32.xlu0 %v6144, 112
  %v7964 = vpop.permute.xlu0 %7963
  %7965 = vrot.lane.b32.xlu0 %v6144, 80
  %v7966 = vpop.permute.xlu0 %7965
  %v7968 = vsel %vm1771, %v7964, 0
  %v7971 = vsel %vm1771, %v7966, 0
  %7973 = vmatprep.subr.bf16.mxu0 0
  %7974 = vmatpush1.bf16.xpose.msra.mxu0 %v7971
  %7975 = vmatprep.subr.bf16.mxu0 0
  %7976 = vmatpush1.bf16.xpose.msra.mxu0 0
  %7977 = vmatprep.subr.bf16.mxu0 0
  %7978 = vmatpush1.bf16.xpose.msra.mxu0 0
  %7979 = vmatprep.subr.bf16.mxu0 0
  %7980 = vmatpush1.bf16.xpose.msra.mxu0 0
  %7981 = vmatprep.subr.bf16.mxu0 0
  %7982 = vmatpush1.bf16.xpose.msra.mxu0 0
  %7983 = vmatprep.subr.bf16.mxu0 0
  %7984 = vmatpush1.bf16.xpose.msra.mxu0 0
  %7985 = vmatprep.subr.bf16.mxu0 0
  %7986 = vmatpush1.bf16.xpose.msra.mxu0 0
  %7987 = vmatprep.subr.bf16.mxu0 0
  %7988 = vmatpush1.bf16.xpose.msra.mxu0 0
  %7989 = vmatprep.subr.bf16.mxu0 0
  %7990 = vmatpush1.bf16.xpose.msra.mxu0 0
  %7991 = vmatprep.subr.bf16.mxu0 0
  %7992 = vmatpush1.bf16.xpose.msra.mxu0 0
  %7993 = vmatprep.subr.bf16.mxu0 0
  %7994 = vmatpush1.bf16.xpose.msra.mxu0 0
  %7995 = vmatprep.subr.bf16.mxu0 0
  %7996 = vmatpush1.bf16.xpose.msra.mxu0 0
  %7997 = vmatprep.subr.bf16.mxu0 0
  %7998 = vmatpush1.bf16.xpose.msra.mxu0 0
  %7999 = vmatprep.subr.bf16.mxu0 0
  %8000 = vmatpush1.bf16.xpose.msra.mxu0 0
  %8001 = vmatprep.subr.bf16.mxu0 0
  %8002 = vmatpush1.bf16.xpose.msra.mxu0 0
  %8003 = vmatprep.subr.bf16.mxu0 0
  %8004 = vmatpush1.bf16.xpose.msra.mxu0 0
  %8005 = vmatprep.mubr.bf16.mxu0 0
  %8006 = vmatmul.mubr.bf16.gmra.mrb[0].mxu0 %v7968
  %v8007 = vpop.f32.mrb[0].mxu0
  %v8008 = vadd.f32 0.0, %v8007
  %v8009 = vpop.f32.mrb[0].mxu0
  %v8010 = vpop.f32.mrb[0].mxu0
  %v8011 = vpop.f32.mrb[0].mxu0
  %8012 = vdwg.mxu0
  %8013 = vrot.lane.b32.xlu0 %v6206, 112
  %v8014 = vpop.permute.xlu0 %8013
  %8015 = vrot.lane.b32.xlu0 %v6206, 80
  %v8016 = vpop.permute.xlu0 %8015
  %v8018 = vsel %vm1771, %v8014, 0
  %v8021 = vsel %vm1771, %v8016, 0
  %8023 = vmatprep.subr.bf16.mxu0 0
  %8024 = vmatpush1.bf16.xpose.msra.mxu0 %v8021
  %8025 = vmatprep.subr.bf16.mxu0 0
  %8026 = vmatpush1.bf16.xpose.msra.mxu0 0
  %8027 = vmatprep.subr.bf16.mxu0 0
  %8028 = vmatpush1.bf16.xpose.msra.mxu0 0
  %8029 = vmatprep.subr.bf16.mxu0 0
  %8030 = vmatpush1.bf16.xpose.msra.mxu0 0
  %8031 = vmatprep.subr.bf16.mxu0 0
  %8032 = vmatpush1.bf16.xpose.msra.mxu0 0
  %8033 = vmatprep.subr.bf16.mxu0 0
  %8034 = vmatpush1.bf16.xpose.msra.mxu0 0
  %8035 = vmatprep.subr.bf16.mxu0 0
  %8036 = vmatpush1.bf16.xpose.msra.mxu0 0
  %8037 = vmatprep.subr.bf16.mxu0 0
  %8038 = vmatpush1.bf16.xpose.msra.mxu0 0
  %8039 = vmatprep.subr.bf16.mxu0 0
  %8040 = vmatpush1.bf16.xpose.msra.mxu0 0
  %8041 = vmatprep.subr.bf16.mxu0 0
  %8042 = vmatpush1.bf16.xpose.msra.mxu0 0
  %8043 = vmatprep.subr.bf16.mxu0 0
  %8044 = vmatpush1.bf16.xpose.msra.mxu0 0
  %8045 = vmatprep.subr.bf16.mxu0 0
  %8046 = vmatpush1.bf16.xpose.msra.mxu0 0
  %8047 = vmatprep.subr.bf16.mxu0 0
  %8048 = vmatpush1.bf16.xpose.msra.mxu0 0
  %8049 = vmatprep.subr.bf16.mxu0 0
  %8050 = vmatpush1.bf16.xpose.msra.mxu0 0
  %8051 = vmatprep.subr.bf16.mxu0 0
  %8052 = vmatpush1.bf16.xpose.msra.mxu0 0
  %8053 = vmatprep.subr.bf16.mxu0 0
  %8054 = vmatpush1.bf16.xpose.msra.mxu0 0
  %8055 = vmatprep.mubr.bf16.mxu0 0
  %8056 = vmatmul.mubr.bf16.gmra.mrb[0].mxu0 %v8018
  %v8057 = vpop.f32.mrb[0].mxu0
  %v8058 = vadd.f32 0.0, %v8057
  %v8059 = vpop.f32.mrb[0].mxu0
  %v8060 = vpop.f32.mrb[0].mxu0
  %v8061 = vpop.f32.mrb[0].mxu0
  %8062 = vdwg.mxu0
  %8063 = vrot.lane.b32.xlu0 %v6268, 112
  %v8064 = vpop.permute.xlu0 %8063
  %8065 = vrot.lane.b32.xlu0 %v6268, 80
  %v8066 = vpop.permute.xlu0 %8065
  %v8068 = vsel %vm1771, %v8064, 0
  %v8071 = vsel %vm1771, %v8066, 0
  %8073 = vmatprep.subr.bf16.mxu0 0
  %8074 = vmatpush1.bf16.xpose.msra.mxu0 %v8071
  %8075 = vmatprep.subr.bf16.mxu0 0
  %8076 = vmatpush1.bf16.xpose.msra.mxu0 0
  %8077 = vmatprep.subr.bf16.mxu0 0
  %8078 = vmatpush1.bf16.xpose.msra.mxu0 0
  %8079 = vmatprep.subr.bf16.mxu0 0
  %8080 = vmatpush1.bf16.xpose.msra.mxu0 0
  %8081 = vmatprep.subr.bf16.mxu0 0
  %8082 = vmatpush1.bf16.xpose.msra.mxu0 0
  %8083 = vmatprep.subr.bf16.mxu0 0
  %8084 = vmatpush1.bf16.xpose.msra.mxu0 0
  %8085 = vmatprep.subr.bf16.mxu0 0
  %8086 = vmatpush1.bf16.xpose.msra.mxu0 0
  %8087 = vmatprep.subr.bf16.mxu0 0
  %8088 = vmatpush1.bf16.xpose.msra.mxu0 0
  %8089 = vmatprep.subr.bf16.mxu0 0
  %8090 = vmatpush1.bf16.xpose.msra.mxu0 0
  %8091 = vmatprep.subr.bf16.mxu0 0
  %8092 = vmatpush1.bf16.xpose.msra.mxu0 0
  %8093 = vmatprep.subr.bf16.mxu0 0
  %8094 = vmatpush1.bf16.xpose.msra.mxu0 0
  %8095 = vmatprep.subr.bf16.mxu0 0
  %8096 = vmatpush1.bf16.xpose.msra.mxu0 0
  %8097 = vmatprep.subr.bf16.mxu0 0
  %8098 = vmatpush1.bf16.xpose.msra.mxu0 0
  %8099 = vmatprep.subr.bf16.mxu0 0
  %8100 = vmatpush1.bf16.xpose.msra.mxu0 0
  %8101 = vmatprep.subr.bf16.mxu0 0
  %8102 = vmatpush1.bf16.xpose.msra.mxu0 0
  %8103 = vmatprep.subr.bf16.mxu0 0
  %8104 = vmatpush1.bf16.xpose.msra.mxu0 0
  %8105 = vmatprep.mubr.bf16.mxu0 0
  %8106 = vmatmul.mubr.bf16.gmra.mrb[0].mxu0 %v8068
  %v8107 = vpop.f32.mrb[0].mxu0
  %v8108 = vadd.f32 0.0, %v8107
  %v8109 = vpop.f32.mrb[0].mxu0
  %v8110 = vpop.f32.mrb[0].mxu0
  %v8111 = vpop.f32.mrb[0].mxu0
  %8112 = vdwg.mxu0
  %8113 = vrot.lane.b32.xlu0 %v6330, 112
  %v8114 = vpop.permute.xlu0 %8113
  %8115 = vrot.lane.b32.xlu0 %v6330, 80
  %v8116 = vpop.permute.xlu0 %8115
  %v8118 = vsel %vm1771, %v8114, 0
  %v8121 = vsel %vm1771, %v8116, 0
  %8123 = vmatprep.subr.bf16.mxu0 0
  %8124 = vmatpush1.bf16.xpose.msra.mxu0 %v8121
  %8125 = vmatprep.subr.bf16.mxu0 0
  %8126 = vmatpush1.bf16.xpose.msra.mxu0 0
  %8127 = vmatprep.subr.bf16.mxu0 0
  %8128 = vmatpush1.bf16.xpose.msra.mxu0 0
  %8129 = vmatprep.subr.bf16.mxu0 0
  %8130 = vmatpush1.bf16.xpose.msra.mxu0 0
  %8131 = vmatprep.subr.bf16.mxu0 0
  %8132 = vmatpush1.bf16.xpose.msra.mxu0 0
  %8133 = vmatprep.subr.bf16.mxu0 0
  %8134 = vmatpush1.bf16.xpose.msra.mxu0 0
  %8135 = vmatprep.subr.bf16.mxu0 0
  %8136 = vmatpush1.bf16.xpose.msra.mxu0 0
  %8137 = vmatprep.subr.bf16.mxu0 0
  %8138 = vmatpush1.bf16.xpose.msra.mxu0 0
  %8139 = vmatprep.subr.bf16.mxu0 0
  %8140 = vmatpush1.bf16.xpose.msra.mxu0 0
  %8141 = vmatprep.subr.bf16.mxu0 0
  %8142 = vmatpush1.bf16.xpose.msra.mxu0 0
  %8143 = vmatprep.subr.bf16.mxu0 0
  %8144 = vmatpush1.bf16.xpose.msra.mxu0 0
  %8145 = vmatprep.subr.bf16.mxu0 0
  %8146 = vmatpush1.bf16.xpose.msra.mxu0 0
  %8147 = vmatprep.subr.bf16.mxu0 0
  %8148 = vmatpush1.bf16.xpose.msra.mxu0 0
  %8149 = vmatprep.subr.bf16.mxu0 0
  %8150 = vmatpush1.bf16.xpose.msra.mxu0 0
  %8151 = vmatprep.subr.bf16.mxu0 0
  %8152 = vmatpush1.bf16.xpose.msra.mxu0 0
  %8153 = vmatprep.subr.bf16.mxu0 0
  %8154 = vmatpush1.bf16.xpose.msra.mxu0 0
  %8155 = vmatprep.mubr.bf16.mxu0 0
  %8156 = vmatmul.mubr.bf16.gmra.mrb[0].mxu0 %v8118
  %v8157 = vpop.f32.mrb[0].mxu0
  %v8158 = vadd.f32 0.0, %v8157
  %v8159 = vpop.f32.mrb[0].mxu0
  %v8160 = vpop.f32.mrb[0].mxu0
  %v8161 = vpop.f32.mrb[0].mxu0
  %8162 = vdwg.mxu0
  %8163 = vrot.lane.b32.xlu0 %v6392, 112
  %v8164 = vpop.permute.xlu0 %8163
  %8165 = vrot.lane.b32.xlu0 %v6392, 80
  %v8166 = vpop.permute.xlu0 %8165
  %v8168 = vsel %vm1771, %v8164, 0
  %v8171 = vsel %vm1771, %v8166, 0
  %8173 = vmatprep.subr.bf16.mxu0 0
  %8174 = vmatpush1.bf16.xpose.msra.mxu0 %v8171
  %8175 = vmatprep.subr.bf16.mxu0 0
  %8176 = vmatpush1.bf16.xpose.msra.mxu0 0
  %8177 = vmatprep.subr.bf16.mxu0 0
  %8178 = vmatpush1.bf16.xpose.msra.mxu0 0
  %8179 = vmatprep.subr.bf16.mxu0 0
  %8180 = vmatpush1.bf16.xpose.msra.mxu0 0
  %8181 = vmatprep.subr.bf16.mxu0 0
  %8182 = vmatpush1.bf16.xpose.msra.mxu0 0
  %8183 = vmatprep.subr.bf16.mxu0 0
  %8184 = vmatpush1.bf16.xpose.msra.mxu0 0
  %8185 = vmatprep.subr.bf16.mxu0 0
  %8186 = vmatpush1.bf16.xpose.msra.mxu0 0
  %8187 = vmatprep.subr.bf16.mxu0 0
  %8188 = vmatpush1.bf16.xpose.msra.mxu0 0
  %8189 = vmatprep.subr.bf16.mxu0 0
  %8190 = vmatpush1.bf16.xpose.msra.mxu0 0
  %8191 = vmatprep.subr.bf16.mxu0 0
  %8192 = vmatpush1.bf16.xpose.msra.mxu0 0
  %8193 = vmatprep.subr.bf16.mxu0 0
  %8194 = vmatpush1.bf16.xpose.msra.mxu0 0
  %8195 = vmatprep.subr.bf16.mxu0 0
  %8196 = vmatpush1.bf16.xpose.msra.mxu0 0
  %8197 = vmatprep.subr.bf16.mxu0 0
  %8198 = vmatpush1.bf16.xpose.msra.mxu0 0
  %8199 = vmatprep.subr.bf16.mxu0 0
  %8200 = vmatpush1.bf16.xpose.msra.mxu0 0
  %8201 = vmatprep.subr.bf16.mxu0 0
  %8202 = vmatpush1.bf16.xpose.msra.mxu0 0
  %8203 = vmatprep.subr.bf16.mxu0 0
  %8204 = vmatpush1.bf16.xpose.msra.mxu0 0
  %8205 = vmatprep.mubr.bf16.mxu0 0
  %8206 = vmatmul.mubr.bf16.gmra.mrb[0].mxu0 %v8168
  %v8207 = vpop.f32.mrb[0].mxu0
  %v8208 = vadd.f32 0.0, %v8207
  %v8209 = vpop.f32.mrb[0].mxu0
  %v8210 = vpop.f32.mrb[0].mxu0
  %v8211 = vpop.f32.mrb[0].mxu0
  %8212 = vdwg.mxu0
  %8213 = vrot.lane.b32.xlu0 %v6454, 112
  %v8214 = vpop.permute.xlu0 %8213
  %8215 = vrot.lane.b32.xlu0 %v6454, 80
  %v8216 = vpop.permute.xlu0 %8215
  %v8218 = vsel %vm1771, %v8214, 0
  %v8221 = vsel %vm1771, %v8216, 0
  %8223 = vmatprep.subr.bf16.mxu0 0
  %8224 = vmatpush1.bf16.xpose.msra.mxu0 %v8221
  %8225 = vmatprep.subr.bf16.mxu0 0
  %8226 = vmatpush1.bf16.xpose.msra.mxu0 0
  %8227 = vmatprep.subr.bf16.mxu0 0
  %8228 = vmatpush1.bf16.xpose.msra.mxu0 0
  %8229 = vmatprep.subr.bf16.mxu0 0
  %8230 = vmatpush1.bf16.xpose.msra.mxu0 0
  %8231 = vmatprep.subr.bf16.mxu0 0
  %8232 = vmatpush1.bf16.xpose.msra.mxu0 0
  %8233 = vmatprep.subr.bf16.mxu0 0
  %8234 = vmatpush1.bf16.xpose.msra.mxu0 0
  %8235 = vmatprep.subr.bf16.mxu0 0
  %8236 = vmatpush1.bf16.xpose.msra.mxu0 0
  %8237 = vmatprep.subr.bf16.mxu0 0
  %8238 = vmatpush1.bf16.xpose.msra.mxu0 0
  %8239 = vmatprep.subr.bf16.mxu0 0
  %8240 = vmatpush1.bf16.xpose.msra.mxu0 0
  %8241 = vmatprep.subr.bf16.mxu0 0
  %8242 = vmatpush1.bf16.xpose.msra.mxu0 0
  %8243 = vmatprep.subr.bf16.mxu0 0
  %8244 = vmatpush1.bf16.xpose.msra.mxu0 0
  %8245 = vmatprep.subr.bf16.mxu0 0
  %8246 = vmatpush1.bf16.xpose.msra.mxu0 0
  %8247 = vmatprep.subr.bf16.mxu0 0
  %8248 = vmatpush1.bf16.xpose.msra.mxu0 0
  %8249 = vmatprep.subr.bf16.mxu0 0
  %8250 = vmatpush1.bf16.xpose.msra.mxu0 0
  %8251 = vmatprep.subr.bf16.mxu0 0
  %8252 = vmatpush1.bf16.xpose.msra.mxu0 0
  %8253 = vmatprep.subr.bf16.mxu0 0
  %8254 = vmatpush1.bf16.xpose.msra.mxu0 0
  %8255 = vmatprep.mubr.bf16.mxu0 0
  %8256 = vmatmul.mubr.bf16.gmra.mrb[0].mxu0 %v8218
  %v8257 = vpop.f32.mrb[0].mxu0
  %v8258 = vadd.f32 0.0, %v8257
  %v8259 = vpop.f32.mrb[0].mxu0
  %v8260 = vpop.f32.mrb[0].mxu0
  %v8261 = vpop.f32.mrb[0].mxu0
  %8262 = vdwg.mxu0
  %v8263 = vsel %vm2252, %v7908, -inf
  %8264 = vmax.xlane.f32.xlu0 %v8263
  %v8265 = vpop.xlane.xlu0 %8264
  %v8266 = vsel %vm2252, %v7958, -inf
  %8267 = vmax.xlane.f32.xlu0 %v8266
  %v8268 = vpop.xlane.xlu0 %8267
  %v8269 = vsel %vm2252, %v8008, -inf
  %8270 = vmax.xlane.f32.xlu0 %v8269
  %v8271 = vpop.xlane.xlu0 %8270
  %v8272 = vsel %vm2252, %v8058, -inf
  %8273 = vmax.xlane.f32.xlu0 %v8272
  %v8274 = vpop.xlane.xlu0 %8273
  %v8275 = vsel %vm2252, %v8108, -inf
  %8276 = vmax.xlane.f32.xlu0 %v8275
  %v8277 = vpop.xlane.xlu0 %8276
  %v8278 = vsel %vm2252, %v8158, -inf
  %8279 = vmax.xlane.f32.xlu0 %v8278
  %v8280 = vpop.xlane.xlu0 %8279
  %v8281 = vsel %vm2252, %v8208, -inf
  %8282 = vmax.xlane.f32.xlu0 %v8281
  %v8283 = vpop.xlane.xlu0 %8282
  %v8284 = vsel %vm2252, %v8258, -inf
  %8285 = vmax.xlane.f32.xlu0 %v8284
  %v8286 = vpop.xlane.xlu0 %8285
  %v8287 = vsub.f32 %v7908, %v8265
  %v8288 = vsub.f32 %v7958, %v8268
  %v8289 = vsub.f32 %v8008, %v8271
  %v8290 = vsub.f32 %v8058, %v8274
  %v8291 = vsub.f32 %v8108, %v8277
  %v8292 = vsub.f32 %v8158, %v8280
  %v8293 = vsub.f32 %v8208, %v8283
  %v8294 = vsub.f32 %v8258, %v8286
  %v8295 = vmul.f32 %v8287, 1.442695
  %v8296 = vpow.pop %v8295
  %v8297 = vmul.f32 %v8288, 1.442695
  %v8298 = vpow.pop %v8297
  %v8299 = vmul.f32 %v8289, 1.442695
  %v8300 = vpow.pop %v8299
  %v8301 = vmul.f32 %v8290, 1.442695
  %v8302 = vpow.pop %v8301
  %v8303 = vmul.f32 %v8291, 1.442695
  %v8304 = vpow.pop %v8303
  %v8305 = vmul.f32 %v8292, 1.442695
  %v8306 = vpow.pop %v8305
  %v8307 = vmul.f32 %v8293, 1.442695
  %v8308 = vpow.pop %v8307
  %v8309 = vmul.f32 %v8294, 1.442695
  %v8310 = vpow.pop %v8309
  %v8311 = vsel %vm2252, %v8296, 0.0
  %8312 = vadd.xlane.f32.xlu0 %v8311
  %v8313 = vpop.xlane.xlu0 %8312
  %v8314 = vsel %vm2252, %v8298, 0.0
  %8315 = vadd.xlane.f32.xlu0 %v8314
  %v8316 = vpop.xlane.xlu0 %8315
  %v8317 = vsel %vm2252, %v8300, 0.0
  %8318 = vadd.xlane.f32.xlu0 %v8317
  %v8319 = vpop.xlane.xlu0 %8318
  %v8320 = vsel %vm2252, %v8302, 0.0
  %8321 = vadd.xlane.f32.xlu0 %v8320
  %v8322 = vpop.xlane.xlu0 %8321
  %v8323 = vsel %vm2252, %v8304, 0.0
  %8324 = vadd.xlane.f32.xlu0 %v8323
  %v8325 = vpop.xlane.xlu0 %8324
  %v8326 = vsel %vm2252, %v8306, 0.0
  %8327 = vadd.xlane.f32.xlu0 %v8326
  %v8328 = vpop.xlane.xlu0 %8327
  %v8329 = vsel %vm2252, %v8308, 0.0
  %8330 = vadd.xlane.f32.xlu0 %v8329
  %v8331 = vpop.xlane.xlu0 %8330
  %v8332 = vsel %vm2252, %v8310, 0.0
  %8333 = vadd.xlane.f32.xlu0 %v8332
  %v8334 = vpop.xlane.xlu0 %8333
  %v8335 = vrcp.pop %v8313
  %v8336 = vmul.f32 %v8296, %v8335
  %v8337 = vrcp.pop %v8316
  %v8338 = vmul.f32 %v8298, %v8337
  %v8339 = vrcp.pop %v8319
  %v8340 = vmul.f32 %v8300, %v8339
  %v8341 = vrcp.pop %v8322
  %v8342 = vmul.f32 %v8302, %v8341
  %v8343 = vrcp.pop %v8325
  %v8344 = vmul.f32 %v8304, %v8343
  %v8345 = vrcp.pop %v8328
  %v8346 = vmul.f32 %v8306, %v8345
  %v8347 = vrcp.pop %v8331
  %v8348 = vmul.f32 %v8308, %v8347
  %v8349 = vrcp.pop %v8334
  %v8350 = vmul.f32 %v8310, %v8349
  %v8351 = vpack.c.bf16 %v8336, %v8336
  %v8352 = vpack.c.bf16 %v8338, %v8338
  %v8353 = vpack.c.bf16 %v8340, %v8340
  %v8354 = vpack.c.bf16 %v8342, %v8342
  %v8355 = vpack.c.bf16 %v8344, %v8344
  %v8356 = vpack.c.bf16 %v8346, %v8346
  %v8357 = vpack.c.bf16 %v8348, %v8348
  %v8358 = vpack.c.bf16 %v8350, %v8350
  %8359 = vrot.lane.b32.xlu0 %v6020, 48
  %v8360 = vpop.permute.xlu0 %8359
  %v8362 = vsel %vm2351, %v8351, 0
  %v8365 = vsel %vm2355, %v8360, 0
  %8367 = vmatprep.subr.bf16.mxu0 0
  %8368 = vmatpush1.bf16.msra.mxu0 %v8365
  %8369 = vmatprep.subr.bf16.mxu0 0
  %8370 = vmatpush1.bf16.msra.mxu0 0
  %8371 = vmatprep.subr.bf16.mxu0 0
  %8372 = vmatpush1.bf16.msra.mxu0 0
  %8373 = vmatprep.subr.bf16.mxu0 0
  %8374 = vmatpush1.bf16.msra.mxu0 0
  %8375 = vmatprep.subr.bf16.mxu0 0
  %8376 = vmatpush1.bf16.msra.mxu0 0
  %8377 = vmatprep.subr.bf16.mxu0 0
  %8378 = vmatpush1.bf16.msra.mxu0 0
  %8379 = vmatprep.subr.bf16.mxu0 0
  %8380 = vmatpush1.bf16.msra.mxu0 0
  %8381 = vmatprep.subr.bf16.mxu0 0
  %8382 = vmatpush1.bf16.msra.mxu0 0
  %8383 = vmatprep.subr.bf16.mxu0 0
  %8384 = vmatpush1.bf16.msra.mxu0 0
  %8385 = vmatprep.subr.bf16.mxu0 0
  %8386 = vmatpush1.bf16.msra.mxu0 0
  %8387 = vmatprep.subr.bf16.mxu0 0
  %8388 = vmatpush1.bf16.msra.mxu0 0
  %8389 = vmatprep.subr.bf16.mxu0 0
  %8390 = vmatpush1.bf16.msra.mxu0 0
  %8391 = vmatprep.subr.bf16.mxu0 0
  %8392 = vmatpush1.bf16.msra.mxu0 0
  %8393 = vmatprep.subr.bf16.mxu0 0
  %8394 = vmatpush1.bf16.msra.mxu0 0
  %8395 = vmatprep.subr.bf16.mxu0 0
  %8396 = vmatpush1.bf16.msra.mxu0 0
  %8397 = vmatprep.subr.bf16.mxu0 0
  %8398 = vmatpush1.bf16.msra.mxu0 0
  %8399 = vmatprep.mubr.bf16.mxu0 0
  %8400 = vmatmul.mubr.bf16.gmra.mrb[0].mxu0 %v8362
  %v8401 = vpop.f32.mrb[0].mxu0
  %v8402 = vadd.f32 0.0, %v8401
  %v8403 = vpop.f32.mrb[0].mxu0
  %v8404 = vpop.f32.mrb[0].mxu0
  %v8405 = vpop.f32.mrb[0].mxu0
  %8406 = vdwg.mxu0
  %8407 = vrot.lane.b32.xlu0 %v6082, 48
  %v8408 = vpop.permute.xlu0 %8407
  %v8410 = vsel %vm2351, %v8352, 0
  %v8413 = vsel %vm2355, %v8408, 0
  %8415 = vmatprep.subr.bf16.mxu0 0
  %8416 = vmatpush1.bf16.msra.mxu0 %v8413
  %8417 = vmatprep.subr.bf16.mxu0 0
  %8418 = vmatpush1.bf16.msra.mxu0 0
  %8419 = vmatprep.subr.bf16.mxu0 0
  %8420 = vmatpush1.bf16.msra.mxu0 0
  %8421 = vmatprep.subr.bf16.mxu0 0
  %8422 = vmatpush1.bf16.msra.mxu0 0
  %8423 = vmatprep.subr.bf16.mxu0 0
  %8424 = vmatpush1.bf16.msra.mxu0 0
  %8425 = vmatprep.subr.bf16.mxu0 0
  %8426 = vmatpush1.bf16.msra.mxu0 0
  %8427 = vmatprep.subr.bf16.mxu0 0
  %8428 = vmatpush1.bf16.msra.mxu0 0
  %8429 = vmatprep.subr.bf16.mxu0 0
  %8430 = vmatpush1.bf16.msra.mxu0 0
  %8431 = vmatprep.subr.bf16.mxu0 0
  %8432 = vmatpush1.bf16.msra.mxu0 0
  %8433 = vmatprep.subr.bf16.mxu0 0
  %8434 = vmatpush1.bf16.msra.mxu0 0
  %8435 = vmatprep.subr.bf16.mxu0 0
  %8436 = vmatpush1.bf16.msra.mxu0 0
  %8437 = vmatprep.subr.bf16.mxu0 0
  %8438 = vmatpush1.bf16.msra.mxu0 0
  %8439 = vmatprep.subr.bf16.mxu0 0
  %8440 = vmatpush1.bf16.msra.mxu0 0
  %8441 = vmatprep.subr.bf16.mxu0 0
  %8442 = vmatpush1.bf16.msra.mxu0 0
  %8443 = vmatprep.subr.bf16.mxu0 0
  %8444 = vmatpush1.bf16.msra.mxu0 0
  %8445 = vmatprep.subr.bf16.mxu0 0
  %8446 = vmatpush1.bf16.msra.mxu0 0
  %8447 = vmatprep.mubr.bf16.mxu0 0
  %8448 = vmatmul.mubr.bf16.gmra.mrb[0].mxu0 %v8410
  %v8449 = vpop.f32.mrb[0].mxu0
  %v8450 = vadd.f32 0.0, %v8449
  %v8451 = vpop.f32.mrb[0].mxu0
  %v8452 = vpop.f32.mrb[0].mxu0
  %v8453 = vpop.f32.mrb[0].mxu0
  %8454 = vdwg.mxu0
  %8455 = vrot.lane.b32.xlu0 %v6144, 48
  %v8456 = vpop.permute.xlu0 %8455
  %v8458 = vsel %vm2351, %v8353, 0
  %v8461 = vsel %vm2355, %v8456, 0
  %8463 = vmatprep.subr.bf16.mxu0 0
  %8464 = vmatpush1.bf16.msra.mxu0 %v8461
  %8465 = vmatprep.subr.bf16.mxu0 0
  %8466 = vmatpush1.bf16.msra.mxu0 0
  %8467 = vmatprep.subr.bf16.mxu0 0
  %8468 = vmatpush1.bf16.msra.mxu0 0
  %8469 = vmatprep.subr.bf16.mxu0 0
  %8470 = vmatpush1.bf16.msra.mxu0 0
  %8471 = vmatprep.subr.bf16.mxu0 0
  %8472 = vmatpush1.bf16.msra.mxu0 0
  %8473 = vmatprep.subr.bf16.mxu0 0
  %8474 = vmatpush1.bf16.msra.mxu0 0
  %8475 = vmatprep.subr.bf16.mxu0 0
  %8476 = vmatpush1.bf16.msra.mxu0 0
  %8477 = vmatprep.subr.bf16.mxu0 0
  %8478 = vmatpush1.bf16.msra.mxu0 0
  %8479 = vmatprep.subr.bf16.mxu0 0
  %8480 = vmatpush1.bf16.msra.mxu0 0
  %8481 = vmatprep.subr.bf16.mxu0 0
  %8482 = vmatpush1.bf16.msra.mxu0 0
  %8483 = vmatprep.subr.bf16.mxu0 0
  %8484 = vmatpush1.bf16.msra.mxu0 0
  %8485 = vmatprep.subr.bf16.mxu0 0
  %8486 = vmatpush1.bf16.msra.mxu0 0
  %8487 = vmatprep.subr.bf16.mxu0 0
  %8488 = vmatpush1.bf16.msra.mxu0 0
  %8489 = vmatprep.subr.bf16.mxu0 0
  %8490 = vmatpush1.bf16.msra.mxu0 0
  %8491 = vmatprep.subr.bf16.mxu0 0
  %8492 = vmatpush1.bf16.msra.mxu0 0
  %8493 = vmatprep.subr.bf16.mxu0 0
  %8494 = vmatpush1.bf16.msra.mxu0 0
  %8495 = vmatprep.mubr.bf16.mxu0 0
  %8496 = vmatmul.mubr.bf16.gmra.mrb[0].mxu0 %v8458
  %v8497 = vpop.f32.mrb[0].mxu0
  %v8498 = vadd.f32 0.0, %v8497
  %v8499 = vpop.f32.mrb[0].mxu0
  %v8500 = vpop.f32.mrb[0].mxu0
  %v8501 = vpop.f32.mrb[0].mxu0
  %8502 = vdwg.mxu0
  %8503 = vrot.lane.b32.xlu0 %v6206, 48
  %v8504 = vpop.permute.xlu0 %8503
  %v8506 = vsel %vm2351, %v8354, 0
  %v8509 = vsel %vm2355, %v8504, 0
  %8511 = vmatprep.subr.bf16.mxu0 0
  %8512 = vmatpush1.bf16.msra.mxu0 %v8509
  %8513 = vmatprep.subr.bf16.mxu0 0
  %8514 = vmatpush1.bf16.msra.mxu0 0
  %8515 = vmatprep.subr.bf16.mxu0 0
  %8516 = vmatpush1.bf16.msra.mxu0 0
  %8517 = vmatprep.subr.bf16.mxu0 0
  %8518 = vmatpush1.bf16.msra.mxu0 0
  %8519 = vmatprep.subr.bf16.mxu0 0
  %8520 = vmatpush1.bf16.msra.mxu0 0
  %8521 = vmatprep.subr.bf16.mxu0 0
  %8522 = vmatpush1.bf16.msra.mxu0 0
  %8523 = vmatprep.subr.bf16.mxu0 0
  %8524 = vmatpush1.bf16.msra.mxu0 0
  %8525 = vmatprep.subr.bf16.mxu0 0
  %8526 = vmatpush1.bf16.msra.mxu0 0
  %8527 = vmatprep.subr.bf16.mxu0 0
  %8528 = vmatpush1.bf16.msra.mxu0 0
  %8529 = vmatprep.subr.bf16.mxu0 0
  %8530 = vmatpush1.bf16.msra.mxu0 0
  %8531 = vmatprep.subr.bf16.mxu0 0
  %8532 = vmatpush1.bf16.msra.mxu0 0
  %8533 = vmatprep.subr.bf16.mxu0 0
  %8534 = vmatpush1.bf16.msra.mxu0 0
  %8535 = vmatprep.subr.bf16.mxu0 0
  %8536 = vmatpush1.bf16.msra.mxu0 0
  %8537 = vmatprep.subr.bf16.mxu0 0
  %8538 = vmatpush1.bf16.msra.mxu0 0
  %8539 = vmatprep.subr.bf16.mxu0 0
  %8540 = vmatpush1.bf16.msra.mxu0 0
  %8541 = vmatprep.subr.bf16.mxu0 0
  %8542 = vmatpush1.bf16.msra.mxu0 0
  %8543 = vmatprep.mubr.bf16.mxu0 0
  %8544 = vmatmul.mubr.bf16.gmra.mrb[0].mxu0 %v8506
  %v8545 = vpop.f32.mrb[0].mxu0
  %v8546 = vadd.f32 0.0, %v8545
  %v8547 = vpop.f32.mrb[0].mxu0
  %v8548 = vpop.f32.mrb[0].mxu0
  %v8549 = vpop.f32.mrb[0].mxu0
  %8550 = vdwg.mxu0
  %8551 = vrot.lane.b32.xlu0 %v6268, 48
  %v8552 = vpop.permute.xlu0 %8551
  %v8554 = vsel %vm2351, %v8355, 0
  %v8557 = vsel %vm2355, %v8552, 0
  %8559 = vmatprep.subr.bf16.mxu0 0
  %8560 = vmatpush1.bf16.msra.mxu0 %v8557
  %8561 = vmatprep.subr.bf16.mxu0 0
  %8562 = vmatpush1.bf16.msra.mxu0 0
  %8563 = vmatprep.subr.bf16.mxu0 0
  %8564 = vmatpush1.bf16.msra.mxu0 0
  %8565 = vmatprep.subr.bf16.mxu0 0
  %8566 = vmatpush1.bf16.msra.mxu0 0
  %8567 = vmatprep.subr.bf16.mxu0 0
  %8568 = vmatpush1.bf16.msra.mxu0 0
  %8569 = vmatprep.subr.bf16.mxu0 0
  %8570 = vmatpush1.bf16.msra.mxu0 0
  %8571 = vmatprep.subr.bf16.mxu0 0
  %8572 = vmatpush1.bf16.msra.mxu0 0
  %8573 = vmatprep.subr.bf16.mxu0 0
  %8574 = vmatpush1.bf16.msra.mxu0 0
  %8575 = vmatprep.subr.bf16.mxu0 0
  %8576 = vmatpush1.bf16.msra.mxu0 0
  %8577 = vmatprep.subr.bf16.mxu0 0
  %8578 = vmatpush1.bf16.msra.mxu0 0
  %8579 = vmatprep.subr.bf16.mxu0 0
  %8580 = vmatpush1.bf16.msra.mxu0 0
  %8581 = vmatprep.subr.bf16.mxu0 0
  %8582 = vmatpush1.bf16.msra.mxu0 0
  %8583 = vmatprep.subr.bf16.mxu0 0
  %8584 = vmatpush1.bf16.msra.mxu0 0
  %8585 = vmatprep.subr.bf16.mxu0 0
  %8586 = vmatpush1.bf16.msra.mxu0 0
  %8587 = vmatprep.subr.bf16.mxu0 0
  %8588 = vmatpush1.bf16.msra.mxu0 0
  %8589 = vmatprep.subr.bf16.mxu0 0
  %8590 = vmatpush1.bf16.msra.mxu0 0
  %8591 = vmatprep.mubr.bf16.mxu0 0
  %8592 = vmatmul.mubr.bf16.gmra.mrb[0].mxu0 %v8554
  %v8593 = vpop.f32.mrb[0].mxu0
  %v8594 = vadd.f32 0.0, %v8593
  %v8595 = vpop.f32.mrb[0].mxu0
  %v8596 = vpop.f32.mrb[0].mxu0
  %v8597 = vpop.f32.mrb[0].mxu0
  %8598 = vdwg.mxu0
  %8599 = vrot.lane.b32.xlu0 %v6330, 48
  %v8600 = vpop.permute.xlu0 %8599
  %v8602 = vsel %vm2351, %v8356, 0
  %v8605 = vsel %vm2355, %v8600, 0
  %8607 = vmatprep.subr.bf16.mxu0 0
  %8608 = vmatpush1.bf16.msra.mxu0 %v8605
  %8609 = vmatprep.subr.bf16.mxu0 0
  %8610 = vmatpush1.bf16.msra.mxu0 0
  %8611 = vmatprep.subr.bf16.mxu0 0
  %8612 = vmatpush1.bf16.msra.mxu0 0
  %8613 = vmatprep.subr.bf16.mxu0 0
  %8614 = vmatpush1.bf16.msra.mxu0 0
  %8615 = vmatprep.subr.bf16.mxu0 0
  %8616 = vmatpush1.bf16.msra.mxu0 0
  %8617 = vmatprep.subr.bf16.mxu0 0
  %8618 = vmatpush1.bf16.msra.mxu0 0
  %8619 = vmatprep.subr.bf16.mxu0 0
  %8620 = vmatpush1.bf16.msra.mxu0 0
  %8621 = vmatprep.subr.bf16.mxu0 0
  %8622 = vmatpush1.bf16.msra.mxu0 0
  %8623 = vmatprep.subr.bf16.mxu0 0
  %8624 = vmatpush1.bf16.msra.mxu0 0
  %8625 = vmatprep.subr.bf16.mxu0 0
  %8626 = vmatpush1.bf16.msra.mxu0 0
  %8627 = vmatprep.subr.bf16.mxu0 0
  %8628 = vmatpush1.bf16.msra.mxu0 0
  %8629 = vmatprep.subr.bf16.mxu0 0
  %8630 = vmatpush1.bf16.msra.mxu0 0
  %8631 = vmatprep.subr.bf16.mxu0 0
  %8632 = vmatpush1.bf16.msra.mxu0 0
  %8633 = vmatprep.subr.bf16.mxu0 0
  %8634 = vmatpush1.bf16.msra.mxu0 0
  %8635 = vmatprep.subr.bf16.mxu0 0
  %8636 = vmatpush1.bf16.msra.mxu0 0
  %8637 = vmatprep.subr.bf16.mxu0 0
  %8638 = vmatpush1.bf16.msra.mxu0 0
  %8639 = vmatprep.mubr.bf16.mxu0 0
  %8640 = vmatmul.mubr.bf16.gmra.mrb[0].mxu0 %v8602
  %v8641 = vpop.f32.mrb[0].mxu0
  %v8642 = vadd.f32 0.0, %v8641
  %v8643 = vpop.f32.mrb[0].mxu0
  %v8644 = vpop.f32.mrb[0].mxu0
  %v8645 = vpop.f32.mrb[0].mxu0
  %8646 = vdwg.mxu0
  %8647 = vrot.lane.b32.xlu0 %v6392, 48
  %v8648 = vpop.permute.xlu0 %8647
  %v8650 = vsel %vm2351, %v8357, 0
  %v8653 = vsel %vm2355, %v8648, 0
  %8655 = vmatprep.subr.bf16.mxu0 0
  %8656 = vmatpush1.bf16.msra.mxu0 %v8653
  %8657 = vmatprep.subr.bf16.mxu0 0
  %8658 = vmatpush1.bf16.msra.mxu0 0
  %8659 = vmatprep.subr.bf16.mxu0 0
  %8660 = vmatpush1.bf16.msra.mxu0 0
  %8661 = vmatprep.subr.bf16.mxu0 0
  %8662 = vmatpush1.bf16.msra.mxu0 0
  %8663 = vmatprep.subr.bf16.mxu0 0
  %8664 = vmatpush1.bf16.msra.mxu0 0
  %8665 = vmatprep.subr.bf16.mxu0 0
  %8666 = vmatpush1.bf16.msra.mxu0 0
  %8667 = vmatprep.subr.bf16.mxu0 0
  %8668 = vmatpush1.bf16.msra.mxu0 0
  %8669 = vmatprep.subr.bf16.mxu0 0
  %8670 = vmatpush1.bf16.msra.mxu0 0
  %8671 = vmatprep.subr.bf16.mxu0 0
  %8672 = vmatpush1.bf16.msra.mxu0 0
  %8673 = vmatprep.subr.bf16.mxu0 0
  %8674 = vmatpush1.bf16.msra.mxu0 0
  %8675 = vmatprep.subr.bf16.mxu0 0
  %8676 = vmatpush1.bf16.msra.mxu0 0
  %8677 = vmatprep.subr.bf16.mxu0 0
  %8678 = vmatpush1.bf16.msra.mxu0 0
  %8679 = vmatprep.subr.bf16.mxu0 0
  %8680 = vmatpush1.bf16.msra.mxu0 0
  %8681 = vmatprep.subr.bf16.mxu0 0
  %8682 = vmatpush1.bf16.msra.mxu0 0
  %8683 = vmatprep.subr.bf16.mxu0 0
  %8684 = vmatpush1.bf16.msra.mxu0 0
  %8685 = vmatprep.subr.bf16.mxu0 0
  %8686 = vmatpush1.bf16.msra.mxu0 0
  %8687 = vmatprep.mubr.bf16.mxu0 0
  %8688 = vmatmul.mubr.bf16.gmra.mrb[0].mxu0 %v8650
  %v8689 = vpop.f32.mrb[0].mxu0
  %v8690 = vadd.f32 0.0, %v8689
  %v8691 = vpop.f32.mrb[0].mxu0
  %v8692 = vpop.f32.mrb[0].mxu0
  %v8693 = vpop.f32.mrb[0].mxu0
  %8694 = vdwg.mxu0
  %8695 = vrot.lane.b32.xlu0 %v6454, 48
  %v8696 = vpop.permute.xlu0 %8695
  %v8698 = vsel %vm2351, %v8358, 0
  %v8701 = vsel %vm2355, %v8696, 0
  %8703 = vmatprep.subr.bf16.mxu0 0
  %8704 = vmatpush1.bf16.msra.mxu0 %v8701
  %8705 = vmatprep.subr.bf16.mxu0 0
  %8706 = vmatpush1.bf16.msra.mxu0 0
  %8707 = vmatprep.subr.bf16.mxu0 0
  %8708 = vmatpush1.bf16.msra.mxu0 0
  %8709 = vmatprep.subr.bf16.mxu0 0
  %8710 = vmatpush1.bf16.msra.mxu0 0
  %8711 = vmatprep.subr.bf16.mxu0 0
  %8712 = vmatpush1.bf16.msra.mxu0 0
  %8713 = vmatprep.subr.bf16.mxu0 0
  %8714 = vmatpush1.bf16.msra.mxu0 0
  %8715 = vmatprep.subr.bf16.mxu0 0
  %8716 = vmatpush1.bf16.msra.mxu0 0
  %8717 = vmatprep.subr.bf16.mxu0 0
  %8718 = vmatpush1.bf16.msra.mxu0 0
  %8719 = vmatprep.subr.bf16.mxu0 0
  %8720 = vmatpush1.bf16.msra.mxu0 0
  %8721 = vmatprep.subr.bf16.mxu0 0
  %8722 = vmatpush1.bf16.msra.mxu0 0
  %8723 = vmatprep.subr.bf16.mxu0 0
  %8724 = vmatpush1.bf16.msra.mxu0 0
  %8725 = vmatprep.subr.bf16.mxu0 0
  %8726 = vmatpush1.bf16.msra.mxu0 0
  %8727 = vmatprep.subr.bf16.mxu0 0
  %8728 = vmatpush1.bf16.msra.mxu0 0
  %8729 = vmatprep.subr.bf16.mxu0 0
  %8730 = vmatpush1.bf16.msra.mxu0 0
  %8731 = vmatprep.subr.bf16.mxu0 0
  %8732 = vmatpush1.bf16.msra.mxu0 0
  %8733 = vmatprep.subr.bf16.mxu0 0
  %8734 = vmatpush1.bf16.msra.mxu0 0
  %8735 = vmatprep.mubr.bf16.mxu0 0
  %8736 = vmatmul.mubr.bf16.gmra.mrb[0].mxu0 %v8698
  %v8737 = vpop.f32.mrb[0].mxu0
  %v8738 = vadd.f32 0.0, %v8737
  %v8739 = vpop.f32.mrb[0].mxu0
  %v8740 = vpop.f32.mrb[0].mxu0
  %v8741 = vpop.f32.mrb[0].mxu0
  %8742 = vdwg.mxu0
  %8743 = vrot.lane.b32.xlu0 %v6020, 104
  %v8744 = vpop.permute.xlu0 %8743
  %8745 = vrot.lane.b32.xlu0 %v6020, 72
  %v8746 = vpop.permute.xlu0 %8745
  %v8748 = vsel %vm1771, %v8744, 0
  %v8751 = vsel %vm1771, %v8746, 0
  %8753 = vmatprep.subr.bf16.mxu0 0
  %8754 = vmatpush1.bf16.xpose.msra.mxu0 %v8751
  %8755 = vmatprep.subr.bf16.mxu0 0
  %8756 = vmatpush1.bf16.xpose.msra.mxu0 0
  %8757 = vmatprep.subr.bf16.mxu0 0
  %8758 = vmatpush1.bf16.xpose.msra.mxu0 0
  %8759 = vmatprep.subr.bf16.mxu0 0
  %8760 = vmatpush1.bf16.xpose.msra.mxu0 0
  %8761 = vmatprep.subr.bf16.mxu0 0
  %8762 = vmatpush1.bf16.xpose.msra.mxu0 0
  %8763 = vmatprep.subr.bf16.mxu0 0
  %8764 = vmatpush1.bf16.xpose.msra.mxu0 0
  %8765 = vmatprep.subr.bf16.mxu0 0
  %8766 = vmatpush1.bf16.xpose.msra.mxu0 0
  %8767 = vmatprep.subr.bf16.mxu0 0
  %8768 = vmatpush1.bf16.xpose.msra.mxu0 0
  %8769 = vmatprep.subr.bf16.mxu0 0
  %8770 = vmatpush1.bf16.xpose.msra.mxu0 0
  %8771 = vmatprep.subr.bf16.mxu0 0
  %8772 = vmatpush1.bf16.xpose.msra.mxu0 0
  %8773 = vmatprep.subr.bf16.mxu0 0
  %8774 = vmatpush1.bf16.xpose.msra.mxu0 0
  %8775 = vmatprep.subr.bf16.mxu0 0
  %8776 = vmatpush1.bf16.xpose.msra.mxu0 0
  %8777 = vmatprep.subr.bf16.mxu0 0
  %8778 = vmatpush1.bf16.xpose.msra.mxu0 0
  %8779 = vmatprep.subr.bf16.mxu0 0
  %8780 = vmatpush1.bf16.xpose.msra.mxu0 0
  %8781 = vmatprep.subr.bf16.mxu0 0
  %8782 = vmatpush1.bf16.xpose.msra.mxu0 0
  %8783 = vmatprep.subr.bf16.mxu0 0
  %8784 = vmatpush1.bf16.xpose.msra.mxu0 0
  %8785 = vmatprep.mubr.bf16.mxu0 0
  %8786 = vmatmul.mubr.bf16.gmra.mrb[0].mxu0 %v8748
  %v8787 = vpop.f32.mrb[0].mxu0
  %v8788 = vadd.f32 0.0, %v8787
  %v8789 = vpop.f32.mrb[0].mxu0
  %v8790 = vpop.f32.mrb[0].mxu0
  %v8791 = vpop.f32.mrb[0].mxu0
  %8792 = vdwg.mxu0
  %8793 = vrot.lane.b32.xlu0 %v6082, 104
  %v8794 = vpop.permute.xlu0 %8793
  %8795 = vrot.lane.b32.xlu0 %v6082, 72
  %v8796 = vpop.permute.xlu0 %8795
  %v8798 = vsel %vm1771, %v8794, 0
  %v8801 = vsel %vm1771, %v8796, 0
  %8803 = vmatprep.subr.bf16.mxu0 0
  %8804 = vmatpush1.bf16.xpose.msra.mxu0 %v8801
  %8805 = vmatprep.subr.bf16.mxu0 0
  %8806 = vmatpush1.bf16.xpose.msra.mxu0 0
  %8807 = vmatprep.subr.bf16.mxu0 0
  %8808 = vmatpush1.bf16.xpose.msra.mxu0 0
  %8809 = vmatprep.subr.bf16.mxu0 0
  %8810 = vmatpush1.bf16.xpose.msra.mxu0 0
  %8811 = vmatprep.subr.bf16.mxu0 0
  %8812 = vmatpush1.bf16.xpose.msra.mxu0 0
  %8813 = vmatprep.subr.bf16.mxu0 0
  %8814 = vmatpush1.bf16.xpose.msra.mxu0 0
  %8815 = vmatprep.subr.bf16.mxu0 0
  %8816 = vmatpush1.bf16.xpose.msra.mxu0 0
  %8817 = vmatprep.subr.bf16.mxu0 0
  %8818 = vmatpush1.bf16.xpose.msra.mxu0 0
  %8819 = vmatprep.subr.bf16.mxu0 0
  %8820 = vmatpush1.bf16.xpose.msra.mxu0 0
  %8821 = vmatprep.subr.bf16.mxu0 0
  %8822 = vmatpush1.bf16.xpose.msra.mxu0 0
  %8823 = vmatprep.subr.bf16.mxu0 0
  %8824 = vmatpush1.bf16.xpose.msra.mxu0 0
  %8825 = vmatprep.subr.bf16.mxu0 0
  %8826 = vmatpush1.bf16.xpose.msra.mxu0 0
  %8827 = vmatprep.subr.bf16.mxu0 0
  %8828 = vmatpush1.bf16.xpose.msra.mxu0 0
  %8829 = vmatprep.subr.bf16.mxu0 0
  %8830 = vmatpush1.bf16.xpose.msra.mxu0 0
  %8831 = vmatprep.subr.bf16.mxu0 0
  %8832 = vmatpush1.bf16.xpose.msra.mxu0 0
  %8833 = vmatprep.subr.bf16.mxu0 0
  %8834 = vmatpush1.bf16.xpose.msra.mxu0 0
  %8835 = vmatprep.mubr.bf16.mxu0 0
  %8836 = vmatmul.mubr.bf16.gmra.mrb[0].mxu0 %v8798
  %v8837 = vpop.f32.mrb[0].mxu0
  %v8838 = vadd.f32 0.0, %v8837
  %v8839 = vpop.f32.mrb[0].mxu0
  %v8840 = vpop.f32.mrb[0].mxu0
  %v8841 = vpop.f32.mrb[0].mxu0
  %8842 = vdwg.mxu0
  %8843 = vrot.lane.b32.xlu0 %v6144, 104
  %v8844 = vpop.permute.xlu0 %8843
  %8845 = vrot.lane.b32.xlu0 %v6144, 72
  %v8846 = vpop.permute.xlu0 %8845
  %v8848 = vsel %vm1771, %v8844, 0
  %v8851 = vsel %vm1771, %v8846, 0
  %8853 = vmatprep.subr.bf16.mxu0 0
  %8854 = vmatpush1.bf16.xpose.msra.mxu0 %v8851
  %8855 = vmatprep.subr.bf16.mxu0 0
  %8856 = vmatpush1.bf16.xpose.msra.mxu0 0
  %8857 = vmatprep.subr.bf16.mxu0 0
  %8858 = vmatpush1.bf16.xpose.msra.mxu0 0
  %8859 = vmatprep.subr.bf16.mxu0 0
  %8860 = vmatpush1.bf16.xpose.msra.mxu0 0
  %8861 = vmatprep.subr.bf16.mxu0 0
  %8862 = vmatpush1.bf16.xpose.msra.mxu0 0
  %8863 = vmatprep.subr.bf16.mxu0 0
  %8864 = vmatpush1.bf16.xpose.msra.mxu0 0
  %8865 = vmatprep.subr.bf16.mxu0 0
  %8866 = vmatpush1.bf16.xpose.msra.mxu0 0
  %8867 = vmatprep.subr.bf16.mxu0 0
  %8868 = vmatpush1.bf16.xpose.msra.mxu0 0
  %8869 = vmatprep.subr.bf16.mxu0 0
  %8870 = vmatpush1.bf16.xpose.msra.mxu0 0
  %8871 = vmatprep.subr.bf16.mxu0 0
  %8872 = vmatpush1.bf16.xpose.msra.mxu0 0
  %8873 = vmatprep.subr.bf16.mxu0 0
  %8874 = vmatpush1.bf16.xpose.msra.mxu0 0
  %8875 = vmatprep.subr.bf16.mxu0 0
  %8876 = vmatpush1.bf16.xpose.msra.mxu0 0
  %8877 = vmatprep.subr.bf16.mxu0 0
  %8878 = vmatpush1.bf16.xpose.msra.mxu0 0
  %8879 = vmatprep.subr.bf16.mxu0 0
  %8880 = vmatpush1.bf16.xpose.msra.mxu0 0
  %8881 = vmatprep.subr.bf16.mxu0 0
  %8882 = vmatpush1.bf16.xpose.msra.mxu0 0
  %8883 = vmatprep.subr.bf16.mxu0 0
  %8884 = vmatpush1.bf16.xpose.msra.mxu0 0
  %8885 = vmatprep.mubr.bf16.mxu0 0
  %8886 = vmatmul.mubr.bf16.gmra.mrb[0].mxu0 %v8848
  %v8887 = vpop.f32.mrb[0].mxu0
  %v8888 = vadd.f32 0.0, %v8887
  %v8889 = vpop.f32.mrb[0].mxu0
  %v8890 = vpop.f32.mrb[0].mxu0
  %v8891 = vpop.f32.mrb[0].mxu0
  %8892 = vdwg.mxu0
  %8893 = vrot.lane.b32.xlu0 %v6206, 104
  %v8894 = vpop.permute.xlu0 %8893
  %8895 = vrot.lane.b32.xlu0 %v6206, 72
  %v8896 = vpop.permute.xlu0 %8895
  %v8898 = vsel %vm1771, %v8894, 0
  %v8901 = vsel %vm1771, %v8896, 0
  %8903 = vmatprep.subr.bf16.mxu0 0
  %8904 = vmatpush1.bf16.xpose.msra.mxu0 %v8901
  %8905 = vmatprep.subr.bf16.mxu0 0
  %8906 = vmatpush1.bf16.xpose.msra.mxu0 0
  %8907 = vmatprep.subr.bf16.mxu0 0
  %8908 = vmatpush1.bf16.xpose.msra.mxu0 0
  %8909 = vmatprep.subr.bf16.mxu0 0
  %8910 = vmatpush1.bf16.xpose.msra.mxu0 0
  %8911 = vmatprep.subr.bf16.mxu0 0
  %8912 = vmatpush1.bf16.xpose.msra.mxu0 0
  %8913 = vmatprep.subr.bf16.mxu0 0
  %8914 = vmatpush1.bf16.xpose.msra.mxu0 0
  %8915 = vmatprep.subr.bf16.mxu0 0
  %8916 = vmatpush1.bf16.xpose.msra.mxu0 0
  %8917 = vmatprep.subr.bf16.mxu0 0
  %8918 = vmatpush1.bf16.xpose.msra.mxu0 0
  %8919 = vmatprep.subr.bf16.mxu0 0
  %8920 = vmatpush1.bf16.xpose.msra.mxu0 0
  %8921 = vmatprep.subr.bf16.mxu0 0
  %8922 = vmatpush1.bf16.xpose.msra.mxu0 0
  %8923 = vmatprep.subr.bf16.mxu0 0
  %8924 = vmatpush1.bf16.xpose.msra.mxu0 0
  %8925 = vmatprep.subr.bf16.mxu0 0
  %8926 = vmatpush1.bf16.xpose.msra.mxu0 0
  %8927 = vmatprep.subr.bf16.mxu0 0
  %8928 = vmatpush1.bf16.xpose.msra.mxu0 0
  %8929 = vmatprep.subr.bf16.mxu0 0
  %8930 = vmatpush1.bf16.xpose.msra.mxu0 0
  %8931 = vmatprep.subr.bf16.mxu0 0
  %8932 = vmatpush1.bf16.xpose.msra.mxu0 0
  %8933 = vmatprep.subr.bf16.mxu0 0
  %8934 = vmatpush1.bf16.xpose.msra.mxu0 0
  %8935 = vmatprep.mubr.bf16.mxu0 0
  %8936 = vmatmul.mubr.bf16.gmra.mrb[0].mxu0 %v8898
  %v8937 = vpop.f32.mrb[0].mxu0
  %v8938 = vadd.f32 0.0, %v8937
  %v8939 = vpop.f32.mrb[0].mxu0
  %v8940 = vpop.f32.mrb[0].mxu0
  %v8941 = vpop.f32.mrb[0].mxu0
  %8942 = vdwg.mxu0
  %8943 = vrot.lane.b32.xlu0 %v6268, 104
  %v8944 = vpop.permute.xlu0 %8943
  %8945 = vrot.lane.b32.xlu0 %v6268, 72
  %v8946 = vpop.permute.xlu0 %8945
  %v8948 = vsel %vm1771, %v8944, 0
  %v8951 = vsel %vm1771, %v8946, 0
  %8953 = vmatprep.subr.bf16.mxu0 0
  %8954 = vmatpush1.bf16.xpose.msra.mxu0 %v8951
  %8955 = vmatprep.subr.bf16.mxu0 0
  %8956 = vmatpush1.bf16.xpose.msra.mxu0 0
  %8957 = vmatprep.subr.bf16.mxu0 0
  %8958 = vmatpush1.bf16.xpose.msra.mxu0 0
  %8959 = vmatprep.subr.bf16.mxu0 0
  %8960 = vmatpush1.bf16.xpose.msra.mxu0 0
  %8961 = vmatprep.subr.bf16.mxu0 0
  %8962 = vmatpush1.bf16.xpose.msra.mxu0 0
  %8963 = vmatprep.subr.bf16.mxu0 0
  %8964 = vmatpush1.bf16.xpose.msra.mxu0 0
  %8965 = vmatprep.subr.bf16.mxu0 0
  %8966 = vmatpush1.bf16.xpose.msra.mxu0 0
  %8967 = vmatprep.subr.bf16.mxu0 0
  %8968 = vmatpush1.bf16.xpose.msra.mxu0 0
  %8969 = vmatprep.subr.bf16.mxu0 0
  %8970 = vmatpush1.bf16.xpose.msra.mxu0 0
  %8971 = vmatprep.subr.bf16.mxu0 0
  %8972 = vmatpush1.bf16.xpose.msra.mxu0 0
  %8973 = vmatprep.subr.bf16.mxu0 0
  %8974 = vmatpush1.bf16.xpose.msra.mxu0 0
  %8975 = vmatprep.subr.bf16.mxu0 0
  %8976 = vmatpush1.bf16.xpose.msra.mxu0 0
  %8977 = vmatprep.subr.bf16.mxu0 0
  %8978 = vmatpush1.bf16.xpose.msra.mxu0 0
  %8979 = vmatprep.subr.bf16.mxu0 0
  %8980 = vmatpush1.bf16.xpose.msra.mxu0 0
  %8981 = vmatprep.subr.bf16.mxu0 0
  %8982 = vmatpush1.bf16.xpose.msra.mxu0 0
  %8983 = vmatprep.subr.bf16.mxu0 0
  %8984 = vmatpush1.bf16.xpose.msra.mxu0 0
  %8985 = vmatprep.mubr.bf16.mxu0 0
  %8986 = vmatmul.mubr.bf16.gmra.mrb[0].mxu0 %v8948
  %v8987 = vpop.f32.mrb[0].mxu0
  %v8988 = vadd.f32 0.0, %v8987
  %v8989 = vpop.f32.mrb[0].mxu0
  %v8990 = vpop.f32.mrb[0].mxu0
  %v8991 = vpop.f32.mrb[0].mxu0
  %8992 = vdwg.mxu0
  %8993 = vrot.lane.b32.xlu0 %v6330, 104
  %v8994 = vpop.permute.xlu0 %8993
  %8995 = vrot.lane.b32.xlu0 %v6330, 72
  %v8996 = vpop.permute.xlu0 %8995
  %v8998 = vsel %vm1771, %v8994, 0
  %v9001 = vsel %vm1771, %v8996, 0
  %9003 = vmatprep.subr.bf16.mxu0 0
  %9004 = vmatpush1.bf16.xpose.msra.mxu0 %v9001
  %9005 = vmatprep.subr.bf16.mxu0 0
  %9006 = vmatpush1.bf16.xpose.msra.mxu0 0
  %9007 = vmatprep.subr.bf16.mxu0 0
  %9008 = vmatpush1.bf16.xpose.msra.mxu0 0
  %9009 = vmatprep.subr.bf16.mxu0 0
  %9010 = vmatpush1.bf16.xpose.msra.mxu0 0
  %9011 = vmatprep.subr.bf16.mxu0 0
  %9012 = vmatpush1.bf16.xpose.msra.mxu0 0
  %9013 = vmatprep.subr.bf16.mxu0 0
  %9014 = vmatpush1.bf16.xpose.msra.mxu0 0
  %9015 = vmatprep.subr.bf16.mxu0 0
  %9016 = vmatpush1.bf16.xpose.msra.mxu0 0
  %9017 = vmatprep.subr.bf16.mxu0 0
  %9018 = vmatpush1.bf16.xpose.msra.mxu0 0
  %9019 = vmatprep.subr.bf16.mxu0 0
  %9020 = vmatpush1.bf16.xpose.msra.mxu0 0
  %9021 = vmatprep.subr.bf16.mxu0 0
  %9022 = vmatpush1.bf16.xpose.msra.mxu0 0
  %9023 = vmatprep.subr.bf16.mxu0 0
  %9024 = vmatpush1.bf16.xpose.msra.mxu0 0
  %9025 = vmatprep.subr.bf16.mxu0 0
  %9026 = vmatpush1.bf16.xpose.msra.mxu0 0
  %9027 = vmatprep.subr.bf16.mxu0 0
  %9028 = vmatpush1.bf16.xpose.msra.mxu0 0
  %9029 = vmatprep.subr.bf16.mxu0 0
  %9030 = vmatpush1.bf16.xpose.msra.mxu0 0
  %9031 = vmatprep.subr.bf16.mxu0 0
  %9032 = vmatpush1.bf16.xpose.msra.mxu0 0
  %9033 = vmatprep.subr.bf16.mxu0 0
  %9034 = vmatpush1.bf16.xpose.msra.mxu0 0
  %9035 = vmatprep.mubr.bf16.mxu0 0
  %9036 = vmatmul.mubr.bf16.gmra.mrb[0].mxu0 %v8998
  %v9037 = vpop.f32.mrb[0].mxu0
  %v9038 = vadd.f32 0.0, %v9037
  %v9039 = vpop.f32.mrb[0].mxu0
  %v9040 = vpop.f32.mrb[0].mxu0
  %v9041 = vpop.f32.mrb[0].mxu0
  %9042 = vdwg.mxu0
  %9043 = vrot.lane.b32.xlu0 %v6392, 104
  %v9044 = vpop.permute.xlu0 %9043
  %9045 = vrot.lane.b32.xlu0 %v6392, 72
  %v9046 = vpop.permute.xlu0 %9045
  %v9048 = vsel %vm1771, %v9044, 0
  %v9051 = vsel %vm1771, %v9046, 0
  %9053 = vmatprep.subr.bf16.mxu0 0
  %9054 = vmatpush1.bf16.xpose.msra.mxu0 %v9051
  %9055 = vmatprep.subr.bf16.mxu0 0
  %9056 = vmatpush1.bf16.xpose.msra.mxu0 0
  %9057 = vmatprep.subr.bf16.mxu0 0
  %9058 = vmatpush1.bf16.xpose.msra.mxu0 0
  %9059 = vmatprep.subr.bf16.mxu0 0
  %9060 = vmatpush1.bf16.xpose.msra.mxu0 0
  %9061 = vmatprep.subr.bf16.mxu0 0
  %9062 = vmatpush1.bf16.xpose.msra.mxu0 0
  %9063 = vmatprep.subr.bf16.mxu0 0
  %9064 = vmatpush1.bf16.xpose.msra.mxu0 0
  %9065 = vmatprep.subr.bf16.mxu0 0
  %9066 = vmatpush1.bf16.xpose.msra.mxu0 0
  %9067 = vmatprep.subr.bf16.mxu0 0
  %9068 = vmatpush1.bf16.xpose.msra.mxu0 0
  %9069 = vmatprep.subr.bf16.mxu0 0
  %9070 = vmatpush1.bf16.xpose.msra.mxu0 0
  %9071 = vmatprep.subr.bf16.mxu0 0
  %9072 = vmatpush1.bf16.xpose.msra.mxu0 0
  %9073 = vmatprep.subr.bf16.mxu0 0
  %9074 = vmatpush1.bf16.xpose.msra.mxu0 0
  %9075 = vmatprep.subr.bf16.mxu0 0
  %9076 = vmatpush1.bf16.xpose.msra.mxu0 0
  %9077 = vmatprep.subr.bf16.mxu0 0
  %9078 = vmatpush1.bf16.xpose.msra.mxu0 0
  %9079 = vmatprep.subr.bf16.mxu0 0
  %9080 = vmatpush1.bf16.xpose.msra.mxu0 0
  %9081 = vmatprep.subr.bf16.mxu0 0
  %9082 = vmatpush1.bf16.xpose.msra.mxu0 0
  %9083 = vmatprep.subr.bf16.mxu0 0
  %9084 = vmatpush1.bf16.xpose.msra.mxu0 0
  %9085 = vmatprep.mubr.bf16.mxu0 0
  %9086 = vmatmul.mubr.bf16.gmra.mrb[0].mxu0 %v9048
  %v9087 = vpop.f32.mrb[0].mxu0
  %v9088 = vadd.f32 0.0, %v9087
  %v9089 = vpop.f32.mrb[0].mxu0
  %v9090 = vpop.f32.mrb[0].mxu0
  %v9091 = vpop.f32.mrb[0].mxu0
  %9092 = vdwg.mxu0
  %9093 = vrot.lane.b32.xlu0 %v6454, 104
  %v9094 = vpop.permute.xlu0 %9093
  %9095 = vrot.lane.b32.xlu0 %v6454, 72
  %v9096 = vpop.permute.xlu0 %9095
  %v9098 = vsel %vm1771, %v9094, 0
  %v9101 = vsel %vm1771, %v9096, 0
  %9103 = vmatprep.subr.bf16.mxu0 0
  %9104 = vmatpush1.bf16.xpose.msra.mxu0 %v9101
  %9105 = vmatprep.subr.bf16.mxu0 0
  %9106 = vmatpush1.bf16.xpose.msra.mxu0 0
  %9107 = vmatprep.subr.bf16.mxu0 0
  %9108 = vmatpush1.bf16.xpose.msra.mxu0 0
  %9109 = vmatprep.subr.bf16.mxu0 0
  %9110 = vmatpush1.bf16.xpose.msra.mxu0 0
  %9111 = vmatprep.subr.bf16.mxu0 0
  %9112 = vmatpush1.bf16.xpose.msra.mxu0 0
  %9113 = vmatprep.subr.bf16.mxu0 0
  %9114 = vmatpush1.bf16.xpose.msra.mxu0 0
  %9115 = vmatprep.subr.bf16.mxu0 0
  %9116 = vmatpush1.bf16.xpose.msra.mxu0 0
  %9117 = vmatprep.subr.bf16.mxu0 0
  %9118 = vmatpush1.bf16.xpose.msra.mxu0 0
  %9119 = vmatprep.subr.bf16.mxu0 0
  %9120 = vmatpush1.bf16.xpose.msra.mxu0 0
  %9121 = vmatprep.subr.bf16.mxu0 0
  %9122 = vmatpush1.bf16.xpose.msra.mxu0 0
  %9123 = vmatprep.subr.bf16.mxu0 0
  %9124 = vmatpush1.bf16.xpose.msra.mxu0 0
  %9125 = vmatprep.subr.bf16.mxu0 0
  %9126 = vmatpush1.bf16.xpose.msra.mxu0 0
  %9127 = vmatprep.subr.bf16.mxu0 0
  %9128 = vmatpush1.bf16.xpose.msra.mxu0 0
  %9129 = vmatprep.subr.bf16.mxu0 0
  %9130 = vmatpush1.bf16.xpose.msra.mxu0 0
  %9131 = vmatprep.subr.bf16.mxu0 0
  %9132 = vmatpush1.bf16.xpose.msra.mxu0 0
  %9133 = vmatprep.subr.bf16.mxu0 0
  %9134 = vmatpush1.bf16.xpose.msra.mxu0 0
  %9135 = vmatprep.mubr.bf16.mxu0 0
  %9136 = vmatmul.mubr.bf16.gmra.mrb[0].mxu0 %v9098
  %v9137 = vpop.f32.mrb[0].mxu0
  %v9138 = vadd.f32 0.0, %v9137
  %v9139 = vpop.f32.mrb[0].mxu0
  %v9140 = vpop.f32.mrb[0].mxu0
  %v9141 = vpop.f32.mrb[0].mxu0
  %9142 = vdwg.mxu0
  %v9143 = vsel %vm2252, %v8788, -inf
  %9144 = vmax.xlane.f32.xlu0 %v9143
  %v9145 = vpop.xlane.xlu0 %9144
  %v9146 = vsel %vm2252, %v8838, -inf
  %9147 = vmax.xlane.f32.xlu0 %v9146
  %v9148 = vpop.xlane.xlu0 %9147
  %v9149 = vsel %vm2252, %v8888, -inf
  %9150 = vmax.xlane.f32.xlu0 %v9149
  %v9151 = vpop.xlane.xlu0 %9150
  %v9152 = vsel %vm2252, %v8938, -inf
  %9153 = vmax.xlane.f32.xlu0 %v9152
  %v9154 = vpop.xlane.xlu0 %9153
  %v9155 = vsel %vm2252, %v8988, -inf
  %9156 = vmax.xlane.f32.xlu0 %v9155
  %v9157 = vpop.xlane.xlu0 %9156
  %v9158 = vsel %vm2252, %v9038, -inf
  %9159 = vmax.xlane.f32.xlu0 %v9158
  %v9160 = vpop.xlane.xlu0 %9159
  %v9161 = vsel %vm2252, %v9088, -inf
  %9162 = vmax.xlane.f32.xlu0 %v9161
  %v9163 = vpop.xlane.xlu0 %9162
  %v9164 = vsel %vm2252, %v9138, -inf
  %9165 = vmax.xlane.f32.xlu0 %v9164
  %v9166 = vpop.xlane.xlu0 %9165
  %v9167 = vsub.f32 %v8788, %v9145
  %v9168 = vsub.f32 %v8838, %v9148
  %v9169 = vsub.f32 %v8888, %v9151
  %v9170 = vsub.f32 %v8938, %v9154
  %v9171 = vsub.f32 %v8988, %v9157
  %v9172 = vsub.f32 %v9038, %v9160
  %v9173 = vsub.f32 %v9088, %v9163
  %v9174 = vsub.f32 %v9138, %v9166
  %v9175 = vmul.f32 %v9167, 1.442695
  %v9176 = vpow.pop %v9175
  %v9177 = vmul.f32 %v9168, 1.442695
  %v9178 = vpow.pop %v9177
  %v9179 = vmul.f32 %v9169, 1.442695
  %v9180 = vpow.pop %v9179
  %v9181 = vmul.f32 %v9170, 1.442695
  %v9182 = vpow.pop %v9181
  %v9183 = vmul.f32 %v9171, 1.442695
  %v9184 = vpow.pop %v9183
  %v9185 = vmul.f32 %v9172, 1.442695
  %v9186 = vpow.pop %v9185
  %v9187 = vmul.f32 %v9173, 1.442695
  %v9188 = vpow.pop %v9187
  %v9189 = vmul.f32 %v9174, 1.442695
  %v9190 = vpow.pop %v9189
  %v9191 = vsel %vm2252, %v9176, 0.0
  %9192 = vadd.xlane.f32.xlu0 %v9191
  %v9193 = vpop.xlane.xlu0 %9192
  %v9194 = vsel %vm2252, %v9178, 0.0
  %9195 = vadd.xlane.f32.xlu0 %v9194
  %v9196 = vpop.xlane.xlu0 %9195
  %v9197 = vsel %vm2252, %v9180, 0.0
  %9198 = vadd.xlane.f32.xlu0 %v9197
  %v9199 = vpop.xlane.xlu0 %9198
  %v9200 = vsel %vm2252, %v9182, 0.0
  %9201 = vadd.xlane.f32.xlu0 %v9200
  %v9202 = vpop.xlane.xlu0 %9201
  %v9203 = vsel %vm2252, %v9184, 0.0
  %9204 = vadd.xlane.f32.xlu0 %v9203
  %v9205 = vpop.xlane.xlu0 %9204
  %v9206 = vsel %vm2252, %v9186, 0.0
  %9207 = vadd.xlane.f32.xlu0 %v9206
  %v9208 = vpop.xlane.xlu0 %9207
  %v9209 = vsel %vm2252, %v9188, 0.0
  %9210 = vadd.xlane.f32.xlu0 %v9209
  %v9211 = vpop.xlane.xlu0 %9210
  %v9212 = vsel %vm2252, %v9190, 0.0
  %9213 = vadd.xlane.f32.xlu0 %v9212
  %v9214 = vpop.xlane.xlu0 %9213
  %v9215 = vrcp.pop %v9193
  %v9216 = vmul.f32 %v9176, %v9215
  %v9217 = vrcp.pop %v9196
  %v9218 = vmul.f32 %v9178, %v9217
  %v9219 = vrcp.pop %v9199
  %v9220 = vmul.f32 %v9180, %v9219
  %v9221 = vrcp.pop %v9202
  %v9222 = vmul.f32 %v9182, %v9221
  %v9223 = vrcp.pop %v9205
  %v9224 = vmul.f32 %v9184, %v9223
  %v9225 = vrcp.pop %v9208
  %v9226 = vmul.f32 %v9186, %v9225
  %v9227 = vrcp.pop %v9211
  %v9228 = vmul.f32 %v9188, %v9227
  %v9229 = vrcp.pop %v9214
  %v9230 = vmul.f32 %v9190, %v9229
  %v9231 = vpack.c.bf16 %v9216, %v9216
  %v9232 = vpack.c.bf16 %v9218, %v9218
  %v9233 = vpack.c.bf16 %v9220, %v9220
  %v9234 = vpack.c.bf16 %v9222, %v9222
  %v9235 = vpack.c.bf16 %v9224, %v9224
  %v9236 = vpack.c.bf16 %v9226, %v9226
  %v9237 = vpack.c.bf16 %v9228, %v9228
  %v9238 = vpack.c.bf16 %v9230, %v9230
  %9239 = vrot.lane.b32.xlu0 %v6020, 40
  %v9240 = vpop.permute.xlu0 %9239
  %v9242 = vsel %vm2351, %v9231, 0
  %v9245 = vsel %vm2355, %v9240, 0
  %9247 = vmatprep.subr.bf16.mxu0 0
  %9248 = vmatpush1.bf16.msra.mxu0 %v9245
  %9249 = vmatprep.subr.bf16.mxu0 0
  %9250 = vmatpush1.bf16.msra.mxu0 0
  %9251 = vmatprep.subr.bf16.mxu0 0
  %9252 = vmatpush1.bf16.msra.mxu0 0
  %9253 = vmatprep.subr.bf16.mxu0 0
  %9254 = vmatpush1.bf16.msra.mxu0 0
  %9255 = vmatprep.subr.bf16.mxu0 0
  %9256 = vmatpush1.bf16.msra.mxu0 0
  %9257 = vmatprep.subr.bf16.mxu0 0
  %9258 = vmatpush1.bf16.msra.mxu0 0
  %9259 = vmatprep.subr.bf16.mxu0 0
  %9260 = vmatpush1.bf16.msra.mxu0 0
  %9261 = vmatprep.subr.bf16.mxu0 0
  %9262 = vmatpush1.bf16.msra.mxu0 0
  %9263 = vmatprep.subr.bf16.mxu0 0
  %9264 = vmatpush1.bf16.msra.mxu0 0
  %9265 = vmatprep.subr.bf16.mxu0 0
  %9266 = vmatpush1.bf16.msra.mxu0 0
  %9267 = vmatprep.subr.bf16.mxu0 0
  %9268 = vmatpush1.bf16.msra.mxu0 0
  %9269 = vmatprep.subr.bf16.mxu0 0
  %9270 = vmatpush1.bf16.msra.mxu0 0
  %9271 = vmatprep.subr.bf16.mxu0 0
  %9272 = vmatpush1.bf16.msra.mxu0 0
  %9273 = vmatprep.subr.bf16.mxu0 0
  %9274 = vmatpush1.bf16.msra.mxu0 0
  %9275 = vmatprep.subr.bf16.mxu0 0
  %9276 = vmatpush1.bf16.msra.mxu0 0
  %9277 = vmatprep.subr.bf16.mxu0 0
  %9278 = vmatpush1.bf16.msra.mxu0 0
  %9279 = vmatprep.mubr.bf16.mxu0 0
  %9280 = vmatmul.mubr.bf16.gmra.mrb[0].mxu0 %v9242
  %v9281 = vpop.f32.mrb[0].mxu0
  %v9282 = vadd.f32 0.0, %v9281
  %v9283 = vpop.f32.mrb[0].mxu0
  %v9284 = vpop.f32.mrb[0].mxu0
  %v9285 = vpop.f32.mrb[0].mxu0
  %9286 = vdwg.mxu0
  %9287 = vrot.lane.b32.xlu0 %v6082, 40
  %v9288 = vpop.permute.xlu0 %9287
  %v9290 = vsel %vm2351, %v9232, 0
  %v9293 = vsel %vm2355, %v9288, 0
  %9295 = vmatprep.subr.bf16.mxu0 0
  %9296 = vmatpush1.bf16.msra.mxu0 %v9293
  %9297 = vmatprep.subr.bf16.mxu0 0
  %9298 = vmatpush1.bf16.msra.mxu0 0
  %9299 = vmatprep.subr.bf16.mxu0 0
  %9300 = vmatpush1.bf16.msra.mxu0 0
  %9301 = vmatprep.subr.bf16.mxu0 0
  %9302 = vmatpush1.bf16.msra.mxu0 0
  %9303 = vmatprep.subr.bf16.mxu0 0
  %9304 = vmatpush1.bf16.msra.mxu0 0
  %9305 = vmatprep.subr.bf16.mxu0 0
  %9306 = vmatpush1.bf16.msra.mxu0 0
  %9307 = vmatprep.subr.bf16.mxu0 0
  %9308 = vmatpush1.bf16.msra.mxu0 0
  %9309 = vmatprep.subr.bf16.mxu0 0
  %9310 = vmatpush1.bf16.msra.mxu0 0
  %9311 = vmatprep.subr.bf16.mxu0 0
  %9312 = vmatpush1.bf16.msra.mxu0 0
  %9313 = vmatprep.subr.bf16.mxu0 0
  %9314 = vmatpush1.bf16.msra.mxu0 0
  %9315 = vmatprep.subr.bf16.mxu0 0
  %9316 = vmatpush1.bf16.msra.mxu0 0
  %9317 = vmatprep.subr.bf16.mxu0 0
  %9318 = vmatpush1.bf16.msra.mxu0 0
  %9319 = vmatprep.subr.bf16.mxu0 0
  %9320 = vmatpush1.bf16.msra.mxu0 0
  %9321 = vmatprep.subr.bf16.mxu0 0
  %9322 = vmatpush1.bf16.msra.mxu0 0
  %9323 = vmatprep.subr.bf16.mxu0 0
  %9324 = vmatpush1.bf16.msra.mxu0 0
  %9325 = vmatprep.subr.bf16.mxu0 0
  %9326 = vmatpush1.bf16.msra.mxu0 0
  %9327 = vmatprep.mubr.bf16.mxu0 0
  %9328 = vmatmul.mubr.bf16.gmra.mrb[0].mxu0 %v9290
  %v9329 = vpop.f32.mrb[0].mxu0
  %v9330 = vadd.f32 0.0, %v9329
  %v9331 = vpop.f32.mrb[0].mxu0
  %v9332 = vpop.f32.mrb[0].mxu0
  %v9333 = vpop.f32.mrb[0].mxu0
  %9334 = vdwg.mxu0
  %9335 = vrot.lane.b32.xlu0 %v6144, 40
  %v9336 = vpop.permute.xlu0 %9335
  %v9338 = vsel %vm2351, %v9233, 0
  %v9341 = vsel %vm2355, %v9336, 0
  %9343 = vmatprep.subr.bf16.mxu0 0
  %9344 = vmatpush1.bf16.msra.mxu0 %v9341
  %9345 = vmatprep.subr.bf16.mxu0 0
  %9346 = vmatpush1.bf16.msra.mxu0 0
  %9347 = vmatprep.subr.bf16.mxu0 0
  %9348 = vmatpush1.bf16.msra.mxu0 0
  %9349 = vmatprep.subr.bf16.mxu0 0
  %9350 = vmatpush1.bf16.msra.mxu0 0
  %9351 = vmatprep.subr.bf16.mxu0 0
  %9352 = vmatpush1.bf16.msra.mxu0 0
  %9353 = vmatprep.subr.bf16.mxu0 0
  %9354 = vmatpush1.bf16.msra.mxu0 0
  %9355 = vmatprep.subr.bf16.mxu0 0
  %9356 = vmatpush1.bf16.msra.mxu0 0
  %9357 = vmatprep.subr.bf16.mxu0 0
  %9358 = vmatpush1.bf16.msra.mxu0 0
  %9359 = vmatprep.subr.bf16.mxu0 0
  %9360 = vmatpush1.bf16.msra.mxu0 0
  %9361 = vmatprep.subr.bf16.mxu0 0
  %9362 = vmatpush1.bf16.msra.mxu0 0
  %9363 = vmatprep.subr.bf16.mxu0 0
  %9364 = vmatpush1.bf16.msra.mxu0 0
  %9365 = vmatprep.subr.bf16.mxu0 0
  %9366 = vmatpush1.bf16.msra.mxu0 0
  %9367 = vmatprep.subr.bf16.mxu0 0
  %9368 = vmatpush1.bf16.msra.mxu0 0
  %9369 = vmatprep.subr.bf16.mxu0 0
  %9370 = vmatpush1.bf16.msra.mxu0 0
  %9371 = vmatprep.subr.bf16.mxu0 0
  %9372 = vmatpush1.bf16.msra.mxu0 0
  %9373 = vmatprep.subr.bf16.mxu0 0
  %9374 = vmatpush1.bf16.msra.mxu0 0
  %9375 = vmatprep.mubr.bf16.mxu0 0
  %9376 = vmatmul.mubr.bf16.gmra.mrb[0].mxu0 %v9338
  %v9377 = vpop.f32.mrb[0].mxu0
  %v9378 = vadd.f32 0.0, %v9377
  %v9379 = vpop.f32.mrb[0].mxu0
  %v9380 = vpop.f32.mrb[0].mxu0
  %v9381 = vpop.f32.mrb[0].mxu0
  %9382 = vdwg.mxu0
  %9383 = vrot.lane.b32.xlu0 %v6206, 40
  %v9384 = vpop.permute.xlu0 %9383
  %v9386 = vsel %vm2351, %v9234, 0
  %v9389 = vsel %vm2355, %v9384, 0
  %9391 = vmatprep.subr.bf16.mxu0 0
  %9392 = vmatpush1.bf16.msra.mxu0 %v9389
  %9393 = vmatprep.subr.bf16.mxu0 0
  %9394 = vmatpush1.bf16.msra.mxu0 0
  %9395 = vmatprep.subr.bf16.mxu0 0
  %9396 = vmatpush1.bf16.msra.mxu0 0
  %9397 = vmatprep.subr.bf16.mxu0 0
  %9398 = vmatpush1.bf16.msra.mxu0 0
  %9399 = vmatprep.subr.bf16.mxu0 0
  %9400 = vmatpush1.bf16.msra.mxu0 0
  %9401 = vmatprep.subr.bf16.mxu0 0
  %9402 = vmatpush1.bf16.msra.mxu0 0
  %9403 = vmatprep.subr.bf16.mxu0 0
  %9404 = vmatpush1.bf16.msra.mxu0 0
  %9405 = vmatprep.subr.bf16.mxu0 0
  %9406 = vmatpush1.bf16.msra.mxu0 0
  %9407 = vmatprep.subr.bf16.mxu0 0
  %9408 = vmatpush1.bf16.msra.mxu0 0
  %9409 = vmatprep.subr.bf16.mxu0 0
  %9410 = vmatpush1.bf16.msra.mxu0 0
  %9411 = vmatprep.subr.bf16.mxu0 0
  %9412 = vmatpush1.bf16.msra.mxu0 0
  %9413 = vmatprep.subr.bf16.mxu0 0
  %9414 = vmatpush1.bf16.msra.mxu0 0
  %9415 = vmatprep.subr.bf16.mxu0 0
  %9416 = vmatpush1.bf16.msra.mxu0 0
  %9417 = vmatprep.subr.bf16.mxu0 0
  %9418 = vmatpush1.bf16.msra.mxu0 0
  %9419 = vmatprep.subr.bf16.mxu0 0
  %9420 = vmatpush1.bf16.msra.mxu0 0
  %9421 = vmatprep.subr.bf16.mxu0 0
  %9422 = vmatpush1.bf16.msra.mxu0 0
  %9423 = vmatprep.mubr.bf16.mxu0 0
  %9424 = vmatmul.mubr.bf16.gmra.mrb[0].mxu0 %v9386
  %v9425 = vpop.f32.mrb[0].mxu0
  %v9426 = vadd.f32 0.0, %v9425
  %v9427 = vpop.f32.mrb[0].mxu0
  %v9428 = vpop.f32.mrb[0].mxu0
  %v9429 = vpop.f32.mrb[0].mxu0
  %9430 = vdwg.mxu0
  %9431 = vrot.lane.b32.xlu0 %v6268, 40
  %v9432 = vpop.permute.xlu0 %9431
  %v9434 = vsel %vm2351, %v9235, 0
  %v9437 = vsel %vm2355, %v9432, 0
  %9439 = vmatprep.subr.bf16.mxu0 0
  %9440 = vmatpush1.bf16.msra.mxu0 %v9437
  %9441 = vmatprep.subr.bf16.mxu0 0
  %9442 = vmatpush1.bf16.msra.mxu0 0
  %9443 = vmatprep.subr.bf16.mxu0 0
  %9444 = vmatpush1.bf16.msra.mxu0 0
  %9445 = vmatprep.subr.bf16.mxu0 0
  %9446 = vmatpush1.bf16.msra.mxu0 0
  %9447 = vmatprep.subr.bf16.mxu0 0
  %9448 = vmatpush1.bf16.msra.mxu0 0
  %9449 = vmatprep.subr.bf16.mxu0 0
  %9450 = vmatpush1.bf16.msra.mxu0 0
  %9451 = vmatprep.subr.bf16.mxu0 0
  %9452 = vmatpush1.bf16.msra.mxu0 0
  %9453 = vmatprep.subr.bf16.mxu0 0
  %9454 = vmatpush1.bf16.msra.mxu0 0
  %9455 = vmatprep.subr.bf16.mxu0 0
  %9456 = vmatpush1.bf16.msra.mxu0 0
  %9457 = vmatprep.subr.bf16.mxu0 0
  %9458 = vmatpush1.bf16.msra.mxu0 0
  %9459 = vmatprep.subr.bf16.mxu0 0
  %9460 = vmatpush1.bf16.msra.mxu0 0
  %9461 = vmatprep.subr.bf16.mxu0 0
  %9462 = vmatpush1.bf16.msra.mxu0 0
  %9463 = vmatprep.subr.bf16.mxu0 0
  %9464 = vmatpush1.bf16.msra.mxu0 0
  %9465 = vmatprep.subr.bf16.mxu0 0
  %9466 = vmatpush1.bf16.msra.mxu0 0
  %9467 = vmatprep.subr.bf16.mxu0 0
  %9468 = vmatpush1.bf16.msra.mxu0 0
  %9469 = vmatprep.subr.bf16.mxu0 0
  %9470 = vmatpush1.bf16.msra.mxu0 0
  %9471 = vmatprep.mubr.bf16.mxu0 0
  %9472 = vmatmul.mubr.bf16.gmra.mrb[0].mxu0 %v9434
  %v9473 = vpop.f32.mrb[0].mxu0
  %v9474 = vadd.f32 0.0, %v9473
  %v9475 = vpop.f32.mrb[0].mxu0
  %v9476 = vpop.f32.mrb[0].mxu0
  %v9477 = vpop.f32.mrb[0].mxu0
  %9478 = vdwg.mxu0
  %9479 = vrot.lane.b32.xlu0 %v6330, 40
  %v9480 = vpop.permute.xlu0 %9479
  %v9482 = vsel %vm2351, %v9236, 0
  %v9485 = vsel %vm2355, %v9480, 0
  %9487 = vmatprep.subr.bf16.mxu0 0
  %9488 = vmatpush1.bf16.msra.mxu0 %v9485
  %9489 = vmatprep.subr.bf16.mxu0 0
  %9490 = vmatpush1.bf16.msra.mxu0 0
  %9491 = vmatprep.subr.bf16.mxu0 0
  %9492 = vmatpush1.bf16.msra.mxu0 0
  %9493 = vmatprep.subr.bf16.mxu0 0
  %9494 = vmatpush1.bf16.msra.mxu0 0
  %9495 = vmatprep.subr.bf16.mxu0 0
  %9496 = vmatpush1.bf16.msra.mxu0 0
  %9497 = vmatprep.subr.bf16.mxu0 0
  %9498 = vmatpush1.bf16.msra.mxu0 0
  %9499 = vmatprep.subr.bf16.mxu0 0
  %9500 = vmatpush1.bf16.msra.mxu0 0
  %9501 = vmatprep.subr.bf16.mxu0 0
  %9502 = vmatpush1.bf16.msra.mxu0 0
  %9503 = vmatprep.subr.bf16.mxu0 0
  %9504 = vmatpush1.bf16.msra.mxu0 0
  %9505 = vmatprep.subr.bf16.mxu0 0
  %9506 = vmatpush1.bf16.msra.mxu0 0
  %9507 = vmatprep.subr.bf16.mxu0 0
  %9508 = vmatpush1.bf16.msra.mxu0 0
  %9509 = vmatprep.subr.bf16.mxu0 0
  %9510 = vmatpush1.bf16.msra.mxu0 0
  %9511 = vmatprep.subr.bf16.mxu0 0
  %9512 = vmatpush1.bf16.msra.mxu0 0
  %9513 = vmatprep.subr.bf16.mxu0 0
  %9514 = vmatpush1.bf16.msra.mxu0 0
  %9515 = vmatprep.subr.bf16.mxu0 0
  %9516 = vmatpush1.bf16.msra.mxu0 0
  %9517 = vmatprep.subr.bf16.mxu0 0
  %9518 = vmatpush1.bf16.msra.mxu0 0
  %9519 = vmatprep.mubr.bf16.mxu0 0
  %9520 = vmatmul.mubr.bf16.gmra.mrb[0].mxu0 %v9482
  %v9521 = vpop.f32.mrb[0].mxu0
  %v9522 = vadd.f32 0.0, %v9521
  %v9523 = vpop.f32.mrb[0].mxu0
  %v9524 = vpop.f32.mrb[0].mxu0
  %v9525 = vpop.f32.mrb[0].mxu0
  %9526 = vdwg.mxu0
  %9527 = vrot.lane.b32.xlu0 %v6392, 40
  %v9528 = vpop.permute.xlu0 %9527
  %v9530 = vsel %vm2351, %v9237, 0
  %v9533 = vsel %vm2355, %v9528, 0
  %9535 = vmatprep.subr.bf16.mxu0 0
  %9536 = vmatpush1.bf16.msra.mxu0 %v9533
  %9537 = vmatprep.subr.bf16.mxu0 0
  %9538 = vmatpush1.bf16.msra.mxu0 0
  %9539 = vmatprep.subr.bf16.mxu0 0
  %9540 = vmatpush1.bf16.msra.mxu0 0
  %9541 = vmatprep.subr.bf16.mxu0 0
  %9542 = vmatpush1.bf16.msra.mxu0 0
  %9543 = vmatprep.subr.bf16.mxu0 0
  %9544 = vmatpush1.bf16.msra.mxu0 0
  %9545 = vmatprep.subr.bf16.mxu0 0
  %9546 = vmatpush1.bf16.msra.mxu0 0
  %9547 = vmatprep.subr.bf16.mxu0 0
  %9548 = vmatpush1.bf16.msra.mxu0 0
  %9549 = vmatprep.subr.bf16.mxu0 0
  %9550 = vmatpush1.bf16.msra.mxu0 0
  %9551 = vmatprep.subr.bf16.mxu0 0
  %9552 = vmatpush1.bf16.msra.mxu0 0
  %9553 = vmatprep.subr.bf16.mxu0 0
  %9554 = vmatpush1.bf16.msra.mxu0 0
  %9555 = vmatprep.subr.bf16.mxu0 0
  %9556 = vmatpush1.bf16.msra.mxu0 0
  %9557 = vmatprep.subr.bf16.mxu0 0
  %9558 = vmatpush1.bf16.msra.mxu0 0
  %9559 = vmatprep.subr.bf16.mxu0 0
  %9560 = vmatpush1.bf16.msra.mxu0 0
  %9561 = vmatprep.subr.bf16.mxu0 0
  %9562 = vmatpush1.bf16.msra.mxu0 0
  %9563 = vmatprep.subr.bf16.mxu0 0
  %9564 = vmatpush1.bf16.msra.mxu0 0
  %9565 = vmatprep.subr.bf16.mxu0 0
  %9566 = vmatpush1.bf16.msra.mxu0 0
  %9567 = vmatprep.mubr.bf16.mxu0 0
  %9568 = vmatmul.mubr.bf16.gmra.mrb[0].mxu0 %v9530
  %v9569 = vpop.f32.mrb[0].mxu0
  %v9570 = vadd.f32 0.0, %v9569
  %v9571 = vpop.f32.mrb[0].mxu0
  %v9572 = vpop.f32.mrb[0].mxu0
  %v9573 = vpop.f32.mrb[0].mxu0
  %9574 = vdwg.mxu0
  %9575 = vrot.lane.b32.xlu0 %v6454, 40
  %v9576 = vpop.permute.xlu0 %9575
  %v9578 = vsel %vm2351, %v9238, 0
  %v9581 = vsel %vm2355, %v9576, 0
  %9583 = vmatprep.subr.bf16.mxu0 0
  %9584 = vmatpush1.bf16.msra.mxu0 %v9581
  %9585 = vmatprep.subr.bf16.mxu0 0
  %9586 = vmatpush1.bf16.msra.mxu0 0
  %9587 = vmatprep.subr.bf16.mxu0 0
  %9588 = vmatpush1.bf16.msra.mxu0 0
  %9589 = vmatprep.subr.bf16.mxu0 0
  %9590 = vmatpush1.bf16.msra.mxu0 0
  %9591 = vmatprep.subr.bf16.mxu0 0
  %9592 = vmatpush1.bf16.msra.mxu0 0
  %9593 = vmatprep.subr.bf16.mxu0 0
  %9594 = vmatpush1.bf16.msra.mxu0 0
  %9595 = vmatprep.subr.bf16.mxu0 0
  %9596 = vmatpush1.bf16.msra.mxu0 0
  %9597 = vmatprep.subr.bf16.mxu0 0
  %9598 = vmatpush1.bf16.msra.mxu0 0
  %9599 = vmatprep.subr.bf16.mxu0 0
  %9600 = vmatpush1.bf16.msra.mxu0 0
  %9601 = vmatprep.subr.bf16.mxu0 0
  %9602 = vmatpush1.bf16.msra.mxu0 0
  %9603 = vmatprep.subr.bf16.mxu0 0
  %9604 = vmatpush1.bf16.msra.mxu0 0
  %9605 = vmatprep.subr.bf16.mxu0 0
  %9606 = vmatpush1.bf16.msra.mxu0 0
  %9607 = vmatprep.subr.bf16.mxu0 0
  %9608 = vmatpush1.bf16.msra.mxu0 0
  %9609 = vmatprep.subr.bf16.mxu0 0
  %9610 = vmatpush1.bf16.msra.mxu0 0
  %9611 = vmatprep.subr.bf16.mxu0 0
  %9612 = vmatpush1.bf16.msra.mxu0 0
  %9613 = vmatprep.subr.bf16.mxu0 0
  %9614 = vmatpush1.bf16.msra.mxu0 0
  %9615 = vmatprep.mubr.bf16.mxu0 0
  %9616 = vmatmul.mubr.bf16.gmra.mrb[0].mxu0 %v9578
  %v9617 = vpop.f32.mrb[0].mxu0
  %v9618 = vadd.f32 0.0, %v9617
  %v9619 = vpop.f32.mrb[0].mxu0
  %v9620 = vpop.f32.mrb[0].mxu0
  %v9621 = vpop.f32.mrb[0].mxu0
  %9622 = vdwg.mxu0
  %v9631 = vcombine.low %v6642, %v6690
  %v9632 = vcombine.low %v6738, %v6786
  %v9634 = vunpack.c.l.s4 1983009808
  %v9635 = vunpack.c.0.s8 %v9634
  %v9636 = vlaneseq
  %v9637 = vshrl.u32 %v9636, 7
  %v9638 = vsub.s32 %v9635, %v9637
  %v9639 = vrot.slane %v9631, %v9638
  %v9641 = vunpack.c.l.s4 1983009808
  %v9642 = vunpack.c.0.s8 %v9641
  %v9643 = vlaneseq
  %v9644 = vshrl.u32 %v9643, 7
  %v9645 = vsub.s32 %v9642, %v9644
  %v9646 = vrot.slane %v9632, %v9645
  %v9647 = vcombine.low %v9639, %v9646
  %v9648 = vcombine.low %v6834, %v6882
  %v9649 = vcombine.low %v6930, %v6978
  %v9651 = vunpack.c.l.s4 1983009808
  %v9652 = vunpack.c.0.s8 %v9651
  %v9653 = vlaneseq
  %v9654 = vshrl.u32 %v9653, 7
  %v9655 = vsub.s32 %v9652, %v9654
  %v9656 = vrot.slane %v9648, %v9655
  %v9658 = vunpack.c.l.s4 1983009808
  %v9659 = vunpack.c.0.s8 %v9658
  %v9660 = vlaneseq
  %v9661 = vshrl.u32 %v9660, 7
  %v9662 = vsub.s32 %v9659, %v9661
  %v9663 = vrot.slane %v9649, %v9662
  %v9664 = vcombine.low %v9656, %v9663
  %v9675 = vcombine.low %v7522, %v7570
  %v9676 = vcombine.low %v7618, %v7666
  %v9678 = vunpack.c.l.s4 1983009808
  %v9679 = vunpack.c.0.s8 %v9678
  %v9680 = vlaneseq
  %v9681 = vshrl.u32 %v9680, 7
  %v9682 = vsub.s32 %v9679, %v9681
  %v9683 = vrot.slane %v9675, %v9682
  %v9685 = vunpack.c.l.s4 1983009808
  %v9686 = vunpack.c.0.s8 %v9685
  %v9687 = vlaneseq
  %v9688 = vshrl.u32 %v9687, 7
  %v9689 = vsub.s32 %v9686, %v9688
  %v9690 = vrot.slane %v9676, %v9689
  %v9691 = vcombine.low %v9683, %v9690
  %v9692 = vcombine.low %v7714, %v7762
  %v9693 = vcombine.low %v7810, %v7858
  %v9695 = vunpack.c.l.s4 1983009808
  %v9696 = vunpack.c.0.s8 %v9695
  %v9697 = vlaneseq
  %v9698 = vshrl.u32 %v9697, 7
  %v9699 = vsub.s32 %v9696, %v9698
  %v9700 = vrot.slane %v9692, %v9699
  %v9702 = vunpack.c.l.s4 1983009808
  %v9703 = vunpack.c.0.s8 %v9702
  %v9704 = vlaneseq
  %v9705 = vshrl.u32 %v9704, 7
  %v9706 = vsub.s32 %v9703, %v9705
  %v9707 = vrot.slane %v9693, %v9706
  %v9708 = vcombine.low %v9700, %v9707
  %9709 = vrot.lane.b32.xlu0 %v9691, 8
  %v9710 = vpop.permute.xlu0 %9709
  %9711 = vrot.lane.b32.xlu0 %v9708, 8
  %v9712 = vpop.permute.xlu0 %9711
  %v9723 = vcombine.low %v8402, %v8450
  %v9724 = vcombine.low %v8498, %v8546
  %v9726 = vunpack.c.l.s4 1983009808
  %v9727 = vunpack.c.0.s8 %v9726
  %v9728 = vlaneseq
  %v9729 = vshrl.u32 %v9728, 7
  %v9730 = vsub.s32 %v9727, %v9729
  %v9731 = vrot.slane %v9723, %v9730
  %v9733 = vunpack.c.l.s4 1983009808
  %v9734 = vunpack.c.0.s8 %v9733
  %v9735 = vlaneseq
  %v9736 = vshrl.u32 %v9735, 7
  %v9737 = vsub.s32 %v9734, %v9736
  %v9738 = vrot.slane %v9724, %v9737
  %v9739 = vcombine.low %v9731, %v9738
  %v9740 = vcombine.low %v8594, %v8642
  %v9741 = vcombine.low %v8690, %v8738
  %v9743 = vunpack.c.l.s4 1983009808
  %v9744 = vunpack.c.0.s8 %v9743
  %v9745 = vlaneseq
  %v9746 = vshrl.u32 %v9745, 7
  %v9747 = vsub.s32 %v9744, %v9746
  %v9748 = vrot.slane %v9740, %v9747
  %v9750 = vunpack.c.l.s4 1983009808
  %v9751 = vunpack.c.0.s8 %v9750
  %v9752 = vlaneseq
  %v9753 = vshrl.u32 %v9752, 7
  %v9754 = vsub.s32 %v9751, %v9753
  %v9755 = vrot.slane %v9741, %v9754
  %v9756 = vcombine.low %v9748, %v9755
  %9757 = vrot.lane.b32.xlu0 %v9739, 16
  %v9758 = vpop.permute.xlu0 %9757
  %9759 = vrot.lane.b32.xlu0 %v9756, 16
  %v9760 = vpop.permute.xlu0 %9759
  %v9771 = vcombine.low %v9282, %v9330
  %v9772 = vcombine.low %v9378, %v9426
  %v9774 = vunpack.c.l.s4 1983009808
  %v9775 = vunpack.c.0.s8 %v9774
  %v9776 = vlaneseq
  %v9777 = vshrl.u32 %v9776, 7
  %v9778 = vsub.s32 %v9775, %v9777
  %v9779 = vrot.slane %v9771, %v9778
  %v9781 = vunpack.c.l.s4 1983009808
  %v9782 = vunpack.c.0.s8 %v9781
  %v9783 = vlaneseq
  %v9784 = vshrl.u32 %v9783, 7
  %v9785 = vsub.s32 %v9782, %v9784
  %v9786 = vrot.slane %v9772, %v9785
  %v9787 = vcombine.low %v9779, %v9786
  %v9788 = vcombine.low %v9474, %v9522
  %v9789 = vcombine.low %v9570, %v9618
  %v9791 = vunpack.c.l.s4 1983009808
  %v9792 = vunpack.c.0.s8 %v9791
  %v9793 = vlaneseq
  %v9794 = vshrl.u32 %v9793, 7
  %v9795 = vsub.s32 %v9792, %v9794
  %v9796 = vrot.slane %v9788, %v9795
  %v9798 = vunpack.c.l.s4 1983009808
  %v9799 = vunpack.c.0.s8 %v9798
  %v9800 = vlaneseq
  %v9801 = vshrl.u32 %v9800, 7
  %v9802 = vsub.s32 %v9799, %v9801
  %v9803 = vrot.slane %v9789, %v9802
  %v9804 = vcombine.low %v9796, %v9803
  %9805 = vrot.lane.b32.xlu0 %v9787, 24
  %v9806 = vpop.permute.xlu0 %9805
  %9807 = vrot.lane.b32.xlu0 %v9804, 24
  %v9808 = vpop.permute.xlu0 %9807
  %v9811 = vsel %vm1771, %v9647, %v9710
  %v9812 = vsel %vm1771, %v9664, %v9712
  %v9813 = vsel %vm5565, %v9811, %v9758
  %v9814 = vsel %vm5565, %v9812, %v9760
  %v9815 = vsel %vm5568, %v9813, %v9806
  %v9816 = vsel %vm5568, %v9814, %v9808
  %v9817 = vpack.c.bf16 %v9816, %v9815
  %s9818 = scalar_lea.vmem %s25, 16
  %v9819 = vld [vmem:[%s9818] sm:$0xf]
  %v9820 = vld [vmem:[%s9818 + $0x4] sm:$0xf]
  %v9821 = vld [vmem:[%s9818 + $0x8] sm:$0xf]
  %v9822 = vld [vmem:[%s9818 + $0xc] sm:$0xf]
  %s9823 = scalar_lea.vmem %s27, 1
  %v9824 = vld [vmem:[%s9823] sm:$0x1]
  %v9826 = vlaneseq
  %v9827 = vshrl.u32 %v9826, 7
  %v9828 = vsub.s32 0, %v9827
  %v9829 = vrot.slane %v9824, %v9828
  %v9835 = vunpack.c.l.b16 %v9819
  %v9836 = vunpack.c.l.b16 %v9820
  %v9837 = vunpack.c.l.b16 %v9821
  %v9838 = vunpack.c.l.b16 %v9822
  %v9839 = vpack.c.b16 %v9836, %v9835
  %v9840 = vpack.c.b16 %v9838, %v9837
  %v9844 = vsel %vm798, %v9817, 0
  %9846 = vmatprep.subr.bf16.mxu0 0
  %9847 = vmatpush1.bf16.msra.mxu0 %v9839
  %9848 = vmatprep.subr.bf16.mxu0 0
  %9849 = vmatpush1.bf16.msra.mxu0 %v9840
  %9850 = vmatprep.subr.bf16.mxu0 0
  %9851 = vmatpush1.bf16.msra.mxu0 0
  %9852 = vmatprep.subr.bf16.mxu0 0
  %9853 = vmatpush1.bf16.msra.mxu0 0
  %9854 = vmatprep.subr.bf16.mxu0 0
  %9855 = vmatpush1.bf16.msra.mxu0 0
  %9856 = vmatprep.subr.bf16.mxu0 0
  %9857 = vmatpush1.bf16.msra.mxu0 0
  %9858 = vmatprep.subr.bf16.mxu0 0
  %9859 = vmatpush1.bf16.msra.mxu0 0
  %9860 = vmatprep.subr.bf16.mxu0 0
  %9861 = vmatpush1.bf16.msra.mxu0 0
  %9862 = vmatprep.subr.bf16.mxu0 0
  %9863 = vmatpush1.bf16.msra.mxu0 0
  %9864 = vmatprep.subr.bf16.mxu0 0
  %9865 = vmatpush1.bf16.msra.mxu0 0
  %9866 = vmatprep.subr.bf16.mxu0 0
  %9867 = vmatpush1.bf16.msra.mxu0 0
  %9868 = vmatprep.subr.bf16.mxu0 0
  %9869 = vmatpush1.bf16.msra.mxu0 0
  %9870 = vmatprep.subr.bf16.mxu0 0
  %9871 = vmatpush1.bf16.msra.mxu0 0
  %9872 = vmatprep.subr.bf16.mxu0 0
  %9873 = vmatpush1.bf16.msra.mxu0 0
  %9874 = vmatprep.subr.bf16.mxu0 0
  %9875 = vmatpush1.bf16.msra.mxu0 0
  %9876 = vmatprep.subr.bf16.mxu0 0
  %9877 = vmatpush1.bf16.msra.mxu0 0
  %9878 = vmatprep.mubr.bf16.mxu0 0
  %9879 = vmatmul.mubr.bf16.gmra.mrb[0].mxu0 %v9844
  %v9880 = vpop.f32.mrb[0].mxu0
  %v9881 = vadd.f32 %v9829, %v9880
  %v9882 = vpop.f32.mrb[0].mxu0
  %v9883 = vpop.f32.mrb[0].mxu0
  %v9884 = vadd.f32 %v9829, %v9883
  %v9885 = vpop.f32.mrb[0].mxu0
  %9886 = vdwg.mxu0
  %v9887 = vadd.f32 %v5884, %v9881
  %v9888 = vadd.f32 %v5885, %v9884
  %v9889 = vsel %vm798, %v9887, 0.0
  %9890 = vadd.xlane.f32.xlu0 %v9889
  %v9891 = vpop.xlane.xlu0 %9890
  %v9892 = vsel %vm798, %v9888, 0.0
  %9893 = vadd.xlane.f32.xlu0 %v9892
  %v9894 = vpop.xlane.xlu0 %9893
  %v9895 = vmul.f32 %v9891, %v5647
  %v9896 = vmul.f32 %v9894, %v5647
  %v9897 = vsub.f32 %v9887, %v9895
  %v9898 = vsub.f32 %v9888, %v9896
  %v9899 = vmul.f32 %v9897, %v9897
  %v9900 = vmul.f32 %v9898, %v9898
  %v9901 = vsel %vm798, %v9899, 0.0
  %9902 = vadd.xlane.f32.xlu0 %v9901
  %v9903 = vpop.xlane.xlu0 %9902
  %v9904 = vsel %vm798, %v9900, 0.0
  %9905 = vadd.xlane.f32.xlu0 %v9904
  %v9906 = vpop.xlane.xlu0 %9905
  %v9907 = vmul.f32 %v9903, %v5647
  %v9908 = vmul.f32 %v9906, %v5647
  %v9909 = vadd.f32 %v9907, 1e-05
  %v9910 = vadd.f32 %v9908, 1e-05
  %v9911 = vrsqrt.pop %v9909
  %v9912 = vrsqrt.pop %v9910
  %v9913 = vmul.f32 %v9897, %v9911
  %v9914 = vmul.f32 %v9898, %v9912
  %s9915 = scalar_lea.vmem %s29, 1
  %v9916 = vld [vmem:[%s9915] sm:$0x1]
  %v9918 = vlaneseq
  %v9919 = vshrl.u32 %v9918, 7
  %v9920 = vsub.s32 0, %v9919
  %v9921 = vrot.slane %v9916, %v9920
  %v9923 = vmul.f32 %v9913, %v9921
  %v9924 = vmul.f32 %v9914, %v9921
  %s9925 = scalar_lea.vmem %s31, 1
  %v9926 = vld [vmem:[%s9925] sm:$0x1]
  %v9928 = vlaneseq
  %v9929 = vshrl.u32 %v9928, 7
  %v9930 = vsub.s32 0, %v9929
  %v9931 = vrot.slane %v9926, %v9930
  %v9933 = vadd.f32 %v9923, %v9931
  %v9934 = vadd.f32 %v9924, %v9931
  %v9935 = vpack.c.bf16 %v9934, %v9933
  %s9936 = scalar_lea.vmem %s33, 16
  %v9937 = vld [vmem:[%s9936] sm:$0xf]
  %v9938 = vld [vmem:[%s9936 + $0x4] sm:$0xf]
  %v9939 = vld [vmem:[%s9936 + $0x8] sm:$0xf]
  %v9940 = vld [vmem:[%s9936 + $0xc] sm:$0xf]
  %s9941 = scalar_lea.vmem %s35, 1
  %v9942 = vld [vmem:[%s9941] sm:$0x1]
  %v9944 = vlaneseq
  %v9945 = vshrl.u32 %v9944, 7
  %v9946 = vsub.s32 0, %v9945
  %v9947 = vrot.slane %v9942, %v9946
  %v9953 = vunpack.c.l.b16 %v9937
  %v9954 = vunpack.c.l.b16 %v9938
  %v9955 = vunpack.c.l.b16 %v9939
  %v9956 = vunpack.c.l.b16 %v9940
  %v9957 = vpack.c.b16 %v9954, %v9953
  %v9958 = vpack.c.b16 %v9956, %v9955
  %v9962 = vsel %vm798, %v9935, 0
  %9964 = vmatprep.subr.bf16.mxu0 0
  %9965 = vmatpush1.bf16.msra.mxu0 %v9957
  %9966 = vmatprep.subr.bf16.mxu0 0
  %9967 = vmatpush1.bf16.msra.mxu0 %v9958
  %9968 = vmatprep.subr.bf16.mxu0 0
  %9969 = vmatpush1.bf16.msra.mxu0 0
  %9970 = vmatprep.subr.bf16.mxu0 0
  %9971 = vmatpush1.bf16.msra.mxu0 0
  %9972 = vmatprep.subr.bf16.mxu0 0
  %9973 = vmatpush1.bf16.msra.mxu0 0
  %9974 = vmatprep.subr.bf16.mxu0 0
  %9975 = vmatpush1.bf16.msra.mxu0 0
  %9976 = vmatprep.subr.bf16.mxu0 0
  %9977 = vmatpush1.bf16.msra.mxu0 0
  %9978 = vmatprep.subr.bf16.mxu0 0
  %9979 = vmatpush1.bf16.msra.mxu0 0
  %9980 = vmatprep.subr.bf16.mxu0 0
  %9981 = vmatpush1.bf16.msra.mxu0 0
  %9982 = vmatprep.subr.bf16.mxu0 0
  %9983 = vmatpush1.bf16.msra.mxu0 0
  %9984 = vmatprep.subr.bf16.mxu0 0
  %9985 = vmatpush1.bf16.msra.mxu0 0
  %9986 = vmatprep.subr.bf16.mxu0 0
  %9987 = vmatpush1.bf16.msra.mxu0 0
  %9988 = vmatprep.subr.bf16.mxu0 0
  %9989 = vmatpush1.bf16.msra.mxu0 0
  %9990 = vmatprep.subr.bf16.mxu0 0
  %9991 = vmatpush1.bf16.msra.mxu0 0
  %9992 = vmatprep.subr.bf16.mxu0 0
  %9993 = vmatpush1.bf16.msra.mxu0 0
  %9994 = vmatprep.subr.bf16.mxu0 0
  %9995 = vmatpush1.bf16.msra.mxu0 0
  %9996 = vmatprep.mubr.bf16.mxu0 0
  %9997 = vmatmul.mubr.bf16.gmra.mrb[0].mxu0 %v9962
  %v9998 = vpop.f32.mrb[0].mxu0
  %v9999 = vadd.f32 %v9947, %v9998
  %v10000 = vpop.f32.mrb[0].mxu0
  %v10001 = vpop.f32.mrb[0].mxu0
  %v10002 = vadd.f32 %v9947, %v10001
  %v10003 = vpop.f32.mrb[0].mxu0
  %10004 = vdwg.mxu0
  %v10005 = vmax.f32 %v9999, 0.0
  %v10006 = vmax.f32 %v10002, 0.0
  %v10007 = vpack.c.bf16 %v10006, %v10005
  %s10008 = scalar_lea.vmem %s37, 32
  %v10009 = vld [vmem:[%s10008] sm:$0xf]
  %v10010 = vld [vmem:[%s10008 + $0x4] sm:$0xf]
  %v10011 = vld [vmem:[%s10008 + $0x8] sm:$0xf]
  %v10012 = vld [vmem:[%s10008 + $0xc] sm:$0xf]
  %v10013 = vld [vmem:[%s10008 + $0x10] sm:$0xf]
  %v10014 = vld [vmem:[%s10008 + $0x14] sm:$0xf]
  %v10015 = vld [vmem:[%s10008 + $0x18] sm:$0xf]
  %v10016 = vld [vmem:[%s10008 + $0x1c] sm:$0xf]
  %s10017 = scalar_lea.vmem %s39, 1
  %v10018 = vld [vmem:[%s10017] sm:$0x1]
  %v10020 = vlaneseq
  %v10021 = vshrl.u32 %v10020, 7
  %v10022 = vsub.s32 0, %v10021
  %v10023 = vrot.slane %v10018, %v10022
  %v10033 = vunpack.c.l.b16 %v10009
  %v10034 = vunpack.c.l.b16 %v10010
  %v10035 = vunpack.c.l.b16 %v10011
  %v10036 = vunpack.c.l.b16 %v10012
  %v10037 = vunpack.c.l.b16 %v10013
  %v10038 = vunpack.c.l.b16 %v10014
  %v10039 = vunpack.c.l.b16 %v10015
  %v10040 = vunpack.c.l.b16 %v10016
  %v10041 = vpack.c.b16 %v10034, %v10033
  %v10042 = vpack.c.b16 %v10036, %v10035
  %v10043 = vpack.c.b16 %v10038, %v10037
  %v10044 = vpack.c.b16 %v10040, %v10039
  %v10050 = vsel %vm517, %v10007, 0
  %10052 = vmatprep.subr.bf16.mxu0 0
  %10053 = vmatpush1.bf16.msra.mxu0 %v10041
  %10054 = vmatprep.subr.bf16.mxu0 0
  %10055 = vmatpush1.bf16.msra.mxu0 %v10042
  %10056 = vmatprep.subr.bf16.mxu0 0
  %10057 = vmatpush1.bf16.msra.mxu0 %v10043
  %10058 = vmatprep.subr.bf16.mxu0 0
  %10059 = vmatpush1.bf16.msra.mxu0 %v10044
  %10060 = vmatprep.subr.bf16.mxu0 0
  %10061 = vmatpush1.bf16.msra.mxu0 0
  %10062 = vmatprep.subr.bf16.mxu0 0
  %10063 = vmatpush1.bf16.msra.mxu0 0
  %10064 = vmatprep.subr.bf16.mxu0 0
  %10065 = vmatpush1.bf16.msra.mxu0 0
  %10066 = vmatprep.subr.bf16.mxu0 0
  %10067 = vmatpush1.bf16.msra.mxu0 0
  %10068 = vmatprep.subr.bf16.mxu0 0
  %10069 = vmatpush1.bf16.msra.mxu0 0
  %10070 = vmatprep.subr.bf16.mxu0 0
  %10071 = vmatpush1.bf16.msra.mxu0 0
  %10072 = vmatprep.subr.bf16.mxu0 0
  %10073 = vmatpush1.bf16.msra.mxu0 0
  %10074 = vmatprep.subr.bf16.mxu0 0
  %10075 = vmatpush1.bf16.msra.mxu0 0
  %10076 = vmatprep.subr.bf16.mxu0 0
  %10077 = vmatpush1.bf16.msra.mxu0 0
  %10078 = vmatprep.subr.bf16.mxu0 0
  %10079 = vmatpush1.bf16.msra.mxu0 0
  %10080 = vmatprep.subr.bf16.mxu0 0
  %10081 = vmatpush1.bf16.msra.mxu0 0
  %10082 = vmatprep.subr.bf16.mxu0 0
  %10083 = vmatpush1.bf16.msra.mxu0 0
  %10084 = vmatprep.mubr.bf16.mxu0 0
  %10085 = vmatmul.mubr.bf16.gmra.mrb[0].mxu0 %v10050
  %v10086 = vpop.f32.mrb[0].mxu0
  %v10087 = vadd.f32 %v10023, %v10086
  %v10088 = vpop.f32.mrb[0].mxu0
  %v10089 = vpop.f32.mrb[0].mxu0
  %v10090 = vadd.f32 %v10023, %v10089
  %v10091 = vpop.f32.mrb[0].mxu0
  %10092 = vdwg.mxu0
  %v10093 = vadd.f32 %v9933, %v10087
  %v10094 = vadd.f32 %v9934, %v10090
  %v10095 = vsel %vm798, %v10093, 0.0
  %10096 = vadd.xlane.f32.xlu0 %v10095
  %v10097 = vpop.xlane.xlu0 %10096
  %v10098 = vsel %vm798, %v10094, 0.0
  %10099 = vadd.xlane.f32.xlu0 %v10098
  %v10100 = vpop.xlane.xlu0 %10099
  %v10101 = vmul.f32 %v10097, %v5647
  %v10102 = vmul.f32 %v10100, %v5647
  %v10103 = vsub.f32 %v10093, %v10101
  %v10104 = vsub.f32 %v10094, %v10102
  %v10105 = vmul.f32 %v10103, %v10103
  %v10106 = vmul.f32 %v10104, %v10104
  %v10107 = vsel %vm798, %v10105, 0.0
  %10108 = vadd.xlane.f32.xlu0 %v10107
  %v10109 = vpop.xlane.xlu0 %10108
  %v10110 = vsel %vm798, %v10106, 0.0
  %10111 = vadd.xlane.f32.xlu0 %v10110
  %v10112 = vpop.xlane.xlu0 %10111
  %v10113 = vmul.f32 %v10109, %v5647
  %v10114 = vmul.f32 %v10112, %v5647
  %v10115 = vadd.f32 %v10113, 1e-05
  %v10116 = vadd.f32 %v10114, 1e-05
  %v10117 = vrsqrt.pop %v10115
  %v10118 = vrsqrt.pop %v10116
  %v10119 = vmul.f32 %v10103, %v10117
  %v10120 = vmul.f32 %v10104, %v10118
  %s10121 = scalar_lea.vmem %s41, 1
  %v10122 = vld [vmem:[%s10121] sm:$0x1]
  %v10124 = vlaneseq
  %v10125 = vshrl.u32 %v10124, 7
  %v10126 = vsub.s32 0, %v10125
  %v10127 = vrot.slane %v10122, %v10126
  %v10129 = vmul.f32 %v10119, %v10127
  %v10130 = vmul.f32 %v10120, %v10127
  %s10131 = scalar_lea.vmem %s43, 1
  %v10132 = vld [vmem:[%s10131] sm:$0x1]
  %v10134 = vlaneseq
  %v10135 = vshrl.u32 %v10134, 7
  %v10136 = vsub.s32 0, %v10135
  %v10137 = vrot.slane %v10132, %v10136
  %v10139 = vadd.f32 %v10129, %v10137
  %v10140 = vadd.f32 %v10130, %v10137
  %v10141 = vpack.c.bf16 %v10140, %v10139
  %v10142 = vld [vmem:[%s45] sm:$0xf]
  %v10143 = vld [vmem:[%s45 + $0x4] sm:$0xf]
  %v10144 = vld [vmem:[%s45 + $0x8] sm:$0xf]
  %v10145 = vld [vmem:[%s45 + $0xc] sm:$0xf]
  %v10146 = vld [vmem:[%s47] sm:$0x1]
  %v10148 = vlaneseq
  %v10149 = vshrl.u32 %v10148, 7
  %v10150 = vsub.s32 0, %v10149
  %v10151 = vrot.slane %v10146, %v10150
  %v10157 = vunpack.c.l.b16 %v10142
  %v10158 = vunpack.c.l.b16 %v10143
  %v10159 = vunpack.c.l.b16 %v10144
  %v10160 = vunpack.c.l.b16 %v10145
  %v10161 = vpack.c.b16 %v10158, %v10157
  %v10162 = vpack.c.b16 %v10160, %v10159
  %v10166 = vsel %vm798, %v10141, 0
  %10168 = vmatprep.subr.bf16.mxu0 0
  %10169 = vmatpush1.bf16.msra.mxu0 %v10161
  %10170 = vmatprep.subr.bf16.mxu0 0
  %10171 = vmatpush1.bf16.msra.mxu0 %v10162
  %10172 = vmatprep.subr.bf16.mxu0 0
  %10173 = vmatpush1.bf16.msra.mxu0 0
  %10174 = vmatprep.subr.bf16.mxu0 0
  %10175 = vmatpush1.bf16.msra.mxu0 0
  %10176 = vmatprep.subr.bf16.mxu0 0
  %10177 = vmatpush1.bf16.msra.mxu0 0
  %10178 = vmatprep.subr.bf16.mxu0 0
  %10179 = vmatpush1.bf16.msra.mxu0 0
  %10180 = vmatprep.subr.bf16.mxu0 0
  %10181 = vmatpush1.bf16.msra.mxu0 0
  %10182 = vmatprep.subr.bf16.mxu0 0
  %10183 = vmatpush1.bf16.msra.mxu0 0
  %10184 = vmatprep.subr.bf16.mxu0 0
  %10185 = vmatpush1.bf16.msra.mxu0 0
  %10186 = vmatprep.subr.bf16.mxu0 0
  %10187 = vmatpush1.bf16.msra.mxu0 0
  %10188 = vmatprep.subr.bf16.mxu0 0
  %10189 = vmatpush1.bf16.msra.mxu0 0
  %10190 = vmatprep.subr.bf16.mxu0 0
  %10191 = vmatpush1.bf16.msra.mxu0 0
  %10192 = vmatprep.subr.bf16.mxu0 0
  %10193 = vmatpush1.bf16.msra.mxu0 0
  %10194 = vmatprep.subr.bf16.mxu0 0
  %10195 = vmatpush1.bf16.msra.mxu0 0
  %10196 = vmatprep.subr.bf16.mxu0 0
  %10197 = vmatpush1.bf16.msra.mxu0 0
  %10198 = vmatprep.subr.bf16.mxu0 0
  %10199 = vmatpush1.bf16.msra.mxu0 0
  %10200 = vmatprep.mubr.bf16.mxu0 0
  %10201 = vmatmul.mubr.bf16.gmra.mrb[0].mxu0 %v10166
  %v10202 = vpop.f32.mrb[0].mxu0
  %v10203 = vadd.f32 %v10151, %v10202
  %v10204 = vpop.f32.mrb[0].mxu0
  %v10205 = vpop.f32.mrb[0].mxu0
  %v10206 = vadd.f32 %v10151, %v10205
  %v10207 = vpop.f32.mrb[0].mxu0
  %10208 = vdwg.mxu0
  %v10209 = vmax.f32 %v10203, 0.0
  %v10210 = vmax.f32 %v10206, 0.0
  %v10211 = vld [vmem:[%s49] sm:$0x1]
  %v10213 = vlaneseq
  %v10214 = vshrl.u32 %v10213, 7
  %v10215 = vsub.s32 0, %v10214
  %v10216 = vrot.slane %v10211, %v10215
  %v10218 = vmul.f32 %v10209, %v10216
  %v10219 = vmul.f32 %v10210, %v10216
  %v10220 = vsel %vm5565, %v10218, 0.0
  %10221 = vadd.xlane.f32.xlu0 %v10220
  %v10222 = vpop.xlane.xlu0 %10221
  %v10223 = vsel %vm5565, %v10219, 0.0
  %10224 = vadd.xlane.f32.xlu0 %v10223
  %v10225 = vpop.xlane.xlu0 %10224
  %v10226 = vld [vmem:[#allocation3] sm:$0x1]
  %v10228 = vlaneseq
  %v10229 = vshrl.u32 %v10228, 7
  %v10230 = vsub.s32 0, %v10229
  %v10231 = vrot.slane %v10226, %v10230
  %v10233 = vadd.f32 %v10222, %v10231
  %v10234 = vadd.f32 %v10225, %v10231
  %v10235 = vxor.u32 %v10233, 2147483648
  %v10236 = vxor.u32 %v10234, 2147483648
  %v10237 = vmul.f32 %v10235, 1.442695
  %v10238 = vpow.pop %v10237
  %v10239 = vmul.f32 %v10236, 1.442695
  %v10240 = vpow.pop %v10239
  %v10241 = vadd.f32 %v10238, 1.0
  %v10242 = vadd.f32 %v10240, 1.0
  %v10243 = vrcp.pop %v10241
  %v10244 = vmul.f32 1.0, %v10243
  %v10245 = vrcp.pop %v10242
  %v10246 = vmul.f32 1.0, %v10245
  %10248 = vset.pattern.permute.xlu0 0
  %10249 = vperm.xlu0 %10248, %v10244
  %v10250 = vpop.permute.xlu0 %10249
  %10253 = vset.pattern.permute.xlu0 0
  %10254 = vperm.xlu0 %10253, %v10246
  %v10255 = vpop.permute.xlu0 %10254
  %v10257 = vmul.f32 %v10139, %v10250
  %v10258 = vmul.f32 %v10140, %v10255
  %v10261 = vcombine.high %v10257, %v10257
  %v10263 = vunpack.c.l.s4 1983009808
  %v10264 = vunpack.c.0.s8 %v10263
  %v10265 = vlaneseq
  %v10266 = vshrl.u32 %v10265, 7
  %v10267 = vsub.s32 %v10264, %v10266
  %v10268 = vrot.slane %v10257, %v10267
  %v10270 = vunpack.c.l.s4 1983009808
  %v10271 = vunpack.c.0.s8 %v10270
  %v10272 = vlaneseq
  %v10273 = vshrl.u32 %v10272, 7
  %v10274 = vsub.s32 %v10271, %v10273
  %v10275 = vrot.slane %v10261, %v10274
  %v10276 = vcombine.high %v10268, %v10268
  %v10277 = vcombine.high %v10275, %v10275
  %v10278 = vcombine.high %v10258, %v10258
  %v10280 = vunpack.c.l.s4 1983009808
  %v10281 = vunpack.c.0.s8 %v10280
  %v10282 = vlaneseq
  %v10283 = vshrl.u32 %v10282, 7
  %v10284 = vsub.s32 %v10281, %v10283
  %v10285 = vrot.slane %v10258, %v10284
  %v10287 = vunpack.c.l.s4 1983009808
  %v10288 = vunpack.c.0.s8 %v10287
  %v10289 = vlaneseq
  %v10290 = vshrl.u32 %v10289, 7
  %v10291 = vsub.s32 %v10288, %v10290
  %v10292 = vrot.slane %v10278, %v10291
  %v10293 = vcombine.high %v10285, %v10285
  %v10294 = vcombine.high %v10292, %v10292
  %vm10303 = vcmask 254976
  %v10304 = vsel %vm10303, %v10268, 0.0
  %v10305 = vsel %vm10303, %v10276, 0.0
  %v10306 = vadd.f32 %v10304, %v10305
  %v10307 = vsel %vm10303, %v10275, 0.0
  %v10308 = vadd.f32 %v10306, %v10307
  %v10309 = vsel %vm10303, %v10277, 0.0
  %v10310 = vadd.f32 %v10308, %v10309
  %v10311 = vsel %vm10303, %v10285, 0.0
  %v10312 = vadd.f32 %v10310, %v10311
  %v10313 = vsel %vm10303, %v10293, 0.0
  %v10314 = vadd.f32 %v10312, %v10313
  %v10315 = vsel %vm10303, %v10292, 0.0
  %v10316 = vadd.f32 %v10314, %v10315
  %v10317 = vsel %vm10303, %v10294, 0.0
  %v10318 = vadd.f32 %v10316, %v10317
  %v10319 = vrcp.pop 8.0
  %v10320 = vmul.f32 %v10318, %v10319
  %v10321 = vpack.c.bf16 %v10320, %v10320
  %v10322 = vld [vmem:[%s53] sm:$0xf]
  %v10323 = vld [vmem:[%s53 + $0x4] sm:$0xf]
  %v10324 = vld [vmem:[%s53 + $0x8] sm:$0xf]
  %v10325 = vld [vmem:[%s53 + $0xc] sm:$0xf]
  %v10326 = vld [vmem:[%s55] sm:$0x1]
  %v10328 = vlaneseq
  %v10329 = vshrl.u32 %v10328, 7
  %v10330 = vsub.s32 0, %v10329
  %v10331 = vrot.slane %v10326, %v10330
  %v10337 = vunpack.c.l.b16 %v10322
  %v10338 = vunpack.c.l.b16 %v10323
  %v10339 = vunpack.c.l.b16 %v10324
  %v10340 = vunpack.c.l.b16 %v10325
  %v10341 = vpack.c.b16 %v10338, %v10337
  %v10342 = vpack.c.b16 %v10340, %v10339
  %v10346 = vsel %vm798, %v10321, 0
  %10348 = vmatprep.subr.bf16.mxu0 0
  %10349 = vmatpush1.bf16.msra.mxu0 %v10341
  %10350 = vmatprep.subr.bf16.mxu0 0
  %10351 = vmatpush1.bf16.msra.mxu0 %v10342
  %10352 = vmatprep.subr.bf16.mxu0 0
  %10353 = vmatpush1.bf16.msra.mxu0 0
  %10354 = vmatprep.subr.bf16.mxu0 0
  %10355 = vmatpush1.bf16.msra.mxu0 0
  %10356 = vmatprep.subr.bf16.mxu0 0
  %10357 = vmatpush1.bf16.msra.mxu0 0
  %10358 = vmatprep.subr.bf16.mxu0 0
  %10359 = vmatpush1.bf16.msra.mxu0 0
  %10360 = vmatprep.subr.bf16.mxu0 0
  %10361 = vmatpush1.bf16.msra.mxu0 0
  %10362 = vmatprep.subr.bf16.mxu0 0
  %10363 = vmatpush1.bf16.msra.mxu0 0
  %10364 = vmatprep.subr.bf16.mxu0 0
  %10365 = vmatpush1.bf16.msra.mxu0 0
  %10366 = vmatprep.subr.bf16.mxu0 0
  %10367 = vmatpush1.bf16.msra.mxu0 0
  %10368 = vmatprep.subr.bf16.mxu0 0
  %10369 = vmatpush1.bf16.msra.mxu0 0
  %10370 = vmatprep.subr.bf16.mxu0 0
  %10371 = vmatpush1.bf16.msra.mxu0 0
  %10372 = vmatprep.subr.bf16.mxu0 0
  %10373 = vmatpush1.bf16.msra.mxu0 0
  %10374 = vmatprep.subr.bf16.mxu0 0
  %10375 = vmatpush1.bf16.msra.mxu0 0
  %10376 = vmatprep.subr.bf16.mxu0 0
  %10377 = vmatpush1.bf16.msra.mxu0 0
  %10378 = vmatprep.subr.bf16.mxu0 0
  %10379 = vmatpush1.bf16.msra.mxu0 0
  %10380 = vmatprep.mubr.bf16.mxu0 0
  %10381 = vmatmul.mubr.bf16.gmra.mrb[0].mxu0 %v10346
  %v10382 = vpop.f32.mrb[0].mxu0
  %v10383 = vadd.f32 %v10331, %v10382
  %v10384 = vpop.f32.mrb[0].mxu0
  %v10385 = vpop.f32.mrb[0].mxu0
  %v10386 = vpop.f32.mrb[0].mxu0
  %10387 = vdwg.mxu0
  %v10388 = vmax.f32 %v10383, 0.0
  %v10389 = vpack.c.bf16 %v10388, %v10388
  %v10390 = vld [vmem:[%s57] sm:$0xf]
  %v10391 = vld [vmem:[%s57 + $0x4] sm:$0xf]
  %v10392 = vld [vmem:[%s59] sm:$0x1]
  %v10394 = vlaneseq
  %v10395 = vshrl.u32 %v10394, 7
  %v10396 = vsub.s32 0, %v10395
  %v10397 = vrot.slane %v10392, %v10396
  %v10401 = vunpack.c.l.b16 %v10390
  %v10402 = vunpack.c.l.b16 %v10391
  %v10403 = vpack.c.b16 %v10402, %v10401
  %v10406 = vsel %vm5565, %v10389, 0
  %10408 = vmatprep.subr.bf16.mxu0 0
  %10409 = vmatpush1.bf16.msra.mxu0 %v10403
  %10410 = vmatprep.subr.bf16.mxu0 0
  %10411 = vmatpush1.bf16.msra.mxu0 0
  %10412 = vmatprep.subr.bf16.mxu0 0
  %10413 = vmatpush1.bf16.msra.mxu0 0
  %10414 = vmatprep.subr.bf16.mxu0 0
  %10415 = vmatpush1.bf16.msra.mxu0 0
  %10416 = vmatprep.subr.bf16.mxu0 0
  %10417 = vmatpush1.bf16.msra.mxu0 0
  %10418 = vmatprep.subr.bf16.mxu0 0
  %10419 = vmatpush1.bf16.msra.mxu0 0
  %10420 = vmatprep.subr.bf16.mxu0 0
  %10421 = vmatpush1.bf16.msra.mxu0 0
  %10422 = vmatprep.subr.bf16.mxu0 0
  %10423 = vmatpush1.bf16.msra.mxu0 0
  %10424 = vmatprep.subr.bf16.mxu0 0
  %10425 = vmatpush1.bf16.msra.mxu0 0
  %10426 = vmatprep.subr.bf16.mxu0 0
  %10427 = vmatpush1.bf16.msra.mxu0 0
  %10428 = vmatprep.subr.bf16.mxu0 0
  %10429 = vmatpush1.bf16.msra.mxu0 0
  %10430 = vmatprep.subr.bf16.mxu0 0
  %10431 = vmatpush1.bf16.msra.mxu0 0
  %10432 = vmatprep.subr.bf16.mxu0 0
  %10433 = vmatpush1.bf16.msra.mxu0 0
  %10434 = vmatprep.subr.bf16.mxu0 0
  %10435 = vmatpush1.bf16.msra.mxu0 0
  %10436 = vmatprep.subr.bf16.mxu0 0
  %10437 = vmatpush1.bf16.msra.mxu0 0
  %10438 = vmatprep.subr.bf16.mxu0 0
  %10439 = vmatpush1.bf16.msra.mxu0 0
  %10440 = vmatprep.mubr.bf16.mxu0 0
  %10441 = vmatmul.mubr.bf16.gmra.mrb[0].mxu0 %v10406
  %v10442 = vpop.f32.mrb[0].mxu0
  %v10443 = vadd.f32 %v10397, %v10442
  %v10444 = vpop.f32.mrb[0].mxu0
  %v10445 = vpop.f32.mrb[0].mxu0
  %v10446 = vpop.f32.mrb[0].mxu0
  %10447 = vdwg.mxu0
  %v10448 = vmax.f32 %v10443, 0.0
  %v10449 = vld [vmem:[%s61] sm:$0x1]
  %v10451 = vlaneseq
  %v10452 = vshrl.u32 %v10451, 7
  %v10453 = vsub.s32 0, %v10452
  %v10454 = vrot.slane %v10449, %v10453
  %v10456 = vmul.f32 %v10448, %v10454
  %vm10457 = vcmask 58368
  %v10458 = vsel %vm10457, %v10456, 0.0
  %10459 = vadd.xlane.f32.xlu0 %v10458
  %v10460 = vpop.xlane.xlu0 %10459
  %v10461 = vld [vmem:[#allocation4] sm:$0x1]
  %v10463 = vlaneseq
  %v10464 = vshrl.u32 %v10463, 7
  %v10465 = vsub.s32 0, %v10464
  %v10466 = vrot.slane %v10461, %v10465
  %v10468 = vadd.f32 %v10460, %v10466
  %v10469 = vxor.u32 %v10468, 2147483648
  %v10470 = vmul.f32 %v10469, 1.442695
  %v10471 = vpow.pop %v10470
  %v10472 = vadd.f32 %v10471, 1.0
  %v10473 = vrcp.pop %v10472
  %v10474 = vmul.f32 1.0, %v10473
  %vm10475 = vcmask 1024
  %10476 = vst.msk [vmem:[%s65] sm:$0x3] %vm10475, %v10474
  // Predicated region
  $region130: #{deepfake_detector_forward.1} parent=0 // pred_check
    _
  $region131: #{deepfake_detector_forward.1} parent=0 // pred_check_branch
    %10478 = sbr.rel (0) target = $region133
  $region132: #{deepfake_detector_forward.1} parent=0 // pred_region
    _
  $region133: #{deepfake_detector_forward.1} parent=0 // pred_fallthru
    _
  // Predicated region
  $region134: #{deepfake_detector_forward.1} parent=0 // pred_check
    _
  $region135: #{deepfake_detector_forward.1} parent=0 // pred_check_branch
    %10480 = sbr.rel (0) target = $region137
  $region136: #{deepfake_detector_forward.1} parent=0 // pred_region
    _
  $region137: #{deepfake_detector_forward.1} parent=0 // pred_fallthru
    _

</llo_original>
